<compile_context>
chip_gen: v6e
topology: v6e:2x2x1
jax: 0.10.0
libtpu: 0.0.40
codegen_flags: <defaults>
</compile_context>

<pallas_src>
import math

import jax
import jax.numpy as jnp
from jax import lax
from jax.experimental import pallas as pl
from jax.experimental.pallas import tpu as pltpu

EMBED_DIM = 8
NUM_HEADS = 2
WINDOW = (4, 4, 4)
LN_EPS = 1e-5
BN_EPS = 1e-5
V_TH = 1.0
TAU = 2.0
LIF_THRESH = TAU * V_TH        # (x / tau) >= v_th  <=>  x >= tau * v_th (tau=2 exact)


# ---------------------------------------------------------------------------
# Fused kernel: per-window MHSA + residual + LayerNorm + LIF
#               + 1x1x1 conv (BatchNorm folded) + LIF
# Processes TW windows per grid step.
# ---------------------------------------------------------------------------
def _fused_kernel(x_ref, wqkv_ref, bqkv_ref, wo_ref, bo_ref, g_ref, beta_ref,
                  w2_ref, b2_ref, o_ref):
    tw, n, c = x_ref.shape
    hd = c // NUM_HEADS
    scale = 1.0 / math.sqrt(hd)

    x3 = x_ref[...]                                      # (TW, N, C)
    x2 = x3.reshape(tw * n, c)                           # (TW*N, C)

    # in_proj (weights pre-transposed to (C, 3C))
    qkv = jnp.dot(x2, wqkv_ref[...],
                  preferred_element_type=jnp.float32) + bqkv_ref[...]
    qkv3 = qkv.reshape(tw, n, 3 * c)
    q = qkv3[:, :, 0 * c:1 * c]
    k = qkv3[:, :, 1 * c:2 * c]
    v = qkv3[:, :, 2 * c:3 * c]

    wo = wo_ref[...]                                     # (C, C)
    acc = None
    for h in range(NUM_HEADS):                           # static unroll
        qh = q[:, :, h * hd:(h + 1) * hd] * scale        # (TW, N, hd)
        kh = k[:, :, h * hd:(h + 1) * hd]
        vh = v[:, :, h * hd:(h + 1) * hd]
        # scores, batched over the TW windows: (TW, N, N)
        s = lax.dot_general(qh, kh, (((2,), (2,)), ((0,), (0,))),
                            preferred_element_type=jnp.float32)
        s = s - jnp.max(s, axis=-1, keepdims=True)
        p = jnp.exp(s)
        p = p * pl.reciprocal(jnp.sum(p, axis=-1, keepdims=True), approx=True)
        oh = lax.dot_general(p, vh, (((2,), (1,)), ((0,), (0,))),
                             preferred_element_type=jnp.float32)  # (TW, N, hd)
        # fold head output through its slice of the out-proj weight:
        # avoids a lane-concatenate of 4-wide head slabs.
        proj = jnp.dot(oh.reshape(tw * n, hd), wo[h * hd:(h + 1) * hd, :],
                       preferred_element_type=jnp.float32)        # (TW*N, C)
        acc = proj if acc is None else acc + proj

    # out-proj bias + residual + LayerNorm over C
    y = acc + bo_ref[...] + x2
    mean = jnp.mean(y, axis=-1, keepdims=True)
    var = jnp.mean(jnp.square(y - mean), axis=-1, keepdims=True)
    yn = (y - mean) * lax.rsqrt(var + LN_EPS) * g_ref[...] + beta_ref[...]

    # LIF 1 (fresh state)
    s1 = (yn >= LIF_THRESH).astype(jnp.float32)

    # fused MLP: 1x1x1 conv (per-voxel linear) with BatchNorm folded, + LIF 2
    z = jnp.dot(s1, w2_ref[...],
                preferred_element_type=jnp.float32) + b2_ref[...]
    o_ref[...] = (z >= LIF_THRESH).astype(jnp.float32).reshape(tw, n, c)


def fused_block(x_windows, params, max_windows_per_step=8):
    NW, N, C = x_windows.shape
    # largest divisor of NW that is <= max_windows_per_step (no tail blocks;
    # keeps the grid >= 2 steps at these sizes so both v7x TCs get work)
    tw = max(d for d in range(1, min(NW, max_windows_per_step) + 1)
             if NW % d == 0)

    weights = params        # all 2D arrays

    def full_spec(w):
        return pl.BlockSpec(w.shape, lambda i: (0, 0))

    return pl.pallas_call(
        _fused_kernel,
        out_shape=jax.ShapeDtypeStruct((NW, N, C), jnp.float32),
        grid_spec=pltpu.PrefetchScalarGridSpec(
            num_scalar_prefetch=0,
            grid=(NW // tw,),
            in_specs=[pl.BlockSpec((tw, N, C), lambda i: (i, 0, 0))] +
                     [full_spec(w) for w in weights],
            out_specs=pl.BlockSpec((tw, N, C), lambda i: (i, 0, 0)),
        ),
        compiler_params=pltpu.CompilerParams(
            dimension_semantics=("parallel",)),
    )(x_windows, *weights)


# ---------------------------------------------------------------------------
# Glue: window partition / reverse (matches the PyTorch view/permute exactly)
# ---------------------------------------------------------------------------
def window_partition(x, window):
    B, C, D, H, W = x.shape
    wd, wh, ww = window
    Dn, Hn, Wn = D // wd, H // wh, W // ww
    xw = x.reshape(B, C, Dn, wd, Hn, wh, Wn, ww)
    xw = jnp.transpose(xw, (0, 2, 4, 6, 1, 3, 5, 7))
    xw = xw.reshape(-1, C, wd * wh * ww)
    return jnp.transpose(xw, (0, 2, 1))                  # (NW, N, C)


def window_reverse(xw, B, C, D, H, W, window):
    wd, wh, ww = window
    Dn, Hn, Wn = D // wd, H // wh, W // ww
    x = jnp.transpose(xw, (0, 2, 1))                     # (NW, C, N)
    x = x.reshape(B, Dn, Hn, Wn, C, wd, wh, ww)
    x = jnp.transpose(x, (0, 4, 1, 5, 2, 6, 3, 7))
    return x.reshape(B, C, D, H, W)


def spiking_transformer_block_3d(x, params):
    B, C, D, H, W = x.shape
    xw = window_partition(x, WINDOW)                     # (NW, N, C)
    yw = fused_block(xw, params)                         # fused attn + MLP
    return window_reverse(yw, B, C, D, H, W, WINDOW)     # NCDHW


# ---------------------------------------------------------------------------
# Deterministic parameter init (same shapes as the PyTorch module __init__)
# ---------------------------------------------------------------------------
def init_params(key):
    C = EMBED_DIM
    ks = jax.random.split(key, 8)
    wqkv = jax.random.normal(ks[0], (3 * C, C), jnp.float32) * 0.3  # in_proj_weight
    bqkv = jax.random.normal(ks[1], (3 * C,), jnp.float32) * 0.1
    wo = jax.random.normal(ks[2], (C, C), jnp.float32) * 0.3        # out_proj.weight
    bo = jax.random.normal(ks[3], (C,), jnp.float32) * 0.1
    ln_g = 1.0 + 0.1 * jax.random.normal(ks[4], (C,), jnp.float32)
    ln_b = 0.1 * jax.random.normal(ks[5], (C,), jnp.float32)
    conv_w = jax.random.normal(ks[6], (C, C), jnp.float32) * 0.3    # (Cout,Cin) of 1x1x1 conv
    conv_b = jax.random.normal(ks[7], (C,), jnp.float32) * 0.1

    # BatchNorm3d in eval mode with the module's initial running stats
    # (mean=0, var=1, gamma=1, beta=0).  Trained running stats must be
    # re-folded into the conv weight/bias below.
    bn_gamma = jnp.ones((C,), jnp.float32)
    bn_beta = jnp.zeros((C,), jnp.float32)
    bn_mean = jnp.zeros((C,), jnp.float32)
    bn_var = jnp.ones((C,), jnp.float32)
    bn_scale = bn_gamma / jnp.sqrt(bn_var + BN_EPS)
    bn_shift = bn_beta - bn_mean * bn_scale

    params = (
        wqkv.T,                                   # (C, 3C)   x @ W^T
        bqkv.reshape(1, 3 * C),
        wo.T,                                     # (C, C)
        bo.reshape(1, C),
        ln_g.reshape(1, C),
        ln_b.reshape(1, C),
        conv_w.T * bn_scale.reshape(1, C),        # conv + BN folded, (Cin, Cout)
        (conv_b * bn_scale + bn_shift).reshape(1, C),
    )
    return params


if __name__ == "__main__":
    key = jax.random.PRNGKey(0)
    kx, kp = jax.random.split(key)
    B, C, D, H, W = 2, EMBED_DIM, 8, 8, 8        # divisible by window (4,4,4)
    x = jax.random.normal(kx, (B, C, D, H, W), jnp.float32) * 2.0
    params = init_params(kp)
    out = jax.jit(spiking_transformer_block_3d)(x, params)
    jax.block_until_ready(out)
    assert out.shape == (B, C, D, H, W)
    assert bool(jnp.all((out == 0.0) | (out == 1.0)))    # spikes are binary
    print("KERNEL_OK")
</pallas_src>

<mosaic_0001>
module attributes {stable_mosaic.version = 11 : i64} {
  func.func @_fused_kernel(%arg0: i32, %arg1: memref<8x64x8xf32, #tpu.memory_space<vmem>>, %arg2: memref<8x24xf32, #tpu.memory_space<vmem>>, %arg3: memref<1x24xf32, #tpu.memory_space<vmem>>, %arg4: memref<8x8xf32, #tpu.memory_space<vmem>>, %arg5: memref<1x8xf32, #tpu.memory_space<vmem>>, %arg6: memref<1x8xf32, #tpu.memory_space<vmem>>, %arg7: memref<1x8xf32, #tpu.memory_space<vmem>>, %arg8: memref<8x8xf32, #tpu.memory_space<vmem>>, %arg9: memref<1x8xf32, #tpu.memory_space<vmem>>, %arg10: memref<8x64x8xf32, #tpu.memory_space<vmem>>) attributes {dimension_semantics = [#tpu.dimension_semantics<parallel>], iteration_bounds = array<i64: 2>, scalar_prefetch = 0 : i64, scratch_operands = 0 : i64, tpu.core_type = #tpu.core_type<tc>, window_params = [{transform_indices = @transform_0, window_bounds = array<i64: 8, 64, 8>}, {pipeline_mode = #tpu.pipeline_mode<synchronous>, transform_indices = @transform_1, window_bounds = array<i64: 8, 24>}, {pipeline_mode = #tpu.pipeline_mode<synchronous>, transform_indices = @transform_2, window_bounds = array<i64: 1, 24>}, {pipeline_mode = #tpu.pipeline_mode<synchronous>, transform_indices = @transform_3, window_bounds = array<i64: 8, 8>}, {pipeline_mode = #tpu.pipeline_mode<synchronous>, transform_indices = @transform_4, window_bounds = array<i64: 1, 8>}, {pipeline_mode = #tpu.pipeline_mode<synchronous>, transform_indices = @transform_5, window_bounds = array<i64: 1, 8>}, {pipeline_mode = #tpu.pipeline_mode<synchronous>, transform_indices = @transform_6, window_bounds = array<i64: 1, 8>}, {pipeline_mode = #tpu.pipeline_mode<synchronous>, transform_indices = @transform_7, window_bounds = array<i64: 8, 8>}, {pipeline_mode = #tpu.pipeline_mode<synchronous>, transform_indices = @transform_8, window_bounds = array<i64: 1, 8>}, {transform_indices = @transform_9, window_bounds = array<i64: 8, 64, 8>}]} {
    %c0 = arith.constant 0 : index
    %c0_0 = arith.constant 0 : index
    %c0_1 = arith.constant 0 : index
    %0 = vector.load %arg1[%c0, %c0_0, %c0_1] : memref<8x64x8xf32, #tpu.memory_space<vmem>>, vector<8x64x8xf32>
    %1 = vector.shape_cast %0 : vector<8x64x8xf32> to vector<512x8xf32>
    %c0_2 = arith.constant 0 : index
    %c0_3 = arith.constant 0 : index
    %2 = vector.load %arg2[%c0_2, %c0_3] : memref<8x24xf32, #tpu.memory_space<vmem>>, vector<8x24xf32>
    %cst = arith.constant dense<0.000000e+00> : vector<512x24xf32>
    %3 = tpu.matmul %1, %2, %cst {dimension_numbers = #tpu.dot_dimension_numbers<[1], [0], [0], [1], [0, 0, 1, 1], [], []>} : vector<512x8xf32>, vector<8x24xf32>, vector<512x24xf32> -> vector<512x24xf32>
    %c0_4 = arith.constant 0 : index
    %c0_5 = arith.constant 0 : index
    %4 = vector.load %arg3[%c0_4, %c0_5] : memref<1x24xf32, #tpu.memory_space<vmem>>, vector<1x24xf32>
    %5 = vector.broadcast %4 : vector<1x24xf32> to vector<512x24xf32>
    %6 = arith.addf %3, %5 : vector<512x24xf32>
    %7 = vector.shape_cast %6 : vector<512x24xf32> to vector<8x64x24xf32>
    %8 = vector.extract_strided_slice %7 {offsets = [0, 0, 0], sizes = [8, 64, 8], strides = [1, 1, 1]} : vector<8x64x24xf32> to vector<8x64x8xf32>
    %9 = vector.extract_strided_slice %7 {offsets = [0, 0, 8], sizes = [8, 64, 8], strides = [1, 1, 1]} : vector<8x64x24xf32> to vector<8x64x8xf32>
    %10 = vector.extract_strided_slice %7 {offsets = [0, 0, 16], sizes = [8, 64, 8], strides = [1, 1, 1]} : vector<8x64x24xf32> to vector<8x64x8xf32>
    %c0_6 = arith.constant 0 : index
    %c0_7 = arith.constant 0 : index
    %11 = vector.load %arg4[%c0_6, %c0_7] : memref<8x8xf32, #tpu.memory_space<vmem>>, vector<8x8xf32>
    %12 = vector.extract_strided_slice %8 {offsets = [0, 0, 0], sizes = [8, 64, 4], strides = [1, 1, 1]} : vector<8x64x8xf32> to vector<8x64x4xf32>
    %cst_8 = arith.constant 5.000000e-01 : f32
    %13 = vector.broadcast %cst_8 : f32 to vector<8x64x4xf32>
    %14 = arith.mulf %12, %13 : vector<8x64x4xf32>
    %15 = vector.extract_strided_slice %9 {offsets = [0, 0, 0], sizes = [8, 64, 4], strides = [1, 1, 1]} : vector<8x64x8xf32> to vector<8x64x4xf32>
    %16 = vector.extract_strided_slice %10 {offsets = [0, 0, 0], sizes = [8, 64, 4], strides = [1, 1, 1]} : vector<8x64x8xf32> to vector<8x64x4xf32>
    %cst_9 = arith.constant dense<0.000000e+00> : vector<8x64x64xf32>
    %17 = tpu.matmul %14, %15, %cst_9 {dimension_numbers = #tpu.dot_dimension_numbers<[2], [2], [1], [1], [0, 0, 0, 1, 1, 1], [0], [0]>} : vector<8x64x4xf32>, vector<8x64x4xf32>, vector<8x64x64xf32> -> vector<8x64x64xf32>
    %cst_10 = arith.constant dense<0xFF800000> : vector<8x64xf32>
    %18 = vector.multi_reduction <maximumf>, %17, %cst_10 [2] : vector<8x64x64xf32> to vector<8x64xf32>
    %19 = vector.shape_cast %18 : vector<8x64xf32> to vector<8x64x1xf32>
    %20 = vector.broadcast %19 : vector<8x64x1xf32> to vector<8x64x64xf32>
    %21 = arith.subf %17, %20 : vector<8x64x64xf32>
    %22 = math.exp %21 : vector<8x64x64xf32>
    %cst_11 = arith.constant dense<0.000000e+00> : vector<8x64xf32>
    %23 = vector.multi_reduction <add>, %22, %cst_11 [2] : vector<8x64x64xf32> to vector<8x64xf32>
    %24 = vector.shape_cast %23 : vector<8x64xf32> to vector<8x64x1xf32>
    %25 = tpu.reciprocal %24 {approx = true} : vector<8x64x1xf32> -> vector<8x64x1xf32>
    %26 = vector.broadcast %25 : vector<8x64x1xf32> to vector<8x64x64xf32>
    %27 = arith.mulf %22, %26 : vector<8x64x64xf32>
    %cst_12 = arith.constant dense<0.000000e+00> : vector<8x64x4xf32>
    %28 = tpu.matmul %27, %16, %cst_12 {dimension_numbers = #tpu.dot_dimension_numbers<[2], [1], [1], [2], [0, 0, 0, 1, 1, 2], [0], [0]>} : vector<8x64x64xf32>, vector<8x64x4xf32>, vector<8x64x4xf32> -> vector<8x64x4xf32>
    %29 = vector.shape_cast %28 : vector<8x64x4xf32> to vector<512x4xf32>
    %30 = vector.extract_strided_slice %11 {offsets = [0, 0], sizes = [4, 8], strides = [1, 1]} : vector<8x8xf32> to vector<4x8xf32>
    %cst_13 = arith.constant dense<0.000000e+00> : vector<512x8xf32>
    %31 = tpu.matmul %29, %30, %cst_13 {dimension_numbers = #tpu.dot_dimension_numbers<[1], [0], [0], [1], [0, 0, 1, 1], [], []>} : vector<512x4xf32>, vector<4x8xf32>, vector<512x8xf32> -> vector<512x8xf32>
    %32 = vector.extract_strided_slice %8 {offsets = [0, 0, 4], sizes = [8, 64, 4], strides = [1, 1, 1]} : vector<8x64x8xf32> to vector<8x64x4xf32>
    %cst_14 = arith.constant 5.000000e-01 : f32
    %33 = vector.broadcast %cst_14 : f32 to vector<8x64x4xf32>
    %34 = arith.mulf %32, %33 : vector<8x64x4xf32>
    %35 = vector.extract_strided_slice %9 {offsets = [0, 0, 4], sizes = [8, 64, 4], strides = [1, 1, 1]} : vector<8x64x8xf32> to vector<8x64x4xf32>
    %36 = vector.extract_strided_slice %10 {offsets = [0, 0, 4], sizes = [8, 64, 4], strides = [1, 1, 1]} : vector<8x64x8xf32> to vector<8x64x4xf32>
    %cst_15 = arith.constant dense<0.000000e+00> : vector<8x64x64xf32>
    %37 = tpu.matmul %34, %35, %cst_15 {dimension_numbers = #tpu.dot_dimension_numbers<[2], [2], [1], [1], [0, 0, 0, 1, 1, 1], [0], [0]>} : vector<8x64x4xf32>, vector<8x64x4xf32>, vector<8x64x64xf32> -> vector<8x64x64xf32>
    %cst_16 = arith.constant dense<0xFF800000> : vector<8x64xf32>
    %38 = vector.multi_reduction <maximumf>, %37, %cst_16 [2] : vector<8x64x64xf32> to vector<8x64xf32>
    %39 = vector.shape_cast %38 : vector<8x64xf32> to vector<8x64x1xf32>
    %40 = vector.broadcast %39 : vector<8x64x1xf32> to vector<8x64x64xf32>
    %41 = arith.subf %37, %40 : vector<8x64x64xf32>
    %42 = math.exp %41 : vector<8x64x64xf32>
    %cst_17 = arith.constant dense<0.000000e+00> : vector<8x64xf32>
    %43 = vector.multi_reduction <add>, %42, %cst_17 [2] : vector<8x64x64xf32> to vector<8x64xf32>
    %44 = vector.shape_cast %43 : vector<8x64xf32> to vector<8x64x1xf32>
    %45 = tpu.reciprocal %44 {approx = true} : vector<8x64x1xf32> -> vector<8x64x1xf32>
    %46 = vector.broadcast %45 : vector<8x64x1xf32> to vector<8x64x64xf32>
    %47 = arith.mulf %42, %46 : vector<8x64x64xf32>
    %cst_18 = arith.constant dense<0.000000e+00> : vector<8x64x4xf32>
    %48 = tpu.matmul %47, %36, %cst_18 {dimension_numbers = #tpu.dot_dimension_numbers<[2], [1], [1], [2], [0, 0, 0, 1, 1, 2], [0], [0]>} : vector<8x64x64xf32>, vector<8x64x4xf32>, vector<8x64x4xf32> -> vector<8x64x4xf32>
    %49 = vector.shape_cast %48 : vector<8x64x4xf32> to vector<512x4xf32>
    %50 = vector.extract_strided_slice %11 {offsets = [4, 0], sizes = [4, 8], strides = [1, 1]} : vector<8x8xf32> to vector<4x8xf32>
    %cst_19 = arith.constant dense<0.000000e+00> : vector<512x8xf32>
    %51 = tpu.matmul %49, %50, %cst_19 {dimension_numbers = #tpu.dot_dimension_numbers<[1], [0], [0], [1], [0, 0, 1, 1], [], []>} : vector<512x4xf32>, vector<4x8xf32>, vector<512x8xf32> -> vector<512x8xf32>
    %52 = arith.addf %31, %51 : vector<512x8xf32>
    %c0_20 = arith.constant 0 : index
    %c0_21 = arith.constant 0 : index
    %53 = vector.load %arg5[%c0_20, %c0_21] : memref<1x8xf32, #tpu.memory_space<vmem>>, vector<1x8xf32>
    %54 = vector.broadcast %53 : vector<1x8xf32> to vector<512x8xf32>
    %55 = arith.addf %52, %54 : vector<512x8xf32>
    %56 = arith.addf %55, %1 : vector<512x8xf32>
    %cst_22 = arith.constant dense<0.000000e+00> : vector<512xf32>
    %57 = vector.multi_reduction <add>, %56, %cst_22 [1] : vector<512x8xf32> to vector<512xf32>
    %58 = vector.shape_cast %57 : vector<512xf32> to vector<512x1xf32>
    %cst_23 = arith.constant 8.000000e+00 : f32
    %59 = vector.broadcast %cst_23 : f32 to vector<512x1xf32>
    %60 = arith.divf %58, %59 : vector<512x1xf32>
    %61 = vector.broadcast %60 : vector<512x1xf32> to vector<512x8xf32>
    %62 = arith.subf %56, %61 : vector<512x8xf32>
    %63 = arith.mulf %62, %62 : vector<512x8xf32>
    %cst_24 = arith.constant dense<0.000000e+00> : vector<512xf32>
    %64 = vector.multi_reduction <add>, %63, %cst_24 [1] : vector<512x8xf32> to vector<512xf32>
    %65 = vector.shape_cast %64 : vector<512xf32> to vector<512x1xf32>
    %cst_25 = arith.constant 8.000000e+00 : f32
    %66 = vector.broadcast %cst_25 : f32 to vector<512x1xf32>
    %67 = arith.divf %65, %66 : vector<512x1xf32>
    %68 = vector.broadcast %60 : vector<512x1xf32> to vector<512x8xf32>
    %69 = arith.subf %56, %68 : vector<512x8xf32>
    %cst_26 = arith.constant 9.99999974E-6 : f32
    %70 = vector.broadcast %cst_26 : f32 to vector<512x1xf32>
    %71 = arith.addf %67, %70 : vector<512x1xf32>
    %72 = math.rsqrt %71 : vector<512x1xf32>
    %73 = vector.broadcast %72 : vector<512x1xf32> to vector<512x8xf32>
    %74 = arith.mulf %69, %73 : vector<512x8xf32>
    %c0_27 = arith.constant 0 : index
    %c0_28 = arith.constant 0 : index
    %75 = vector.load %arg6[%c0_27, %c0_28] : memref<1x8xf32, #tpu.memory_space<vmem>>, vector<1x8xf32>
    %76 = vector.broadcast %75 : vector<1x8xf32> to vector<512x8xf32>
    %77 = arith.mulf %74, %76 : vector<512x8xf32>
    %c0_29 = arith.constant 0 : index
    %c0_30 = arith.constant 0 : index
    %78 = vector.load %arg7[%c0_29, %c0_30] : memref<1x8xf32, #tpu.memory_space<vmem>>, vector<1x8xf32>
    %79 = vector.broadcast %78 : vector<1x8xf32> to vector<512x8xf32>
    %80 = arith.addf %77, %79 : vector<512x8xf32>
    %cst_31 = arith.constant 2.000000e+00 : f32
    %81 = vector.broadcast %cst_31 : f32 to vector<512x8xf32>
    %82 = arith.cmpf oge, %80, %81 : vector<512x8xf32>
    %83 = arith.extui %82 : vector<512x8xi1> to vector<512x8xi32>
    %84 = arith.sitofp %83 : vector<512x8xi32> to vector<512x8xf32>
    %c0_32 = arith.constant 0 : index
    %c0_33 = arith.constant 0 : index
    %85 = vector.load %arg8[%c0_32, %c0_33] : memref<8x8xf32, #tpu.memory_space<vmem>>, vector<8x8xf32>
    %cst_34 = arith.constant dense<0.000000e+00> : vector<512x8xf32>
    %86 = tpu.matmul %84, %85, %cst_34 {dimension_numbers = #tpu.dot_dimension_numbers<[1], [0], [0], [1], [0, 0, 1, 1], [], []>} : vector<512x8xf32>, vector<8x8xf32>, vector<512x8xf32> -> vector<512x8xf32>
    %c0_35 = arith.constant 0 : index
    %c0_36 = arith.constant 0 : index
    %87 = vector.load %arg9[%c0_35, %c0_36] : memref<1x8xf32, #tpu.memory_space<vmem>>, vector<1x8xf32>
    %88 = vector.broadcast %87 : vector<1x8xf32> to vector<512x8xf32>
    %89 = arith.addf %86, %88 : vector<512x8xf32>
    %cst_37 = arith.constant 2.000000e+00 : f32
    %90 = vector.broadcast %cst_37 : f32 to vector<512x8xf32>
    %91 = arith.cmpf oge, %89, %90 : vector<512x8xf32>
    %92 = arith.extui %91 : vector<512x8xi1> to vector<512x8xi32>
    %93 = arith.sitofp %92 : vector<512x8xi32> to vector<512x8xf32>
    %94 = vector.shape_cast %93 : vector<512x8xf32> to vector<8x64x8xf32>
    %c0_38 = arith.constant 0 : index
    %c0_39 = arith.constant 0 : index
    %c0_40 = arith.constant 0 : index
    %95 = vector.load %arg10[%c0_38, %c0_39, %c0_40] : memref<8x64x8xf32, #tpu.memory_space<vmem>>, vector<8x64x8xf32>
    tpu.vector_store %arg10[%c0_38, %c0_39, %c0_40], %94 {strides = array<i32>} : memref<8x64x8xf32, #tpu.memory_space<vmem>>, vector<8x64x8xf32>,
    return
  }
  func.func @transform_0(%arg0: i32) -> (i32, i32, i32) {
    %c0_i32 = arith.constant 0 : i32
    %c0_i32_0 = arith.constant 0 : i32
    %c0_i32_1 = arith.constant 0 : i32
    return %arg0, %c0_i32, %c0_i32_0 : i32, i32, i32
  }
  func.func @transform_1(%arg0: i32) -> (i32, i32) {
    %c0_i32 = arith.constant 0 : i32
    %c0_i32_0 = arith.constant 0 : i32
    %c0_i32_1 = arith.constant 0 : i32
    return %c0_i32, %c0_i32_0 : i32, i32
  }
  func.func @transform_2(%arg0: i32) -> (i32, i32) {
    %c0_i32 = arith.constant 0 : i32
    %c0_i32_0 = arith.constant 0 : i32
    %c0_i32_1 = arith.constant 0 : i32
    return %c0_i32, %c0_i32_0 : i32, i32
  }
  func.func @transform_3(%arg0: i32) -> (i32, i32) {
    %c0_i32 = arith.constant 0 : i32
    %c0_i32_0 = arith.constant 0 : i32
    %c0_i32_1 = arith.constant 0 : i32
    return %c0_i32, %c0_i32_0 : i32, i32
  }
  func.func @transform_4(%arg0: i32) -> (i32, i32) {
    %c0_i32 = arith.constant 0 : i32
    %c0_i32_0 = arith.constant 0 : i32
    %c0_i32_1 = arith.constant 0 : i32
    return %c0_i32, %c0_i32_0 : i32, i32
  }
  func.func @transform_5(%arg0: i32) -> (i32, i32) {
    %c0_i32 = arith.constant 0 : i32
    %c0_i32_0 = arith.constant 0 : i32
    %c0_i32_1 = arith.constant 0 : i32
    return %c0_i32, %c0_i32_0 : i32, i32
  }
  func.func @transform_6(%arg0: i32) -> (i32, i32) {
    %c0_i32 = arith.constant 0 : i32
    %c0_i32_0 = arith.constant 0 : i32
    %c0_i32_1 = arith.constant 0 : i32
    return %c0_i32, %c0_i32_0 : i32, i32
  }
  func.func @transform_7(%arg0: i32) -> (i32, i32) {
    %c0_i32 = arith.constant 0 : i32
    %c0_i32_0 = arith.constant 0 : i32
    %c0_i32_1 = arith.constant 0 : i32
    return %c0_i32, %c0_i32_0 : i32, i32
  }
  func.func @transform_8(%arg0: i32) -> (i32, i32) {
    %c0_i32 = arith.constant 0 : i32
    %c0_i32_0 = arith.constant 0 : i32
    %c0_i32_1 = arith.constant 0 : i32
    return %c0_i32, %c0_i32_0 : i32, i32
  }
  func.func @transform_9(%arg0: i32) -> (i32, i32, i32) {
    %c0_i32 = arith.constant 0 : i32
    %c0_i32_0 = arith.constant 0 : i32
    %c0_i32_1 = arith.constant 0 : i32
    return %arg0, %c0_i32, %c0_i32_0 : i32, i32, i32
  }
}

</mosaic_0001>

<llo_original>
// kernel: spiking_transformer_block_3d.1
$region0: #{spiking_transformer_block_3d.1}
  #allocation0 [shape = 'u32[]', space=smem, size = 0x4, offset = 0x4, fixed_abs, tag = 'smem constant byte address 0x4 - core index']
  #allocation1 [shape = 'u32[144,128]{1,0:T(1,128)}', space=vmem, size = 0x12000, scoped, tag = 'internal scratch']
  %s0 = inlined_call_operand.vmem [shape: f32[16,64,8], index: 0, kind: input, shape index: {}]
  %s1 = inlined_call_operand.vmem [shape: f32[8,24], index: 1, kind: input, shape index: {}]
  %s2 = inlined_call_operand.vmem [shape: f32[1,24], index: 2, kind: input, shape index: {}]
  %s3 = inlined_call_operand.vmem [shape: f32[8,8], index: 3, kind: input, shape index: {}]
  %s4 = inlined_call_operand.vmem [shape: f32[1,8], index: 4, kind: input, shape index: {}]
  %s5 = inlined_call_operand.vmem [shape: f32[1,8], index: 5, kind: input, shape index: {}]
  %s6 = inlined_call_operand.vmem [shape: f32[1,8], index: 6, kind: input, shape index: {}]
  %s7 = inlined_call_operand.vmem [shape: f32[8,8], index: 7, kind: input, shape index: {}]
  %s8 = inlined_call_operand.vmem [shape: f32[1,8], index: 8, kind: input, shape index: {}]
  %s9 = inlined_call_operand.vmem [shape: f32[16,64,8], index: 9, kind: output, shape index: {}]
  %s10 = sld [smem:[#allocation0]]
  $region69: #{spiking_transformer_block_3d.1} parent=0
    _
  %s12 = ssub.s32 1, %s10
  %s13 = scalar_select 0, %s12, %s10
  loop: start=0, step=1, limit=4
  $region2: #{spiking_transformer_block_3d.1} parent=0 // loop_pre_header
    _
  $region3: #{spiking_transformer_block_3d.1} parent=0 // loop_header
    %s15 = sphi 0, %s19
    %p16 = scmp.ge.s32.totalorder %s15, 4
    %s25 = sphi 0, %s27
    %s28 = sphi 0, %s25
    %s29 = sphi 0, %s28
    %s45 = sphi 0, %s29
    %s49 = sphi 0, %s49
    %s51 = sphi 0, %s49
    %s52 = sphi 0, %s51
    %s66 = sphi 0, %s52
    %s70 = sphi 0, %s70
    %s72 = sphi 0, %s70
    %s73 = sphi 0, %s72
    %s87 = sphi 0, %s73
    %s91 = sphi 0, %s91
    %s93 = sphi 0, %s91
    %s94 = sphi 0, %s93
    %s108 = sphi 0, %s94
    %s112 = sphi 0, %s112
    %s114 = sphi 0, %s112
    %s115 = sphi 0, %s114
    %s129 = sphi 0, %s115
    %s133 = sphi 0, %s133
    %s135 = sphi 0, %s133
    %s136 = sphi 0, %s135
    %s150 = sphi 0, %s136
    %s154 = sphi 0, %s154
    %s156 = sphi 0, %s154
    %s157 = sphi 0, %s156
    %s171 = sphi 0, %s157
    %s175 = sphi 0, %s175
    %s177 = sphi 0, %s175
    %s178 = sphi 0, %s177
    %s192 = sphi 0, %s178
    %s196 = sphi 0, %s196
    %s198 = sphi 0, %s196
    %s199 = sphi 0, %s198
    %s213 = sphi 0, %s199
    %s219 = sphi 0, %s221
    %s222 = sphi 0, %s219
    %s223 = sphi 0, %s222
    %s239 = sphi 0, %s223
  $region4: #{spiking_transformer_block_3d.1} parent=0 // loop_header_branch
    %18 = sbr.rel (%p16) target = $region8
  $region5: #{spiking_transformer_block_3d.1} parent=0 // loop_body
    %s20 = ssub.s32 %s15, 1
    %s21 = ssub.s32 %s15, 2
    %s22 = sadd.s32 %s15, 1
    %s23 = ssub.s32 %s15, %s22
    %p24 = scmp.eq.s32.totalorder %s23, 0
    %s26 = sadd.s32 %s25, 1
    %s27 = scalar_select %p24, %s25, %s26
    %p30 = pneg %p24
    %p31 = scmp.eq.s32.totalorder %s15, 1
    %p32 = por %p30, %p31
    %p33 = scmp.ne.s32.totalorder %s25, %s28
    %p34 = scmp.eq.s32.totalorder %s15, 0
    %p35 = por %p33, %p34
    %p36 = scmp.ne.s32.totalorder %s25, %s28
    %p37 = scmp.eq.s32.totalorder %s20, 1
    %p38 = por %p36, %p37
    %p39 = scmp.ne.s32.totalorder %s28, %s29
    %p40 = scmp.eq.s32.totalorder %s20, 0
    %p41 = por %p39, %p40
    %p42 = scmp.ne.s32.totalorder %s28, %s29
    %p43 = scmp.eq.s32.totalorder %s21, 1
    %p44 = por %p42, %p43
    %p46 = scmp.ne.s32.totalorder %s29, %s45
    %p47 = scmp.eq.s32.totalorder %s21, 0
    %p48 = por %p46, %p47
    %s50 = sadd.s32 %s49, 1
    %p53 = scmp.eq.s32.totalorder %s15, 1
    %p54 = scmp.ne.s32.totalorder %s49, %s51
    %p55 = scmp.eq.s32.totalorder %s15, 0
    %p56 = por %p54, %p55
    %p57 = scmp.ne.s32.totalorder %s49, %s51
    %p58 = scmp.eq.s32.totalorder %s20, 1
    %p59 = por %p57, %p58
    %p60 = scmp.ne.s32.totalorder %s51, %s52
    %p61 = scmp.eq.s32.totalorder %s20, 0
    %p62 = por %p60, %p61
    %p63 = scmp.ne.s32.totalorder %s51, %s52
    %p64 = scmp.eq.s32.totalorder %s21, 1
    %p65 = por %p63, %p64
    %p67 = scmp.ne.s32.totalorder %s52, %s66
    %p68 = scmp.eq.s32.totalorder %s21, 0
    %p69 = por %p67, %p68
    %s71 = sadd.s32 %s70, 1
    %p74 = scmp.eq.s32.totalorder %s15, 1
    %p75 = scmp.ne.s32.totalorder %s70, %s72
    %p76 = scmp.eq.s32.totalorder %s15, 0
    %p77 = por %p75, %p76
    %p78 = scmp.ne.s32.totalorder %s70, %s72
    %p79 = scmp.eq.s32.totalorder %s20, 1
    %p80 = por %p78, %p79
    %p81 = scmp.ne.s32.totalorder %s72, %s73
    %p82 = scmp.eq.s32.totalorder %s20, 0
    %p83 = por %p81, %p82
    %p84 = scmp.ne.s32.totalorder %s72, %s73
    %p85 = scmp.eq.s32.totalorder %s21, 1
    %p86 = por %p84, %p85
    %p88 = scmp.ne.s32.totalorder %s73, %s87
    %p89 = scmp.eq.s32.totalorder %s21, 0
    %p90 = por %p88, %p89
    %s92 = sadd.s32 %s91, 1
    %p95 = scmp.eq.s32.totalorder %s15, 1
    %p96 = scmp.ne.s32.totalorder %s91, %s93
    %p97 = scmp.eq.s32.totalorder %s15, 0
    %p98 = por %p96, %p97
    %p99 = scmp.ne.s32.totalorder %s91, %s93
    %p100 = scmp.eq.s32.totalorder %s20, 1
    %p101 = por %p99, %p100
    %p102 = scmp.ne.s32.totalorder %s93, %s94
    %p103 = scmp.eq.s32.totalorder %s20, 0
    %p104 = por %p102, %p103
    %p105 = scmp.ne.s32.totalorder %s93, %s94
    %p106 = scmp.eq.s32.totalorder %s21, 1
    %p107 = por %p105, %p106
    %p109 = scmp.ne.s32.totalorder %s94, %s108
    %p110 = scmp.eq.s32.totalorder %s21, 0
    %p111 = por %p109, %p110
    %s113 = sadd.s32 %s112, 1
    %p116 = scmp.eq.s32.totalorder %s15, 1
    %p117 = scmp.ne.s32.totalorder %s112, %s114
    %p118 = scmp.eq.s32.totalorder %s15, 0
    %p119 = por %p117, %p118
    %p120 = scmp.ne.s32.totalorder %s112, %s114
    %p121 = scmp.eq.s32.totalorder %s20, 1
    %p122 = por %p120, %p121
    %p123 = scmp.ne.s32.totalorder %s114, %s115
    %p124 = scmp.eq.s32.totalorder %s20, 0
    %p125 = por %p123, %p124
    %p126 = scmp.ne.s32.totalorder %s114, %s115
    %p127 = scmp.eq.s32.totalorder %s21, 1
    %p128 = por %p126, %p127
    %p130 = scmp.ne.s32.totalorder %s115, %s129
    %p131 = scmp.eq.s32.totalorder %s21, 0
    %p132 = por %p130, %p131
    %s134 = sadd.s32 %s133, 1
    %p137 = scmp.eq.s32.totalorder %s15, 1
    %p138 = scmp.ne.s32.totalorder %s133, %s135
    %p139 = scmp.eq.s32.totalorder %s15, 0
    %p140 = por %p138, %p139
    %p141 = scmp.ne.s32.totalorder %s133, %s135
    %p142 = scmp.eq.s32.totalorder %s20, 1
    %p143 = por %p141, %p142
    %p144 = scmp.ne.s32.totalorder %s135, %s136
    %p145 = scmp.eq.s32.totalorder %s20, 0
    %p146 = por %p144, %p145
    %p147 = scmp.ne.s32.totalorder %s135, %s136
    %p148 = scmp.eq.s32.totalorder %s21, 1
    %p149 = por %p147, %p148
    %p151 = scmp.ne.s32.totalorder %s136, %s150
    %p152 = scmp.eq.s32.totalorder %s21, 0
    %p153 = por %p151, %p152
    %s155 = sadd.s32 %s154, 1
    %p158 = scmp.eq.s32.totalorder %s15, 1
    %p159 = scmp.ne.s32.totalorder %s154, %s156
    %p160 = scmp.eq.s32.totalorder %s15, 0
    %p161 = por %p159, %p160
    %p162 = scmp.ne.s32.totalorder %s154, %s156
    %p163 = scmp.eq.s32.totalorder %s20, 1
    %p164 = por %p162, %p163
    %p165 = scmp.ne.s32.totalorder %s156, %s157
    %p166 = scmp.eq.s32.totalorder %s20, 0
    %p167 = por %p165, %p166
    %p168 = scmp.ne.s32.totalorder %s156, %s157
    %p169 = scmp.eq.s32.totalorder %s21, 1
    %p170 = por %p168, %p169
    %p172 = scmp.ne.s32.totalorder %s157, %s171
    %p173 = scmp.eq.s32.totalorder %s21, 0
    %p174 = por %p172, %p173
    %s176 = sadd.s32 %s175, 1
    %p179 = scmp.eq.s32.totalorder %s15, 1
    %p180 = scmp.ne.s32.totalorder %s175, %s177
    %p181 = scmp.eq.s32.totalorder %s15, 0
    %p182 = por %p180, %p181
    %p183 = scmp.ne.s32.totalorder %s175, %s177
    %p184 = scmp.eq.s32.totalorder %s20, 1
    %p185 = por %p183, %p184
    %p186 = scmp.ne.s32.totalorder %s177, %s178
    %p187 = scmp.eq.s32.totalorder %s20, 0
    %p188 = por %p186, %p187
    %p189 = scmp.ne.s32.totalorder %s177, %s178
    %p190 = scmp.eq.s32.totalorder %s21, 1
    %p191 = por %p189, %p190
    %p193 = scmp.ne.s32.totalorder %s178, %s192
    %p194 = scmp.eq.s32.totalorder %s21, 0
    %p195 = por %p193, %p194
    %s197 = sadd.s32 %s196, 1
    %p200 = scmp.eq.s32.totalorder %s15, 1
    %p201 = scmp.ne.s32.totalorder %s196, %s198
    %p202 = scmp.eq.s32.totalorder %s15, 0
    %p203 = por %p201, %p202
    %p204 = scmp.ne.s32.totalorder %s196, %s198
    %p205 = scmp.eq.s32.totalorder %s20, 1
    %p206 = por %p204, %p205
    %p207 = scmp.ne.s32.totalorder %s198, %s199
    %p208 = scmp.eq.s32.totalorder %s20, 0
    %p209 = por %p207, %p208
    %p210 = scmp.ne.s32.totalorder %s198, %s199
    %p211 = scmp.eq.s32.totalorder %s21, 1
    %p212 = por %p210, %p211
    %p214 = scmp.ne.s32.totalorder %s199, %s213
    %p215 = scmp.eq.s32.totalorder %s21, 0
    %p216 = por %p214, %p215
    %s217 = ssub.s32 %s15, %s22
    %p218 = scmp.eq.s32.totalorder %s217, 0
    %s220 = sadd.s32 %s219, 1
    %s221 = scalar_select %p218, %s219, %s220
    %p224 = pneg %p218
    %p225 = scmp.eq.s32.totalorder %s15, 1
    %p226 = por %p224, %p225
    %p227 = scmp.ne.s32.totalorder %s219, %s222
    %p228 = scmp.eq.s32.totalorder %s15, 0
    %p229 = por %p227, %p228
    %p230 = scmp.ne.s32.totalorder %s219, %s222
    %p231 = scmp.eq.s32.totalorder %s20, 1
    %p232 = por %p230, %p231
    %p233 = scmp.ne.s32.totalorder %s222, %s223
    %p234 = scmp.eq.s32.totalorder %s20, 0
    %p235 = por %p233, %p234
    %p236 = scmp.ne.s32.totalorder %s222, %s223
    %p237 = scmp.eq.s32.totalorder %s21, 1
    %p238 = por %p236, %p237
    %p240 = scmp.ne.s32.totalorder %s223, %s239
    %p241 = scmp.eq.s32.totalorder %s21, 0
    %p242 = por %p240, %p241
    %p243 = scmp.le.s32.totalorder 1, %s15
    %p244 = scmp.lt.s32.totalorder %s15, 3
    %p245 = pnand %p243, %p244
    %p246 = pneg %p245
    // Predicated region
    $region9: #{spiking_transformer_block_3d.1} parent=5 // pred_check
      _
    $region10: #{spiking_transformer_block_3d.1} parent=5 // pred_check_branch
      %248 = sbr.rel (%p245) target = $region12
    $region11: #{spiking_transformer_block_3d.1} parent=5 // pred_region
      %s249 = ssub.s32 %s15, 1
      // Predicated region
      $region13: #{spiking_transformer_block_3d.1} parent=11 // pred_check
        %p250 = pneg %p62
      $region14: #{spiking_transformer_block_3d.1} parent=11 // pred_check_branch
        %252 = sbr.rel (%p250) target = $region16
      $region15: #{spiking_transformer_block_3d.1} parent=11 // pred_region
        _
      $region16: #{spiking_transformer_block_3d.1} parent=11 // pred_fallthru
        _
      // Predicated region
      $region17: #{spiking_transformer_block_3d.1} parent=11 // pred_check
        %p253 = pneg %p83
      $region18: #{spiking_transformer_block_3d.1} parent=11 // pred_check_branch
        %255 = sbr.rel (%p253) target = $region20
      $region19: #{spiking_transformer_block_3d.1} parent=11 // pred_region
        _
      $region20: #{spiking_transformer_block_3d.1} parent=11 // pred_fallthru
        _
      // Predicated region
      $region21: #{spiking_transformer_block_3d.1} parent=11 // pred_check
        %p256 = pneg %p104
      $region22: #{spiking_transformer_block_3d.1} parent=11 // pred_check_branch
        %258 = sbr.rel (%p256) target = $region24
      $region23: #{spiking_transformer_block_3d.1} parent=11 // pred_region
        _
      $region24: #{spiking_transformer_block_3d.1} parent=11 // pred_fallthru
        _
      // Predicated region
      $region25: #{spiking_transformer_block_3d.1} parent=11 // pred_check
        %p259 = pneg %p125
      $region26: #{spiking_transformer_block_3d.1} parent=11 // pred_check_branch
        %261 = sbr.rel (%p259) target = $region28
      $region27: #{spiking_transformer_block_3d.1} parent=11 // pred_region
        _
      $region28: #{spiking_transformer_block_3d.1} parent=11 // pred_fallthru
        _
      // Predicated region
      $region29: #{spiking_transformer_block_3d.1} parent=11 // pred_check
        %p262 = pneg %p146
      $region30: #{spiking_transformer_block_3d.1} parent=11 // pred_check_branch
        %264 = sbr.rel (%p262) target = $region32
      $region31: #{spiking_transformer_block_3d.1} parent=11 // pred_region
        _
      $region32: #{spiking_transformer_block_3d.1} parent=11 // pred_fallthru
        _
      // Predicated region
      $region33: #{spiking_transformer_block_3d.1} parent=11 // pred_check
        %p265 = pneg %p167
      $region34: #{spiking_transformer_block_3d.1} parent=11 // pred_check_branch
        %267 = sbr.rel (%p265) target = $region36
      $region35: #{spiking_transformer_block_3d.1} parent=11 // pred_region
        _
      $region36: #{spiking_transformer_block_3d.1} parent=11 // pred_fallthru
        _
      // Predicated region
      $region37: #{spiking_transformer_block_3d.1} parent=11 // pred_check
        %p268 = pneg %p188
      $region38: #{spiking_transformer_block_3d.1} parent=11 // pred_check_branch
        %270 = sbr.rel (%p268) target = $region40
      $region39: #{spiking_transformer_block_3d.1} parent=11 // pred_region
        _
      $region40: #{spiking_transformer_block_3d.1} parent=11 // pred_fallthru
        _
      // Predicated region
      $region41: #{spiking_transformer_block_3d.1} parent=11 // pred_check
        %p271 = pneg %p209
      $region42: #{spiking_transformer_block_3d.1} parent=11 // pred_check_branch
        %273 = sbr.rel (%p271) target = $region44
      $region43: #{spiking_transformer_block_3d.1} parent=11 // pred_region
        _
      $region44: #{spiking_transformer_block_3d.1} parent=11 // pred_fallthru
        _
    $region12: #{spiking_transformer_block_3d.1} parent=5 // pred_fallthru
      _
    %p274 = scmp.lt.s32.totalorder %s15, 2
    // Predicated region
    $region45: #{spiking_transformer_block_3d.1} parent=5 // pred_check
      %p275 = pneg %p274
    $region46: #{spiking_transformer_block_3d.1} parent=5 // pred_check_branch
      %277 = sbr.rel (%p275) target = $region48
    $region47: #{spiking_transformer_block_3d.1} parent=5 // pred_region
      // Predicated region
      $region49: #{spiking_transformer_block_3d.1} parent=47 // pred_check
        %p278 = pneg %p35
      $region50: #{spiking_transformer_block_3d.1} parent=47 // pred_check_branch
        %280 = sbr.rel (%p278) target = $region52
      $region51: #{spiking_transformer_block_3d.1} parent=47 // pred_region
        %s281 = smul.u32 8, %s15
        %p282 = scmp.lt.s32.totalorder %s281, 15
        %s283 = scalar_select %p282, %s281, 15
        %s284 = smul.addr %s283, 8
        %s285 = smul.addr %s284, 8
        %s286 = scalar_lea.vmem %s0, %s285
        %s287 = smul.u32 8, %s15
      $region52: #{spiking_transformer_block_3d.1} parent=47 // pred_fallthru
        _
    $region48: #{spiking_transformer_block_3d.1} parent=5 // pred_fallthru
      _
    %p288 = scmp.le.s32.totalorder 1, %s15
    %p289 = scmp.lt.s32.totalorder %s15, 3
    %p290 = pnand %p288, %p289
    %p291 = pneg %p290
    // Predicated region
    $region53: #{spiking_transformer_block_3d.1} parent=5 // pred_check
      _
    $region54: #{spiking_transformer_block_3d.1} parent=5 // pred_check_branch
      %293 = sbr.rel (%p290) target = $region56
    $region55: #{spiking_transformer_block_3d.1} parent=5 // pred_region
      %s294 = ssub.s32 %s15, 1
      %s295 = smul.u32 8, %s20
      %p296 = scmp.lt.s32.totalorder %s295, 15
      %s297 = scalar_select %p296, %s295, 15
      %s298 = smul.addr %s297, 8
      %s299 = smul.addr %s298, 8
      %s300 = scalar_lea.vmem %s0, %s299
      %p301 = pneg %p41
      %p302 = pneg %p38
      %p303 = pneg %p62
      %p304 = pneg %p59
      %p305 = pneg %p83
      %p306 = pneg %p80
      %p307 = pneg %p104
      %p308 = pneg %p101
      %p309 = pneg %p125
      %p310 = pneg %p122
      %p311 = pneg %p146
      %p312 = pneg %p143
      %p313 = pneg %p167
      %p314 = pneg %p164
      %p315 = pneg %p188
      %p316 = pneg %p185
      %p317 = pneg %p209
      %p318 = pneg %p206
      %p319 = pneg %p235
      %p320 = pneg %p232
      %s321 = smul.u32 8, %s20
      %p322 = scmp.lt.s32.totalorder %s321, 15
      %s323 = scalar_select %p322, %s321, 15
      %s324 = smul.addr %s323, 8
      %s325 = smul.addr %s324, 8
      %s326 = scalar_lea.vmem %s9, %s325
      %s327 = smul.u32 8, %s20
      %p328 = scmp.lt.s32.totalorder %s327, 15
      %s329 = scalar_select %p328, %s327, 15
      %s330 = smul.addr %s329, 8
      %s331 = smul.addr %s330, 8
      %s332 = scalar_lea.vmem %s0, %s331
      %s333 = smul.u32 8, %s20
      %s334 = smul.u32 8, %s20
      %p335 = scmp.lt.s32.totalorder %s334, 15
      %s336 = scalar_select %p335, %s334, 15
      %s337 = smul.addr %s336, 8
      %s338 = smul.addr %s337, 8
      %s339 = scalar_lea.vmem %s9, %s338
      %s340 = smul.u32 8, %s20
      %v341 = vld [vmem:[%s332] sm:$0xff]
      %v342 = vld [vmem:[%s332 + $0x8] sm:$0xff]
      %v343 = vld [vmem:[%s332 + $0x10] sm:$0xff]
      %v344 = vld [vmem:[%s332 + $0x18] sm:$0xff]
      %v345 = vld [vmem:[%s332 + $0x20] sm:$0xff]
      %v346 = vld [vmem:[%s332 + $0x28] sm:$0xff]
      %v347 = vld [vmem:[%s332 + $0x30] sm:$0xff]
      %v348 = vld [vmem:[%s332 + $0x38] sm:$0xff]
      %v349 = vld [vmem:[%s332 + $0x40] sm:$0xff]
      %v350 = vld [vmem:[%s332 + $0x48] sm:$0xff]
      %v351 = vld [vmem:[%s332 + $0x50] sm:$0xff]
      %v352 = vld [vmem:[%s332 + $0x58] sm:$0xff]
      %v353 = vld [vmem:[%s332 + $0x60] sm:$0xff]
      %v354 = vld [vmem:[%s332 + $0x68] sm:$0xff]
      %v355 = vld [vmem:[%s332 + $0x70] sm:$0xff]
      %v356 = vld [vmem:[%s332 + $0x78] sm:$0xff]
      %v357 = vld [vmem:[%s332 + $0x80] sm:$0xff]
      %v358 = vld [vmem:[%s332 + $0x88] sm:$0xff]
      %v359 = vld [vmem:[%s332 + $0x90] sm:$0xff]
      %v360 = vld [vmem:[%s332 + $0x98] sm:$0xff]
      %v361 = vld [vmem:[%s332 + $0xa0] sm:$0xff]
      %v362 = vld [vmem:[%s332 + $0xa8] sm:$0xff]
      %v363 = vld [vmem:[%s332 + $0xb0] sm:$0xff]
      %v364 = vld [vmem:[%s332 + $0xb8] sm:$0xff]
      %v365 = vld [vmem:[%s332 + $0xc0] sm:$0xff]
      %v366 = vld [vmem:[%s332 + $0xc8] sm:$0xff]
      %v367 = vld [vmem:[%s332 + $0xd0] sm:$0xff]
      %v368 = vld [vmem:[%s332 + $0xd8] sm:$0xff]
      %v369 = vld [vmem:[%s332 + $0xe0] sm:$0xff]
      %v370 = vld [vmem:[%s332 + $0xe8] sm:$0xff]
      %v371 = vld [vmem:[%s332 + $0xf0] sm:$0xff]
      %v372 = vld [vmem:[%s332 + $0xf8] sm:$0xff]
      %v373 = vld [vmem:[%s332 + $0x100] sm:$0xff]
      %v374 = vld [vmem:[%s332 + $0x108] sm:$0xff]
      %v375 = vld [vmem:[%s332 + $0x110] sm:$0xff]
      %v376 = vld [vmem:[%s332 + $0x118] sm:$0xff]
      %v377 = vld [vmem:[%s332 + $0x120] sm:$0xff]
      %v378 = vld [vmem:[%s332 + $0x128] sm:$0xff]
      %v379 = vld [vmem:[%s332 + $0x130] sm:$0xff]
      %v380 = vld [vmem:[%s332 + $0x138] sm:$0xff]
      %v381 = vld [vmem:[%s332 + $0x140] sm:$0xff]
      %v382 = vld [vmem:[%s332 + $0x148] sm:$0xff]
      %v383 = vld [vmem:[%s332 + $0x150] sm:$0xff]
      %v384 = vld [vmem:[%s332 + $0x158] sm:$0xff]
      %v385 = vld [vmem:[%s332 + $0x160] sm:$0xff]
      %v386 = vld [vmem:[%s332 + $0x168] sm:$0xff]
      %v387 = vld [vmem:[%s332 + $0x170] sm:$0xff]
      %v388 = vld [vmem:[%s332 + $0x178] sm:$0xff]
      %v389 = vld [vmem:[%s332 + $0x180] sm:$0xff]
      %v390 = vld [vmem:[%s332 + $0x188] sm:$0xff]
      %v391 = vld [vmem:[%s332 + $0x190] sm:$0xff]
      %v392 = vld [vmem:[%s332 + $0x198] sm:$0xff]
      %v393 = vld [vmem:[%s332 + $0x1a0] sm:$0xff]
      %v394 = vld [vmem:[%s332 + $0x1a8] sm:$0xff]
      %v395 = vld [vmem:[%s332 + $0x1b0] sm:$0xff]
      %v396 = vld [vmem:[%s332 + $0x1b8] sm:$0xff]
      %v397 = vld [vmem:[%s332 + $0x1c0] sm:$0xff]
      %v398 = vld [vmem:[%s332 + $0x1c8] sm:$0xff]
      %v399 = vld [vmem:[%s332 + $0x1d0] sm:$0xff]
      %v400 = vld [vmem:[%s332 + $0x1d8] sm:$0xff]
      %v401 = vld [vmem:[%s332 + $0x1e0] sm:$0xff]
      %v402 = vld [vmem:[%s332 + $0x1e8] sm:$0xff]
      %v403 = vld [vmem:[%s332 + $0x1f0] sm:$0xff]
      %v404 = vld [vmem:[%s332 + $0x1f8] sm:$0xff]
      %v405 = vld [vmem:[%s1] sm:$0xff]
      %v406 = vld [vmem:[%s2] sm:$0x1]
      %v408 = vlaneseq
      %v409 = vshrl.u32 %v408, 7
      %v410 = vsub.s32 0, %v409
      %v411 = vrot.slane %v406, %v410
      %vm413 = vcmask 64512
      %v415 = vsel %vm413, %v341, 0
      %v418 = vsel %vm413, %v342, 0
      %v421 = vsel %vm413, %v343, 0
      %v424 = vsel %vm413, %v344, 0
      %v427 = vsel %vm413, %v345, 0
      %v430 = vsel %vm413, %v346, 0
      %v433 = vsel %vm413, %v347, 0
      %v436 = vsel %vm413, %v348, 0
      %v439 = vsel %vm413, %v349, 0
      %v442 = vsel %vm413, %v350, 0
      %v445 = vsel %vm413, %v351, 0
      %v448 = vsel %vm413, %v352, 0
      %v451 = vsel %vm413, %v353, 0
      %v454 = vsel %vm413, %v354, 0
      %v457 = vsel %vm413, %v355, 0
      %v460 = vsel %vm413, %v356, 0
      %v463 = vsel %vm413, %v357, 0
      %v466 = vsel %vm413, %v358, 0
      %v469 = vsel %vm413, %v359, 0
      %v472 = vsel %vm413, %v360, 0
      %v475 = vsel %vm413, %v361, 0
      %v478 = vsel %vm413, %v362, 0
      %v481 = vsel %vm413, %v363, 0
      %v484 = vsel %vm413, %v364, 0
      %v487 = vsel %vm413, %v365, 0
      %v490 = vsel %vm413, %v366, 0
      %v493 = vsel %vm413, %v367, 0
      %v496 = vsel %vm413, %v368, 0
      %v499 = vsel %vm413, %v369, 0
      %v502 = vsel %vm413, %v370, 0
      %v505 = vsel %vm413, %v371, 0
      %v508 = vsel %vm413, %v372, 0
      %v511 = vsel %vm413, %v373, 0
      %v514 = vsel %vm413, %v374, 0
      %v517 = vsel %vm413, %v375, 0
      %v520 = vsel %vm413, %v376, 0
      %v523 = vsel %vm413, %v377, 0
      %v526 = vsel %vm413, %v378, 0
      %v529 = vsel %vm413, %v379, 0
      %v532 = vsel %vm413, %v380, 0
      %v535 = vsel %vm413, %v381, 0
      %v538 = vsel %vm413, %v382, 0
      %v541 = vsel %vm413, %v383, 0
      %v544 = vsel %vm413, %v384, 0
      %v547 = vsel %vm413, %v385, 0
      %v550 = vsel %vm413, %v386, 0
      %v553 = vsel %vm413, %v387, 0
      %v556 = vsel %vm413, %v388, 0
      %v559 = vsel %vm413, %v389, 0
      %v562 = vsel %vm413, %v390, 0
      %v565 = vsel %vm413, %v391, 0
      %v568 = vsel %vm413, %v392, 0
      %v571 = vsel %vm413, %v393, 0
      %v574 = vsel %vm413, %v394, 0
      %v577 = vsel %vm413, %v395, 0
      %v580 = vsel %vm413, %v396, 0
      %v583 = vsel %vm413, %v397, 0
      %v586 = vsel %vm413, %v398, 0
      %v589 = vsel %vm413, %v399, 0
      %v592 = vsel %vm413, %v400, 0
      %v595 = vsel %vm413, %v401, 0
      %v598 = vsel %vm413, %v402, 0
      %v601 = vsel %vm413, %v403, 0
      %v604 = vsel %vm413, %v404, 0
      %606 = vmatprep.subr.mxu0 0.0
      %607 = vmatpush1.msra.mxu0 0.0
      %608 = vmatprep.subr.mxu0 0.0
      %609 = vmatpush1.msra.mxu0 0.0
      %610 = vmatprep.subr.mxu0 0.0
      %611 = vmatpush1.msra.mxu0 0.0
      %612 = vmatprep.subr.mxu0 0.0
      %613 = vmatpush1.msra.mxu0 0.0
      %614 = vmatprep.subr.mxu0 0.0
      %615 = vmatpush1.msra.mxu0 0.0
      %616 = vmatprep.subr.mxu0 0.0
      %617 = vmatpush1.msra.mxu0 0.0
      %618 = vmatprep.subr.mxu0 0.0
      %619 = vmatpush1.msra.mxu0 0.0
      %620 = vmatprep.subr.mxu0 0.0
      %621 = vmatpush1.msra.mxu0 0.0
      %622 = vmatprep.subr.mxu0 0.0
      %623 = vmatpush1.msra.mxu0 0.0
      %624 = vmatprep.subr.mxu0 0.0
      %625 = vmatpush1.msra.mxu0 0.0
      %626 = vmatprep.subr.mxu0 0.0
      %627 = vmatpush1.msra.mxu0 0.0
      %628 = vmatprep.subr.mxu0 0.0
      %629 = vmatpush1.msra.mxu0 0.0
      %630 = vmatprep.subr.mxu0 0.0
      %631 = vmatpush1.msra.mxu0 0.0
      %632 = vmatprep.subr.mxu0 0.0
      %633 = vmatpush1.msra.mxu0 0.0
      %634 = vmatprep.subr.mxu0 0.0
      %635 = vmatpush1.msra.mxu0 0.0
      %636 = vmatprep.subr.mxu0 0.0
      %637 = vmatpush1.msra.mxu0 %v405
      %638 = vmatprep.subr.mxu0 0.0
      %639 = vmatpush2.msra.mxu0 0.0
      %640 = vmatprep.subr.mxu0 0.0
      %641 = vmatpush2.msra.mxu0 0.0
      %642 = vmatprep.subr.mxu0 0.0
      %643 = vmatpush2.msra.mxu0 0.0
      %644 = vmatprep.subr.mxu0 0.0
      %645 = vmatpush2.msra.mxu0 0.0
      %646 = vmatprep.subr.mxu0 0.0
      %647 = vmatpush2.msra.mxu0 0.0
      %648 = vmatprep.subr.mxu0 0.0
      %649 = vmatpush2.msra.mxu0 0.0
      %650 = vmatprep.subr.mxu0 0.0
      %651 = vmatpush2.msra.mxu0 0.0
      %652 = vmatprep.subr.mxu0 0.0
      %653 = vmatpush2.msra.mxu0 0.0
      %654 = vmatprep.subr.mxu0 0.0
      %655 = vmatpush2.msra.mxu0 0.0
      %656 = vmatprep.subr.mxu0 0.0
      %657 = vmatpush2.msra.mxu0 0.0
      %658 = vmatprep.subr.mxu0 0.0
      %659 = vmatpush2.msra.mxu0 0.0
      %660 = vmatprep.subr.mxu0 0.0
      %661 = vmatpush2.msra.mxu0 0.0
      %662 = vmatprep.subr.mxu0 0.0
      %663 = vmatpush2.msra.mxu0 0.0
      %664 = vmatprep.subr.mxu0 0.0
      %665 = vmatpush2.msra.mxu0 0.0
      %666 = vmatprep.subr.mxu0 0.0
      %667 = vmatpush2.msra.mxu0 0.0
      %668 = vmatprep.subr.mxu0 0.0
      %669 = vmatpush2.msra.mxu0 0.0
      %670 = vmatprep.mubr.f32.mxu0 0.0
      %671 = vmatmul.mubr.f32.gmra.mxu0 %v415
      %v672 = vpop.f32.mrf.mxu0
      %v673 = vadd.f32 %v411, %v672
      %v674 = vpop.f32.mrf.mxu0
      %675 = vmatprep.mubr.f32.mxu0 0.0
      %676 = vmatmul.mubr.f32.gmra.mxu0 %v418
      %v677 = vpop.f32.mrf.mxu0
      %v678 = vadd.f32 %v411, %v677
      %v679 = vpop.f32.mrf.mxu0
      %680 = vmatprep.mubr.f32.mxu0 0.0
      %681 = vmatmul.mubr.f32.gmra.mxu0 %v421
      %v682 = vpop.f32.mrf.mxu0
      %v683 = vadd.f32 %v411, %v682
      %v684 = vpop.f32.mrf.mxu0
      %685 = vmatprep.mubr.f32.mxu0 0.0
      %686 = vmatmul.mubr.f32.gmra.mxu0 %v424
      %v687 = vpop.f32.mrf.mxu0
      %v688 = vadd.f32 %v411, %v687
      %v689 = vpop.f32.mrf.mxu0
      %690 = vmatprep.mubr.f32.mxu0 0.0
      %691 = vmatmul.mubr.f32.gmra.mxu0 %v427
      %v692 = vpop.f32.mrf.mxu0
      %v693 = vadd.f32 %v411, %v692
      %v694 = vpop.f32.mrf.mxu0
      %695 = vmatprep.mubr.f32.mxu0 0.0
      %696 = vmatmul.mubr.f32.gmra.mxu0 %v430
      %v697 = vpop.f32.mrf.mxu0
      %v698 = vadd.f32 %v411, %v697
      %v699 = vpop.f32.mrf.mxu0
      %700 = vmatprep.mubr.f32.mxu0 0.0
      %701 = vmatmul.mubr.f32.gmra.mxu0 %v433
      %v702 = vpop.f32.mrf.mxu0
      %v703 = vadd.f32 %v411, %v702
      %v704 = vpop.f32.mrf.mxu0
      %705 = vmatprep.mubr.f32.mxu0 0.0
      %706 = vmatmul.mubr.f32.gmra.mxu0 %v436
      %v707 = vpop.f32.mrf.mxu0
      %v708 = vadd.f32 %v411, %v707
      %v709 = vpop.f32.mrf.mxu0
      %710 = vmatprep.mubr.f32.mxu0 0.0
      %711 = vmatmul.mubr.f32.gmra.mxu0 %v439
      %v712 = vpop.f32.mrf.mxu0
      %v713 = vadd.f32 %v411, %v712
      %v714 = vpop.f32.mrf.mxu0
      %715 = vmatprep.mubr.f32.mxu0 0.0
      %716 = vmatmul.mubr.f32.gmra.mxu0 %v442
      %v717 = vpop.f32.mrf.mxu0
      %v718 = vadd.f32 %v411, %v717
      %v719 = vpop.f32.mrf.mxu0
      %720 = vmatprep.mubr.f32.mxu0 0.0
      %721 = vmatmul.mubr.f32.gmra.mxu0 %v445
      %v722 = vpop.f32.mrf.mxu0
      %v723 = vadd.f32 %v411, %v722
      %v724 = vpop.f32.mrf.mxu0
      %725 = vmatprep.mubr.f32.mxu0 0.0
      %726 = vmatmul.mubr.f32.gmra.mxu0 %v448
      %v727 = vpop.f32.mrf.mxu0
      %v728 = vadd.f32 %v411, %v727
      %v729 = vpop.f32.mrf.mxu0
      %730 = vmatprep.mubr.f32.mxu0 0.0
      %731 = vmatmul.mubr.f32.gmra.mxu0 %v451
      %v732 = vpop.f32.mrf.mxu0
      %v733 = vadd.f32 %v411, %v732
      %v734 = vpop.f32.mrf.mxu0
      %735 = vmatprep.mubr.f32.mxu0 0.0
      %736 = vmatmul.mubr.f32.gmra.mxu0 %v454
      %v737 = vpop.f32.mrf.mxu0
      %v738 = vadd.f32 %v411, %v737
      %v739 = vpop.f32.mrf.mxu0
      %740 = vmatprep.mubr.f32.mxu0 0.0
      %741 = vmatmul.mubr.f32.gmra.mxu0 %v457
      %v742 = vpop.f32.mrf.mxu0
      %v743 = vadd.f32 %v411, %v742
      %v744 = vpop.f32.mrf.mxu0
      %745 = vmatprep.mubr.f32.mxu0 0.0
      %746 = vmatmul.mubr.f32.gmra.mxu0 %v460
      %v747 = vpop.f32.mrf.mxu0
      %v748 = vadd.f32 %v411, %v747
      %v749 = vpop.f32.mrf.mxu0
      %750 = vmatprep.mubr.f32.mxu0 0.0
      %751 = vmatmul.mubr.f32.gmra.mxu0 %v463
      %v752 = vpop.f32.mrf.mxu0
      %v753 = vadd.f32 %v411, %v752
      %v754 = vpop.f32.mrf.mxu0
      %755 = vmatprep.mubr.f32.mxu0 0.0
      %756 = vmatmul.mubr.f32.gmra.mxu0 %v466
      %v757 = vpop.f32.mrf.mxu0
      %v758 = vadd.f32 %v411, %v757
      %v759 = vpop.f32.mrf.mxu0
      %760 = vmatprep.mubr.f32.mxu0 0.0
      %761 = vmatmul.mubr.f32.gmra.mxu0 %v469
      %v762 = vpop.f32.mrf.mxu0
      %v763 = vadd.f32 %v411, %v762
      %v764 = vpop.f32.mrf.mxu0
      %765 = vmatprep.mubr.f32.mxu0 0.0
      %766 = vmatmul.mubr.f32.gmra.mxu0 %v472
      %v767 = vpop.f32.mrf.mxu0
      %v768 = vadd.f32 %v411, %v767
      %v769 = vpop.f32.mrf.mxu0
      %770 = vmatprep.mubr.f32.mxu0 0.0
      %771 = vmatmul.mubr.f32.gmra.mxu0 %v475
      %v772 = vpop.f32.mrf.mxu0
      %v773 = vadd.f32 %v411, %v772
      %v774 = vpop.f32.mrf.mxu0
      %775 = vmatprep.mubr.f32.mxu0 0.0
      %776 = vmatmul.mubr.f32.gmra.mxu0 %v478
      %v777 = vpop.f32.mrf.mxu0
      %v778 = vadd.f32 %v411, %v777
      %v779 = vpop.f32.mrf.mxu0
      %780 = vmatprep.mubr.f32.mxu0 0.0
      %781 = vmatmul.mubr.f32.gmra.mxu0 %v481
      %v782 = vpop.f32.mrf.mxu0
      %v783 = vadd.f32 %v411, %v782
      %v784 = vpop.f32.mrf.mxu0
      %785 = vmatprep.mubr.f32.mxu0 0.0
      %786 = vmatmul.mubr.f32.gmra.mxu0 %v484
      %v787 = vpop.f32.mrf.mxu0
      %v788 = vadd.f32 %v411, %v787
      %v789 = vpop.f32.mrf.mxu0
      %790 = vmatprep.mubr.f32.mxu0 0.0
      %791 = vmatmul.mubr.f32.gmra.mxu0 %v487
      %v792 = vpop.f32.mrf.mxu0
      %v793 = vadd.f32 %v411, %v792
      %v794 = vpop.f32.mrf.mxu0
      %795 = vmatprep.mubr.f32.mxu0 0.0
      %796 = vmatmul.mubr.f32.gmra.mxu0 %v490
      %v797 = vpop.f32.mrf.mxu0
      %v798 = vadd.f32 %v411, %v797
      %v799 = vpop.f32.mrf.mxu0
      %800 = vmatprep.mubr.f32.mxu0 0.0
      %801 = vmatmul.mubr.f32.gmra.mxu0 %v493
      %v802 = vpop.f32.mrf.mxu0
      %v803 = vadd.f32 %v411, %v802
      %v804 = vpop.f32.mrf.mxu0
      %805 = vmatprep.mubr.f32.mxu0 0.0
      %806 = vmatmul.mubr.f32.gmra.mxu0 %v496
      %v807 = vpop.f32.mrf.mxu0
      %v808 = vadd.f32 %v411, %v807
      %v809 = vpop.f32.mrf.mxu0
      %810 = vmatprep.mubr.f32.mxu0 0.0
      %811 = vmatmul.mubr.f32.gmra.mxu0 %v499
      %v812 = vpop.f32.mrf.mxu0
      %v813 = vadd.f32 %v411, %v812
      %v814 = vpop.f32.mrf.mxu0
      %815 = vmatprep.mubr.f32.mxu0 0.0
      %816 = vmatmul.mubr.f32.gmra.mxu0 %v502
      %v817 = vpop.f32.mrf.mxu0
      %v818 = vadd.f32 %v411, %v817
      %v819 = vpop.f32.mrf.mxu0
      %820 = vmatprep.mubr.f32.mxu0 0.0
      %821 = vmatmul.mubr.f32.gmra.mxu0 %v505
      %v822 = vpop.f32.mrf.mxu0
      %v823 = vadd.f32 %v411, %v822
      %v824 = vpop.f32.mrf.mxu0
      %825 = vmatprep.mubr.f32.mxu0 0.0
      %826 = vmatmul.mubr.f32.gmra.mxu0 %v508
      %v827 = vpop.f32.mrf.mxu0
      %v828 = vadd.f32 %v411, %v827
      %v829 = vpop.f32.mrf.mxu0
      %830 = vmatprep.mubr.f32.mxu0 0.0
      %831 = vmatmul.mubr.f32.gmra.mxu0 %v511
      %v832 = vpop.f32.mrf.mxu0
      %v833 = vadd.f32 %v411, %v832
      %v834 = vpop.f32.mrf.mxu0
      %835 = vmatprep.mubr.f32.mxu0 0.0
      %836 = vmatmul.mubr.f32.gmra.mxu0 %v514
      %v837 = vpop.f32.mrf.mxu0
      %v838 = vadd.f32 %v411, %v837
      %v839 = vpop.f32.mrf.mxu0
      %840 = vmatprep.mubr.f32.mxu0 0.0
      %841 = vmatmul.mubr.f32.gmra.mxu0 %v517
      %v842 = vpop.f32.mrf.mxu0
      %v843 = vadd.f32 %v411, %v842
      %v844 = vpop.f32.mrf.mxu0
      %845 = vmatprep.mubr.f32.mxu0 0.0
      %846 = vmatmul.mubr.f32.gmra.mxu0 %v520
      %v847 = vpop.f32.mrf.mxu0
      %v848 = vadd.f32 %v411, %v847
      %v849 = vpop.f32.mrf.mxu0
      %850 = vmatprep.mubr.f32.mxu0 0.0
      %851 = vmatmul.mubr.f32.gmra.mxu0 %v523
      %v852 = vpop.f32.mrf.mxu0
      %v853 = vadd.f32 %v411, %v852
      %v854 = vpop.f32.mrf.mxu0
      %855 = vmatprep.mubr.f32.mxu0 0.0
      %856 = vmatmul.mubr.f32.gmra.mxu0 %v526
      %v857 = vpop.f32.mrf.mxu0
      %v858 = vadd.f32 %v411, %v857
      %v859 = vpop.f32.mrf.mxu0
      %860 = vmatprep.mubr.f32.mxu0 0.0
      %861 = vmatmul.mubr.f32.gmra.mxu0 %v529
      %v862 = vpop.f32.mrf.mxu0
      %v863 = vadd.f32 %v411, %v862
      %v864 = vpop.f32.mrf.mxu0
      %865 = vmatprep.mubr.f32.mxu0 0.0
      %866 = vmatmul.mubr.f32.gmra.mxu0 %v532
      %v867 = vpop.f32.mrf.mxu0
      %v868 = vadd.f32 %v411, %v867
      %v869 = vpop.f32.mrf.mxu0
      %870 = vmatprep.mubr.f32.mxu0 0.0
      %871 = vmatmul.mubr.f32.gmra.mxu0 %v535
      %v872 = vpop.f32.mrf.mxu0
      %v873 = vadd.f32 %v411, %v872
      %v874 = vpop.f32.mrf.mxu0
      %875 = vmatprep.mubr.f32.mxu0 0.0
      %876 = vmatmul.mubr.f32.gmra.mxu0 %v538
      %v877 = vpop.f32.mrf.mxu0
      %v878 = vadd.f32 %v411, %v877
      %v879 = vpop.f32.mrf.mxu0
      %880 = vmatprep.mubr.f32.mxu0 0.0
      %881 = vmatmul.mubr.f32.gmra.mxu0 %v541
      %v882 = vpop.f32.mrf.mxu0
      %v883 = vadd.f32 %v411, %v882
      %v884 = vpop.f32.mrf.mxu0
      %885 = vmatprep.mubr.f32.mxu0 0.0
      %886 = vmatmul.mubr.f32.gmra.mxu0 %v544
      %v887 = vpop.f32.mrf.mxu0
      %v888 = vadd.f32 %v411, %v887
      %v889 = vpop.f32.mrf.mxu0
      %890 = vmatprep.mubr.f32.mxu0 0.0
      %891 = vmatmul.mubr.f32.gmra.mxu0 %v547
      %v892 = vpop.f32.mrf.mxu0
      %v893 = vadd.f32 %v411, %v892
      %v894 = vpop.f32.mrf.mxu0
      %895 = vmatprep.mubr.f32.mxu0 0.0
      %896 = vmatmul.mubr.f32.gmra.mxu0 %v550
      %v897 = vpop.f32.mrf.mxu0
      %v898 = vadd.f32 %v411, %v897
      %v899 = vpop.f32.mrf.mxu0
      %900 = vmatprep.mubr.f32.mxu0 0.0
      %901 = vmatmul.mubr.f32.gmra.mxu0 %v553
      %v902 = vpop.f32.mrf.mxu0
      %v903 = vadd.f32 %v411, %v902
      %v904 = vpop.f32.mrf.mxu0
      %905 = vmatprep.mubr.f32.mxu0 0.0
      %906 = vmatmul.mubr.f32.gmra.mxu0 %v556
      %v907 = vpop.f32.mrf.mxu0
      %v908 = vadd.f32 %v411, %v907
      %v909 = vpop.f32.mrf.mxu0
      %910 = vmatprep.mubr.f32.mxu0 0.0
      %911 = vmatmul.mubr.f32.gmra.mxu0 %v559
      %v912 = vpop.f32.mrf.mxu0
      %v913 = vadd.f32 %v411, %v912
      %v914 = vpop.f32.mrf.mxu0
      %915 = vmatprep.mubr.f32.mxu0 0.0
      %916 = vmatmul.mubr.f32.gmra.mxu0 %v562
      %v917 = vpop.f32.mrf.mxu0
      %v918 = vadd.f32 %v411, %v917
      %v919 = vpop.f32.mrf.mxu0
      %920 = vmatprep.mubr.f32.mxu0 0.0
      %921 = vmatmul.mubr.f32.gmra.mxu0 %v565
      %v922 = vpop.f32.mrf.mxu0
      %v923 = vadd.f32 %v411, %v922
      %v924 = vpop.f32.mrf.mxu0
      %925 = vmatprep.mubr.f32.mxu0 0.0
      %926 = vmatmul.mubr.f32.gmra.mxu0 %v568
      %v927 = vpop.f32.mrf.mxu0
      %v928 = vadd.f32 %v411, %v927
      %v929 = vpop.f32.mrf.mxu0
      %930 = vmatprep.mubr.f32.mxu0 0.0
      %931 = vmatmul.mubr.f32.gmra.mxu0 %v571
      %v932 = vpop.f32.mrf.mxu0
      %v933 = vadd.f32 %v411, %v932
      %v934 = vpop.f32.mrf.mxu0
      %935 = vmatprep.mubr.f32.mxu0 0.0
      %936 = vmatmul.mubr.f32.gmra.mxu0 %v574
      %v937 = vpop.f32.mrf.mxu0
      %v938 = vadd.f32 %v411, %v937
      %v939 = vpop.f32.mrf.mxu0
      %940 = vmatprep.mubr.f32.mxu0 0.0
      %941 = vmatmul.mubr.f32.gmra.mxu0 %v577
      %v942 = vpop.f32.mrf.mxu0
      %v943 = vadd.f32 %v411, %v942
      %v944 = vpop.f32.mrf.mxu0
      %945 = vmatprep.mubr.f32.mxu0 0.0
      %946 = vmatmul.mubr.f32.gmra.mxu0 %v580
      %v947 = vpop.f32.mrf.mxu0
      %v948 = vadd.f32 %v411, %v947
      %v949 = vpop.f32.mrf.mxu0
      %950 = vmatprep.mubr.f32.mxu0 0.0
      %951 = vmatmul.mubr.f32.gmra.mxu0 %v583
      %v952 = vpop.f32.mrf.mxu0
      %v953 = vadd.f32 %v411, %v952
      %v954 = vpop.f32.mrf.mxu0
      %955 = vmatprep.mubr.f32.mxu0 0.0
      %956 = vmatmul.mubr.f32.gmra.mxu0 %v586
      %v957 = vpop.f32.mrf.mxu0
      %v958 = vadd.f32 %v411, %v957
      %v959 = vpop.f32.mrf.mxu0
      %960 = vmatprep.mubr.f32.mxu0 0.0
      %961 = vmatmul.mubr.f32.gmra.mxu0 %v589
      %v962 = vpop.f32.mrf.mxu0
      %v963 = vadd.f32 %v411, %v962
      %v964 = vpop.f32.mrf.mxu0
      %965 = vmatprep.mubr.f32.mxu0 0.0
      %966 = vmatmul.mubr.f32.gmra.mxu0 %v592
      %v967 = vpop.f32.mrf.mxu0
      %v968 = vadd.f32 %v411, %v967
      %v969 = vpop.f32.mrf.mxu0
      %970 = vmatprep.mubr.f32.mxu0 0.0
      %971 = vmatmul.mubr.f32.gmra.mxu0 %v595
      %v972 = vpop.f32.mrf.mxu0
      %v973 = vadd.f32 %v411, %v972
      %v974 = vpop.f32.mrf.mxu0
      %975 = vmatprep.mubr.f32.mxu0 0.0
      %976 = vmatmul.mubr.f32.gmra.mxu0 %v598
      %v977 = vpop.f32.mrf.mxu0
      %v978 = vadd.f32 %v411, %v977
      %v979 = vpop.f32.mrf.mxu0
      %980 = vmatprep.mubr.f32.mxu0 0.0
      %981 = vmatmul.mubr.f32.gmra.mxu0 %v601
      %v982 = vpop.f32.mrf.mxu0
      %v983 = vadd.f32 %v411, %v982
      %v984 = vpop.f32.mrf.mxu0
      %985 = vmatprep.mubr.f32.mxu0 0.0
      %986 = vmatmul.mubr.f32.gmra.mxu0 %v604
      %v987 = vpop.f32.mrf.mxu0
      %v988 = vadd.f32 %v411, %v987
      %v989 = vpop.f32.mrf.mxu0
      %990 = vdwg.mxu0
      %v991 = vld [vmem:[%s3] sm:$0xff]
      %v992 = vmul.f32 %v673, 0.5
      %v993 = vmul.f32 %v678, 0.5
      %v994 = vmul.f32 %v683, 0.5
      %v995 = vmul.f32 %v688, 0.5
      %v996 = vmul.f32 %v693, 0.5
      %v997 = vmul.f32 %v698, 0.5
      %v998 = vmul.f32 %v703, 0.5
      %v999 = vmul.f32 %v708, 0.5
      %v1000 = vmul.f32 %v713, 0.5
      %v1001 = vmul.f32 %v718, 0.5
      %v1002 = vmul.f32 %v723, 0.5
      %v1003 = vmul.f32 %v728, 0.5
      %v1004 = vmul.f32 %v733, 0.5
      %v1005 = vmul.f32 %v738, 0.5
      %v1006 = vmul.f32 %v743, 0.5
      %v1007 = vmul.f32 %v748, 0.5
      %v1008 = vmul.f32 %v753, 0.5
      %v1009 = vmul.f32 %v758, 0.5
      %v1010 = vmul.f32 %v763, 0.5
      %v1011 = vmul.f32 %v768, 0.5
      %v1012 = vmul.f32 %v773, 0.5
      %v1013 = vmul.f32 %v778, 0.5
      %v1014 = vmul.f32 %v783, 0.5
      %v1015 = vmul.f32 %v788, 0.5
      %v1016 = vmul.f32 %v793, 0.5
      %v1017 = vmul.f32 %v798, 0.5
      %v1018 = vmul.f32 %v803, 0.5
      %v1019 = vmul.f32 %v808, 0.5
      %v1020 = vmul.f32 %v813, 0.5
      %v1021 = vmul.f32 %v818, 0.5
      %v1022 = vmul.f32 %v823, 0.5
      %v1023 = vmul.f32 %v828, 0.5
      %v1024 = vmul.f32 %v833, 0.5
      %v1025 = vmul.f32 %v838, 0.5
      %v1026 = vmul.f32 %v843, 0.5
      %v1027 = vmul.f32 %v848, 0.5
      %v1028 = vmul.f32 %v853, 0.5
      %v1029 = vmul.f32 %v858, 0.5
      %v1030 = vmul.f32 %v863, 0.5
      %v1031 = vmul.f32 %v868, 0.5
      %v1032 = vmul.f32 %v873, 0.5
      %v1033 = vmul.f32 %v878, 0.5
      %v1034 = vmul.f32 %v883, 0.5
      %v1035 = vmul.f32 %v888, 0.5
      %v1036 = vmul.f32 %v893, 0.5
      %v1037 = vmul.f32 %v898, 0.5
      %v1038 = vmul.f32 %v903, 0.5
      %v1039 = vmul.f32 %v908, 0.5
      %v1040 = vmul.f32 %v913, 0.5
      %v1041 = vmul.f32 %v918, 0.5
      %v1042 = vmul.f32 %v923, 0.5
      %v1043 = vmul.f32 %v928, 0.5
      %v1044 = vmul.f32 %v933, 0.5
      %v1045 = vmul.f32 %v938, 0.5
      %v1046 = vmul.f32 %v943, 0.5
      %v1047 = vmul.f32 %v948, 0.5
      %v1048 = vmul.f32 %v953, 0.5
      %v1049 = vmul.f32 %v958, 0.5
      %v1050 = vmul.f32 %v963, 0.5
      %v1051 = vmul.f32 %v968, 0.5
      %v1052 = vmul.f32 %v973, 0.5
      %v1053 = vmul.f32 %v978, 0.5
      %v1054 = vmul.f32 %v983, 0.5
      %v1055 = vmul.f32 %v988, 0.5
      %1064 = vrot.lane.b32.xlu0 %v673, 120
      %v1065 = vpop.permute.xlu0 %1064
      %1066 = vrot.lane.b32.xlu0 %v678, 120
      %v1067 = vpop.permute.xlu0 %1066
      %1068 = vrot.lane.b32.xlu0 %v683, 120
      %v1069 = vpop.permute.xlu0 %1068
      %1070 = vrot.lane.b32.xlu0 %v688, 120
      %v1071 = vpop.permute.xlu0 %1070
      %1072 = vrot.lane.b32.xlu0 %v693, 120
      %v1073 = vpop.permute.xlu0 %1072
      %1074 = vrot.lane.b32.xlu0 %v698, 120
      %v1075 = vpop.permute.xlu0 %1074
      %1076 = vrot.lane.b32.xlu0 %v703, 120
      %v1077 = vpop.permute.xlu0 %1076
      %1078 = vrot.lane.b32.xlu0 %v708, 120
      %v1079 = vpop.permute.xlu0 %1078
      %vm1080 = vcmask 31744
      %v1082 = vsel %vm1080, %v992, 0
      %v1085 = vsel %vm1080, %v993, 0
      %v1088 = vsel %vm1080, %v994, 0
      %v1091 = vsel %vm1080, %v995, 0
      %v1094 = vsel %vm1080, %v996, 0
      %v1097 = vsel %vm1080, %v997, 0
      %v1100 = vsel %vm1080, %v998, 0
      %v1103 = vsel %vm1080, %v999, 0
      %v1105 = vsel %vm1080, %v1065, 0
      %v1107 = vsel %vm1080, %v1067, 0
      %v1109 = vsel %vm1080, %v1069, 0
      %v1111 = vsel %vm1080, %v1071, 0
      %v1113 = vsel %vm1080, %v1073, 0
      %v1115 = vsel %vm1080, %v1075, 0
      %v1117 = vsel %vm1080, %v1077, 0
      %v1119 = vsel %vm1080, %v1079, 0
      %1121 = vmatprep.subr.mxu0 0.0
      %1122 = vmatpush1.xpose.msra.mxu0 0.0
      %1123 = vmatprep.subr.mxu0 0.0
      %1124 = vmatpush1.xpose.msra.mxu0 0.0
      %1125 = vmatprep.subr.mxu0 0.0
      %1126 = vmatpush1.xpose.msra.mxu0 0.0
      %1127 = vmatprep.subr.mxu0 0.0
      %1128 = vmatpush1.xpose.msra.mxu0 0.0
      %1129 = vmatprep.subr.mxu0 0.0
      %1130 = vmatpush1.xpose.msra.mxu0 0.0
      %1131 = vmatprep.subr.mxu0 0.0
      %1132 = vmatpush1.xpose.msra.mxu0 0.0
      %1133 = vmatprep.subr.mxu0 0.0
      %1134 = vmatpush1.xpose.msra.mxu0 0.0
      %1135 = vmatprep.subr.mxu0 0.0
      %1136 = vmatpush1.xpose.msra.mxu0 0.0
      %1137 = vmatprep.subr.mxu0 0.0
      %1138 = vmatpush1.xpose.msra.mxu0 %v1119
      %1139 = vmatprep.subr.mxu0 0.0
      %1140 = vmatpush1.xpose.msra.mxu0 %v1117
      %1141 = vmatprep.subr.mxu0 0.0
      %1142 = vmatpush1.xpose.msra.mxu0 %v1115
      %1143 = vmatprep.subr.mxu0 0.0
      %1144 = vmatpush1.xpose.msra.mxu0 %v1113
      %1145 = vmatprep.subr.mxu0 0.0
      %1146 = vmatpush1.xpose.msra.mxu0 %v1111
      %1147 = vmatprep.subr.mxu0 0.0
      %1148 = vmatpush1.xpose.msra.mxu0 %v1109
      %1149 = vmatprep.subr.mxu0 0.0
      %1150 = vmatpush1.xpose.msra.mxu0 %v1107
      %1151 = vmatprep.subr.mxu0 0.0
      %1152 = vmatpush1.xpose.msra.mxu0 %v1105
      %1153 = vmatprep.subr.mxu0 0.0
      %1154 = vmatpush2.xpose.msra.mxu0 0.0
      %1155 = vmatprep.subr.mxu0 0.0
      %1156 = vmatpush2.xpose.msra.mxu0 0.0
      %1157 = vmatprep.subr.mxu0 0.0
      %1158 = vmatpush2.xpose.msra.mxu0 0.0
      %1159 = vmatprep.subr.mxu0 0.0
      %1160 = vmatpush2.xpose.msra.mxu0 0.0
      %1161 = vmatprep.subr.mxu0 0.0
      %1162 = vmatpush2.xpose.msra.mxu0 0.0
      %1163 = vmatprep.subr.mxu0 0.0
      %1164 = vmatpush2.xpose.msra.mxu0 0.0
      %1165 = vmatprep.subr.mxu0 0.0
      %1166 = vmatpush2.xpose.msra.mxu0 0.0
      %1167 = vmatprep.subr.mxu0 0.0
      %1168 = vmatpush2.xpose.msra.mxu0 0.0
      %1169 = vmatprep.subr.mxu0 0.0
      %1170 = vmatpush2.xpose.msra.mxu0 0.0
      %1171 = vmatprep.subr.mxu0 0.0
      %1172 = vmatpush2.xpose.msra.mxu0 0.0
      %1173 = vmatprep.subr.mxu0 0.0
      %1174 = vmatpush2.xpose.msra.mxu0 0.0
      %1175 = vmatprep.subr.mxu0 0.0
      %1176 = vmatpush2.xpose.msra.mxu0 0.0
      %1177 = vmatprep.subr.mxu0 0.0
      %1178 = vmatpush2.xpose.msra.mxu0 0.0
      %1179 = vmatprep.subr.mxu0 0.0
      %1180 = vmatpush2.xpose.msra.mxu0 0.0
      %1181 = vmatprep.subr.mxu0 0.0
      %1182 = vmatpush2.xpose.msra.mxu0 0.0
      %1183 = vmatprep.subr.mxu0 0.0
      %1184 = vmatpush2.xpose.msra.mxu0 0.0
      %1185 = vmatprep.mubr.f32.mxu0 0.0
      %1186 = vmatmul.mubr.f32.gmra.mxu0 %v1082
      %v1187 = vpop.f32.mrf.mxu0
      %v1188 = vadd.f32 0.0, %v1187
      %v1189 = vpop.f32.mrf.mxu0
      %1190 = vmatprep.mubr.f32.mxu0 0.0
      %1191 = vmatmul.mubr.f32.gmra.mxu0 %v1085
      %v1192 = vpop.f32.mrf.mxu0
      %v1193 = vadd.f32 0.0, %v1192
      %v1194 = vpop.f32.mrf.mxu0
      %1195 = vmatprep.mubr.f32.mxu0 0.0
      %1196 = vmatmul.mubr.f32.gmra.mxu0 %v1088
      %v1197 = vpop.f32.mrf.mxu0
      %v1198 = vadd.f32 0.0, %v1197
      %v1199 = vpop.f32.mrf.mxu0
      %1200 = vmatprep.mubr.f32.mxu0 0.0
      %1201 = vmatmul.mubr.f32.gmra.mxu0 %v1091
      %v1202 = vpop.f32.mrf.mxu0
      %v1203 = vadd.f32 0.0, %v1202
      %v1204 = vpop.f32.mrf.mxu0
      %1205 = vmatprep.mubr.f32.mxu0 0.0
      %1206 = vmatmul.mubr.f32.gmra.mxu0 %v1094
      %v1207 = vpop.f32.mrf.mxu0
      %v1208 = vadd.f32 0.0, %v1207
      %v1209 = vpop.f32.mrf.mxu0
      %1210 = vmatprep.mubr.f32.mxu0 0.0
      %1211 = vmatmul.mubr.f32.gmra.mxu0 %v1097
      %v1212 = vpop.f32.mrf.mxu0
      %v1213 = vadd.f32 0.0, %v1212
      %v1214 = vpop.f32.mrf.mxu0
      %1215 = vmatprep.mubr.f32.mxu0 0.0
      %1216 = vmatmul.mubr.f32.gmra.mxu0 %v1100
      %v1217 = vpop.f32.mrf.mxu0
      %v1218 = vadd.f32 0.0, %v1217
      %v1219 = vpop.f32.mrf.mxu0
      %1220 = vmatprep.mubr.f32.mxu0 0.0
      %1221 = vmatmul.mubr.f32.gmra.mxu0 %v1103
      %v1222 = vpop.f32.mrf.mxu0
      %v1223 = vadd.f32 0.0, %v1222
      %v1224 = vpop.f32.mrf.mxu0
      %1225 = vdwg.mxu0
      %1234 = vrot.lane.b32.xlu0 %v713, 120
      %v1235 = vpop.permute.xlu0 %1234
      %1236 = vrot.lane.b32.xlu0 %v718, 120
      %v1237 = vpop.permute.xlu0 %1236
      %1238 = vrot.lane.b32.xlu0 %v723, 120
      %v1239 = vpop.permute.xlu0 %1238
      %1240 = vrot.lane.b32.xlu0 %v728, 120
      %v1241 = vpop.permute.xlu0 %1240
      %1242 = vrot.lane.b32.xlu0 %v733, 120
      %v1243 = vpop.permute.xlu0 %1242
      %1244 = vrot.lane.b32.xlu0 %v738, 120
      %v1245 = vpop.permute.xlu0 %1244
      %1246 = vrot.lane.b32.xlu0 %v743, 120
      %v1247 = vpop.permute.xlu0 %1246
      %1248 = vrot.lane.b32.xlu0 %v748, 120
      %v1249 = vpop.permute.xlu0 %1248
      %v1251 = vsel %vm1080, %v1000, 0
      %v1254 = vsel %vm1080, %v1001, 0
      %v1257 = vsel %vm1080, %v1002, 0
      %v1260 = vsel %vm1080, %v1003, 0
      %v1263 = vsel %vm1080, %v1004, 0
      %v1266 = vsel %vm1080, %v1005, 0
      %v1269 = vsel %vm1080, %v1006, 0
      %v1272 = vsel %vm1080, %v1007, 0
      %v1274 = vsel %vm1080, %v1235, 0
      %v1276 = vsel %vm1080, %v1237, 0
      %v1278 = vsel %vm1080, %v1239, 0
      %v1280 = vsel %vm1080, %v1241, 0
      %v1282 = vsel %vm1080, %v1243, 0
      %v1284 = vsel %vm1080, %v1245, 0
      %v1286 = vsel %vm1080, %v1247, 0
      %v1288 = vsel %vm1080, %v1249, 0
      %1290 = vmatprep.subr.mxu0 0.0
      %1291 = vmatpush1.xpose.msra.mxu0 0.0
      %1292 = vmatprep.subr.mxu0 0.0
      %1293 = vmatpush1.xpose.msra.mxu0 0.0
      %1294 = vmatprep.subr.mxu0 0.0
      %1295 = vmatpush1.xpose.msra.mxu0 0.0
      %1296 = vmatprep.subr.mxu0 0.0
      %1297 = vmatpush1.xpose.msra.mxu0 0.0
      %1298 = vmatprep.subr.mxu0 0.0
      %1299 = vmatpush1.xpose.msra.mxu0 0.0
      %1300 = vmatprep.subr.mxu0 0.0
      %1301 = vmatpush1.xpose.msra.mxu0 0.0
      %1302 = vmatprep.subr.mxu0 0.0
      %1303 = vmatpush1.xpose.msra.mxu0 0.0
      %1304 = vmatprep.subr.mxu0 0.0
      %1305 = vmatpush1.xpose.msra.mxu0 0.0
      %1306 = vmatprep.subr.mxu0 0.0
      %1307 = vmatpush1.xpose.msra.mxu0 %v1288
      %1308 = vmatprep.subr.mxu0 0.0
      %1309 = vmatpush1.xpose.msra.mxu0 %v1286
      %1310 = vmatprep.subr.mxu0 0.0
      %1311 = vmatpush1.xpose.msra.mxu0 %v1284
      %1312 = vmatprep.subr.mxu0 0.0
      %1313 = vmatpush1.xpose.msra.mxu0 %v1282
      %1314 = vmatprep.subr.mxu0 0.0
      %1315 = vmatpush1.xpose.msra.mxu0 %v1280
      %1316 = vmatprep.subr.mxu0 0.0
      %1317 = vmatpush1.xpose.msra.mxu0 %v1278
      %1318 = vmatprep.subr.mxu0 0.0
      %1319 = vmatpush1.xpose.msra.mxu0 %v1276
      %1320 = vmatprep.subr.mxu0 0.0
      %1321 = vmatpush1.xpose.msra.mxu0 %v1274
      %1322 = vmatprep.subr.mxu0 0.0
      %1323 = vmatpush2.xpose.msra.mxu0 0.0
      %1324 = vmatprep.subr.mxu0 0.0
      %1325 = vmatpush2.xpose.msra.mxu0 0.0
      %1326 = vmatprep.subr.mxu0 0.0
      %1327 = vmatpush2.xpose.msra.mxu0 0.0
      %1328 = vmatprep.subr.mxu0 0.0
      %1329 = vmatpush2.xpose.msra.mxu0 0.0
      %1330 = vmatprep.subr.mxu0 0.0
      %1331 = vmatpush2.xpose.msra.mxu0 0.0
      %1332 = vmatprep.subr.mxu0 0.0
      %1333 = vmatpush2.xpose.msra.mxu0 0.0
      %1334 = vmatprep.subr.mxu0 0.0
      %1335 = vmatpush2.xpose.msra.mxu0 0.0
      %1336 = vmatprep.subr.mxu0 0.0
      %1337 = vmatpush2.xpose.msra.mxu0 0.0
      %1338 = vmatprep.subr.mxu0 0.0
      %1339 = vmatpush2.xpose.msra.mxu0 0.0
      %1340 = vmatprep.subr.mxu0 0.0
      %1341 = vmatpush2.xpose.msra.mxu0 0.0
      %1342 = vmatprep.subr.mxu0 0.0
      %1343 = vmatpush2.xpose.msra.mxu0 0.0
      %1344 = vmatprep.subr.mxu0 0.0
      %1345 = vmatpush2.xpose.msra.mxu0 0.0
      %1346 = vmatprep.subr.mxu0 0.0
      %1347 = vmatpush2.xpose.msra.mxu0 0.0
      %1348 = vmatprep.subr.mxu0 0.0
      %1349 = vmatpush2.xpose.msra.mxu0 0.0
      %1350 = vmatprep.subr.mxu0 0.0
      %1351 = vmatpush2.xpose.msra.mxu0 0.0
      %1352 = vmatprep.subr.mxu0 0.0
      %1353 = vmatpush2.xpose.msra.mxu0 0.0
      %1354 = vmatprep.mubr.f32.mxu0 0.0
      %1355 = vmatmul.mubr.f32.gmra.mxu0 %v1251
      %v1356 = vpop.f32.mrf.mxu0
      %v1357 = vadd.f32 0.0, %v1356
      %v1358 = vpop.f32.mrf.mxu0
      %1359 = vmatprep.mubr.f32.mxu0 0.0
      %1360 = vmatmul.mubr.f32.gmra.mxu0 %v1254
      %v1361 = vpop.f32.mrf.mxu0
      %v1362 = vadd.f32 0.0, %v1361
      %v1363 = vpop.f32.mrf.mxu0
      %1364 = vmatprep.mubr.f32.mxu0 0.0
      %1365 = vmatmul.mubr.f32.gmra.mxu0 %v1257
      %v1366 = vpop.f32.mrf.mxu0
      %v1367 = vadd.f32 0.0, %v1366
      %v1368 = vpop.f32.mrf.mxu0
      %1369 = vmatprep.mubr.f32.mxu0 0.0
      %1370 = vmatmul.mubr.f32.gmra.mxu0 %v1260
      %v1371 = vpop.f32.mrf.mxu0
      %v1372 = vadd.f32 0.0, %v1371
      %v1373 = vpop.f32.mrf.mxu0
      %1374 = vmatprep.mubr.f32.mxu0 0.0
      %1375 = vmatmul.mubr.f32.gmra.mxu0 %v1263
      %v1376 = vpop.f32.mrf.mxu0
      %v1377 = vadd.f32 0.0, %v1376
      %v1378 = vpop.f32.mrf.mxu0
      %1379 = vmatprep.mubr.f32.mxu0 0.0
      %1380 = vmatmul.mubr.f32.gmra.mxu0 %v1266
      %v1381 = vpop.f32.mrf.mxu0
      %v1382 = vadd.f32 0.0, %v1381
      %v1383 = vpop.f32.mrf.mxu0
      %1384 = vmatprep.mubr.f32.mxu0 0.0
      %1385 = vmatmul.mubr.f32.gmra.mxu0 %v1269
      %v1386 = vpop.f32.mrf.mxu0
      %v1387 = vadd.f32 0.0, %v1386
      %v1388 = vpop.f32.mrf.mxu0
      %1389 = vmatprep.mubr.f32.mxu0 0.0
      %1390 = vmatmul.mubr.f32.gmra.mxu0 %v1272
      %v1391 = vpop.f32.mrf.mxu0
      %v1392 = vadd.f32 0.0, %v1391
      %v1393 = vpop.f32.mrf.mxu0
      %1394 = vdwg.mxu0
      %1403 = vrot.lane.b32.xlu0 %v753, 120
      %v1404 = vpop.permute.xlu0 %1403
      %1405 = vrot.lane.b32.xlu0 %v758, 120
      %v1406 = vpop.permute.xlu0 %1405
      %1407 = vrot.lane.b32.xlu0 %v763, 120
      %v1408 = vpop.permute.xlu0 %1407
      %1409 = vrot.lane.b32.xlu0 %v768, 120
      %v1410 = vpop.permute.xlu0 %1409
      %1411 = vrot.lane.b32.xlu0 %v773, 120
      %v1412 = vpop.permute.xlu0 %1411
      %1413 = vrot.lane.b32.xlu0 %v778, 120
      %v1414 = vpop.permute.xlu0 %1413
      %1415 = vrot.lane.b32.xlu0 %v783, 120
      %v1416 = vpop.permute.xlu0 %1415
      %1417 = vrot.lane.b32.xlu0 %v788, 120
      %v1418 = vpop.permute.xlu0 %1417
      %v1420 = vsel %vm1080, %v1008, 0
      %v1423 = vsel %vm1080, %v1009, 0
      %v1426 = vsel %vm1080, %v1010, 0
      %v1429 = vsel %vm1080, %v1011, 0
      %v1432 = vsel %vm1080, %v1012, 0
      %v1435 = vsel %vm1080, %v1013, 0
      %v1438 = vsel %vm1080, %v1014, 0
      %v1441 = vsel %vm1080, %v1015, 0
      %v1443 = vsel %vm1080, %v1404, 0
      %v1445 = vsel %vm1080, %v1406, 0
      %v1447 = vsel %vm1080, %v1408, 0
      %v1449 = vsel %vm1080, %v1410, 0
      %v1451 = vsel %vm1080, %v1412, 0
      %v1453 = vsel %vm1080, %v1414, 0
      %v1455 = vsel %vm1080, %v1416, 0
      %v1457 = vsel %vm1080, %v1418, 0
      %1459 = vmatprep.subr.mxu0 0.0
      %1460 = vmatpush1.xpose.msra.mxu0 0.0
      %1461 = vmatprep.subr.mxu0 0.0
      %1462 = vmatpush1.xpose.msra.mxu0 0.0
      %1463 = vmatprep.subr.mxu0 0.0
      %1464 = vmatpush1.xpose.msra.mxu0 0.0
      %1465 = vmatprep.subr.mxu0 0.0
      %1466 = vmatpush1.xpose.msra.mxu0 0.0
      %1467 = vmatprep.subr.mxu0 0.0
      %1468 = vmatpush1.xpose.msra.mxu0 0.0
      %1469 = vmatprep.subr.mxu0 0.0
      %1470 = vmatpush1.xpose.msra.mxu0 0.0
      %1471 = vmatprep.subr.mxu0 0.0
      %1472 = vmatpush1.xpose.msra.mxu0 0.0
      %1473 = vmatprep.subr.mxu0 0.0
      %1474 = vmatpush1.xpose.msra.mxu0 0.0
      %1475 = vmatprep.subr.mxu0 0.0
      %1476 = vmatpush1.xpose.msra.mxu0 %v1457
      %1477 = vmatprep.subr.mxu0 0.0
      %1478 = vmatpush1.xpose.msra.mxu0 %v1455
      %1479 = vmatprep.subr.mxu0 0.0
      %1480 = vmatpush1.xpose.msra.mxu0 %v1453
      %1481 = vmatprep.subr.mxu0 0.0
      %1482 = vmatpush1.xpose.msra.mxu0 %v1451
      %1483 = vmatprep.subr.mxu0 0.0
      %1484 = vmatpush1.xpose.msra.mxu0 %v1449
      %1485 = vmatprep.subr.mxu0 0.0
      %1486 = vmatpush1.xpose.msra.mxu0 %v1447
      %1487 = vmatprep.subr.mxu0 0.0
      %1488 = vmatpush1.xpose.msra.mxu0 %v1445
      %1489 = vmatprep.subr.mxu0 0.0
      %1490 = vmatpush1.xpose.msra.mxu0 %v1443
      %1491 = vmatprep.subr.mxu0 0.0
      %1492 = vmatpush2.xpose.msra.mxu0 0.0
      %1493 = vmatprep.subr.mxu0 0.0
      %1494 = vmatpush2.xpose.msra.mxu0 0.0
      %1495 = vmatprep.subr.mxu0 0.0
      %1496 = vmatpush2.xpose.msra.mxu0 0.0
      %1497 = vmatprep.subr.mxu0 0.0
      %1498 = vmatpush2.xpose.msra.mxu0 0.0
      %1499 = vmatprep.subr.mxu0 0.0
      %1500 = vmatpush2.xpose.msra.mxu0 0.0
      %1501 = vmatprep.subr.mxu0 0.0
      %1502 = vmatpush2.xpose.msra.mxu0 0.0
      %1503 = vmatprep.subr.mxu0 0.0
      %1504 = vmatpush2.xpose.msra.mxu0 0.0
      %1505 = vmatprep.subr.mxu0 0.0
      %1506 = vmatpush2.xpose.msra.mxu0 0.0
      %1507 = vmatprep.subr.mxu0 0.0
      %1508 = vmatpush2.xpose.msra.mxu0 0.0
      %1509 = vmatprep.subr.mxu0 0.0
      %1510 = vmatpush2.xpose.msra.mxu0 0.0
      %1511 = vmatprep.subr.mxu0 0.0
      %1512 = vmatpush2.xpose.msra.mxu0 0.0
      %1513 = vmatprep.subr.mxu0 0.0
      %1514 = vmatpush2.xpose.msra.mxu0 0.0
      %1515 = vmatprep.subr.mxu0 0.0
      %1516 = vmatpush2.xpose.msra.mxu0 0.0
      %1517 = vmatprep.subr.mxu0 0.0
      %1518 = vmatpush2.xpose.msra.mxu0 0.0
      %1519 = vmatprep.subr.mxu0 0.0
      %1520 = vmatpush2.xpose.msra.mxu0 0.0
      %1521 = vmatprep.subr.mxu0 0.0
      %1522 = vmatpush2.xpose.msra.mxu0 0.0
      %1523 = vmatprep.mubr.f32.mxu0 0.0
      %1524 = vmatmul.mubr.f32.gmra.mxu0 %v1420
      %v1525 = vpop.f32.mrf.mxu0
      %v1526 = vadd.f32 0.0, %v1525
      %v1527 = vpop.f32.mrf.mxu0
      %1528 = vmatprep.mubr.f32.mxu0 0.0
      %1529 = vmatmul.mubr.f32.gmra.mxu0 %v1423
      %v1530 = vpop.f32.mrf.mxu0
      %v1531 = vadd.f32 0.0, %v1530
      %v1532 = vpop.f32.mrf.mxu0
      %1533 = vmatprep.mubr.f32.mxu0 0.0
      %1534 = vmatmul.mubr.f32.gmra.mxu0 %v1426
      %v1535 = vpop.f32.mrf.mxu0
      %v1536 = vadd.f32 0.0, %v1535
      %v1537 = vpop.f32.mrf.mxu0
      %1538 = vmatprep.mubr.f32.mxu0 0.0
      %1539 = vmatmul.mubr.f32.gmra.mxu0 %v1429
      %v1540 = vpop.f32.mrf.mxu0
      %v1541 = vadd.f32 0.0, %v1540
      %v1542 = vpop.f32.mrf.mxu0
      %1543 = vmatprep.mubr.f32.mxu0 0.0
      %1544 = vmatmul.mubr.f32.gmra.mxu0 %v1432
      %v1545 = vpop.f32.mrf.mxu0
      %v1546 = vadd.f32 0.0, %v1545
      %v1547 = vpop.f32.mrf.mxu0
      %1548 = vmatprep.mubr.f32.mxu0 0.0
      %1549 = vmatmul.mubr.f32.gmra.mxu0 %v1435
      %v1550 = vpop.f32.mrf.mxu0
      %v1551 = vadd.f32 0.0, %v1550
      %v1552 = vpop.f32.mrf.mxu0
      %1553 = vmatprep.mubr.f32.mxu0 0.0
      %1554 = vmatmul.mubr.f32.gmra.mxu0 %v1438
      %v1555 = vpop.f32.mrf.mxu0
      %v1556 = vadd.f32 0.0, %v1555
      %v1557 = vpop.f32.mrf.mxu0
      %1558 = vmatprep.mubr.f32.mxu0 0.0
      %1559 = vmatmul.mubr.f32.gmra.mxu0 %v1441
      %v1560 = vpop.f32.mrf.mxu0
      %v1561 = vadd.f32 0.0, %v1560
      %v1562 = vpop.f32.mrf.mxu0
      %1563 = vdwg.mxu0
      %1572 = vrot.lane.b32.xlu0 %v793, 120
      %v1573 = vpop.permute.xlu0 %1572
      %1574 = vrot.lane.b32.xlu0 %v798, 120
      %v1575 = vpop.permute.xlu0 %1574
      %1576 = vrot.lane.b32.xlu0 %v803, 120
      %v1577 = vpop.permute.xlu0 %1576
      %1578 = vrot.lane.b32.xlu0 %v808, 120
      %v1579 = vpop.permute.xlu0 %1578
      %1580 = vrot.lane.b32.xlu0 %v813, 120
      %v1581 = vpop.permute.xlu0 %1580
      %1582 = vrot.lane.b32.xlu0 %v818, 120
      %v1583 = vpop.permute.xlu0 %1582
      %1584 = vrot.lane.b32.xlu0 %v823, 120
      %v1585 = vpop.permute.xlu0 %1584
      %1586 = vrot.lane.b32.xlu0 %v828, 120
      %v1587 = vpop.permute.xlu0 %1586
      %v1589 = vsel %vm1080, %v1016, 0
      %v1592 = vsel %vm1080, %v1017, 0
      %v1595 = vsel %vm1080, %v1018, 0
      %v1598 = vsel %vm1080, %v1019, 0
      %v1601 = vsel %vm1080, %v1020, 0
      %v1604 = vsel %vm1080, %v1021, 0
      %v1607 = vsel %vm1080, %v1022, 0
      %v1610 = vsel %vm1080, %v1023, 0
      %v1612 = vsel %vm1080, %v1573, 0
      %v1614 = vsel %vm1080, %v1575, 0
      %v1616 = vsel %vm1080, %v1577, 0
      %v1618 = vsel %vm1080, %v1579, 0
      %v1620 = vsel %vm1080, %v1581, 0
      %v1622 = vsel %vm1080, %v1583, 0
      %v1624 = vsel %vm1080, %v1585, 0
      %v1626 = vsel %vm1080, %v1587, 0
      %1628 = vmatprep.subr.mxu0 0.0
      %1629 = vmatpush1.xpose.msra.mxu0 0.0
      %1630 = vmatprep.subr.mxu0 0.0
      %1631 = vmatpush1.xpose.msra.mxu0 0.0
      %1632 = vmatprep.subr.mxu0 0.0
      %1633 = vmatpush1.xpose.msra.mxu0 0.0
      %1634 = vmatprep.subr.mxu0 0.0
      %1635 = vmatpush1.xpose.msra.mxu0 0.0
      %1636 = vmatprep.subr.mxu0 0.0
      %1637 = vmatpush1.xpose.msra.mxu0 0.0
      %1638 = vmatprep.subr.mxu0 0.0
      %1639 = vmatpush1.xpose.msra.mxu0 0.0
      %1640 = vmatprep.subr.mxu0 0.0
      %1641 = vmatpush1.xpose.msra.mxu0 0.0
      %1642 = vmatprep.subr.mxu0 0.0
      %1643 = vmatpush1.xpose.msra.mxu0 0.0
      %1644 = vmatprep.subr.mxu0 0.0
      %1645 = vmatpush1.xpose.msra.mxu0 %v1626
      %1646 = vmatprep.subr.mxu0 0.0
      %1647 = vmatpush1.xpose.msra.mxu0 %v1624
      %1648 = vmatprep.subr.mxu0 0.0
      %1649 = vmatpush1.xpose.msra.mxu0 %v1622
      %1650 = vmatprep.subr.mxu0 0.0
      %1651 = vmatpush1.xpose.msra.mxu0 %v1620
      %1652 = vmatprep.subr.mxu0 0.0
      %1653 = vmatpush1.xpose.msra.mxu0 %v1618
      %1654 = vmatprep.subr.mxu0 0.0
      %1655 = vmatpush1.xpose.msra.mxu0 %v1616
      %1656 = vmatprep.subr.mxu0 0.0
      %1657 = vmatpush1.xpose.msra.mxu0 %v1614
      %1658 = vmatprep.subr.mxu0 0.0
      %1659 = vmatpush1.xpose.msra.mxu0 %v1612
      %1660 = vmatprep.subr.mxu0 0.0
      %1661 = vmatpush2.xpose.msra.mxu0 0.0
      %1662 = vmatprep.subr.mxu0 0.0
      %1663 = vmatpush2.xpose.msra.mxu0 0.0
      %1664 = vmatprep.subr.mxu0 0.0
      %1665 = vmatpush2.xpose.msra.mxu0 0.0
      %1666 = vmatprep.subr.mxu0 0.0
      %1667 = vmatpush2.xpose.msra.mxu0 0.0
      %1668 = vmatprep.subr.mxu0 0.0
      %1669 = vmatpush2.xpose.msra.mxu0 0.0
      %1670 = vmatprep.subr.mxu0 0.0
      %1671 = vmatpush2.xpose.msra.mxu0 0.0
      %1672 = vmatprep.subr.mxu0 0.0
      %1673 = vmatpush2.xpose.msra.mxu0 0.0
      %1674 = vmatprep.subr.mxu0 0.0
      %1675 = vmatpush2.xpose.msra.mxu0 0.0
      %1676 = vmatprep.subr.mxu0 0.0
      %1677 = vmatpush2.xpose.msra.mxu0 0.0
      %1678 = vmatprep.subr.mxu0 0.0
      %1679 = vmatpush2.xpose.msra.mxu0 0.0
      %1680 = vmatprep.subr.mxu0 0.0
      %1681 = vmatpush2.xpose.msra.mxu0 0.0
      %1682 = vmatprep.subr.mxu0 0.0
      %1683 = vmatpush2.xpose.msra.mxu0 0.0
      %1684 = vmatprep.subr.mxu0 0.0
      %1685 = vmatpush2.xpose.msra.mxu0 0.0
      %1686 = vmatprep.subr.mxu0 0.0
      %1687 = vmatpush2.xpose.msra.mxu0 0.0
      %1688 = vmatprep.subr.mxu0 0.0
      %1689 = vmatpush2.xpose.msra.mxu0 0.0
      %1690 = vmatprep.subr.mxu0 0.0
      %1691 = vmatpush2.xpose.msra.mxu0 0.0
      %1692 = vmatprep.mubr.f32.mxu0 0.0
      %1693 = vmatmul.mubr.f32.gmra.mxu0 %v1589
      %v1694 = vpop.f32.mrf.mxu0
      %v1695 = vadd.f32 0.0, %v1694
      %v1696 = vpop.f32.mrf.mxu0
      %1697 = vmatprep.mubr.f32.mxu0 0.0
      %1698 = vmatmul.mubr.f32.gmra.mxu0 %v1592
      %v1699 = vpop.f32.mrf.mxu0
      %v1700 = vadd.f32 0.0, %v1699
      %v1701 = vpop.f32.mrf.mxu0
      %1702 = vmatprep.mubr.f32.mxu0 0.0
      %1703 = vmatmul.mubr.f32.gmra.mxu0 %v1595
      %v1704 = vpop.f32.mrf.mxu0
      %v1705 = vadd.f32 0.0, %v1704
      %v1706 = vpop.f32.mrf.mxu0
      %1707 = vmatprep.mubr.f32.mxu0 0.0
      %1708 = vmatmul.mubr.f32.gmra.mxu0 %v1598
      %v1709 = vpop.f32.mrf.mxu0
      %v1710 = vadd.f32 0.0, %v1709
      %v1711 = vpop.f32.mrf.mxu0
      %1712 = vmatprep.mubr.f32.mxu0 0.0
      %1713 = vmatmul.mubr.f32.gmra.mxu0 %v1601
      %v1714 = vpop.f32.mrf.mxu0
      %v1715 = vadd.f32 0.0, %v1714
      %v1716 = vpop.f32.mrf.mxu0
      %1717 = vmatprep.mubr.f32.mxu0 0.0
      %1718 = vmatmul.mubr.f32.gmra.mxu0 %v1604
      %v1719 = vpop.f32.mrf.mxu0
      %v1720 = vadd.f32 0.0, %v1719
      %v1721 = vpop.f32.mrf.mxu0
      %1722 = vmatprep.mubr.f32.mxu0 0.0
      %1723 = vmatmul.mubr.f32.gmra.mxu0 %v1607
      %v1724 = vpop.f32.mrf.mxu0
      %v1725 = vadd.f32 0.0, %v1724
      %v1726 = vpop.f32.mrf.mxu0
      %1727 = vmatprep.mubr.f32.mxu0 0.0
      %1728 = vmatmul.mubr.f32.gmra.mxu0 %v1610
      %v1729 = vpop.f32.mrf.mxu0
      %v1730 = vadd.f32 0.0, %v1729
      %v1731 = vpop.f32.mrf.mxu0
      %1732 = vdwg.mxu0
      %1741 = vrot.lane.b32.xlu0 %v833, 120
      %v1742 = vpop.permute.xlu0 %1741
      %1743 = vrot.lane.b32.xlu0 %v838, 120
      %v1744 = vpop.permute.xlu0 %1743
      %1745 = vrot.lane.b32.xlu0 %v843, 120
      %v1746 = vpop.permute.xlu0 %1745
      %1747 = vrot.lane.b32.xlu0 %v848, 120
      %v1748 = vpop.permute.xlu0 %1747
      %1749 = vrot.lane.b32.xlu0 %v853, 120
      %v1750 = vpop.permute.xlu0 %1749
      %1751 = vrot.lane.b32.xlu0 %v858, 120
      %v1752 = vpop.permute.xlu0 %1751
      %1753 = vrot.lane.b32.xlu0 %v863, 120
      %v1754 = vpop.permute.xlu0 %1753
      %1755 = vrot.lane.b32.xlu0 %v868, 120
      %v1756 = vpop.permute.xlu0 %1755
      %v1758 = vsel %vm1080, %v1024, 0
      %v1761 = vsel %vm1080, %v1025, 0
      %v1764 = vsel %vm1080, %v1026, 0
      %v1767 = vsel %vm1080, %v1027, 0
      %v1770 = vsel %vm1080, %v1028, 0
      %v1773 = vsel %vm1080, %v1029, 0
      %v1776 = vsel %vm1080, %v1030, 0
      %v1779 = vsel %vm1080, %v1031, 0
      %v1781 = vsel %vm1080, %v1742, 0
      %v1783 = vsel %vm1080, %v1744, 0
      %v1785 = vsel %vm1080, %v1746, 0
      %v1787 = vsel %vm1080, %v1748, 0
      %v1789 = vsel %vm1080, %v1750, 0
      %v1791 = vsel %vm1080, %v1752, 0
      %v1793 = vsel %vm1080, %v1754, 0
      %v1795 = vsel %vm1080, %v1756, 0
      %1797 = vmatprep.subr.mxu0 0.0
      %1798 = vmatpush1.xpose.msra.mxu0 0.0
      %1799 = vmatprep.subr.mxu0 0.0
      %1800 = vmatpush1.xpose.msra.mxu0 0.0
      %1801 = vmatprep.subr.mxu0 0.0
      %1802 = vmatpush1.xpose.msra.mxu0 0.0
      %1803 = vmatprep.subr.mxu0 0.0
      %1804 = vmatpush1.xpose.msra.mxu0 0.0
      %1805 = vmatprep.subr.mxu0 0.0
      %1806 = vmatpush1.xpose.msra.mxu0 0.0
      %1807 = vmatprep.subr.mxu0 0.0
      %1808 = vmatpush1.xpose.msra.mxu0 0.0
      %1809 = vmatprep.subr.mxu0 0.0
      %1810 = vmatpush1.xpose.msra.mxu0 0.0
      %1811 = vmatprep.subr.mxu0 0.0
      %1812 = vmatpush1.xpose.msra.mxu0 0.0
      %1813 = vmatprep.subr.mxu0 0.0
      %1814 = vmatpush1.xpose.msra.mxu0 %v1795
      %1815 = vmatprep.subr.mxu0 0.0
      %1816 = vmatpush1.xpose.msra.mxu0 %v1793
      %1817 = vmatprep.subr.mxu0 0.0
      %1818 = vmatpush1.xpose.msra.mxu0 %v1791
      %1819 = vmatprep.subr.mxu0 0.0
      %1820 = vmatpush1.xpose.msra.mxu0 %v1789
      %1821 = vmatprep.subr.mxu0 0.0
      %1822 = vmatpush1.xpose.msra.mxu0 %v1787
      %1823 = vmatprep.subr.mxu0 0.0
      %1824 = vmatpush1.xpose.msra.mxu0 %v1785
      %1825 = vmatprep.subr.mxu0 0.0
      %1826 = vmatpush1.xpose.msra.mxu0 %v1783
      %1827 = vmatprep.subr.mxu0 0.0
      %1828 = vmatpush1.xpose.msra.mxu0 %v1781
      %1829 = vmatprep.subr.mxu0 0.0
      %1830 = vmatpush2.xpose.msra.mxu0 0.0
      %1831 = vmatprep.subr.mxu0 0.0
      %1832 = vmatpush2.xpose.msra.mxu0 0.0
      %1833 = vmatprep.subr.mxu0 0.0
      %1834 = vmatpush2.xpose.msra.mxu0 0.0
      %1835 = vmatprep.subr.mxu0 0.0
      %1836 = vmatpush2.xpose.msra.mxu0 0.0
      %1837 = vmatprep.subr.mxu0 0.0
      %1838 = vmatpush2.xpose.msra.mxu0 0.0
      %1839 = vmatprep.subr.mxu0 0.0
      %1840 = vmatpush2.xpose.msra.mxu0 0.0
      %1841 = vmatprep.subr.mxu0 0.0
      %1842 = vmatpush2.xpose.msra.mxu0 0.0
      %1843 = vmatprep.subr.mxu0 0.0
      %1844 = vmatpush2.xpose.msra.mxu0 0.0
      %1845 = vmatprep.subr.mxu0 0.0
      %1846 = vmatpush2.xpose.msra.mxu0 0.0
      %1847 = vmatprep.subr.mxu0 0.0
      %1848 = vmatpush2.xpose.msra.mxu0 0.0
      %1849 = vmatprep.subr.mxu0 0.0
      %1850 = vmatpush2.xpose.msra.mxu0 0.0
      %1851 = vmatprep.subr.mxu0 0.0
      %1852 = vmatpush2.xpose.msra.mxu0 0.0
      %1853 = vmatprep.subr.mxu0 0.0
      %1854 = vmatpush2.xpose.msra.mxu0 0.0
      %1855 = vmatprep.subr.mxu0 0.0
      %1856 = vmatpush2.xpose.msra.mxu0 0.0
      %1857 = vmatprep.subr.mxu0 0.0
      %1858 = vmatpush2.xpose.msra.mxu0 0.0
      %1859 = vmatprep.subr.mxu0 0.0
      %1860 = vmatpush2.xpose.msra.mxu0 0.0
      %1861 = vmatprep.mubr.f32.mxu0 0.0
      %1862 = vmatmul.mubr.f32.gmra.mxu0 %v1758
      %v1863 = vpop.f32.mrf.mxu0
      %v1864 = vadd.f32 0.0, %v1863
      %v1865 = vpop.f32.mrf.mxu0
      %1866 = vmatprep.mubr.f32.mxu0 0.0
      %1867 = vmatmul.mubr.f32.gmra.mxu0 %v1761
      %v1868 = vpop.f32.mrf.mxu0
      %v1869 = vadd.f32 0.0, %v1868
      %v1870 = vpop.f32.mrf.mxu0
      %1871 = vmatprep.mubr.f32.mxu0 0.0
      %1872 = vmatmul.mubr.f32.gmra.mxu0 %v1764
      %v1873 = vpop.f32.mrf.mxu0
      %v1874 = vadd.f32 0.0, %v1873
      %v1875 = vpop.f32.mrf.mxu0
      %1876 = vmatprep.mubr.f32.mxu0 0.0
      %1877 = vmatmul.mubr.f32.gmra.mxu0 %v1767
      %v1878 = vpop.f32.mrf.mxu0
      %v1879 = vadd.f32 0.0, %v1878
      %v1880 = vpop.f32.mrf.mxu0
      %1881 = vmatprep.mubr.f32.mxu0 0.0
      %1882 = vmatmul.mubr.f32.gmra.mxu0 %v1770
      %v1883 = vpop.f32.mrf.mxu0
      %v1884 = vadd.f32 0.0, %v1883
      %v1885 = vpop.f32.mrf.mxu0
      %1886 = vmatprep.mubr.f32.mxu0 0.0
      %1887 = vmatmul.mubr.f32.gmra.mxu0 %v1773
      %v1888 = vpop.f32.mrf.mxu0
      %v1889 = vadd.f32 0.0, %v1888
      %v1890 = vpop.f32.mrf.mxu0
      %1891 = vmatprep.mubr.f32.mxu0 0.0
      %1892 = vmatmul.mubr.f32.gmra.mxu0 %v1776
      %v1893 = vpop.f32.mrf.mxu0
      %v1894 = vadd.f32 0.0, %v1893
      %v1895 = vpop.f32.mrf.mxu0
      %1896 = vmatprep.mubr.f32.mxu0 0.0
      %1897 = vmatmul.mubr.f32.gmra.mxu0 %v1779
      %v1898 = vpop.f32.mrf.mxu0
      %v1899 = vadd.f32 0.0, %v1898
      %v1900 = vpop.f32.mrf.mxu0
      %1901 = vdwg.mxu0
      %1910 = vrot.lane.b32.xlu0 %v873, 120
      %v1911 = vpop.permute.xlu0 %1910
      %1912 = vrot.lane.b32.xlu0 %v878, 120
      %v1913 = vpop.permute.xlu0 %1912
      %1914 = vrot.lane.b32.xlu0 %v883, 120
      %v1915 = vpop.permute.xlu0 %1914
      %1916 = vrot.lane.b32.xlu0 %v888, 120
      %v1917 = vpop.permute.xlu0 %1916
      %1918 = vrot.lane.b32.xlu0 %v893, 120
      %v1919 = vpop.permute.xlu0 %1918
      %1920 = vrot.lane.b32.xlu0 %v898, 120
      %v1921 = vpop.permute.xlu0 %1920
      %1922 = vrot.lane.b32.xlu0 %v903, 120
      %v1923 = vpop.permute.xlu0 %1922
      %1924 = vrot.lane.b32.xlu0 %v908, 120
      %v1925 = vpop.permute.xlu0 %1924
      %v1927 = vsel %vm1080, %v1032, 0
      %v1930 = vsel %vm1080, %v1033, 0
      %v1933 = vsel %vm1080, %v1034, 0
      %v1936 = vsel %vm1080, %v1035, 0
      %v1939 = vsel %vm1080, %v1036, 0
      %v1942 = vsel %vm1080, %v1037, 0
      %v1945 = vsel %vm1080, %v1038, 0
      %v1948 = vsel %vm1080, %v1039, 0
      %v1950 = vsel %vm1080, %v1911, 0
      %v1952 = vsel %vm1080, %v1913, 0
      %v1954 = vsel %vm1080, %v1915, 0
      %v1956 = vsel %vm1080, %v1917, 0
      %v1958 = vsel %vm1080, %v1919, 0
      %v1960 = vsel %vm1080, %v1921, 0
      %v1962 = vsel %vm1080, %v1923, 0
      %v1964 = vsel %vm1080, %v1925, 0
      %1966 = vmatprep.subr.mxu0 0.0
      %1967 = vmatpush1.xpose.msra.mxu0 0.0
      %1968 = vmatprep.subr.mxu0 0.0
      %1969 = vmatpush1.xpose.msra.mxu0 0.0
      %1970 = vmatprep.subr.mxu0 0.0
      %1971 = vmatpush1.xpose.msra.mxu0 0.0
      %1972 = vmatprep.subr.mxu0 0.0
      %1973 = vmatpush1.xpose.msra.mxu0 0.0
      %1974 = vmatprep.subr.mxu0 0.0
      %1975 = vmatpush1.xpose.msra.mxu0 0.0
      %1976 = vmatprep.subr.mxu0 0.0
      %1977 = vmatpush1.xpose.msra.mxu0 0.0
      %1978 = vmatprep.subr.mxu0 0.0
      %1979 = vmatpush1.xpose.msra.mxu0 0.0
      %1980 = vmatprep.subr.mxu0 0.0
      %1981 = vmatpush1.xpose.msra.mxu0 0.0
      %1982 = vmatprep.subr.mxu0 0.0
      %1983 = vmatpush1.xpose.msra.mxu0 %v1964
      %1984 = vmatprep.subr.mxu0 0.0
      %1985 = vmatpush1.xpose.msra.mxu0 %v1962
      %1986 = vmatprep.subr.mxu0 0.0
      %1987 = vmatpush1.xpose.msra.mxu0 %v1960
      %1988 = vmatprep.subr.mxu0 0.0
      %1989 = vmatpush1.xpose.msra.mxu0 %v1958
      %1990 = vmatprep.subr.mxu0 0.0
      %1991 = vmatpush1.xpose.msra.mxu0 %v1956
      %1992 = vmatprep.subr.mxu0 0.0
      %1993 = vmatpush1.xpose.msra.mxu0 %v1954
      %1994 = vmatprep.subr.mxu0 0.0
      %1995 = vmatpush1.xpose.msra.mxu0 %v1952
      %1996 = vmatprep.subr.mxu0 0.0
      %1997 = vmatpush1.xpose.msra.mxu0 %v1950
      %1998 = vmatprep.subr.mxu0 0.0
      %1999 = vmatpush2.xpose.msra.mxu0 0.0
      %2000 = vmatprep.subr.mxu0 0.0
      %2001 = vmatpush2.xpose.msra.mxu0 0.0
      %2002 = vmatprep.subr.mxu0 0.0
      %2003 = vmatpush2.xpose.msra.mxu0 0.0
      %2004 = vmatprep.subr.mxu0 0.0
      %2005 = vmatpush2.xpose.msra.mxu0 0.0
      %2006 = vmatprep.subr.mxu0 0.0
      %2007 = vmatpush2.xpose.msra.mxu0 0.0
      %2008 = vmatprep.subr.mxu0 0.0
      %2009 = vmatpush2.xpose.msra.mxu0 0.0
      %2010 = vmatprep.subr.mxu0 0.0
      %2011 = vmatpush2.xpose.msra.mxu0 0.0
      %2012 = vmatprep.subr.mxu0 0.0
      %2013 = vmatpush2.xpose.msra.mxu0 0.0
      %2014 = vmatprep.subr.mxu0 0.0
      %2015 = vmatpush2.xpose.msra.mxu0 0.0
      %2016 = vmatprep.subr.mxu0 0.0
      %2017 = vmatpush2.xpose.msra.mxu0 0.0
      %2018 = vmatprep.subr.mxu0 0.0
      %2019 = vmatpush2.xpose.msra.mxu0 0.0
      %2020 = vmatprep.subr.mxu0 0.0
      %2021 = vmatpush2.xpose.msra.mxu0 0.0
      %2022 = vmatprep.subr.mxu0 0.0
      %2023 = vmatpush2.xpose.msra.mxu0 0.0
      %2024 = vmatprep.subr.mxu0 0.0
      %2025 = vmatpush2.xpose.msra.mxu0 0.0
      %2026 = vmatprep.subr.mxu0 0.0
      %2027 = vmatpush2.xpose.msra.mxu0 0.0
      %2028 = vmatprep.subr.mxu0 0.0
      %2029 = vmatpush2.xpose.msra.mxu0 0.0
      %2030 = vmatprep.mubr.f32.mxu0 0.0
      %2031 = vmatmul.mubr.f32.gmra.mxu0 %v1927
      %v2032 = vpop.f32.mrf.mxu0
      %v2033 = vadd.f32 0.0, %v2032
      %v2034 = vpop.f32.mrf.mxu0
      %2035 = vmatprep.mubr.f32.mxu0 0.0
      %2036 = vmatmul.mubr.f32.gmra.mxu0 %v1930
      %v2037 = vpop.f32.mrf.mxu0
      %v2038 = vadd.f32 0.0, %v2037
      %v2039 = vpop.f32.mrf.mxu0
      %2040 = vmatprep.mubr.f32.mxu0 0.0
      %2041 = vmatmul.mubr.f32.gmra.mxu0 %v1933
      %v2042 = vpop.f32.mrf.mxu0
      %v2043 = vadd.f32 0.0, %v2042
      %v2044 = vpop.f32.mrf.mxu0
      %2045 = vmatprep.mubr.f32.mxu0 0.0
      %2046 = vmatmul.mubr.f32.gmra.mxu0 %v1936
      %v2047 = vpop.f32.mrf.mxu0
      %v2048 = vadd.f32 0.0, %v2047
      %v2049 = vpop.f32.mrf.mxu0
      %2050 = vmatprep.mubr.f32.mxu0 0.0
      %2051 = vmatmul.mubr.f32.gmra.mxu0 %v1939
      %v2052 = vpop.f32.mrf.mxu0
      %v2053 = vadd.f32 0.0, %v2052
      %v2054 = vpop.f32.mrf.mxu0
      %2055 = vmatprep.mubr.f32.mxu0 0.0
      %2056 = vmatmul.mubr.f32.gmra.mxu0 %v1942
      %v2057 = vpop.f32.mrf.mxu0
      %v2058 = vadd.f32 0.0, %v2057
      %v2059 = vpop.f32.mrf.mxu0
      %2060 = vmatprep.mubr.f32.mxu0 0.0
      %2061 = vmatmul.mubr.f32.gmra.mxu0 %v1945
      %v2062 = vpop.f32.mrf.mxu0
      %v2063 = vadd.f32 0.0, %v2062
      %v2064 = vpop.f32.mrf.mxu0
      %2065 = vmatprep.mubr.f32.mxu0 0.0
      %2066 = vmatmul.mubr.f32.gmra.mxu0 %v1948
      %v2067 = vpop.f32.mrf.mxu0
      %v2068 = vadd.f32 0.0, %v2067
      %v2069 = vpop.f32.mrf.mxu0
      %2070 = vdwg.mxu0
      %2079 = vrot.lane.b32.xlu0 %v913, 120
      %v2080 = vpop.permute.xlu0 %2079
      %2081 = vrot.lane.b32.xlu0 %v918, 120
      %v2082 = vpop.permute.xlu0 %2081
      %2083 = vrot.lane.b32.xlu0 %v923, 120
      %v2084 = vpop.permute.xlu0 %2083
      %2085 = vrot.lane.b32.xlu0 %v928, 120
      %v2086 = vpop.permute.xlu0 %2085
      %2087 = vrot.lane.b32.xlu0 %v933, 120
      %v2088 = vpop.permute.xlu0 %2087
      %2089 = vrot.lane.b32.xlu0 %v938, 120
      %v2090 = vpop.permute.xlu0 %2089
      %2091 = vrot.lane.b32.xlu0 %v943, 120
      %v2092 = vpop.permute.xlu0 %2091
      %2093 = vrot.lane.b32.xlu0 %v948, 120
      %v2094 = vpop.permute.xlu0 %2093
      %v2096 = vsel %vm1080, %v1040, 0
      %v2099 = vsel %vm1080, %v1041, 0
      %v2102 = vsel %vm1080, %v1042, 0
      %v2105 = vsel %vm1080, %v1043, 0
      %v2108 = vsel %vm1080, %v1044, 0
      %v2111 = vsel %vm1080, %v1045, 0
      %v2114 = vsel %vm1080, %v1046, 0
      %v2117 = vsel %vm1080, %v1047, 0
      %v2119 = vsel %vm1080, %v2080, 0
      %v2121 = vsel %vm1080, %v2082, 0
      %v2123 = vsel %vm1080, %v2084, 0
      %v2125 = vsel %vm1080, %v2086, 0
      %v2127 = vsel %vm1080, %v2088, 0
      %v2129 = vsel %vm1080, %v2090, 0
      %v2131 = vsel %vm1080, %v2092, 0
      %v2133 = vsel %vm1080, %v2094, 0
      %2135 = vmatprep.subr.mxu0 0.0
      %2136 = vmatpush1.xpose.msra.mxu0 0.0
      %2137 = vmatprep.subr.mxu0 0.0
      %2138 = vmatpush1.xpose.msra.mxu0 0.0
      %2139 = vmatprep.subr.mxu0 0.0
      %2140 = vmatpush1.xpose.msra.mxu0 0.0
      %2141 = vmatprep.subr.mxu0 0.0
      %2142 = vmatpush1.xpose.msra.mxu0 0.0
      %2143 = vmatprep.subr.mxu0 0.0
      %2144 = vmatpush1.xpose.msra.mxu0 0.0
      %2145 = vmatprep.subr.mxu0 0.0
      %2146 = vmatpush1.xpose.msra.mxu0 0.0
      %2147 = vmatprep.subr.mxu0 0.0
      %2148 = vmatpush1.xpose.msra.mxu0 0.0
      %2149 = vmatprep.subr.mxu0 0.0
      %2150 = vmatpush1.xpose.msra.mxu0 0.0
      %2151 = vmatprep.subr.mxu0 0.0
      %2152 = vmatpush1.xpose.msra.mxu0 %v2133
      %2153 = vmatprep.subr.mxu0 0.0
      %2154 = vmatpush1.xpose.msra.mxu0 %v2131
      %2155 = vmatprep.subr.mxu0 0.0
      %2156 = vmatpush1.xpose.msra.mxu0 %v2129
      %2157 = vmatprep.subr.mxu0 0.0
      %2158 = vmatpush1.xpose.msra.mxu0 %v2127
      %2159 = vmatprep.subr.mxu0 0.0
      %2160 = vmatpush1.xpose.msra.mxu0 %v2125
      %2161 = vmatprep.subr.mxu0 0.0
      %2162 = vmatpush1.xpose.msra.mxu0 %v2123
      %2163 = vmatprep.subr.mxu0 0.0
      %2164 = vmatpush1.xpose.msra.mxu0 %v2121
      %2165 = vmatprep.subr.mxu0 0.0
      %2166 = vmatpush1.xpose.msra.mxu0 %v2119
      %2167 = vmatprep.subr.mxu0 0.0
      %2168 = vmatpush2.xpose.msra.mxu0 0.0
      %2169 = vmatprep.subr.mxu0 0.0
      %2170 = vmatpush2.xpose.msra.mxu0 0.0
      %2171 = vmatprep.subr.mxu0 0.0
      %2172 = vmatpush2.xpose.msra.mxu0 0.0
      %2173 = vmatprep.subr.mxu0 0.0
      %2174 = vmatpush2.xpose.msra.mxu0 0.0
      %2175 = vmatprep.subr.mxu0 0.0
      %2176 = vmatpush2.xpose.msra.mxu0 0.0
      %2177 = vmatprep.subr.mxu0 0.0
      %2178 = vmatpush2.xpose.msra.mxu0 0.0
      %2179 = vmatprep.subr.mxu0 0.0
      %2180 = vmatpush2.xpose.msra.mxu0 0.0
      %2181 = vmatprep.subr.mxu0 0.0
      %2182 = vmatpush2.xpose.msra.mxu0 0.0
      %2183 = vmatprep.subr.mxu0 0.0
      %2184 = vmatpush2.xpose.msra.mxu0 0.0
      %2185 = vmatprep.subr.mxu0 0.0
      %2186 = vmatpush2.xpose.msra.mxu0 0.0
      %2187 = vmatprep.subr.mxu0 0.0
      %2188 = vmatpush2.xpose.msra.mxu0 0.0
      %2189 = vmatprep.subr.mxu0 0.0
      %2190 = vmatpush2.xpose.msra.mxu0 0.0
      %2191 = vmatprep.subr.mxu0 0.0
      %2192 = vmatpush2.xpose.msra.mxu0 0.0
      %2193 = vmatprep.subr.mxu0 0.0
      %2194 = vmatpush2.xpose.msra.mxu0 0.0
      %2195 = vmatprep.subr.mxu0 0.0
      %2196 = vmatpush2.xpose.msra.mxu0 0.0
      %2197 = vmatprep.subr.mxu0 0.0
      %2198 = vmatpush2.xpose.msra.mxu0 0.0
      %2199 = vmatprep.mubr.f32.mxu0 0.0
      %2200 = vmatmul.mubr.f32.gmra.mxu0 %v2096
      %v2201 = vpop.f32.mrf.mxu0
      %v2202 = vadd.f32 0.0, %v2201
      %v2203 = vpop.f32.mrf.mxu0
      %2204 = vmatprep.mubr.f32.mxu0 0.0
      %2205 = vmatmul.mubr.f32.gmra.mxu0 %v2099
      %v2206 = vpop.f32.mrf.mxu0
      %v2207 = vadd.f32 0.0, %v2206
      %v2208 = vpop.f32.mrf.mxu0
      %2209 = vmatprep.mubr.f32.mxu0 0.0
      %2210 = vmatmul.mubr.f32.gmra.mxu0 %v2102
      %v2211 = vpop.f32.mrf.mxu0
      %v2212 = vadd.f32 0.0, %v2211
      %v2213 = vpop.f32.mrf.mxu0
      %2214 = vmatprep.mubr.f32.mxu0 0.0
      %2215 = vmatmul.mubr.f32.gmra.mxu0 %v2105
      %v2216 = vpop.f32.mrf.mxu0
      %v2217 = vadd.f32 0.0, %v2216
      %v2218 = vpop.f32.mrf.mxu0
      %2219 = vmatprep.mubr.f32.mxu0 0.0
      %2220 = vmatmul.mubr.f32.gmra.mxu0 %v2108
      %v2221 = vpop.f32.mrf.mxu0
      %v2222 = vadd.f32 0.0, %v2221
      %v2223 = vpop.f32.mrf.mxu0
      %2224 = vmatprep.mubr.f32.mxu0 0.0
      %2225 = vmatmul.mubr.f32.gmra.mxu0 %v2111
      %v2226 = vpop.f32.mrf.mxu0
      %v2227 = vadd.f32 0.0, %v2226
      %v2228 = vpop.f32.mrf.mxu0
      %2229 = vmatprep.mubr.f32.mxu0 0.0
      %2230 = vmatmul.mubr.f32.gmra.mxu0 %v2114
      %v2231 = vpop.f32.mrf.mxu0
      %v2232 = vadd.f32 0.0, %v2231
      %v2233 = vpop.f32.mrf.mxu0
      %2234 = vmatprep.mubr.f32.mxu0 0.0
      %2235 = vmatmul.mubr.f32.gmra.mxu0 %v2117
      %v2236 = vpop.f32.mrf.mxu0
      %v2237 = vadd.f32 0.0, %v2236
      %v2238 = vpop.f32.mrf.mxu0
      %2239 = vdwg.mxu0
      %2248 = vrot.lane.b32.xlu0 %v953, 120
      %v2249 = vpop.permute.xlu0 %2248
      %2250 = vrot.lane.b32.xlu0 %v958, 120
      %v2251 = vpop.permute.xlu0 %2250
      %2252 = vrot.lane.b32.xlu0 %v963, 120
      %v2253 = vpop.permute.xlu0 %2252
      %2254 = vrot.lane.b32.xlu0 %v968, 120
      %v2255 = vpop.permute.xlu0 %2254
      %2256 = vrot.lane.b32.xlu0 %v973, 120
      %v2257 = vpop.permute.xlu0 %2256
      %2258 = vrot.lane.b32.xlu0 %v978, 120
      %v2259 = vpop.permute.xlu0 %2258
      %2260 = vrot.lane.b32.xlu0 %v983, 120
      %v2261 = vpop.permute.xlu0 %2260
      %2262 = vrot.lane.b32.xlu0 %v988, 120
      %v2263 = vpop.permute.xlu0 %2262
      %v2265 = vsel %vm1080, %v1048, 0
      %v2268 = vsel %vm1080, %v1049, 0
      %v2271 = vsel %vm1080, %v1050, 0
      %v2274 = vsel %vm1080, %v1051, 0
      %v2277 = vsel %vm1080, %v1052, 0
      %v2280 = vsel %vm1080, %v1053, 0
      %v2283 = vsel %vm1080, %v1054, 0
      %v2286 = vsel %vm1080, %v1055, 0
      %v2288 = vsel %vm1080, %v2249, 0
      %v2290 = vsel %vm1080, %v2251, 0
      %v2292 = vsel %vm1080, %v2253, 0
      %v2294 = vsel %vm1080, %v2255, 0
      %v2296 = vsel %vm1080, %v2257, 0
      %v2298 = vsel %vm1080, %v2259, 0
      %v2300 = vsel %vm1080, %v2261, 0
      %v2302 = vsel %vm1080, %v2263, 0
      %2304 = vmatprep.subr.mxu0 0.0
      %2305 = vmatpush1.xpose.msra.mxu0 0.0
      %2306 = vmatprep.subr.mxu0 0.0
      %2307 = vmatpush1.xpose.msra.mxu0 0.0
      %2308 = vmatprep.subr.mxu0 0.0
      %2309 = vmatpush1.xpose.msra.mxu0 0.0
      %2310 = vmatprep.subr.mxu0 0.0
      %2311 = vmatpush1.xpose.msra.mxu0 0.0
      %2312 = vmatprep.subr.mxu0 0.0
      %2313 = vmatpush1.xpose.msra.mxu0 0.0
      %2314 = vmatprep.subr.mxu0 0.0
      %2315 = vmatpush1.xpose.msra.mxu0 0.0
      %2316 = vmatprep.subr.mxu0 0.0
      %2317 = vmatpush1.xpose.msra.mxu0 0.0
      %2318 = vmatprep.subr.mxu0 0.0
      %2319 = vmatpush1.xpose.msra.mxu0 0.0
      %2320 = vmatprep.subr.mxu0 0.0
      %2321 = vmatpush1.xpose.msra.mxu0 %v2302
      %2322 = vmatprep.subr.mxu0 0.0
      %2323 = vmatpush1.xpose.msra.mxu0 %v2300
      %2324 = vmatprep.subr.mxu0 0.0
      %2325 = vmatpush1.xpose.msra.mxu0 %v2298
      %2326 = vmatprep.subr.mxu0 0.0
      %2327 = vmatpush1.xpose.msra.mxu0 %v2296
      %2328 = vmatprep.subr.mxu0 0.0
      %2329 = vmatpush1.xpose.msra.mxu0 %v2294
      %2330 = vmatprep.subr.mxu0 0.0
      %2331 = vmatpush1.xpose.msra.mxu0 %v2292
      %2332 = vmatprep.subr.mxu0 0.0
      %2333 = vmatpush1.xpose.msra.mxu0 %v2290
      %2334 = vmatprep.subr.mxu0 0.0
      %2335 = vmatpush1.xpose.msra.mxu0 %v2288
      %2336 = vmatprep.subr.mxu0 0.0
      %2337 = vmatpush2.xpose.msra.mxu0 0.0
      %2338 = vmatprep.subr.mxu0 0.0
      %2339 = vmatpush2.xpose.msra.mxu0 0.0
      %2340 = vmatprep.subr.mxu0 0.0
      %2341 = vmatpush2.xpose.msra.mxu0 0.0
      %2342 = vmatprep.subr.mxu0 0.0
      %2343 = vmatpush2.xpose.msra.mxu0 0.0
      %2344 = vmatprep.subr.mxu0 0.0
      %2345 = vmatpush2.xpose.msra.mxu0 0.0
      %2346 = vmatprep.subr.mxu0 0.0
      %2347 = vmatpush2.xpose.msra.mxu0 0.0
      %2348 = vmatprep.subr.mxu0 0.0
      %2349 = vmatpush2.xpose.msra.mxu0 0.0
      %2350 = vmatprep.subr.mxu0 0.0
      %2351 = vmatpush2.xpose.msra.mxu0 0.0
      %2352 = vmatprep.subr.mxu0 0.0
      %2353 = vmatpush2.xpose.msra.mxu0 0.0
      %2354 = vmatprep.subr.mxu0 0.0
      %2355 = vmatpush2.xpose.msra.mxu0 0.0
      %2356 = vmatprep.subr.mxu0 0.0
      %2357 = vmatpush2.xpose.msra.mxu0 0.0
      %2358 = vmatprep.subr.mxu0 0.0
      %2359 = vmatpush2.xpose.msra.mxu0 0.0
      %2360 = vmatprep.subr.mxu0 0.0
      %2361 = vmatpush2.xpose.msra.mxu0 0.0
      %2362 = vmatprep.subr.mxu0 0.0
      %2363 = vmatpush2.xpose.msra.mxu0 0.0
      %2364 = vmatprep.subr.mxu0 0.0
      %2365 = vmatpush2.xpose.msra.mxu0 0.0
      %2366 = vmatprep.subr.mxu0 0.0
      %2367 = vmatpush2.xpose.msra.mxu0 0.0
      %2368 = vmatprep.mubr.f32.mxu0 0.0
      %2369 = vmatmul.mubr.f32.gmra.mxu0 %v2265
      %v2370 = vpop.f32.mrf.mxu0
      %v2371 = vadd.f32 0.0, %v2370
      %v2372 = vpop.f32.mrf.mxu0
      %2373 = vmatprep.mubr.f32.mxu0 0.0
      %2374 = vmatmul.mubr.f32.gmra.mxu0 %v2268
      %v2375 = vpop.f32.mrf.mxu0
      %v2376 = vadd.f32 0.0, %v2375
      %v2377 = vpop.f32.mrf.mxu0
      %2378 = vmatprep.mubr.f32.mxu0 0.0
      %2379 = vmatmul.mubr.f32.gmra.mxu0 %v2271
      %v2380 = vpop.f32.mrf.mxu0
      %v2381 = vadd.f32 0.0, %v2380
      %v2382 = vpop.f32.mrf.mxu0
      %2383 = vmatprep.mubr.f32.mxu0 0.0
      %2384 = vmatmul.mubr.f32.gmra.mxu0 %v2274
      %v2385 = vpop.f32.mrf.mxu0
      %v2386 = vadd.f32 0.0, %v2385
      %v2387 = vpop.f32.mrf.mxu0
      %2388 = vmatprep.mubr.f32.mxu0 0.0
      %2389 = vmatmul.mubr.f32.gmra.mxu0 %v2277
      %v2390 = vpop.f32.mrf.mxu0
      %v2391 = vadd.f32 0.0, %v2390
      %v2392 = vpop.f32.mrf.mxu0
      %2393 = vmatprep.mubr.f32.mxu0 0.0
      %2394 = vmatmul.mubr.f32.gmra.mxu0 %v2280
      %v2395 = vpop.f32.mrf.mxu0
      %v2396 = vadd.f32 0.0, %v2395
      %v2397 = vpop.f32.mrf.mxu0
      %2398 = vmatprep.mubr.f32.mxu0 0.0
      %2399 = vmatmul.mubr.f32.gmra.mxu0 %v2283
      %v2400 = vpop.f32.mrf.mxu0
      %v2401 = vadd.f32 0.0, %v2400
      %v2402 = vpop.f32.mrf.mxu0
      %2403 = vmatprep.mubr.f32.mxu0 0.0
      %2404 = vmatmul.mubr.f32.gmra.mxu0 %v2286
      %v2405 = vpop.f32.mrf.mxu0
      %v2406 = vadd.f32 0.0, %v2405
      %v2407 = vpop.f32.mrf.mxu0
      %2408 = vdwg.mxu0
      %vm2409 = vcmask 523264
      %v2410 = vsel %vm2409, %v1188, -inf
      %2411 = vmax.xlane.f32.xlu0 %v2410
      %v2412 = vpop.xlane.xlu0 %2411
      %v2413 = vsel %vm2409, %v1193, -inf
      %2414 = vmax.xlane.f32.xlu0 %v2413
      %v2415 = vpop.xlane.xlu0 %2414
      %v2416 = vsel %vm2409, %v1198, -inf
      %2417 = vmax.xlane.f32.xlu0 %v2416
      %v2418 = vpop.xlane.xlu0 %2417
      %v2419 = vsel %vm2409, %v1203, -inf
      %2420 = vmax.xlane.f32.xlu0 %v2419
      %v2421 = vpop.xlane.xlu0 %2420
      %v2422 = vsel %vm2409, %v1208, -inf
      %2423 = vmax.xlane.f32.xlu0 %v2422
      %v2424 = vpop.xlane.xlu0 %2423
      %v2425 = vsel %vm2409, %v1213, -inf
      %2426 = vmax.xlane.f32.xlu0 %v2425
      %v2427 = vpop.xlane.xlu0 %2426
      %v2428 = vsel %vm2409, %v1218, -inf
      %2429 = vmax.xlane.f32.xlu0 %v2428
      %v2430 = vpop.xlane.xlu0 %2429
      %v2431 = vsel %vm2409, %v1223, -inf
      %2432 = vmax.xlane.f32.xlu0 %v2431
      %v2433 = vpop.xlane.xlu0 %2432
      %v2434 = vsel %vm2409, %v1357, -inf
      %2435 = vmax.xlane.f32.xlu0 %v2434
      %v2436 = vpop.xlane.xlu0 %2435
      %v2437 = vsel %vm2409, %v1362, -inf
      %2438 = vmax.xlane.f32.xlu0 %v2437
      %v2439 = vpop.xlane.xlu0 %2438
      %v2440 = vsel %vm2409, %v1367, -inf
      %2441 = vmax.xlane.f32.xlu0 %v2440
      %v2442 = vpop.xlane.xlu0 %2441
      %v2443 = vsel %vm2409, %v1372, -inf
      %2444 = vmax.xlane.f32.xlu0 %v2443
      %v2445 = vpop.xlane.xlu0 %2444
      %v2446 = vsel %vm2409, %v1377, -inf
      %2447 = vmax.xlane.f32.xlu0 %v2446
      %v2448 = vpop.xlane.xlu0 %2447
      %v2449 = vsel %vm2409, %v1382, -inf
      %2450 = vmax.xlane.f32.xlu0 %v2449
      %v2451 = vpop.xlane.xlu0 %2450
      %v2452 = vsel %vm2409, %v1387, -inf
      %2453 = vmax.xlane.f32.xlu0 %v2452
      %v2454 = vpop.xlane.xlu0 %2453
      %v2455 = vsel %vm2409, %v1392, -inf
      %2456 = vmax.xlane.f32.xlu0 %v2455
      %v2457 = vpop.xlane.xlu0 %2456
      %v2458 = vsel %vm2409, %v1526, -inf
      %2459 = vmax.xlane.f32.xlu0 %v2458
      %v2460 = vpop.xlane.xlu0 %2459
      %v2461 = vsel %vm2409, %v1531, -inf
      %2462 = vmax.xlane.f32.xlu0 %v2461
      %v2463 = vpop.xlane.xlu0 %2462
      %v2464 = vsel %vm2409, %v1536, -inf
      %2465 = vmax.xlane.f32.xlu0 %v2464
      %v2466 = vpop.xlane.xlu0 %2465
      %v2467 = vsel %vm2409, %v1541, -inf
      %2468 = vmax.xlane.f32.xlu0 %v2467
      %v2469 = vpop.xlane.xlu0 %2468
      %v2470 = vsel %vm2409, %v1546, -inf
      %2471 = vmax.xlane.f32.xlu0 %v2470
      %v2472 = vpop.xlane.xlu0 %2471
      %v2473 = vsel %vm2409, %v1551, -inf
      %2474 = vmax.xlane.f32.xlu0 %v2473
      %v2475 = vpop.xlane.xlu0 %2474
      %v2476 = vsel %vm2409, %v1556, -inf
      %2477 = vmax.xlane.f32.xlu0 %v2476
      %v2478 = vpop.xlane.xlu0 %2477
      %v2479 = vsel %vm2409, %v1561, -inf
      %2480 = vmax.xlane.f32.xlu0 %v2479
      %v2481 = vpop.xlane.xlu0 %2480
      %v2482 = vsel %vm2409, %v1695, -inf
      %2483 = vmax.xlane.f32.xlu0 %v2482
      %v2484 = vpop.xlane.xlu0 %2483
      %v2485 = vsel %vm2409, %v1700, -inf
      %2486 = vmax.xlane.f32.xlu0 %v2485
      %v2487 = vpop.xlane.xlu0 %2486
      %v2488 = vsel %vm2409, %v1705, -inf
      %2489 = vmax.xlane.f32.xlu0 %v2488
      %v2490 = vpop.xlane.xlu0 %2489
      %v2491 = vsel %vm2409, %v1710, -inf
      %2492 = vmax.xlane.f32.xlu0 %v2491
      %v2493 = vpop.xlane.xlu0 %2492
      %v2494 = vsel %vm2409, %v1715, -inf
      %2495 = vmax.xlane.f32.xlu0 %v2494
      %v2496 = vpop.xlane.xlu0 %2495
      %v2497 = vsel %vm2409, %v1720, -inf
      %2498 = vmax.xlane.f32.xlu0 %v2497
      %v2499 = vpop.xlane.xlu0 %2498
      %v2500 = vsel %vm2409, %v1725, -inf
      %2501 = vmax.xlane.f32.xlu0 %v2500
      %v2502 = vpop.xlane.xlu0 %2501
      %v2503 = vsel %vm2409, %v1730, -inf
      %2504 = vmax.xlane.f32.xlu0 %v2503
      %v2505 = vpop.xlane.xlu0 %2504
      %v2506 = vsel %vm2409, %v1864, -inf
      %2507 = vmax.xlane.f32.xlu0 %v2506
      %v2508 = vpop.xlane.xlu0 %2507
      %v2509 = vsel %vm2409, %v1869, -inf
      %2510 = vmax.xlane.f32.xlu0 %v2509
      %v2511 = vpop.xlane.xlu0 %2510
      %v2512 = vsel %vm2409, %v1874, -inf
      %2513 = vmax.xlane.f32.xlu0 %v2512
      %v2514 = vpop.xlane.xlu0 %2513
      %v2515 = vsel %vm2409, %v1879, -inf
      %2516 = vmax.xlane.f32.xlu0 %v2515
      %v2517 = vpop.xlane.xlu0 %2516
      %v2518 = vsel %vm2409, %v1884, -inf
      %2519 = vmax.xlane.f32.xlu0 %v2518
      %v2520 = vpop.xlane.xlu0 %2519
      %v2521 = vsel %vm2409, %v1889, -inf
      %2522 = vmax.xlane.f32.xlu0 %v2521
      %v2523 = vpop.xlane.xlu0 %2522
      %v2524 = vsel %vm2409, %v1894, -inf
      %2525 = vmax.xlane.f32.xlu0 %v2524
      %v2526 = vpop.xlane.xlu0 %2525
      %v2527 = vsel %vm2409, %v1899, -inf
      %2528 = vmax.xlane.f32.xlu0 %v2527
      %v2529 = vpop.xlane.xlu0 %2528
      %v2530 = vsel %vm2409, %v2033, -inf
      %2531 = vmax.xlane.f32.xlu0 %v2530
      %v2532 = vpop.xlane.xlu0 %2531
      %v2533 = vsel %vm2409, %v2038, -inf
      %2534 = vmax.xlane.f32.xlu0 %v2533
      %v2535 = vpop.xlane.xlu0 %2534
      %v2536 = vsel %vm2409, %v2043, -inf
      %2537 = vmax.xlane.f32.xlu0 %v2536
      %v2538 = vpop.xlane.xlu0 %2537
      %v2539 = vsel %vm2409, %v2048, -inf
      %2540 = vmax.xlane.f32.xlu0 %v2539
      %v2541 = vpop.xlane.xlu0 %2540
      %v2542 = vsel %vm2409, %v2053, -inf
      %2543 = vmax.xlane.f32.xlu0 %v2542
      %v2544 = vpop.xlane.xlu0 %2543
      %v2545 = vsel %vm2409, %v2058, -inf
      %2546 = vmax.xlane.f32.xlu0 %v2545
      %v2547 = vpop.xlane.xlu0 %2546
      %v2548 = vsel %vm2409, %v2063, -inf
      %2549 = vmax.xlane.f32.xlu0 %v2548
      %v2550 = vpop.xlane.xlu0 %2549
      %v2551 = vsel %vm2409, %v2068, -inf
      %2552 = vmax.xlane.f32.xlu0 %v2551
      %v2553 = vpop.xlane.xlu0 %2552
      %v2554 = vsel %vm2409, %v2202, -inf
      %2555 = vmax.xlane.f32.xlu0 %v2554
      %v2556 = vpop.xlane.xlu0 %2555
      %v2557 = vsel %vm2409, %v2207, -inf
      %2558 = vmax.xlane.f32.xlu0 %v2557
      %v2559 = vpop.xlane.xlu0 %2558
      %v2560 = vsel %vm2409, %v2212, -inf
      %2561 = vmax.xlane.f32.xlu0 %v2560
      %v2562 = vpop.xlane.xlu0 %2561
      %v2563 = vsel %vm2409, %v2217, -inf
      %2564 = vmax.xlane.f32.xlu0 %v2563
      %v2565 = vpop.xlane.xlu0 %2564
      %v2566 = vsel %vm2409, %v2222, -inf
      %2567 = vmax.xlane.f32.xlu0 %v2566
      %v2568 = vpop.xlane.xlu0 %2567
      %v2569 = vsel %vm2409, %v2227, -inf
      %2570 = vmax.xlane.f32.xlu0 %v2569
      %v2571 = vpop.xlane.xlu0 %2570
      %v2572 = vsel %vm2409, %v2232, -inf
      %2573 = vmax.xlane.f32.xlu0 %v2572
      %v2574 = vpop.xlane.xlu0 %2573
      %v2575 = vsel %vm2409, %v2237, -inf
      %2576 = vmax.xlane.f32.xlu0 %v2575
      %v2577 = vpop.xlane.xlu0 %2576
      %v2578 = vsel %vm2409, %v2371, -inf
      %2579 = vmax.xlane.f32.xlu0 %v2578
      %v2580 = vpop.xlane.xlu0 %2579
      %v2581 = vsel %vm2409, %v2376, -inf
      %2582 = vmax.xlane.f32.xlu0 %v2581
      %v2583 = vpop.xlane.xlu0 %2582
      %v2584 = vsel %vm2409, %v2381, -inf
      %2585 = vmax.xlane.f32.xlu0 %v2584
      %v2586 = vpop.xlane.xlu0 %2585
      %v2587 = vsel %vm2409, %v2386, -inf
      %2588 = vmax.xlane.f32.xlu0 %v2587
      %v2589 = vpop.xlane.xlu0 %2588
      %v2590 = vsel %vm2409, %v2391, -inf
      %2591 = vmax.xlane.f32.xlu0 %v2590
      %v2592 = vpop.xlane.xlu0 %2591
      %v2593 = vsel %vm2409, %v2396, -inf
      %2594 = vmax.xlane.f32.xlu0 %v2593
      %v2595 = vpop.xlane.xlu0 %2594
      %v2596 = vsel %vm2409, %v2401, -inf
      %2597 = vmax.xlane.f32.xlu0 %v2596
      %v2598 = vpop.xlane.xlu0 %2597
      %v2599 = vsel %vm2409, %v2406, -inf
      %2600 = vmax.xlane.f32.xlu0 %v2599
      %v2601 = vpop.xlane.xlu0 %2600
      %v2602 = vsub.f32 %v1188, %v2412
      %v2603 = vsub.f32 %v1193, %v2415
      %v2604 = vsub.f32 %v1198, %v2418
      %v2605 = vsub.f32 %v1203, %v2421
      %v2606 = vsub.f32 %v1208, %v2424
      %v2607 = vsub.f32 %v1213, %v2427
      %v2608 = vsub.f32 %v1218, %v2430
      %v2609 = vsub.f32 %v1223, %v2433
      %v2610 = vsub.f32 %v1357, %v2436
      %v2611 = vsub.f32 %v1362, %v2439
      %v2612 = vsub.f32 %v1367, %v2442
      %v2613 = vsub.f32 %v1372, %v2445
      %v2614 = vsub.f32 %v1377, %v2448
      %v2615 = vsub.f32 %v1382, %v2451
      %v2616 = vsub.f32 %v1387, %v2454
      %v2617 = vsub.f32 %v1392, %v2457
      %v2618 = vsub.f32 %v1526, %v2460
      %v2619 = vsub.f32 %v1531, %v2463
      %v2620 = vsub.f32 %v1536, %v2466
      %v2621 = vsub.f32 %v1541, %v2469
      %v2622 = vsub.f32 %v1546, %v2472
      %v2623 = vsub.f32 %v1551, %v2475
      %v2624 = vsub.f32 %v1556, %v2478
      %v2625 = vsub.f32 %v1561, %v2481
      %v2626 = vsub.f32 %v1695, %v2484
      %v2627 = vsub.f32 %v1700, %v2487
      %v2628 = vsub.f32 %v1705, %v2490
      %v2629 = vsub.f32 %v1710, %v2493
      %v2630 = vsub.f32 %v1715, %v2496
      %v2631 = vsub.f32 %v1720, %v2499
      %v2632 = vsub.f32 %v1725, %v2502
      %v2633 = vsub.f32 %v1730, %v2505
      %v2634 = vsub.f32 %v1864, %v2508
      %v2635 = vsub.f32 %v1869, %v2511
      %v2636 = vsub.f32 %v1874, %v2514
      %v2637 = vsub.f32 %v1879, %v2517
      %v2638 = vsub.f32 %v1884, %v2520
      %v2639 = vsub.f32 %v1889, %v2523
      %v2640 = vsub.f32 %v1894, %v2526
      %v2641 = vsub.f32 %v1899, %v2529
      %v2642 = vsub.f32 %v2033, %v2532
      %v2643 = vsub.f32 %v2038, %v2535
      %v2644 = vsub.f32 %v2043, %v2538
      %v2645 = vsub.f32 %v2048, %v2541
      %v2646 = vsub.f32 %v2053, %v2544
      %v2647 = vsub.f32 %v2058, %v2547
      %v2648 = vsub.f32 %v2063, %v2550
      %v2649 = vsub.f32 %v2068, %v2553
      %v2650 = vsub.f32 %v2202, %v2556
      %v2651 = vsub.f32 %v2207, %v2559
      %v2652 = vsub.f32 %v2212, %v2562
      %v2653 = vsub.f32 %v2217, %v2565
      %v2654 = vsub.f32 %v2222, %v2568
      %v2655 = vsub.f32 %v2227, %v2571
      %v2656 = vsub.f32 %v2232, %v2574
      %v2657 = vsub.f32 %v2237, %v2577
      %v2658 = vsub.f32 %v2371, %v2580
      %v2659 = vsub.f32 %v2376, %v2583
      %v2660 = vsub.f32 %v2381, %v2586
      %v2661 = vsub.f32 %v2386, %v2589
      %v2662 = vsub.f32 %v2391, %v2592
      %v2663 = vsub.f32 %v2396, %v2595
      %v2664 = vsub.f32 %v2401, %v2598
      %v2665 = vsub.f32 %v2406, %v2601
      %v2666 = vmul.f32 %v2602, 1.442695
      %v2667 = vpow.pop %v2666
      %v2668 = vmul.f32 %v2603, 1.442695
      %v2669 = vpow.pop %v2668
      %v2670 = vmul.f32 %v2604, 1.442695
      %v2671 = vpow.pop %v2670
      %v2672 = vmul.f32 %v2605, 1.442695
      %v2673 = vpow.pop %v2672
      %v2674 = vmul.f32 %v2606, 1.442695
      %v2675 = vpow.pop %v2674
      %v2676 = vmul.f32 %v2607, 1.442695
      %v2677 = vpow.pop %v2676
      %v2678 = vmul.f32 %v2608, 1.442695
      %v2679 = vpow.pop %v2678
      %v2680 = vmul.f32 %v2609, 1.442695
      %v2681 = vpow.pop %v2680
      %v2682 = vmul.f32 %v2610, 1.442695
      %v2683 = vpow.pop %v2682
      %v2684 = vmul.f32 %v2611, 1.442695
      %v2685 = vpow.pop %v2684
      %v2686 = vmul.f32 %v2612, 1.442695
      %v2687 = vpow.pop %v2686
      %v2688 = vmul.f32 %v2613, 1.442695
      %v2689 = vpow.pop %v2688
      %v2690 = vmul.f32 %v2614, 1.442695
      %v2691 = vpow.pop %v2690
      %v2692 = vmul.f32 %v2615, 1.442695
      %v2693 = vpow.pop %v2692
      %v2694 = vmul.f32 %v2616, 1.442695
      %v2695 = vpow.pop %v2694
      %v2696 = vmul.f32 %v2617, 1.442695
      %v2697 = vpow.pop %v2696
      %v2698 = vmul.f32 %v2618, 1.442695
      %v2699 = vpow.pop %v2698
      %v2700 = vmul.f32 %v2619, 1.442695
      %v2701 = vpow.pop %v2700
      %v2702 = vmul.f32 %v2620, 1.442695
      %v2703 = vpow.pop %v2702
      %v2704 = vmul.f32 %v2621, 1.442695
      %v2705 = vpow.pop %v2704
      %v2706 = vmul.f32 %v2622, 1.442695
      %v2707 = vpow.pop %v2706
      %v2708 = vmul.f32 %v2623, 1.442695
      %v2709 = vpow.pop %v2708
      %v2710 = vmul.f32 %v2624, 1.442695
      %v2711 = vpow.pop %v2710
      %v2712 = vmul.f32 %v2625, 1.442695
      %v2713 = vpow.pop %v2712
      %v2714 = vmul.f32 %v2626, 1.442695
      %v2715 = vpow.pop %v2714
      %v2716 = vmul.f32 %v2627, 1.442695
      %v2717 = vpow.pop %v2716
      %v2718 = vmul.f32 %v2628, 1.442695
      %v2719 = vpow.pop %v2718
      %v2720 = vmul.f32 %v2629, 1.442695
      %v2721 = vpow.pop %v2720
      %v2722 = vmul.f32 %v2630, 1.442695
      %v2723 = vpow.pop %v2722
      %v2724 = vmul.f32 %v2631, 1.442695
      %v2725 = vpow.pop %v2724
      %v2726 = vmul.f32 %v2632, 1.442695
      %v2727 = vpow.pop %v2726
      %v2728 = vmul.f32 %v2633, 1.442695
      %v2729 = vpow.pop %v2728
      %v2730 = vmul.f32 %v2634, 1.442695
      %v2731 = vpow.pop %v2730
      %v2732 = vmul.f32 %v2635, 1.442695
      %v2733 = vpow.pop %v2732
      %v2734 = vmul.f32 %v2636, 1.442695
      %v2735 = vpow.pop %v2734
      %v2736 = vmul.f32 %v2637, 1.442695
      %v2737 = vpow.pop %v2736
      %v2738 = vmul.f32 %v2638, 1.442695
      %v2739 = vpow.pop %v2738
      %v2740 = vmul.f32 %v2639, 1.442695
      %v2741 = vpow.pop %v2740
      %v2742 = vmul.f32 %v2640, 1.442695
      %v2743 = vpow.pop %v2742
      %v2744 = vmul.f32 %v2641, 1.442695
      %v2745 = vpow.pop %v2744
      %v2746 = vmul.f32 %v2642, 1.442695
      %v2747 = vpow.pop %v2746
      %v2748 = vmul.f32 %v2643, 1.442695
      %v2749 = vpow.pop %v2748
      %v2750 = vmul.f32 %v2644, 1.442695
      %v2751 = vpow.pop %v2750
      %v2752 = vmul.f32 %v2645, 1.442695
      %v2753 = vpow.pop %v2752
      %v2754 = vmul.f32 %v2646, 1.442695
      %v2755 = vpow.pop %v2754
      %v2756 = vmul.f32 %v2647, 1.442695
      %v2757 = vpow.pop %v2756
      %v2758 = vmul.f32 %v2648, 1.442695
      %v2759 = vpow.pop %v2758
      %v2760 = vmul.f32 %v2649, 1.442695
      %v2761 = vpow.pop %v2760
      %v2762 = vmul.f32 %v2650, 1.442695
      %v2763 = vpow.pop %v2762
      %v2764 = vmul.f32 %v2651, 1.442695
      %v2765 = vpow.pop %v2764
      %v2766 = vmul.f32 %v2652, 1.442695
      %v2767 = vpow.pop %v2766
      %v2768 = vmul.f32 %v2653, 1.442695
      %v2769 = vpow.pop %v2768
      %v2770 = vmul.f32 %v2654, 1.442695
      %v2771 = vpow.pop %v2770
      %v2772 = vmul.f32 %v2655, 1.442695
      %v2773 = vpow.pop %v2772
      %v2774 = vmul.f32 %v2656, 1.442695
      %v2775 = vpow.pop %v2774
      %v2776 = vmul.f32 %v2657, 1.442695
      %v2777 = vpow.pop %v2776
      %v2778 = vmul.f32 %v2658, 1.442695
      %v2779 = vpow.pop %v2778
      %v2780 = vmul.f32 %v2659, 1.442695
      %v2781 = vpow.pop %v2780
      %v2782 = vmul.f32 %v2660, 1.442695
      %v2783 = vpow.pop %v2782
      %v2784 = vmul.f32 %v2661, 1.442695
      %v2785 = vpow.pop %v2784
      %v2786 = vmul.f32 %v2662, 1.442695
      %v2787 = vpow.pop %v2786
      %v2788 = vmul.f32 %v2663, 1.442695
      %v2789 = vpow.pop %v2788
      %v2790 = vmul.f32 %v2664, 1.442695
      %v2791 = vpow.pop %v2790
      %v2792 = vmul.f32 %v2665, 1.442695
      %v2793 = vpow.pop %v2792
      %v2794 = vsel %vm2409, %v2667, 0.0
      %2795 = vadd.xlane.f32.xlu0 %v2794
      %v2796 = vpop.xlane.xlu0 %2795
      %v2797 = vsel %vm2409, %v2669, 0.0
      %2798 = vadd.xlane.f32.xlu0 %v2797
      %v2799 = vpop.xlane.xlu0 %2798
      %v2800 = vsel %vm2409, %v2671, 0.0
      %2801 = vadd.xlane.f32.xlu0 %v2800
      %v2802 = vpop.xlane.xlu0 %2801
      %v2803 = vsel %vm2409, %v2673, 0.0
      %2804 = vadd.xlane.f32.xlu0 %v2803
      %v2805 = vpop.xlane.xlu0 %2804
      %v2806 = vsel %vm2409, %v2675, 0.0
      %2807 = vadd.xlane.f32.xlu0 %v2806
      %v2808 = vpop.xlane.xlu0 %2807
      %v2809 = vsel %vm2409, %v2677, 0.0
      %2810 = vadd.xlane.f32.xlu0 %v2809
      %v2811 = vpop.xlane.xlu0 %2810
      %v2812 = vsel %vm2409, %v2679, 0.0
      %2813 = vadd.xlane.f32.xlu0 %v2812
      %v2814 = vpop.xlane.xlu0 %2813
      %v2815 = vsel %vm2409, %v2681, 0.0
      %2816 = vadd.xlane.f32.xlu0 %v2815
      %v2817 = vpop.xlane.xlu0 %2816
      %v2818 = vsel %vm2409, %v2683, 0.0
      %2819 = vadd.xlane.f32.xlu0 %v2818
      %v2820 = vpop.xlane.xlu0 %2819
      %v2821 = vsel %vm2409, %v2685, 0.0
      %2822 = vadd.xlane.f32.xlu0 %v2821
      %v2823 = vpop.xlane.xlu0 %2822
      %v2824 = vsel %vm2409, %v2687, 0.0
      %2825 = vadd.xlane.f32.xlu0 %v2824
      %v2826 = vpop.xlane.xlu0 %2825
      %v2827 = vsel %vm2409, %v2689, 0.0
      %2828 = vadd.xlane.f32.xlu0 %v2827
      %v2829 = vpop.xlane.xlu0 %2828
      %v2830 = vsel %vm2409, %v2691, 0.0
      %2831 = vadd.xlane.f32.xlu0 %v2830
      %v2832 = vpop.xlane.xlu0 %2831
      %v2833 = vsel %vm2409, %v2693, 0.0
      %2834 = vadd.xlane.f32.xlu0 %v2833
      %v2835 = vpop.xlane.xlu0 %2834
      %v2836 = vsel %vm2409, %v2695, 0.0
      %2837 = vadd.xlane.f32.xlu0 %v2836
      %v2838 = vpop.xlane.xlu0 %2837
      %v2839 = vsel %vm2409, %v2697, 0.0
      %2840 = vadd.xlane.f32.xlu0 %v2839
      %v2841 = vpop.xlane.xlu0 %2840
      %v2842 = vsel %vm2409, %v2699, 0.0
      %2843 = vadd.xlane.f32.xlu0 %v2842
      %v2844 = vpop.xlane.xlu0 %2843
      %v2845 = vsel %vm2409, %v2701, 0.0
      %2846 = vadd.xlane.f32.xlu0 %v2845
      %v2847 = vpop.xlane.xlu0 %2846
      %v2848 = vsel %vm2409, %v2703, 0.0
      %2849 = vadd.xlane.f32.xlu0 %v2848
      %v2850 = vpop.xlane.xlu0 %2849
      %v2851 = vsel %vm2409, %v2705, 0.0
      %2852 = vadd.xlane.f32.xlu0 %v2851
      %v2853 = vpop.xlane.xlu0 %2852
      %v2854 = vsel %vm2409, %v2707, 0.0
      %2855 = vadd.xlane.f32.xlu0 %v2854
      %v2856 = vpop.xlane.xlu0 %2855
      %v2857 = vsel %vm2409, %v2709, 0.0
      %2858 = vadd.xlane.f32.xlu0 %v2857
      %v2859 = vpop.xlane.xlu0 %2858
      %v2860 = vsel %vm2409, %v2711, 0.0
      %2861 = vadd.xlane.f32.xlu0 %v2860
      %v2862 = vpop.xlane.xlu0 %2861
      %v2863 = vsel %vm2409, %v2713, 0.0
      %2864 = vadd.xlane.f32.xlu0 %v2863
      %v2865 = vpop.xlane.xlu0 %2864
      %v2866 = vsel %vm2409, %v2715, 0.0
      %2867 = vadd.xlane.f32.xlu0 %v2866
      %v2868 = vpop.xlane.xlu0 %2867
      %v2869 = vsel %vm2409, %v2717, 0.0
      %2870 = vadd.xlane.f32.xlu0 %v2869
      %v2871 = vpop.xlane.xlu0 %2870
      %v2872 = vsel %vm2409, %v2719, 0.0
      %2873 = vadd.xlane.f32.xlu0 %v2872
      %v2874 = vpop.xlane.xlu0 %2873
      %v2875 = vsel %vm2409, %v2721, 0.0
      %2876 = vadd.xlane.f32.xlu0 %v2875
      %v2877 = vpop.xlane.xlu0 %2876
      %v2878 = vsel %vm2409, %v2723, 0.0
      %2879 = vadd.xlane.f32.xlu0 %v2878
      %v2880 = vpop.xlane.xlu0 %2879
      %v2881 = vsel %vm2409, %v2725, 0.0
      %2882 = vadd.xlane.f32.xlu0 %v2881
      %v2883 = vpop.xlane.xlu0 %2882
      %v2884 = vsel %vm2409, %v2727, 0.0
      %2885 = vadd.xlane.f32.xlu0 %v2884
      %v2886 = vpop.xlane.xlu0 %2885
      %v2887 = vsel %vm2409, %v2729, 0.0
      %2888 = vadd.xlane.f32.xlu0 %v2887
      %v2889 = vpop.xlane.xlu0 %2888
      %v2890 = vsel %vm2409, %v2731, 0.0
      %2891 = vadd.xlane.f32.xlu0 %v2890
      %v2892 = vpop.xlane.xlu0 %2891
      %v2893 = vsel %vm2409, %v2733, 0.0
      %2894 = vadd.xlane.f32.xlu0 %v2893
      %v2895 = vpop.xlane.xlu0 %2894
      %v2896 = vsel %vm2409, %v2735, 0.0
      %2897 = vadd.xlane.f32.xlu0 %v2896
      %v2898 = vpop.xlane.xlu0 %2897
      %v2899 = vsel %vm2409, %v2737, 0.0
      %2900 = vadd.xlane.f32.xlu0 %v2899
      %v2901 = vpop.xlane.xlu0 %2900
      %v2902 = vsel %vm2409, %v2739, 0.0
      %2903 = vadd.xlane.f32.xlu0 %v2902
      %v2904 = vpop.xlane.xlu0 %2903
      %v2905 = vsel %vm2409, %v2741, 0.0
      %2906 = vadd.xlane.f32.xlu0 %v2905
      %v2907 = vpop.xlane.xlu0 %2906
      %v2908 = vsel %vm2409, %v2743, 0.0
      %2909 = vadd.xlane.f32.xlu0 %v2908
      %v2910 = vpop.xlane.xlu0 %2909
      %v2911 = vsel %vm2409, %v2745, 0.0
      %2912 = vadd.xlane.f32.xlu0 %v2911
      %v2913 = vpop.xlane.xlu0 %2912
      %v2914 = vsel %vm2409, %v2747, 0.0
      %2915 = vadd.xlane.f32.xlu0 %v2914
      %v2916 = vpop.xlane.xlu0 %2915
      %v2917 = vsel %vm2409, %v2749, 0.0
      %2918 = vadd.xlane.f32.xlu0 %v2917
      %v2919 = vpop.xlane.xlu0 %2918
      %v2920 = vsel %vm2409, %v2751, 0.0
      %2921 = vadd.xlane.f32.xlu0 %v2920
      %v2922 = vpop.xlane.xlu0 %2921
      %v2923 = vsel %vm2409, %v2753, 0.0
      %2924 = vadd.xlane.f32.xlu0 %v2923
      %v2925 = vpop.xlane.xlu0 %2924
      %v2926 = vsel %vm2409, %v2755, 0.0
      %2927 = vadd.xlane.f32.xlu0 %v2926
      %v2928 = vpop.xlane.xlu0 %2927
      %v2929 = vsel %vm2409, %v2757, 0.0
      %2930 = vadd.xlane.f32.xlu0 %v2929
      %v2931 = vpop.xlane.xlu0 %2930
      %v2932 = vsel %vm2409, %v2759, 0.0
      %2933 = vadd.xlane.f32.xlu0 %v2932
      %v2934 = vpop.xlane.xlu0 %2933
      %v2935 = vsel %vm2409, %v2761, 0.0
      %2936 = vadd.xlane.f32.xlu0 %v2935
      %v2937 = vpop.xlane.xlu0 %2936
      %v2938 = vsel %vm2409, %v2763, 0.0
      %2939 = vadd.xlane.f32.xlu0 %v2938
      %v2940 = vpop.xlane.xlu0 %2939
      %v2941 = vsel %vm2409, %v2765, 0.0
      %2942 = vadd.xlane.f32.xlu0 %v2941
      %v2943 = vpop.xlane.xlu0 %2942
      %v2944 = vsel %vm2409, %v2767, 0.0
      %2945 = vadd.xlane.f32.xlu0 %v2944
      %v2946 = vpop.xlane.xlu0 %2945
      %v2947 = vsel %vm2409, %v2769, 0.0
      %2948 = vadd.xlane.f32.xlu0 %v2947
      %v2949 = vpop.xlane.xlu0 %2948
      %v2950 = vsel %vm2409, %v2771, 0.0
      %2951 = vadd.xlane.f32.xlu0 %v2950
      %v2952 = vpop.xlane.xlu0 %2951
      %v2953 = vsel %vm2409, %v2773, 0.0
      %2954 = vadd.xlane.f32.xlu0 %v2953
      %v2955 = vpop.xlane.xlu0 %2954
      %v2956 = vsel %vm2409, %v2775, 0.0
      %2957 = vadd.xlane.f32.xlu0 %v2956
      %v2958 = vpop.xlane.xlu0 %2957
      %v2959 = vsel %vm2409, %v2777, 0.0
      %2960 = vadd.xlane.f32.xlu0 %v2959
      %v2961 = vpop.xlane.xlu0 %2960
      %v2962 = vsel %vm2409, %v2779, 0.0
      %2963 = vadd.xlane.f32.xlu0 %v2962
      %v2964 = vpop.xlane.xlu0 %2963
      %v2965 = vsel %vm2409, %v2781, 0.0
      %2966 = vadd.xlane.f32.xlu0 %v2965
      %v2967 = vpop.xlane.xlu0 %2966
      %v2968 = vsel %vm2409, %v2783, 0.0
      %2969 = vadd.xlane.f32.xlu0 %v2968
      %v2970 = vpop.xlane.xlu0 %2969
      %v2971 = vsel %vm2409, %v2785, 0.0
      %2972 = vadd.xlane.f32.xlu0 %v2971
      %v2973 = vpop.xlane.xlu0 %2972
      %v2974 = vsel %vm2409, %v2787, 0.0
      %2975 = vadd.xlane.f32.xlu0 %v2974
      %v2976 = vpop.xlane.xlu0 %2975
      %v2977 = vsel %vm2409, %v2789, 0.0
      %2978 = vadd.xlane.f32.xlu0 %v2977
      %v2979 = vpop.xlane.xlu0 %2978
      %v2980 = vsel %vm2409, %v2791, 0.0
      %2981 = vadd.xlane.f32.xlu0 %v2980
      %v2982 = vpop.xlane.xlu0 %2981
      %v2983 = vsel %vm2409, %v2793, 0.0
      %2984 = vadd.xlane.f32.xlu0 %v2983
      %v2985 = vpop.xlane.xlu0 %2984
      %v2986 = vrcp.pop %v2796
      %v2987 = vrcp.pop %v2799
      %v2988 = vrcp.pop %v2802
      %v2989 = vrcp.pop %v2805
      %v2990 = vrcp.pop %v2808
      %v2991 = vrcp.pop %v2811
      %v2992 = vrcp.pop %v2814
      %v2993 = vrcp.pop %v2817
      %v2994 = vrcp.pop %v2820
      %v2995 = vrcp.pop %v2823
      %v2996 = vrcp.pop %v2826
      %v2997 = vrcp.pop %v2829
      %v2998 = vrcp.pop %v2832
      %v2999 = vrcp.pop %v2835
      %v3000 = vrcp.pop %v2838
      %v3001 = vrcp.pop %v2841
      %v3002 = vrcp.pop %v2844
      %v3003 = vrcp.pop %v2847
      %v3004 = vrcp.pop %v2850
      %v3005 = vrcp.pop %v2853
      %v3006 = vrcp.pop %v2856
      %v3007 = vrcp.pop %v2859
      %v3008 = vrcp.pop %v2862
      %v3009 = vrcp.pop %v2865
      %v3010 = vrcp.pop %v2868
      %v3011 = vrcp.pop %v2871
      %v3012 = vrcp.pop %v2874
      %v3013 = vrcp.pop %v2877
      %v3014 = vrcp.pop %v2880
      %v3015 = vrcp.pop %v2883
      %v3016 = vrcp.pop %v2886
      %v3017 = vrcp.pop %v2889
      %v3018 = vrcp.pop %v2892
      %v3019 = vrcp.pop %v2895
      %v3020 = vrcp.pop %v2898
      %v3021 = vrcp.pop %v2901
      %v3022 = vrcp.pop %v2904
      %v3023 = vrcp.pop %v2907
      %v3024 = vrcp.pop %v2910
      %v3025 = vrcp.pop %v2913
      %v3026 = vrcp.pop %v2916
      %v3027 = vrcp.pop %v2919
      %v3028 = vrcp.pop %v2922
      %v3029 = vrcp.pop %v2925
      %v3030 = vrcp.pop %v2928
      %v3031 = vrcp.pop %v2931
      %v3032 = vrcp.pop %v2934
      %v3033 = vrcp.pop %v2937
      %v3034 = vrcp.pop %v2940
      %v3035 = vrcp.pop %v2943
      %v3036 = vrcp.pop %v2946
      %v3037 = vrcp.pop %v2949
      %v3038 = vrcp.pop %v2952
      %v3039 = vrcp.pop %v2955
      %v3040 = vrcp.pop %v2958
      %v3041 = vrcp.pop %v2961
      %v3042 = vrcp.pop %v2964
      %v3043 = vrcp.pop %v2967
      %v3044 = vrcp.pop %v2970
      %v3045 = vrcp.pop %v2973
      %v3046 = vrcp.pop %v2976
      %v3047 = vrcp.pop %v2979
      %v3048 = vrcp.pop %v2982
      %v3049 = vrcp.pop %v2985
      %v3050 = vmul.f32 %v2667, %v2986
      %v3051 = vmul.f32 %v2669, %v2987
      %v3052 = vmul.f32 %v2671, %v2988
      %v3053 = vmul.f32 %v2673, %v2989
      %v3054 = vmul.f32 %v2675, %v2990
      %v3055 = vmul.f32 %v2677, %v2991
      %v3056 = vmul.f32 %v2679, %v2992
      %v3057 = vmul.f32 %v2681, %v2993
      %v3058 = vmul.f32 %v2683, %v2994
      %v3059 = vmul.f32 %v2685, %v2995
      %v3060 = vmul.f32 %v2687, %v2996
      %v3061 = vmul.f32 %v2689, %v2997
      %v3062 = vmul.f32 %v2691, %v2998
      %v3063 = vmul.f32 %v2693, %v2999
      %v3064 = vmul.f32 %v2695, %v3000
      %v3065 = vmul.f32 %v2697, %v3001
      %v3066 = vmul.f32 %v2699, %v3002
      %v3067 = vmul.f32 %v2701, %v3003
      %v3068 = vmul.f32 %v2703, %v3004
      %v3069 = vmul.f32 %v2705, %v3005
      %v3070 = vmul.f32 %v2707, %v3006
      %v3071 = vmul.f32 %v2709, %v3007
      %v3072 = vmul.f32 %v2711, %v3008
      %v3073 = vmul.f32 %v2713, %v3009
      %v3074 = vmul.f32 %v2715, %v3010
      %v3075 = vmul.f32 %v2717, %v3011
      %v3076 = vmul.f32 %v2719, %v3012
      %v3077 = vmul.f32 %v2721, %v3013
      %v3078 = vmul.f32 %v2723, %v3014
      %v3079 = vmul.f32 %v2725, %v3015
      %v3080 = vmul.f32 %v2727, %v3016
      %v3081 = vmul.f32 %v2729, %v3017
      %v3082 = vmul.f32 %v2731, %v3018
      %v3083 = vmul.f32 %v2733, %v3019
      %v3084 = vmul.f32 %v2735, %v3020
      %v3085 = vmul.f32 %v2737, %v3021
      %v3086 = vmul.f32 %v2739, %v3022
      %v3087 = vmul.f32 %v2741, %v3023
      %v3088 = vmul.f32 %v2743, %v3024
      %v3089 = vmul.f32 %v2745, %v3025
      %v3090 = vmul.f32 %v2747, %v3026
      %v3091 = vmul.f32 %v2749, %v3027
      %v3092 = vmul.f32 %v2751, %v3028
      %v3093 = vmul.f32 %v2753, %v3029
      %v3094 = vmul.f32 %v2755, %v3030
      %v3095 = vmul.f32 %v2757, %v3031
      %v3096 = vmul.f32 %v2759, %v3032
      %v3097 = vmul.f32 %v2761, %v3033
      %v3098 = vmul.f32 %v2763, %v3034
      %v3099 = vmul.f32 %v2765, %v3035
      %v3100 = vmul.f32 %v2767, %v3036
      %v3101 = vmul.f32 %v2769, %v3037
      %v3102 = vmul.f32 %v2771, %v3038
      %v3103 = vmul.f32 %v2773, %v3039
      %v3104 = vmul.f32 %v2775, %v3040
      %v3105 = vmul.f32 %v2777, %v3041
      %v3106 = vmul.f32 %v2779, %v3042
      %v3107 = vmul.f32 %v2781, %v3043
      %v3108 = vmul.f32 %v2783, %v3044
      %v3109 = vmul.f32 %v2785, %v3045
      %v3110 = vmul.f32 %v2787, %v3046
      %v3111 = vmul.f32 %v2789, %v3047
      %v3112 = vmul.f32 %v2791, %v3048
      %v3113 = vmul.f32 %v2793, %v3049
      %3114 = vrot.lane.b32.xlu0 %v673, 112
      %v3115 = vpop.permute.xlu0 %3114
      %3116 = vrot.lane.b32.xlu0 %v678, 112
      %v3117 = vpop.permute.xlu0 %3116
      %3118 = vrot.lane.b32.xlu0 %v683, 112
      %v3119 = vpop.permute.xlu0 %3118
      %3120 = vrot.lane.b32.xlu0 %v688, 112
      %v3121 = vpop.permute.xlu0 %3120
      %3122 = vrot.lane.b32.xlu0 %v693, 112
      %v3123 = vpop.permute.xlu0 %3122
      %3124 = vrot.lane.b32.xlu0 %v698, 112
      %v3125 = vpop.permute.xlu0 %3124
      %3126 = vrot.lane.b32.xlu0 %v703, 112
      %v3127 = vpop.permute.xlu0 %3126
      %3128 = vrot.lane.b32.xlu0 %v708, 112
      %v3129 = vpop.permute.xlu0 %3128
      %v3139 = vsel %vm2409, %v3050, 0
      %v3142 = vsel %vm2409, %v3051, 0
      %v3145 = vsel %vm2409, %v3052, 0
      %v3148 = vsel %vm2409, %v3053, 0
      %v3151 = vsel %vm2409, %v3054, 0
      %v3154 = vsel %vm2409, %v3055, 0
      %v3157 = vsel %vm2409, %v3056, 0
      %v3160 = vsel %vm2409, %v3057, 0
      %3162 = vmatprep.subr.mxu0 0.0
      %3163 = vmatpush1.msra.mxu0 0.0
      %3164 = vmatprep.subr.mxu0 0.0
      %3165 = vmatpush1.msra.mxu0 0.0
      %3166 = vmatprep.subr.mxu0 0.0
      %3167 = vmatpush1.msra.mxu0 0.0
      %3168 = vmatprep.subr.mxu0 0.0
      %3169 = vmatpush1.msra.mxu0 0.0
      %3170 = vmatprep.subr.mxu0 0.0
      %3171 = vmatpush1.msra.mxu0 0.0
      %3172 = vmatprep.subr.mxu0 0.0
      %3173 = vmatpush1.msra.mxu0 0.0
      %3174 = vmatprep.subr.mxu0 0.0
      %3175 = vmatpush1.msra.mxu0 0.0
      %3176 = vmatprep.subr.mxu0 0.0
      %3177 = vmatpush1.msra.mxu0 0.0
      %3178 = vmatprep.subr.mxu0 0.0
      %3179 = vmatpush1.msra.mxu0 %v3129
      %3180 = vmatprep.subr.mxu0 0.0
      %3181 = vmatpush1.msra.mxu0 %v3127
      %3182 = vmatprep.subr.mxu0 0.0
      %3183 = vmatpush1.msra.mxu0 %v3125
      %3184 = vmatprep.subr.mxu0 0.0
      %3185 = vmatpush1.msra.mxu0 %v3123
      %3186 = vmatprep.subr.mxu0 0.0
      %3187 = vmatpush1.msra.mxu0 %v3121
      %3188 = vmatprep.subr.mxu0 0.0
      %3189 = vmatpush1.msra.mxu0 %v3119
      %3190 = vmatprep.subr.mxu0 0.0
      %3191 = vmatpush1.msra.mxu0 %v3117
      %3192 = vmatprep.subr.mxu0 0.0
      %3193 = vmatpush1.msra.mxu0 %v3115
      %3194 = vmatprep.subr.mxu0 0.0
      %3195 = vmatpush2.msra.mxu0 0.0
      %3196 = vmatprep.subr.mxu0 0.0
      %3197 = vmatpush2.msra.mxu0 0.0
      %3198 = vmatprep.subr.mxu0 0.0
      %3199 = vmatpush2.msra.mxu0 0.0
      %3200 = vmatprep.subr.mxu0 0.0
      %3201 = vmatpush2.msra.mxu0 0.0
      %3202 = vmatprep.subr.mxu0 0.0
      %3203 = vmatpush2.msra.mxu0 0.0
      %3204 = vmatprep.subr.mxu0 0.0
      %3205 = vmatpush2.msra.mxu0 0.0
      %3206 = vmatprep.subr.mxu0 0.0
      %3207 = vmatpush2.msra.mxu0 0.0
      %3208 = vmatprep.subr.mxu0 0.0
      %3209 = vmatpush2.msra.mxu0 0.0
      %3210 = vmatprep.subr.mxu0 0.0
      %3211 = vmatpush2.msra.mxu0 0.0
      %3212 = vmatprep.subr.mxu0 0.0
      %3213 = vmatpush2.msra.mxu0 0.0
      %3214 = vmatprep.subr.mxu0 0.0
      %3215 = vmatpush2.msra.mxu0 0.0
      %3216 = vmatprep.subr.mxu0 0.0
      %3217 = vmatpush2.msra.mxu0 0.0
      %3218 = vmatprep.subr.mxu0 0.0
      %3219 = vmatpush2.msra.mxu0 0.0
      %3220 = vmatprep.subr.mxu0 0.0
      %3221 = vmatpush2.msra.mxu0 0.0
      %3222 = vmatprep.subr.mxu0 0.0
      %3223 = vmatpush2.msra.mxu0 0.0
      %3224 = vmatprep.subr.mxu0 0.0
      %3225 = vmatpush2.msra.mxu0 0.0
      %3226 = vmatprep.mubr.f32.mxu0 0.0
      %3227 = vmatmul.mubr.f32.gmra.mxu0 %v3139
      %v3228 = vpop.f32.mrf.mxu0
      %v3229 = vadd.f32 0.0, %v3228
      %v3230 = vpop.f32.mrf.mxu0
      %3231 = vmatprep.mubr.f32.mxu0 0.0
      %3232 = vmatmul.mubr.f32.gmra.mxu0 %v3142
      %v3233 = vpop.f32.mrf.mxu0
      %v3234 = vadd.f32 0.0, %v3233
      %v3235 = vpop.f32.mrf.mxu0
      %3236 = vmatprep.mubr.f32.mxu0 0.0
      %3237 = vmatmul.mubr.f32.gmra.mxu0 %v3145
      %v3238 = vpop.f32.mrf.mxu0
      %v3239 = vadd.f32 0.0, %v3238
      %v3240 = vpop.f32.mrf.mxu0
      %3241 = vmatprep.mubr.f32.mxu0 0.0
      %3242 = vmatmul.mubr.f32.gmra.mxu0 %v3148
      %v3243 = vpop.f32.mrf.mxu0
      %v3244 = vadd.f32 0.0, %v3243
      %v3245 = vpop.f32.mrf.mxu0
      %3246 = vmatprep.mubr.f32.mxu0 0.0
      %3247 = vmatmul.mubr.f32.gmra.mxu0 %v3151
      %v3248 = vpop.f32.mrf.mxu0
      %v3249 = vadd.f32 0.0, %v3248
      %v3250 = vpop.f32.mrf.mxu0
      %3251 = vmatprep.mubr.f32.mxu0 0.0
      %3252 = vmatmul.mubr.f32.gmra.mxu0 %v3154
      %v3253 = vpop.f32.mrf.mxu0
      %v3254 = vadd.f32 0.0, %v3253
      %v3255 = vpop.f32.mrf.mxu0
      %3256 = vmatprep.mubr.f32.mxu0 0.0
      %3257 = vmatmul.mubr.f32.gmra.mxu0 %v3157
      %v3258 = vpop.f32.mrf.mxu0
      %v3259 = vadd.f32 0.0, %v3258
      %v3260 = vpop.f32.mrf.mxu0
      %3261 = vmatprep.mubr.f32.mxu0 0.0
      %3262 = vmatmul.mubr.f32.gmra.mxu0 %v3160
      %v3263 = vpop.f32.mrf.mxu0
      %v3264 = vadd.f32 0.0, %v3263
      %v3265 = vpop.f32.mrf.mxu0
      %3266 = vdwg.mxu0
      %3267 = vrot.lane.b32.xlu0 %v713, 112
      %v3268 = vpop.permute.xlu0 %3267
      %3269 = vrot.lane.b32.xlu0 %v718, 112
      %v3270 = vpop.permute.xlu0 %3269
      %3271 = vrot.lane.b32.xlu0 %v723, 112
      %v3272 = vpop.permute.xlu0 %3271
      %3273 = vrot.lane.b32.xlu0 %v728, 112
      %v3274 = vpop.permute.xlu0 %3273
      %3275 = vrot.lane.b32.xlu0 %v733, 112
      %v3276 = vpop.permute.xlu0 %3275
      %3277 = vrot.lane.b32.xlu0 %v738, 112
      %v3278 = vpop.permute.xlu0 %3277
      %3279 = vrot.lane.b32.xlu0 %v743, 112
      %v3280 = vpop.permute.xlu0 %3279
      %3281 = vrot.lane.b32.xlu0 %v748, 112
      %v3282 = vpop.permute.xlu0 %3281
      %v3292 = vsel %vm2409, %v3058, 0
      %v3295 = vsel %vm2409, %v3059, 0
      %v3298 = vsel %vm2409, %v3060, 0
      %v3301 = vsel %vm2409, %v3061, 0
      %v3304 = vsel %vm2409, %v3062, 0
      %v3307 = vsel %vm2409, %v3063, 0
      %v3310 = vsel %vm2409, %v3064, 0
      %v3313 = vsel %vm2409, %v3065, 0
      %3315 = vmatprep.subr.mxu0 0.0
      %3316 = vmatpush1.msra.mxu0 0.0
      %3317 = vmatprep.subr.mxu0 0.0
      %3318 = vmatpush1.msra.mxu0 0.0
      %3319 = vmatprep.subr.mxu0 0.0
      %3320 = vmatpush1.msra.mxu0 0.0
      %3321 = vmatprep.subr.mxu0 0.0
      %3322 = vmatpush1.msra.mxu0 0.0
      %3323 = vmatprep.subr.mxu0 0.0
      %3324 = vmatpush1.msra.mxu0 0.0
      %3325 = vmatprep.subr.mxu0 0.0
      %3326 = vmatpush1.msra.mxu0 0.0
      %3327 = vmatprep.subr.mxu0 0.0
      %3328 = vmatpush1.msra.mxu0 0.0
      %3329 = vmatprep.subr.mxu0 0.0
      %3330 = vmatpush1.msra.mxu0 0.0
      %3331 = vmatprep.subr.mxu0 0.0
      %3332 = vmatpush1.msra.mxu0 %v3282
      %3333 = vmatprep.subr.mxu0 0.0
      %3334 = vmatpush1.msra.mxu0 %v3280
      %3335 = vmatprep.subr.mxu0 0.0
      %3336 = vmatpush1.msra.mxu0 %v3278
      %3337 = vmatprep.subr.mxu0 0.0
      %3338 = vmatpush1.msra.mxu0 %v3276
      %3339 = vmatprep.subr.mxu0 0.0
      %3340 = vmatpush1.msra.mxu0 %v3274
      %3341 = vmatprep.subr.mxu0 0.0
      %3342 = vmatpush1.msra.mxu0 %v3272
      %3343 = vmatprep.subr.mxu0 0.0
      %3344 = vmatpush1.msra.mxu0 %v3270
      %3345 = vmatprep.subr.mxu0 0.0
      %3346 = vmatpush1.msra.mxu0 %v3268
      %3347 = vmatprep.subr.mxu0 0.0
      %3348 = vmatpush2.msra.mxu0 0.0
      %3349 = vmatprep.subr.mxu0 0.0
      %3350 = vmatpush2.msra.mxu0 0.0
      %3351 = vmatprep.subr.mxu0 0.0
      %3352 = vmatpush2.msra.mxu0 0.0
      %3353 = vmatprep.subr.mxu0 0.0
      %3354 = vmatpush2.msra.mxu0 0.0
      %3355 = vmatprep.subr.mxu0 0.0
      %3356 = vmatpush2.msra.mxu0 0.0
      %3357 = vmatprep.subr.mxu0 0.0
      %3358 = vmatpush2.msra.mxu0 0.0
      %3359 = vmatprep.subr.mxu0 0.0
      %3360 = vmatpush2.msra.mxu0 0.0
      %3361 = vmatprep.subr.mxu0 0.0
      %3362 = vmatpush2.msra.mxu0 0.0
      %3363 = vmatprep.subr.mxu0 0.0
      %3364 = vmatpush2.msra.mxu0 0.0
      %3365 = vmatprep.subr.mxu0 0.0
      %3366 = vmatpush2.msra.mxu0 0.0
      %3367 = vmatprep.subr.mxu0 0.0
      %3368 = vmatpush2.msra.mxu0 0.0
      %3369 = vmatprep.subr.mxu0 0.0
      %3370 = vmatpush2.msra.mxu0 0.0
      %3371 = vmatprep.subr.mxu0 0.0
      %3372 = vmatpush2.msra.mxu0 0.0
      %3373 = vmatprep.subr.mxu0 0.0
      %3374 = vmatpush2.msra.mxu0 0.0
      %3375 = vmatprep.subr.mxu0 0.0
      %3376 = vmatpush2.msra.mxu0 0.0
      %3377 = vmatprep.subr.mxu0 0.0
      %3378 = vmatpush2.msra.mxu0 0.0
      %3379 = vmatprep.mubr.f32.mxu0 0.0
      %3380 = vmatmul.mubr.f32.gmra.mxu0 %v3292
      %v3381 = vpop.f32.mrf.mxu0
      %v3382 = vadd.f32 0.0, %v3381
      %v3383 = vpop.f32.mrf.mxu0
      %3384 = vmatprep.mubr.f32.mxu0 0.0
      %3385 = vmatmul.mubr.f32.gmra.mxu0 %v3295
      %v3386 = vpop.f32.mrf.mxu0
      %v3387 = vadd.f32 0.0, %v3386
      %v3388 = vpop.f32.mrf.mxu0
      %3389 = vmatprep.mubr.f32.mxu0 0.0
      %3390 = vmatmul.mubr.f32.gmra.mxu0 %v3298
      %v3391 = vpop.f32.mrf.mxu0
      %v3392 = vadd.f32 0.0, %v3391
      %v3393 = vpop.f32.mrf.mxu0
      %3394 = vmatprep.mubr.f32.mxu0 0.0
      %3395 = vmatmul.mubr.f32.gmra.mxu0 %v3301
      %v3396 = vpop.f32.mrf.mxu0
      %v3397 = vadd.f32 0.0, %v3396
      %v3398 = vpop.f32.mrf.mxu0
      %3399 = vmatprep.mubr.f32.mxu0 0.0
      %3400 = vmatmul.mubr.f32.gmra.mxu0 %v3304
      %v3401 = vpop.f32.mrf.mxu0
      %v3402 = vadd.f32 0.0, %v3401
      %v3403 = vpop.f32.mrf.mxu0
      %3404 = vmatprep.mubr.f32.mxu0 0.0
      %3405 = vmatmul.mubr.f32.gmra.mxu0 %v3307
      %v3406 = vpop.f32.mrf.mxu0
      %v3407 = vadd.f32 0.0, %v3406
      %v3408 = vpop.f32.mrf.mxu0
      %3409 = vmatprep.mubr.f32.mxu0 0.0
      %3410 = vmatmul.mubr.f32.gmra.mxu0 %v3310
      %v3411 = vpop.f32.mrf.mxu0
      %v3412 = vadd.f32 0.0, %v3411
      %v3413 = vpop.f32.mrf.mxu0
      %3414 = vmatprep.mubr.f32.mxu0 0.0
      %3415 = vmatmul.mubr.f32.gmra.mxu0 %v3313
      %v3416 = vpop.f32.mrf.mxu0
      %v3417 = vadd.f32 0.0, %v3416
      %v3418 = vpop.f32.mrf.mxu0
      %3419 = vdwg.mxu0
      %3420 = vrot.lane.b32.xlu0 %v753, 112
      %v3421 = vpop.permute.xlu0 %3420
      %3422 = vrot.lane.b32.xlu0 %v758, 112
      %v3423 = vpop.permute.xlu0 %3422
      %3424 = vrot.lane.b32.xlu0 %v763, 112
      %v3425 = vpop.permute.xlu0 %3424
      %3426 = vrot.lane.b32.xlu0 %v768, 112
      %v3427 = vpop.permute.xlu0 %3426
      %3428 = vrot.lane.b32.xlu0 %v773, 112
      %v3429 = vpop.permute.xlu0 %3428
      %3430 = vrot.lane.b32.xlu0 %v778, 112
      %v3431 = vpop.permute.xlu0 %3430
      %3432 = vrot.lane.b32.xlu0 %v783, 112
      %v3433 = vpop.permute.xlu0 %3432
      %3434 = vrot.lane.b32.xlu0 %v788, 112
      %v3435 = vpop.permute.xlu0 %3434
      %v3445 = vsel %vm2409, %v3066, 0
      %v3448 = vsel %vm2409, %v3067, 0
      %v3451 = vsel %vm2409, %v3068, 0
      %v3454 = vsel %vm2409, %v3069, 0
      %v3457 = vsel %vm2409, %v3070, 0
      %v3460 = vsel %vm2409, %v3071, 0
      %v3463 = vsel %vm2409, %v3072, 0
      %v3466 = vsel %vm2409, %v3073, 0
      %3468 = vmatprep.subr.mxu0 0.0
      %3469 = vmatpush1.msra.mxu0 0.0
      %3470 = vmatprep.subr.mxu0 0.0
      %3471 = vmatpush1.msra.mxu0 0.0
      %3472 = vmatprep.subr.mxu0 0.0
      %3473 = vmatpush1.msra.mxu0 0.0
      %3474 = vmatprep.subr.mxu0 0.0
      %3475 = vmatpush1.msra.mxu0 0.0
      %3476 = vmatprep.subr.mxu0 0.0
      %3477 = vmatpush1.msra.mxu0 0.0
      %3478 = vmatprep.subr.mxu0 0.0
      %3479 = vmatpush1.msra.mxu0 0.0
      %3480 = vmatprep.subr.mxu0 0.0
      %3481 = vmatpush1.msra.mxu0 0.0
      %3482 = vmatprep.subr.mxu0 0.0
      %3483 = vmatpush1.msra.mxu0 0.0
      %3484 = vmatprep.subr.mxu0 0.0
      %3485 = vmatpush1.msra.mxu0 %v3435
      %3486 = vmatprep.subr.mxu0 0.0
      %3487 = vmatpush1.msra.mxu0 %v3433
      %3488 = vmatprep.subr.mxu0 0.0
      %3489 = vmatpush1.msra.mxu0 %v3431
      %3490 = vmatprep.subr.mxu0 0.0
      %3491 = vmatpush1.msra.mxu0 %v3429
      %3492 = vmatprep.subr.mxu0 0.0
      %3493 = vmatpush1.msra.mxu0 %v3427
      %3494 = vmatprep.subr.mxu0 0.0
      %3495 = vmatpush1.msra.mxu0 %v3425
      %3496 = vmatprep.subr.mxu0 0.0
      %3497 = vmatpush1.msra.mxu0 %v3423
      %3498 = vmatprep.subr.mxu0 0.0
      %3499 = vmatpush1.msra.mxu0 %v3421
      %3500 = vmatprep.subr.mxu0 0.0
      %3501 = vmatpush2.msra.mxu0 0.0
      %3502 = vmatprep.subr.mxu0 0.0
      %3503 = vmatpush2.msra.mxu0 0.0
      %3504 = vmatprep.subr.mxu0 0.0
      %3505 = vmatpush2.msra.mxu0 0.0
      %3506 = vmatprep.subr.mxu0 0.0
      %3507 = vmatpush2.msra.mxu0 0.0
      %3508 = vmatprep.subr.mxu0 0.0
      %3509 = vmatpush2.msra.mxu0 0.0
      %3510 = vmatprep.subr.mxu0 0.0
      %3511 = vmatpush2.msra.mxu0 0.0
      %3512 = vmatprep.subr.mxu0 0.0
      %3513 = vmatpush2.msra.mxu0 0.0
      %3514 = vmatprep.subr.mxu0 0.0
      %3515 = vmatpush2.msra.mxu0 0.0
      %3516 = vmatprep.subr.mxu0 0.0
      %3517 = vmatpush2.msra.mxu0 0.0
      %3518 = vmatprep.subr.mxu0 0.0
      %3519 = vmatpush2.msra.mxu0 0.0
      %3520 = vmatprep.subr.mxu0 0.0
      %3521 = vmatpush2.msra.mxu0 0.0
      %3522 = vmatprep.subr.mxu0 0.0
      %3523 = vmatpush2.msra.mxu0 0.0
      %3524 = vmatprep.subr.mxu0 0.0
      %3525 = vmatpush2.msra.mxu0 0.0
      %3526 = vmatprep.subr.mxu0 0.0
      %3527 = vmatpush2.msra.mxu0 0.0
      %3528 = vmatprep.subr.mxu0 0.0
      %3529 = vmatpush2.msra.mxu0 0.0
      %3530 = vmatprep.subr.mxu0 0.0
      %3531 = vmatpush2.msra.mxu0 0.0
      %3532 = vmatprep.mubr.f32.mxu0 0.0
      %3533 = vmatmul.mubr.f32.gmra.mxu0 %v3445
      %v3534 = vpop.f32.mrf.mxu0
      %v3535 = vadd.f32 0.0, %v3534
      %v3536 = vpop.f32.mrf.mxu0
      %3537 = vmatprep.mubr.f32.mxu0 0.0
      %3538 = vmatmul.mubr.f32.gmra.mxu0 %v3448
      %v3539 = vpop.f32.mrf.mxu0
      %v3540 = vadd.f32 0.0, %v3539
      %v3541 = vpop.f32.mrf.mxu0
      %3542 = vmatprep.mubr.f32.mxu0 0.0
      %3543 = vmatmul.mubr.f32.gmra.mxu0 %v3451
      %v3544 = vpop.f32.mrf.mxu0
      %v3545 = vadd.f32 0.0, %v3544
      %v3546 = vpop.f32.mrf.mxu0
      %3547 = vmatprep.mubr.f32.mxu0 0.0
      %3548 = vmatmul.mubr.f32.gmra.mxu0 %v3454
      %v3549 = vpop.f32.mrf.mxu0
      %v3550 = vadd.f32 0.0, %v3549
      %v3551 = vpop.f32.mrf.mxu0
      %3552 = vmatprep.mubr.f32.mxu0 0.0
      %3553 = vmatmul.mubr.f32.gmra.mxu0 %v3457
      %v3554 = vpop.f32.mrf.mxu0
      %v3555 = vadd.f32 0.0, %v3554
      %v3556 = vpop.f32.mrf.mxu0
      %3557 = vmatprep.mubr.f32.mxu0 0.0
      %3558 = vmatmul.mubr.f32.gmra.mxu0 %v3460
      %v3559 = vpop.f32.mrf.mxu0
      %v3560 = vadd.f32 0.0, %v3559
      %v3561 = vpop.f32.mrf.mxu0
      %3562 = vmatprep.mubr.f32.mxu0 0.0
      %3563 = vmatmul.mubr.f32.gmra.mxu0 %v3463
      %v3564 = vpop.f32.mrf.mxu0
      %v3565 = vadd.f32 0.0, %v3564
      %v3566 = vpop.f32.mrf.mxu0
      %3567 = vmatprep.mubr.f32.mxu0 0.0
      %3568 = vmatmul.mubr.f32.gmra.mxu0 %v3466
      %v3569 = vpop.f32.mrf.mxu0
      %v3570 = vadd.f32 0.0, %v3569
      %v3571 = vpop.f32.mrf.mxu0
      %3572 = vdwg.mxu0
      %3573 = vrot.lane.b32.xlu0 %v793, 112
      %v3574 = vpop.permute.xlu0 %3573
      %3575 = vrot.lane.b32.xlu0 %v798, 112
      %v3576 = vpop.permute.xlu0 %3575
      %3577 = vrot.lane.b32.xlu0 %v803, 112
      %v3578 = vpop.permute.xlu0 %3577
      %3579 = vrot.lane.b32.xlu0 %v808, 112
      %v3580 = vpop.permute.xlu0 %3579
      %3581 = vrot.lane.b32.xlu0 %v813, 112
      %v3582 = vpop.permute.xlu0 %3581
      %3583 = vrot.lane.b32.xlu0 %v818, 112
      %v3584 = vpop.permute.xlu0 %3583
      %3585 = vrot.lane.b32.xlu0 %v823, 112
      %v3586 = vpop.permute.xlu0 %3585
      %3587 = vrot.lane.b32.xlu0 %v828, 112
      %v3588 = vpop.permute.xlu0 %3587
      %v3598 = vsel %vm2409, %v3074, 0
      %v3601 = vsel %vm2409, %v3075, 0
      %v3604 = vsel %vm2409, %v3076, 0
      %v3607 = vsel %vm2409, %v3077, 0
      %v3610 = vsel %vm2409, %v3078, 0
      %v3613 = vsel %vm2409, %v3079, 0
      %v3616 = vsel %vm2409, %v3080, 0
      %v3619 = vsel %vm2409, %v3081, 0
      %3621 = vmatprep.subr.mxu0 0.0
      %3622 = vmatpush1.msra.mxu0 0.0
      %3623 = vmatprep.subr.mxu0 0.0
      %3624 = vmatpush1.msra.mxu0 0.0
      %3625 = vmatprep.subr.mxu0 0.0
      %3626 = vmatpush1.msra.mxu0 0.0
      %3627 = vmatprep.subr.mxu0 0.0
      %3628 = vmatpush1.msra.mxu0 0.0
      %3629 = vmatprep.subr.mxu0 0.0
      %3630 = vmatpush1.msra.mxu0 0.0
      %3631 = vmatprep.subr.mxu0 0.0
      %3632 = vmatpush1.msra.mxu0 0.0
      %3633 = vmatprep.subr.mxu0 0.0
      %3634 = vmatpush1.msra.mxu0 0.0
      %3635 = vmatprep.subr.mxu0 0.0
      %3636 = vmatpush1.msra.mxu0 0.0
      %3637 = vmatprep.subr.mxu0 0.0
      %3638 = vmatpush1.msra.mxu0 %v3588
      %3639 = vmatprep.subr.mxu0 0.0
      %3640 = vmatpush1.msra.mxu0 %v3586
      %3641 = vmatprep.subr.mxu0 0.0
      %3642 = vmatpush1.msra.mxu0 %v3584
      %3643 = vmatprep.subr.mxu0 0.0
      %3644 = vmatpush1.msra.mxu0 %v3582
      %3645 = vmatprep.subr.mxu0 0.0
      %3646 = vmatpush1.msra.mxu0 %v3580
      %3647 = vmatprep.subr.mxu0 0.0
      %3648 = vmatpush1.msra.mxu0 %v3578
      %3649 = vmatprep.subr.mxu0 0.0
      %3650 = vmatpush1.msra.mxu0 %v3576
      %3651 = vmatprep.subr.mxu0 0.0
      %3652 = vmatpush1.msra.mxu0 %v3574
      %3653 = vmatprep.subr.mxu0 0.0
      %3654 = vmatpush2.msra.mxu0 0.0
      %3655 = vmatprep.subr.mxu0 0.0
      %3656 = vmatpush2.msra.mxu0 0.0
      %3657 = vmatprep.subr.mxu0 0.0
      %3658 = vmatpush2.msra.mxu0 0.0
      %3659 = vmatprep.subr.mxu0 0.0
      %3660 = vmatpush2.msra.mxu0 0.0
      %3661 = vmatprep.subr.mxu0 0.0
      %3662 = vmatpush2.msra.mxu0 0.0
      %3663 = vmatprep.subr.mxu0 0.0
      %3664 = vmatpush2.msra.mxu0 0.0
      %3665 = vmatprep.subr.mxu0 0.0
      %3666 = vmatpush2.msra.mxu0 0.0
      %3667 = vmatprep.subr.mxu0 0.0
      %3668 = vmatpush2.msra.mxu0 0.0
      %3669 = vmatprep.subr.mxu0 0.0
      %3670 = vmatpush2.msra.mxu0 0.0
      %3671 = vmatprep.subr.mxu0 0.0
      %3672 = vmatpush2.msra.mxu0 0.0
      %3673 = vmatprep.subr.mxu0 0.0
      %3674 = vmatpush2.msra.mxu0 0.0
      %3675 = vmatprep.subr.mxu0 0.0
      %3676 = vmatpush2.msra.mxu0 0.0
      %3677 = vmatprep.subr.mxu0 0.0
      %3678 = vmatpush2.msra.mxu0 0.0
      %3679 = vmatprep.subr.mxu0 0.0
      %3680 = vmatpush2.msra.mxu0 0.0
      %3681 = vmatprep.subr.mxu0 0.0
      %3682 = vmatpush2.msra.mxu0 0.0
      %3683 = vmatprep.subr.mxu0 0.0
      %3684 = vmatpush2.msra.mxu0 0.0
      %3685 = vmatprep.mubr.f32.mxu0 0.0
      %3686 = vmatmul.mubr.f32.gmra.mxu0 %v3598
      %v3687 = vpop.f32.mrf.mxu0
      %v3688 = vadd.f32 0.0, %v3687
      %v3689 = vpop.f32.mrf.mxu0
      %3690 = vmatprep.mubr.f32.mxu0 0.0
      %3691 = vmatmul.mubr.f32.gmra.mxu0 %v3601
      %v3692 = vpop.f32.mrf.mxu0
      %v3693 = vadd.f32 0.0, %v3692
      %v3694 = vpop.f32.mrf.mxu0
      %3695 = vmatprep.mubr.f32.mxu0 0.0
      %3696 = vmatmul.mubr.f32.gmra.mxu0 %v3604
      %v3697 = vpop.f32.mrf.mxu0
      %v3698 = vadd.f32 0.0, %v3697
      %v3699 = vpop.f32.mrf.mxu0
      %3700 = vmatprep.mubr.f32.mxu0 0.0
      %3701 = vmatmul.mubr.f32.gmra.mxu0 %v3607
      %v3702 = vpop.f32.mrf.mxu0
      %v3703 = vadd.f32 0.0, %v3702
      %v3704 = vpop.f32.mrf.mxu0
      %3705 = vmatprep.mubr.f32.mxu0 0.0
      %3706 = vmatmul.mubr.f32.gmra.mxu0 %v3610
      %v3707 = vpop.f32.mrf.mxu0
      %v3708 = vadd.f32 0.0, %v3707
      %v3709 = vpop.f32.mrf.mxu0
      %3710 = vmatprep.mubr.f32.mxu0 0.0
      %3711 = vmatmul.mubr.f32.gmra.mxu0 %v3613
      %v3712 = vpop.f32.mrf.mxu0
      %v3713 = vadd.f32 0.0, %v3712
      %v3714 = vpop.f32.mrf.mxu0
      %3715 = vmatprep.mubr.f32.mxu0 0.0
      %3716 = vmatmul.mubr.f32.gmra.mxu0 %v3616
      %v3717 = vpop.f32.mrf.mxu0
      %v3718 = vadd.f32 0.0, %v3717
      %v3719 = vpop.f32.mrf.mxu0
      %3720 = vmatprep.mubr.f32.mxu0 0.0
      %3721 = vmatmul.mubr.f32.gmra.mxu0 %v3619
      %v3722 = vpop.f32.mrf.mxu0
      %v3723 = vadd.f32 0.0, %v3722
      %v3724 = vpop.f32.mrf.mxu0
      %3725 = vdwg.mxu0
      %3726 = vrot.lane.b32.xlu0 %v833, 112
      %v3727 = vpop.permute.xlu0 %3726
      %3728 = vrot.lane.b32.xlu0 %v838, 112
      %v3729 = vpop.permute.xlu0 %3728
      %3730 = vrot.lane.b32.xlu0 %v843, 112
      %v3731 = vpop.permute.xlu0 %3730
      %3732 = vrot.lane.b32.xlu0 %v848, 112
      %v3733 = vpop.permute.xlu0 %3732
      %3734 = vrot.lane.b32.xlu0 %v853, 112
      %v3735 = vpop.permute.xlu0 %3734
      %3736 = vrot.lane.b32.xlu0 %v858, 112
      %v3737 = vpop.permute.xlu0 %3736
      %3738 = vrot.lane.b32.xlu0 %v863, 112
      %v3739 = vpop.permute.xlu0 %3738
      %3740 = vrot.lane.b32.xlu0 %v868, 112
      %v3741 = vpop.permute.xlu0 %3740
      %v3751 = vsel %vm2409, %v3082, 0
      %v3754 = vsel %vm2409, %v3083, 0
      %v3757 = vsel %vm2409, %v3084, 0
      %v3760 = vsel %vm2409, %v3085, 0
      %v3763 = vsel %vm2409, %v3086, 0
      %v3766 = vsel %vm2409, %v3087, 0
      %v3769 = vsel %vm2409, %v3088, 0
      %v3772 = vsel %vm2409, %v3089, 0
      %3774 = vmatprep.subr.mxu0 0.0
      %3775 = vmatpush1.msra.mxu0 0.0
      %3776 = vmatprep.subr.mxu0 0.0
      %3777 = vmatpush1.msra.mxu0 0.0
      %3778 = vmatprep.subr.mxu0 0.0
      %3779 = vmatpush1.msra.mxu0 0.0
      %3780 = vmatprep.subr.mxu0 0.0
      %3781 = vmatpush1.msra.mxu0 0.0
      %3782 = vmatprep.subr.mxu0 0.0
      %3783 = vmatpush1.msra.mxu0 0.0
      %3784 = vmatprep.subr.mxu0 0.0
      %3785 = vmatpush1.msra.mxu0 0.0
      %3786 = vmatprep.subr.mxu0 0.0
      %3787 = vmatpush1.msra.mxu0 0.0
      %3788 = vmatprep.subr.mxu0 0.0
      %3789 = vmatpush1.msra.mxu0 0.0
      %3790 = vmatprep.subr.mxu0 0.0
      %3791 = vmatpush1.msra.mxu0 %v3741
      %3792 = vmatprep.subr.mxu0 0.0
      %3793 = vmatpush1.msra.mxu0 %v3739
      %3794 = vmatprep.subr.mxu0 0.0
      %3795 = vmatpush1.msra.mxu0 %v3737
      %3796 = vmatprep.subr.mxu0 0.0
      %3797 = vmatpush1.msra.mxu0 %v3735
      %3798 = vmatprep.subr.mxu0 0.0
      %3799 = vmatpush1.msra.mxu0 %v3733
      %3800 = vmatprep.subr.mxu0 0.0
      %3801 = vmatpush1.msra.mxu0 %v3731
      %3802 = vmatprep.subr.mxu0 0.0
      %3803 = vmatpush1.msra.mxu0 %v3729
      %3804 = vmatprep.subr.mxu0 0.0
      %3805 = vmatpush1.msra.mxu0 %v3727
      %3806 = vmatprep.subr.mxu0 0.0
      %3807 = vmatpush2.msra.mxu0 0.0
      %3808 = vmatprep.subr.mxu0 0.0
      %3809 = vmatpush2.msra.mxu0 0.0
      %3810 = vmatprep.subr.mxu0 0.0
      %3811 = vmatpush2.msra.mxu0 0.0
      %3812 = vmatprep.subr.mxu0 0.0
      %3813 = vmatpush2.msra.mxu0 0.0
      %3814 = vmatprep.subr.mxu0 0.0
      %3815 = vmatpush2.msra.mxu0 0.0
      %3816 = vmatprep.subr.mxu0 0.0
      %3817 = vmatpush2.msra.mxu0 0.0
      %3818 = vmatprep.subr.mxu0 0.0
      %3819 = vmatpush2.msra.mxu0 0.0
      %3820 = vmatprep.subr.mxu0 0.0
      %3821 = vmatpush2.msra.mxu0 0.0
      %3822 = vmatprep.subr.mxu0 0.0
      %3823 = vmatpush2.msra.mxu0 0.0
      %3824 = vmatprep.subr.mxu0 0.0
      %3825 = vmatpush2.msra.mxu0 0.0
      %3826 = vmatprep.subr.mxu0 0.0
      %3827 = vmatpush2.msra.mxu0 0.0
      %3828 = vmatprep.subr.mxu0 0.0
      %3829 = vmatpush2.msra.mxu0 0.0
      %3830 = vmatprep.subr.mxu0 0.0
      %3831 = vmatpush2.msra.mxu0 0.0
      %3832 = vmatprep.subr.mxu0 0.0
      %3833 = vmatpush2.msra.mxu0 0.0
      %3834 = vmatprep.subr.mxu0 0.0
      %3835 = vmatpush2.msra.mxu0 0.0
      %3836 = vmatprep.subr.mxu0 0.0
      %3837 = vmatpush2.msra.mxu0 0.0
      %3838 = vmatprep.mubr.f32.mxu0 0.0
      %3839 = vmatmul.mubr.f32.gmra.mxu0 %v3751
      %v3840 = vpop.f32.mrf.mxu0
      %v3841 = vadd.f32 0.0, %v3840
      %v3842 = vpop.f32.mrf.mxu0
      %3843 = vmatprep.mubr.f32.mxu0 0.0
      %3844 = vmatmul.mubr.f32.gmra.mxu0 %v3754
      %v3845 = vpop.f32.mrf.mxu0
      %v3846 = vadd.f32 0.0, %v3845
      %v3847 = vpop.f32.mrf.mxu0
      %3848 = vmatprep.mubr.f32.mxu0 0.0
      %3849 = vmatmul.mubr.f32.gmra.mxu0 %v3757
      %v3850 = vpop.f32.mrf.mxu0
      %v3851 = vadd.f32 0.0, %v3850
      %v3852 = vpop.f32.mrf.mxu0
      %3853 = vmatprep.mubr.f32.mxu0 0.0
      %3854 = vmatmul.mubr.f32.gmra.mxu0 %v3760
      %v3855 = vpop.f32.mrf.mxu0
      %v3856 = vadd.f32 0.0, %v3855
      %v3857 = vpop.f32.mrf.mxu0
      %3858 = vmatprep.mubr.f32.mxu0 0.0
      %3859 = vmatmul.mubr.f32.gmra.mxu0 %v3763
      %v3860 = vpop.f32.mrf.mxu0
      %v3861 = vadd.f32 0.0, %v3860
      %v3862 = vpop.f32.mrf.mxu0
      %3863 = vmatprep.mubr.f32.mxu0 0.0
      %3864 = vmatmul.mubr.f32.gmra.mxu0 %v3766
      %v3865 = vpop.f32.mrf.mxu0
      %v3866 = vadd.f32 0.0, %v3865
      %v3867 = vpop.f32.mrf.mxu0
      %3868 = vmatprep.mubr.f32.mxu0 0.0
      %3869 = vmatmul.mubr.f32.gmra.mxu0 %v3769
      %v3870 = vpop.f32.mrf.mxu0
      %v3871 = vadd.f32 0.0, %v3870
      %v3872 = vpop.f32.mrf.mxu0
      %3873 = vmatprep.mubr.f32.mxu0 0.0
      %3874 = vmatmul.mubr.f32.gmra.mxu0 %v3772
      %v3875 = vpop.f32.mrf.mxu0
      %v3876 = vadd.f32 0.0, %v3875
      %v3877 = vpop.f32.mrf.mxu0
      %3878 = vdwg.mxu0
      %3879 = vrot.lane.b32.xlu0 %v873, 112
      %v3880 = vpop.permute.xlu0 %3879
      %3881 = vrot.lane.b32.xlu0 %v878, 112
      %v3882 = vpop.permute.xlu0 %3881
      %3883 = vrot.lane.b32.xlu0 %v883, 112
      %v3884 = vpop.permute.xlu0 %3883
      %3885 = vrot.lane.b32.xlu0 %v888, 112
      %v3886 = vpop.permute.xlu0 %3885
      %3887 = vrot.lane.b32.xlu0 %v893, 112
      %v3888 = vpop.permute.xlu0 %3887
      %3889 = vrot.lane.b32.xlu0 %v898, 112
      %v3890 = vpop.permute.xlu0 %3889
      %3891 = vrot.lane.b32.xlu0 %v903, 112
      %v3892 = vpop.permute.xlu0 %3891
      %3893 = vrot.lane.b32.xlu0 %v908, 112
      %v3894 = vpop.permute.xlu0 %3893
      %v3904 = vsel %vm2409, %v3090, 0
      %v3907 = vsel %vm2409, %v3091, 0
      %v3910 = vsel %vm2409, %v3092, 0
      %v3913 = vsel %vm2409, %v3093, 0
      %v3916 = vsel %vm2409, %v3094, 0
      %v3919 = vsel %vm2409, %v3095, 0
      %v3922 = vsel %vm2409, %v3096, 0
      %v3925 = vsel %vm2409, %v3097, 0
      %3927 = vmatprep.subr.mxu0 0.0
      %3928 = vmatpush1.msra.mxu0 0.0
      %3929 = vmatprep.subr.mxu0 0.0
      %3930 = vmatpush1.msra.mxu0 0.0
      %3931 = vmatprep.subr.mxu0 0.0
      %3932 = vmatpush1.msra.mxu0 0.0
      %3933 = vmatprep.subr.mxu0 0.0
      %3934 = vmatpush1.msra.mxu0 0.0
      %3935 = vmatprep.subr.mxu0 0.0
      %3936 = vmatpush1.msra.mxu0 0.0
      %3937 = vmatprep.subr.mxu0 0.0
      %3938 = vmatpush1.msra.mxu0 0.0
      %3939 = vmatprep.subr.mxu0 0.0
      %3940 = vmatpush1.msra.mxu0 0.0
      %3941 = vmatprep.subr.mxu0 0.0
      %3942 = vmatpush1.msra.mxu0 0.0
      %3943 = vmatprep.subr.mxu0 0.0
      %3944 = vmatpush1.msra.mxu0 %v3894
      %3945 = vmatprep.subr.mxu0 0.0
      %3946 = vmatpush1.msra.mxu0 %v3892
      %3947 = vmatprep.subr.mxu0 0.0
      %3948 = vmatpush1.msra.mxu0 %v3890
      %3949 = vmatprep.subr.mxu0 0.0
      %3950 = vmatpush1.msra.mxu0 %v3888
      %3951 = vmatprep.subr.mxu0 0.0
      %3952 = vmatpush1.msra.mxu0 %v3886
      %3953 = vmatprep.subr.mxu0 0.0
      %3954 = vmatpush1.msra.mxu0 %v3884
      %3955 = vmatprep.subr.mxu0 0.0
      %3956 = vmatpush1.msra.mxu0 %v3882
      %3957 = vmatprep.subr.mxu0 0.0
      %3958 = vmatpush1.msra.mxu0 %v3880
      %3959 = vmatprep.subr.mxu0 0.0
      %3960 = vmatpush2.msra.mxu0 0.0
      %3961 = vmatprep.subr.mxu0 0.0
      %3962 = vmatpush2.msra.mxu0 0.0
      %3963 = vmatprep.subr.mxu0 0.0
      %3964 = vmatpush2.msra.mxu0 0.0
      %3965 = vmatprep.subr.mxu0 0.0
      %3966 = vmatpush2.msra.mxu0 0.0
      %3967 = vmatprep.subr.mxu0 0.0
      %3968 = vmatpush2.msra.mxu0 0.0
      %3969 = vmatprep.subr.mxu0 0.0
      %3970 = vmatpush2.msra.mxu0 0.0
      %3971 = vmatprep.subr.mxu0 0.0
      %3972 = vmatpush2.msra.mxu0 0.0
      %3973 = vmatprep.subr.mxu0 0.0
      %3974 = vmatpush2.msra.mxu0 0.0
      %3975 = vmatprep.subr.mxu0 0.0
      %3976 = vmatpush2.msra.mxu0 0.0
      %3977 = vmatprep.subr.mxu0 0.0
      %3978 = vmatpush2.msra.mxu0 0.0
      %3979 = vmatprep.subr.mxu0 0.0
      %3980 = vmatpush2.msra.mxu0 0.0
      %3981 = vmatprep.subr.mxu0 0.0
      %3982 = vmatpush2.msra.mxu0 0.0
      %3983 = vmatprep.subr.mxu0 0.0
      %3984 = vmatpush2.msra.mxu0 0.0
      %3985 = vmatprep.subr.mxu0 0.0
      %3986 = vmatpush2.msra.mxu0 0.0
      %3987 = vmatprep.subr.mxu0 0.0
      %3988 = vmatpush2.msra.mxu0 0.0
      %3989 = vmatprep.subr.mxu0 0.0
      %3990 = vmatpush2.msra.mxu0 0.0
      %3991 = vmatprep.mubr.f32.mxu0 0.0
      %3992 = vmatmul.mubr.f32.gmra.mxu0 %v3904
      %v3993 = vpop.f32.mrf.mxu0
      %v3994 = vadd.f32 0.0, %v3993
      %v3995 = vpop.f32.mrf.mxu0
      %3996 = vmatprep.mubr.f32.mxu0 0.0
      %3997 = vmatmul.mubr.f32.gmra.mxu0 %v3907
      %v3998 = vpop.f32.mrf.mxu0
      %v3999 = vadd.f32 0.0, %v3998
      %v4000 = vpop.f32.mrf.mxu0
      %4001 = vmatprep.mubr.f32.mxu0 0.0
      %4002 = vmatmul.mubr.f32.gmra.mxu0 %v3910
      %v4003 = vpop.f32.mrf.mxu0
      %v4004 = vadd.f32 0.0, %v4003
      %v4005 = vpop.f32.mrf.mxu0
      %4006 = vmatprep.mubr.f32.mxu0 0.0
      %4007 = vmatmul.mubr.f32.gmra.mxu0 %v3913
      %v4008 = vpop.f32.mrf.mxu0
      %v4009 = vadd.f32 0.0, %v4008
      %v4010 = vpop.f32.mrf.mxu0
      %4011 = vmatprep.mubr.f32.mxu0 0.0
      %4012 = vmatmul.mubr.f32.gmra.mxu0 %v3916
      %v4013 = vpop.f32.mrf.mxu0
      %v4014 = vadd.f32 0.0, %v4013
      %v4015 = vpop.f32.mrf.mxu0
      %4016 = vmatprep.mubr.f32.mxu0 0.0
      %4017 = vmatmul.mubr.f32.gmra.mxu0 %v3919
      %v4018 = vpop.f32.mrf.mxu0
      %v4019 = vadd.f32 0.0, %v4018
      %v4020 = vpop.f32.mrf.mxu0
      %4021 = vmatprep.mubr.f32.mxu0 0.0
      %4022 = vmatmul.mubr.f32.gmra.mxu0 %v3922
      %v4023 = vpop.f32.mrf.mxu0
      %v4024 = vadd.f32 0.0, %v4023
      %v4025 = vpop.f32.mrf.mxu0
      %4026 = vmatprep.mubr.f32.mxu0 0.0
      %4027 = vmatmul.mubr.f32.gmra.mxu0 %v3925
      %v4028 = vpop.f32.mrf.mxu0
      %v4029 = vadd.f32 0.0, %v4028
      %v4030 = vpop.f32.mrf.mxu0
      %4031 = vdwg.mxu0
      %4032 = vrot.lane.b32.xlu0 %v913, 112
      %v4033 = vpop.permute.xlu0 %4032
      %4034 = vrot.lane.b32.xlu0 %v918, 112
      %v4035 = vpop.permute.xlu0 %4034
      %4036 = vrot.lane.b32.xlu0 %v923, 112
      %v4037 = vpop.permute.xlu0 %4036
      %4038 = vrot.lane.b32.xlu0 %v928, 112
      %v4039 = vpop.permute.xlu0 %4038
      %4040 = vrot.lane.b32.xlu0 %v933, 112
      %v4041 = vpop.permute.xlu0 %4040
      %4042 = vrot.lane.b32.xlu0 %v938, 112
      %v4043 = vpop.permute.xlu0 %4042
      %4044 = vrot.lane.b32.xlu0 %v943, 112
      %v4045 = vpop.permute.xlu0 %4044
      %4046 = vrot.lane.b32.xlu0 %v948, 112
      %v4047 = vpop.permute.xlu0 %4046
      %v4057 = vsel %vm2409, %v3098, 0
      %v4060 = vsel %vm2409, %v3099, 0
      %v4063 = vsel %vm2409, %v3100, 0
      %v4066 = vsel %vm2409, %v3101, 0
      %v4069 = vsel %vm2409, %v3102, 0
      %v4072 = vsel %vm2409, %v3103, 0
      %v4075 = vsel %vm2409, %v3104, 0
      %v4078 = vsel %vm2409, %v3105, 0
      %4080 = vmatprep.subr.mxu0 0.0
      %4081 = vmatpush1.msra.mxu0 0.0
      %4082 = vmatprep.subr.mxu0 0.0
      %4083 = vmatpush1.msra.mxu0 0.0
      %4084 = vmatprep.subr.mxu0 0.0
      %4085 = vmatpush1.msra.mxu0 0.0
      %4086 = vmatprep.subr.mxu0 0.0
      %4087 = vmatpush1.msra.mxu0 0.0
      %4088 = vmatprep.subr.mxu0 0.0
      %4089 = vmatpush1.msra.mxu0 0.0
      %4090 = vmatprep.subr.mxu0 0.0
      %4091 = vmatpush1.msra.mxu0 0.0
      %4092 = vmatprep.subr.mxu0 0.0
      %4093 = vmatpush1.msra.mxu0 0.0
      %4094 = vmatprep.subr.mxu0 0.0
      %4095 = vmatpush1.msra.mxu0 0.0
      %4096 = vmatprep.subr.mxu0 0.0
      %4097 = vmatpush1.msra.mxu0 %v4047
      %4098 = vmatprep.subr.mxu0 0.0
      %4099 = vmatpush1.msra.mxu0 %v4045
      %4100 = vmatprep.subr.mxu0 0.0
      %4101 = vmatpush1.msra.mxu0 %v4043
      %4102 = vmatprep.subr.mxu0 0.0
      %4103 = vmatpush1.msra.mxu0 %v4041
      %4104 = vmatprep.subr.mxu0 0.0
      %4105 = vmatpush1.msra.mxu0 %v4039
      %4106 = vmatprep.subr.mxu0 0.0
      %4107 = vmatpush1.msra.mxu0 %v4037
      %4108 = vmatprep.subr.mxu0 0.0
      %4109 = vmatpush1.msra.mxu0 %v4035
      %4110 = vmatprep.subr.mxu0 0.0
      %4111 = vmatpush1.msra.mxu0 %v4033
      %4112 = vmatprep.subr.mxu0 0.0
      %4113 = vmatpush2.msra.mxu0 0.0
      %4114 = vmatprep.subr.mxu0 0.0
      %4115 = vmatpush2.msra.mxu0 0.0
      %4116 = vmatprep.subr.mxu0 0.0
      %4117 = vmatpush2.msra.mxu0 0.0
      %4118 = vmatprep.subr.mxu0 0.0
      %4119 = vmatpush2.msra.mxu0 0.0
      %4120 = vmatprep.subr.mxu0 0.0
      %4121 = vmatpush2.msra.mxu0 0.0
      %4122 = vmatprep.subr.mxu0 0.0
      %4123 = vmatpush2.msra.mxu0 0.0
      %4124 = vmatprep.subr.mxu0 0.0
      %4125 = vmatpush2.msra.mxu0 0.0
      %4126 = vmatprep.subr.mxu0 0.0
      %4127 = vmatpush2.msra.mxu0 0.0
      %4128 = vmatprep.subr.mxu0 0.0
      %4129 = vmatpush2.msra.mxu0 0.0
      %4130 = vmatprep.subr.mxu0 0.0
      %4131 = vmatpush2.msra.mxu0 0.0
      %4132 = vmatprep.subr.mxu0 0.0
      %4133 = vmatpush2.msra.mxu0 0.0
      %4134 = vmatprep.subr.mxu0 0.0
      %4135 = vmatpush2.msra.mxu0 0.0
      %4136 = vmatprep.subr.mxu0 0.0
      %4137 = vmatpush2.msra.mxu0 0.0
      %4138 = vmatprep.subr.mxu0 0.0
      %4139 = vmatpush2.msra.mxu0 0.0
      %4140 = vmatprep.subr.mxu0 0.0
      %4141 = vmatpush2.msra.mxu0 0.0
      %4142 = vmatprep.subr.mxu0 0.0
      %4143 = vmatpush2.msra.mxu0 0.0
      %4144 = vmatprep.mubr.f32.mxu0 0.0
      %4145 = vmatmul.mubr.f32.gmra.mxu0 %v4057
      %v4146 = vpop.f32.mrf.mxu0
      %v4147 = vadd.f32 0.0, %v4146
      %v4148 = vpop.f32.mrf.mxu0
      %4149 = vmatprep.mubr.f32.mxu0 0.0
      %4150 = vmatmul.mubr.f32.gmra.mxu0 %v4060
      %v4151 = vpop.f32.mrf.mxu0
      %v4152 = vadd.f32 0.0, %v4151
      %v4153 = vpop.f32.mrf.mxu0
      %4154 = vmatprep.mubr.f32.mxu0 0.0
      %4155 = vmatmul.mubr.f32.gmra.mxu0 %v4063
      %v4156 = vpop.f32.mrf.mxu0
      %v4157 = vadd.f32 0.0, %v4156
      %v4158 = vpop.f32.mrf.mxu0
      %4159 = vmatprep.mubr.f32.mxu0 0.0
      %4160 = vmatmul.mubr.f32.gmra.mxu0 %v4066
      %v4161 = vpop.f32.mrf.mxu0
      %v4162 = vadd.f32 0.0, %v4161
      %v4163 = vpop.f32.mrf.mxu0
      %4164 = vmatprep.mubr.f32.mxu0 0.0
      %4165 = vmatmul.mubr.f32.gmra.mxu0 %v4069
      %v4166 = vpop.f32.mrf.mxu0
      %v4167 = vadd.f32 0.0, %v4166
      %v4168 = vpop.f32.mrf.mxu0
      %4169 = vmatprep.mubr.f32.mxu0 0.0
      %4170 = vmatmul.mubr.f32.gmra.mxu0 %v4072
      %v4171 = vpop.f32.mrf.mxu0
      %v4172 = vadd.f32 0.0, %v4171
      %v4173 = vpop.f32.mrf.mxu0
      %4174 = vmatprep.mubr.f32.mxu0 0.0
      %4175 = vmatmul.mubr.f32.gmra.mxu0 %v4075
      %v4176 = vpop.f32.mrf.mxu0
      %v4177 = vadd.f32 0.0, %v4176
      %v4178 = vpop.f32.mrf.mxu0
      %4179 = vmatprep.mubr.f32.mxu0 0.0
      %4180 = vmatmul.mubr.f32.gmra.mxu0 %v4078
      %v4181 = vpop.f32.mrf.mxu0
      %v4182 = vadd.f32 0.0, %v4181
      %v4183 = vpop.f32.mrf.mxu0
      %4184 = vdwg.mxu0
      %4185 = vrot.lane.b32.xlu0 %v953, 112
      %v4186 = vpop.permute.xlu0 %4185
      %4187 = vrot.lane.b32.xlu0 %v958, 112
      %v4188 = vpop.permute.xlu0 %4187
      %4189 = vrot.lane.b32.xlu0 %v963, 112
      %v4190 = vpop.permute.xlu0 %4189
      %4191 = vrot.lane.b32.xlu0 %v968, 112
      %v4192 = vpop.permute.xlu0 %4191
      %4193 = vrot.lane.b32.xlu0 %v973, 112
      %v4194 = vpop.permute.xlu0 %4193
      %4195 = vrot.lane.b32.xlu0 %v978, 112
      %v4196 = vpop.permute.xlu0 %4195
      %4197 = vrot.lane.b32.xlu0 %v983, 112
      %v4198 = vpop.permute.xlu0 %4197
      %4199 = vrot.lane.b32.xlu0 %v988, 112
      %v4200 = vpop.permute.xlu0 %4199
      %v4210 = vsel %vm2409, %v3106, 0
      %v4213 = vsel %vm2409, %v3107, 0
      %v4216 = vsel %vm2409, %v3108, 0
      %v4219 = vsel %vm2409, %v3109, 0
      %v4222 = vsel %vm2409, %v3110, 0
      %v4225 = vsel %vm2409, %v3111, 0
      %v4228 = vsel %vm2409, %v3112, 0
      %v4231 = vsel %vm2409, %v3113, 0
      %4233 = vmatprep.subr.mxu0 0.0
      %4234 = vmatpush1.msra.mxu0 0.0
      %4235 = vmatprep.subr.mxu0 0.0
      %4236 = vmatpush1.msra.mxu0 0.0
      %4237 = vmatprep.subr.mxu0 0.0
      %4238 = vmatpush1.msra.mxu0 0.0
      %4239 = vmatprep.subr.mxu0 0.0
      %4240 = vmatpush1.msra.mxu0 0.0
      %4241 = vmatprep.subr.mxu0 0.0
      %4242 = vmatpush1.msra.mxu0 0.0
      %4243 = vmatprep.subr.mxu0 0.0
      %4244 = vmatpush1.msra.mxu0 0.0
      %4245 = vmatprep.subr.mxu0 0.0
      %4246 = vmatpush1.msra.mxu0 0.0
      %4247 = vmatprep.subr.mxu0 0.0
      %4248 = vmatpush1.msra.mxu0 0.0
      %4249 = vmatprep.subr.mxu0 0.0
      %4250 = vmatpush1.msra.mxu0 %v4200
      %4251 = vmatprep.subr.mxu0 0.0
      %4252 = vmatpush1.msra.mxu0 %v4198
      %4253 = vmatprep.subr.mxu0 0.0
      %4254 = vmatpush1.msra.mxu0 %v4196
      %4255 = vmatprep.subr.mxu0 0.0
      %4256 = vmatpush1.msra.mxu0 %v4194
      %4257 = vmatprep.subr.mxu0 0.0
      %4258 = vmatpush1.msra.mxu0 %v4192
      %4259 = vmatprep.subr.mxu0 0.0
      %4260 = vmatpush1.msra.mxu0 %v4190
      %4261 = vmatprep.subr.mxu0 0.0
      %4262 = vmatpush1.msra.mxu0 %v4188
      %4263 = vmatprep.subr.mxu0 0.0
      %4264 = vmatpush1.msra.mxu0 %v4186
      %4265 = vmatprep.subr.mxu0 0.0
      %4266 = vmatpush2.msra.mxu0 0.0
      %4267 = vmatprep.subr.mxu0 0.0
      %4268 = vmatpush2.msra.mxu0 0.0
      %4269 = vmatprep.subr.mxu0 0.0
      %4270 = vmatpush2.msra.mxu0 0.0
      %4271 = vmatprep.subr.mxu0 0.0
      %4272 = vmatpush2.msra.mxu0 0.0
      %4273 = vmatprep.subr.mxu0 0.0
      %4274 = vmatpush2.msra.mxu0 0.0
      %4275 = vmatprep.subr.mxu0 0.0
      %4276 = vmatpush2.msra.mxu0 0.0
      %4277 = vmatprep.subr.mxu0 0.0
      %4278 = vmatpush2.msra.mxu0 0.0
      %4279 = vmatprep.subr.mxu0 0.0
      %4280 = vmatpush2.msra.mxu0 0.0
      %4281 = vmatprep.subr.mxu0 0.0
      %4282 = vmatpush2.msra.mxu0 0.0
      %4283 = vmatprep.subr.mxu0 0.0
      %4284 = vmatpush2.msra.mxu0 0.0
      %4285 = vmatprep.subr.mxu0 0.0
      %4286 = vmatpush2.msra.mxu0 0.0
      %4287 = vmatprep.subr.mxu0 0.0
      %4288 = vmatpush2.msra.mxu0 0.0
      %4289 = vmatprep.subr.mxu0 0.0
      %4290 = vmatpush2.msra.mxu0 0.0
      %4291 = vmatprep.subr.mxu0 0.0
      %4292 = vmatpush2.msra.mxu0 0.0
      %4293 = vmatprep.subr.mxu0 0.0
      %4294 = vmatpush2.msra.mxu0 0.0
      %4295 = vmatprep.subr.mxu0 0.0
      %4296 = vmatpush2.msra.mxu0 0.0
      %4297 = vmatprep.mubr.f32.mxu0 0.0
      %4298 = vmatmul.mubr.f32.gmra.mxu0 %v4210
      %v4299 = vpop.f32.mrf.mxu0
      %v4300 = vadd.f32 0.0, %v4299
      %v4301 = vpop.f32.mrf.mxu0
      %4302 = vmatprep.mubr.f32.mxu0 0.0
      %4303 = vmatmul.mubr.f32.gmra.mxu0 %v4213
      %v4304 = vpop.f32.mrf.mxu0
      %v4305 = vadd.f32 0.0, %v4304
      %v4306 = vpop.f32.mrf.mxu0
      %4307 = vmatprep.mubr.f32.mxu0 0.0
      %4308 = vmatmul.mubr.f32.gmra.mxu0 %v4216
      %v4309 = vpop.f32.mrf.mxu0
      %v4310 = vadd.f32 0.0, %v4309
      %v4311 = vpop.f32.mrf.mxu0
      %4312 = vmatprep.mubr.f32.mxu0 0.0
      %4313 = vmatmul.mubr.f32.gmra.mxu0 %v4219
      %v4314 = vpop.f32.mrf.mxu0
      %v4315 = vadd.f32 0.0, %v4314
      %v4316 = vpop.f32.mrf.mxu0
      %4317 = vmatprep.mubr.f32.mxu0 0.0
      %4318 = vmatmul.mubr.f32.gmra.mxu0 %v4222
      %v4319 = vpop.f32.mrf.mxu0
      %v4320 = vadd.f32 0.0, %v4319
      %v4321 = vpop.f32.mrf.mxu0
      %4322 = vmatprep.mubr.f32.mxu0 0.0
      %4323 = vmatmul.mubr.f32.gmra.mxu0 %v4225
      %v4324 = vpop.f32.mrf.mxu0
      %v4325 = vadd.f32 0.0, %v4324
      %v4326 = vpop.f32.mrf.mxu0
      %4327 = vmatprep.mubr.f32.mxu0 0.0
      %4328 = vmatmul.mubr.f32.gmra.mxu0 %v4228
      %v4329 = vpop.f32.mrf.mxu0
      %v4330 = vadd.f32 0.0, %v4329
      %v4331 = vpop.f32.mrf.mxu0
      %4332 = vmatprep.mubr.f32.mxu0 0.0
      %4333 = vmatmul.mubr.f32.gmra.mxu0 %v4231
      %v4334 = vpop.f32.mrf.mxu0
      %v4335 = vadd.f32 0.0, %v4334
      %v4336 = vpop.f32.mrf.mxu0
      %4337 = vdwg.mxu0
      %4338 = vrot.lane.b32.xlu0 %v992, 124
      %v4339 = vpop.permute.xlu0 %4338
      %4340 = vrot.lane.b32.xlu0 %v993, 124
      %v4341 = vpop.permute.xlu0 %4340
      %4342 = vrot.lane.b32.xlu0 %v994, 124
      %v4343 = vpop.permute.xlu0 %4342
      %4344 = vrot.lane.b32.xlu0 %v995, 124
      %v4345 = vpop.permute.xlu0 %4344
      %4346 = vrot.lane.b32.xlu0 %v996, 124
      %v4347 = vpop.permute.xlu0 %4346
      %4348 = vrot.lane.b32.xlu0 %v997, 124
      %v4349 = vpop.permute.xlu0 %4348
      %4350 = vrot.lane.b32.xlu0 %v998, 124
      %v4351 = vpop.permute.xlu0 %4350
      %4352 = vrot.lane.b32.xlu0 %v999, 124
      %v4353 = vpop.permute.xlu0 %4352
      %4354 = vrot.lane.b32.xlu0 %v673, 116
      %v4355 = vpop.permute.xlu0 %4354
      %4356 = vrot.lane.b32.xlu0 %v678, 116
      %v4357 = vpop.permute.xlu0 %4356
      %4358 = vrot.lane.b32.xlu0 %v683, 116
      %v4359 = vpop.permute.xlu0 %4358
      %4360 = vrot.lane.b32.xlu0 %v688, 116
      %v4361 = vpop.permute.xlu0 %4360
      %4362 = vrot.lane.b32.xlu0 %v693, 116
      %v4363 = vpop.permute.xlu0 %4362
      %4364 = vrot.lane.b32.xlu0 %v698, 116
      %v4365 = vpop.permute.xlu0 %4364
      %4366 = vrot.lane.b32.xlu0 %v703, 116
      %v4367 = vpop.permute.xlu0 %4366
      %4368 = vrot.lane.b32.xlu0 %v708, 116
      %v4369 = vpop.permute.xlu0 %4368
      %v4370 = vsel %vm1080, %v4339, 0
      %v4372 = vsel %vm1080, %v4341, 0
      %v4374 = vsel %vm1080, %v4343, 0
      %v4376 = vsel %vm1080, %v4345, 0
      %v4378 = vsel %vm1080, %v4347, 0
      %v4380 = vsel %vm1080, %v4349, 0
      %v4382 = vsel %vm1080, %v4351, 0
      %v4384 = vsel %vm1080, %v4353, 0
      %v4386 = vsel %vm1080, %v4355, 0
      %v4388 = vsel %vm1080, %v4357, 0
      %v4390 = vsel %vm1080, %v4359, 0
      %v4392 = vsel %vm1080, %v4361, 0
      %v4394 = vsel %vm1080, %v4363, 0
      %v4396 = vsel %vm1080, %v4365, 0
      %v4398 = vsel %vm1080, %v4367, 0
      %v4400 = vsel %vm1080, %v4369, 0
      %4402 = vmatprep.subr.mxu0 0.0
      %4403 = vmatpush1.xpose.msra.mxu0 0.0
      %4404 = vmatprep.subr.mxu0 0.0
      %4405 = vmatpush1.xpose.msra.mxu0 0.0
      %4406 = vmatprep.subr.mxu0 0.0
      %4407 = vmatpush1.xpose.msra.mxu0 0.0
      %4408 = vmatprep.subr.mxu0 0.0
      %4409 = vmatpush1.xpose.msra.mxu0 0.0
      %4410 = vmatprep.subr.mxu0 0.0
      %4411 = vmatpush1.xpose.msra.mxu0 0.0
      %4412 = vmatprep.subr.mxu0 0.0
      %4413 = vmatpush1.xpose.msra.mxu0 0.0
      %4414 = vmatprep.subr.mxu0 0.0
      %4415 = vmatpush1.xpose.msra.mxu0 0.0
      %4416 = vmatprep.subr.mxu0 0.0
      %4417 = vmatpush1.xpose.msra.mxu0 0.0
      %4418 = vmatprep.subr.mxu0 0.0
      %4419 = vmatpush1.xpose.msra.mxu0 %v4400
      %4420 = vmatprep.subr.mxu0 0.0
      %4421 = vmatpush1.xpose.msra.mxu0 %v4398
      %4422 = vmatprep.subr.mxu0 0.0
      %4423 = vmatpush1.xpose.msra.mxu0 %v4396
      %4424 = vmatprep.subr.mxu0 0.0
      %4425 = vmatpush1.xpose.msra.mxu0 %v4394
      %4426 = vmatprep.subr.mxu0 0.0
      %4427 = vmatpush1.xpose.msra.mxu0 %v4392
      %4428 = vmatprep.subr.mxu0 0.0
      %4429 = vmatpush1.xpose.msra.mxu0 %v4390
      %4430 = vmatprep.subr.mxu0 0.0
      %4431 = vmatpush1.xpose.msra.mxu0 %v4388
      %4432 = vmatprep.subr.mxu0 0.0
      %4433 = vmatpush1.xpose.msra.mxu0 %v4386
      %4434 = vmatprep.subr.mxu0 0.0
      %4435 = vmatpush2.xpose.msra.mxu0 0.0
      %4436 = vmatprep.subr.mxu0 0.0
      %4437 = vmatpush2.xpose.msra.mxu0 0.0
      %4438 = vmatprep.subr.mxu0 0.0
      %4439 = vmatpush2.xpose.msra.mxu0 0.0
      %4440 = vmatprep.subr.mxu0 0.0
      %4441 = vmatpush2.xpose.msra.mxu0 0.0
      %4442 = vmatprep.subr.mxu0 0.0
      %4443 = vmatpush2.xpose.msra.mxu0 0.0
      %4444 = vmatprep.subr.mxu0 0.0
      %4445 = vmatpush2.xpose.msra.mxu0 0.0
      %4446 = vmatprep.subr.mxu0 0.0
      %4447 = vmatpush2.xpose.msra.mxu0 0.0
      %4448 = vmatprep.subr.mxu0 0.0
      %4449 = vmatpush2.xpose.msra.mxu0 0.0
      %4450 = vmatprep.subr.mxu0 0.0
      %4451 = vmatpush2.xpose.msra.mxu0 0.0
      %4452 = vmatprep.subr.mxu0 0.0
      %4453 = vmatpush2.xpose.msra.mxu0 0.0
      %4454 = vmatprep.subr.mxu0 0.0
      %4455 = vmatpush2.xpose.msra.mxu0 0.0
      %4456 = vmatprep.subr.mxu0 0.0
      %4457 = vmatpush2.xpose.msra.mxu0 0.0
      %4458 = vmatprep.subr.mxu0 0.0
      %4459 = vmatpush2.xpose.msra.mxu0 0.0
      %4460 = vmatprep.subr.mxu0 0.0
      %4461 = vmatpush2.xpose.msra.mxu0 0.0
      %4462 = vmatprep.subr.mxu0 0.0
      %4463 = vmatpush2.xpose.msra.mxu0 0.0
      %4464 = vmatprep.subr.mxu0 0.0
      %4465 = vmatpush2.xpose.msra.mxu0 0.0
      %4466 = vmatprep.mubr.f32.mxu0 0.0
      %4467 = vmatmul.mubr.f32.gmra.mxu0 %v4370
      %v4468 = vpop.f32.mrf.mxu0
      %v4469 = vadd.f32 0.0, %v4468
      %v4470 = vpop.f32.mrf.mxu0
      %4471 = vmatprep.mubr.f32.mxu0 0.0
      %4472 = vmatmul.mubr.f32.gmra.mxu0 %v4372
      %v4473 = vpop.f32.mrf.mxu0
      %v4474 = vadd.f32 0.0, %v4473
      %v4475 = vpop.f32.mrf.mxu0
      %4476 = vmatprep.mubr.f32.mxu0 0.0
      %4477 = vmatmul.mubr.f32.gmra.mxu0 %v4374
      %v4478 = vpop.f32.mrf.mxu0
      %v4479 = vadd.f32 0.0, %v4478
      %v4480 = vpop.f32.mrf.mxu0
      %4481 = vmatprep.mubr.f32.mxu0 0.0
      %4482 = vmatmul.mubr.f32.gmra.mxu0 %v4376
      %v4483 = vpop.f32.mrf.mxu0
      %v4484 = vadd.f32 0.0, %v4483
      %v4485 = vpop.f32.mrf.mxu0
      %4486 = vmatprep.mubr.f32.mxu0 0.0
      %4487 = vmatmul.mubr.f32.gmra.mxu0 %v4378
      %v4488 = vpop.f32.mrf.mxu0
      %v4489 = vadd.f32 0.0, %v4488
      %v4490 = vpop.f32.mrf.mxu0
      %4491 = vmatprep.mubr.f32.mxu0 0.0
      %4492 = vmatmul.mubr.f32.gmra.mxu0 %v4380
      %v4493 = vpop.f32.mrf.mxu0
      %v4494 = vadd.f32 0.0, %v4493
      %v4495 = vpop.f32.mrf.mxu0
      %4496 = vmatprep.mubr.f32.mxu0 0.0
      %4497 = vmatmul.mubr.f32.gmra.mxu0 %v4382
      %v4498 = vpop.f32.mrf.mxu0
      %v4499 = vadd.f32 0.0, %v4498
      %v4500 = vpop.f32.mrf.mxu0
      %4501 = vmatprep.mubr.f32.mxu0 0.0
      %4502 = vmatmul.mubr.f32.gmra.mxu0 %v4384
      %v4503 = vpop.f32.mrf.mxu0
      %v4504 = vadd.f32 0.0, %v4503
      %v4505 = vpop.f32.mrf.mxu0
      %4506 = vdwg.mxu0
      %4507 = vrot.lane.b32.xlu0 %v1000, 124
      %v4508 = vpop.permute.xlu0 %4507
      %4509 = vrot.lane.b32.xlu0 %v1001, 124
      %v4510 = vpop.permute.xlu0 %4509
      %4511 = vrot.lane.b32.xlu0 %v1002, 124
      %v4512 = vpop.permute.xlu0 %4511
      %4513 = vrot.lane.b32.xlu0 %v1003, 124
      %v4514 = vpop.permute.xlu0 %4513
      %4515 = vrot.lane.b32.xlu0 %v1004, 124
      %v4516 = vpop.permute.xlu0 %4515
      %4517 = vrot.lane.b32.xlu0 %v1005, 124
      %v4518 = vpop.permute.xlu0 %4517
      %4519 = vrot.lane.b32.xlu0 %v1006, 124
      %v4520 = vpop.permute.xlu0 %4519
      %4521 = vrot.lane.b32.xlu0 %v1007, 124
      %v4522 = vpop.permute.xlu0 %4521
      %4523 = vrot.lane.b32.xlu0 %v713, 116
      %v4524 = vpop.permute.xlu0 %4523
      %4525 = vrot.lane.b32.xlu0 %v718, 116
      %v4526 = vpop.permute.xlu0 %4525
      %4527 = vrot.lane.b32.xlu0 %v723, 116
      %v4528 = vpop.permute.xlu0 %4527
      %4529 = vrot.lane.b32.xlu0 %v728, 116
      %v4530 = vpop.permute.xlu0 %4529
      %4531 = vrot.lane.b32.xlu0 %v733, 116
      %v4532 = vpop.permute.xlu0 %4531
      %4533 = vrot.lane.b32.xlu0 %v738, 116
      %v4534 = vpop.permute.xlu0 %4533
      %4535 = vrot.lane.b32.xlu0 %v743, 116
      %v4536 = vpop.permute.xlu0 %4535
      %4537 = vrot.lane.b32.xlu0 %v748, 116
      %v4538 = vpop.permute.xlu0 %4537
      %v4539 = vsel %vm1080, %v4508, 0
      %v4541 = vsel %vm1080, %v4510, 0
      %v4543 = vsel %vm1080, %v4512, 0
      %v4545 = vsel %vm1080, %v4514, 0
      %v4547 = vsel %vm1080, %v4516, 0
      %v4549 = vsel %vm1080, %v4518, 0
      %v4551 = vsel %vm1080, %v4520, 0
      %v4553 = vsel %vm1080, %v4522, 0
      %v4555 = vsel %vm1080, %v4524, 0
      %v4557 = vsel %vm1080, %v4526, 0
      %v4559 = vsel %vm1080, %v4528, 0
      %v4561 = vsel %vm1080, %v4530, 0
      %v4563 = vsel %vm1080, %v4532, 0
      %v4565 = vsel %vm1080, %v4534, 0
      %v4567 = vsel %vm1080, %v4536, 0
      %v4569 = vsel %vm1080, %v4538, 0
      %4571 = vmatprep.subr.mxu0 0.0
      %4572 = vmatpush1.xpose.msra.mxu0 0.0
      %4573 = vmatprep.subr.mxu0 0.0
      %4574 = vmatpush1.xpose.msra.mxu0 0.0
      %4575 = vmatprep.subr.mxu0 0.0
      %4576 = vmatpush1.xpose.msra.mxu0 0.0
      %4577 = vmatprep.subr.mxu0 0.0
      %4578 = vmatpush1.xpose.msra.mxu0 0.0
      %4579 = vmatprep.subr.mxu0 0.0
      %4580 = vmatpush1.xpose.msra.mxu0 0.0
      %4581 = vmatprep.subr.mxu0 0.0
      %4582 = vmatpush1.xpose.msra.mxu0 0.0
      %4583 = vmatprep.subr.mxu0 0.0
      %4584 = vmatpush1.xpose.msra.mxu0 0.0
      %4585 = vmatprep.subr.mxu0 0.0
      %4586 = vmatpush1.xpose.msra.mxu0 0.0
      %4587 = vmatprep.subr.mxu0 0.0
      %4588 = vmatpush1.xpose.msra.mxu0 %v4569
      %4589 = vmatprep.subr.mxu0 0.0
      %4590 = vmatpush1.xpose.msra.mxu0 %v4567
      %4591 = vmatprep.subr.mxu0 0.0
      %4592 = vmatpush1.xpose.msra.mxu0 %v4565
      %4593 = vmatprep.subr.mxu0 0.0
      %4594 = vmatpush1.xpose.msra.mxu0 %v4563
      %4595 = vmatprep.subr.mxu0 0.0
      %4596 = vmatpush1.xpose.msra.mxu0 %v4561
      %4597 = vmatprep.subr.mxu0 0.0
      %4598 = vmatpush1.xpose.msra.mxu0 %v4559
      %4599 = vmatprep.subr.mxu0 0.0
      %4600 = vmatpush1.xpose.msra.mxu0 %v4557
      %4601 = vmatprep.subr.mxu0 0.0
      %4602 = vmatpush1.xpose.msra.mxu0 %v4555
      %4603 = vmatprep.subr.mxu0 0.0
      %4604 = vmatpush2.xpose.msra.mxu0 0.0
      %4605 = vmatprep.subr.mxu0 0.0
      %4606 = vmatpush2.xpose.msra.mxu0 0.0
      %4607 = vmatprep.subr.mxu0 0.0
      %4608 = vmatpush2.xpose.msra.mxu0 0.0
      %4609 = vmatprep.subr.mxu0 0.0
      %4610 = vmatpush2.xpose.msra.mxu0 0.0
      %4611 = vmatprep.subr.mxu0 0.0
      %4612 = vmatpush2.xpose.msra.mxu0 0.0
      %4613 = vmatprep.subr.mxu0 0.0
      %4614 = vmatpush2.xpose.msra.mxu0 0.0
      %4615 = vmatprep.subr.mxu0 0.0
      %4616 = vmatpush2.xpose.msra.mxu0 0.0
      %4617 = vmatprep.subr.mxu0 0.0
      %4618 = vmatpush2.xpose.msra.mxu0 0.0
      %4619 = vmatprep.subr.mxu0 0.0
      %4620 = vmatpush2.xpose.msra.mxu0 0.0
      %4621 = vmatprep.subr.mxu0 0.0
      %4622 = vmatpush2.xpose.msra.mxu0 0.0
      %4623 = vmatprep.subr.mxu0 0.0
      %4624 = vmatpush2.xpose.msra.mxu0 0.0
      %4625 = vmatprep.subr.mxu0 0.0
      %4626 = vmatpush2.xpose.msra.mxu0 0.0
      %4627 = vmatprep.subr.mxu0 0.0
      %4628 = vmatpush2.xpose.msra.mxu0 0.0
      %4629 = vmatprep.subr.mxu0 0.0
      %4630 = vmatpush2.xpose.msra.mxu0 0.0
      %4631 = vmatprep.subr.mxu0 0.0
      %4632 = vmatpush2.xpose.msra.mxu0 0.0
      %4633 = vmatprep.subr.mxu0 0.0
      %4634 = vmatpush2.xpose.msra.mxu0 0.0
      %4635 = vmatprep.mubr.f32.mxu0 0.0
      %4636 = vmatmul.mubr.f32.gmra.mxu0 %v4539
      %v4637 = vpop.f32.mrf.mxu0
      %v4638 = vadd.f32 0.0, %v4637
      %v4639 = vpop.f32.mrf.mxu0
      %4640 = vmatprep.mubr.f32.mxu0 0.0
      %4641 = vmatmul.mubr.f32.gmra.mxu0 %v4541
      %v4642 = vpop.f32.mrf.mxu0
      %v4643 = vadd.f32 0.0, %v4642
      %v4644 = vpop.f32.mrf.mxu0
      %4645 = vmatprep.mubr.f32.mxu0 0.0
      %4646 = vmatmul.mubr.f32.gmra.mxu0 %v4543
      %v4647 = vpop.f32.mrf.mxu0
      %v4648 = vadd.f32 0.0, %v4647
      %v4649 = vpop.f32.mrf.mxu0
      %4650 = vmatprep.mubr.f32.mxu0 0.0
      %4651 = vmatmul.mubr.f32.gmra.mxu0 %v4545
      %v4652 = vpop.f32.mrf.mxu0
      %v4653 = vadd.f32 0.0, %v4652
      %v4654 = vpop.f32.mrf.mxu0
      %4655 = vmatprep.mubr.f32.mxu0 0.0
      %4656 = vmatmul.mubr.f32.gmra.mxu0 %v4547
      %v4657 = vpop.f32.mrf.mxu0
      %v4658 = vadd.f32 0.0, %v4657
      %v4659 = vpop.f32.mrf.mxu0
      %4660 = vmatprep.mubr.f32.mxu0 0.0
      %4661 = vmatmul.mubr.f32.gmra.mxu0 %v4549
      %v4662 = vpop.f32.mrf.mxu0
      %v4663 = vadd.f32 0.0, %v4662
      %v4664 = vpop.f32.mrf.mxu0
      %4665 = vmatprep.mubr.f32.mxu0 0.0
      %4666 = vmatmul.mubr.f32.gmra.mxu0 %v4551
      %v4667 = vpop.f32.mrf.mxu0
      %v4668 = vadd.f32 0.0, %v4667
      %v4669 = vpop.f32.mrf.mxu0
      %4670 = vmatprep.mubr.f32.mxu0 0.0
      %4671 = vmatmul.mubr.f32.gmra.mxu0 %v4553
      %v4672 = vpop.f32.mrf.mxu0
      %v4673 = vadd.f32 0.0, %v4672
      %v4674 = vpop.f32.mrf.mxu0
      %4675 = vdwg.mxu0
      %4676 = vrot.lane.b32.xlu0 %v1008, 124
      %v4677 = vpop.permute.xlu0 %4676
      %4678 = vrot.lane.b32.xlu0 %v1009, 124
      %v4679 = vpop.permute.xlu0 %4678
      %4680 = vrot.lane.b32.xlu0 %v1010, 124
      %v4681 = vpop.permute.xlu0 %4680
      %4682 = vrot.lane.b32.xlu0 %v1011, 124
      %v4683 = vpop.permute.xlu0 %4682
      %4684 = vrot.lane.b32.xlu0 %v1012, 124
      %v4685 = vpop.permute.xlu0 %4684
      %4686 = vrot.lane.b32.xlu0 %v1013, 124
      %v4687 = vpop.permute.xlu0 %4686
      %4688 = vrot.lane.b32.xlu0 %v1014, 124
      %v4689 = vpop.permute.xlu0 %4688
      %4690 = vrot.lane.b32.xlu0 %v1015, 124
      %v4691 = vpop.permute.xlu0 %4690
      %4692 = vrot.lane.b32.xlu0 %v753, 116
      %v4693 = vpop.permute.xlu0 %4692
      %4694 = vrot.lane.b32.xlu0 %v758, 116
      %v4695 = vpop.permute.xlu0 %4694
      %4696 = vrot.lane.b32.xlu0 %v763, 116
      %v4697 = vpop.permute.xlu0 %4696
      %4698 = vrot.lane.b32.xlu0 %v768, 116
      %v4699 = vpop.permute.xlu0 %4698
      %4700 = vrot.lane.b32.xlu0 %v773, 116
      %v4701 = vpop.permute.xlu0 %4700
      %4702 = vrot.lane.b32.xlu0 %v778, 116
      %v4703 = vpop.permute.xlu0 %4702
      %4704 = vrot.lane.b32.xlu0 %v783, 116
      %v4705 = vpop.permute.xlu0 %4704
      %4706 = vrot.lane.b32.xlu0 %v788, 116
      %v4707 = vpop.permute.xlu0 %4706
      %v4708 = vsel %vm1080, %v4677, 0
      %v4710 = vsel %vm1080, %v4679, 0
      %v4712 = vsel %vm1080, %v4681, 0
      %v4714 = vsel %vm1080, %v4683, 0
      %v4716 = vsel %vm1080, %v4685, 0
      %v4718 = vsel %vm1080, %v4687, 0
      %v4720 = vsel %vm1080, %v4689, 0
      %v4722 = vsel %vm1080, %v4691, 0
      %v4724 = vsel %vm1080, %v4693, 0
      %v4726 = vsel %vm1080, %v4695, 0
      %v4728 = vsel %vm1080, %v4697, 0
      %v4730 = vsel %vm1080, %v4699, 0
      %v4732 = vsel %vm1080, %v4701, 0
      %v4734 = vsel %vm1080, %v4703, 0
      %v4736 = vsel %vm1080, %v4705, 0
      %v4738 = vsel %vm1080, %v4707, 0
      %4740 = vmatprep.subr.mxu0 0.0
      %4741 = vmatpush1.xpose.msra.mxu0 0.0
      %4742 = vmatprep.subr.mxu0 0.0
      %4743 = vmatpush1.xpose.msra.mxu0 0.0
      %4744 = vmatprep.subr.mxu0 0.0
      %4745 = vmatpush1.xpose.msra.mxu0 0.0
      %4746 = vmatprep.subr.mxu0 0.0
      %4747 = vmatpush1.xpose.msra.mxu0 0.0
      %4748 = vmatprep.subr.mxu0 0.0
      %4749 = vmatpush1.xpose.msra.mxu0 0.0
      %4750 = vmatprep.subr.mxu0 0.0
      %4751 = vmatpush1.xpose.msra.mxu0 0.0
      %4752 = vmatprep.subr.mxu0 0.0
      %4753 = vmatpush1.xpose.msra.mxu0 0.0
      %4754 = vmatprep.subr.mxu0 0.0
      %4755 = vmatpush1.xpose.msra.mxu0 0.0
      %4756 = vmatprep.subr.mxu0 0.0
      %4757 = vmatpush1.xpose.msra.mxu0 %v4738
      %4758 = vmatprep.subr.mxu0 0.0
      %4759 = vmatpush1.xpose.msra.mxu0 %v4736
      %4760 = vmatprep.subr.mxu0 0.0
      %4761 = vmatpush1.xpose.msra.mxu0 %v4734
      %4762 = vmatprep.subr.mxu0 0.0
      %4763 = vmatpush1.xpose.msra.mxu0 %v4732
      %4764 = vmatprep.subr.mxu0 0.0
      %4765 = vmatpush1.xpose.msra.mxu0 %v4730
      %4766 = vmatprep.subr.mxu0 0.0
      %4767 = vmatpush1.xpose.msra.mxu0 %v4728
      %4768 = vmatprep.subr.mxu0 0.0
      %4769 = vmatpush1.xpose.msra.mxu0 %v4726
      %4770 = vmatprep.subr.mxu0 0.0
      %4771 = vmatpush1.xpose.msra.mxu0 %v4724
      %4772 = vmatprep.subr.mxu0 0.0
      %4773 = vmatpush2.xpose.msra.mxu0 0.0
      %4774 = vmatprep.subr.mxu0 0.0
      %4775 = vmatpush2.xpose.msra.mxu0 0.0
      %4776 = vmatprep.subr.mxu0 0.0
      %4777 = vmatpush2.xpose.msra.mxu0 0.0
      %4778 = vmatprep.subr.mxu0 0.0
      %4779 = vmatpush2.xpose.msra.mxu0 0.0
      %4780 = vmatprep.subr.mxu0 0.0
      %4781 = vmatpush2.xpose.msra.mxu0 0.0
      %4782 = vmatprep.subr.mxu0 0.0
      %4783 = vmatpush2.xpose.msra.mxu0 0.0
      %4784 = vmatprep.subr.mxu0 0.0
      %4785 = vmatpush2.xpose.msra.mxu0 0.0
      %4786 = vmatprep.subr.mxu0 0.0
      %4787 = vmatpush2.xpose.msra.mxu0 0.0
      %4788 = vmatprep.subr.mxu0 0.0
      %4789 = vmatpush2.xpose.msra.mxu0 0.0
      %4790 = vmatprep.subr.mxu0 0.0
      %4791 = vmatpush2.xpose.msra.mxu0 0.0
      %4792 = vmatprep.subr.mxu0 0.0
      %4793 = vmatpush2.xpose.msra.mxu0 0.0
      %4794 = vmatprep.subr.mxu0 0.0
      %4795 = vmatpush2.xpose.msra.mxu0 0.0
      %4796 = vmatprep.subr.mxu0 0.0
      %4797 = vmatpush2.xpose.msra.mxu0 0.0
      %4798 = vmatprep.subr.mxu0 0.0
      %4799 = vmatpush2.xpose.msra.mxu0 0.0
      %4800 = vmatprep.subr.mxu0 0.0
      %4801 = vmatpush2.xpose.msra.mxu0 0.0
      %4802 = vmatprep.subr.mxu0 0.0
      %4803 = vmatpush2.xpose.msra.mxu0 0.0
      %4804 = vmatprep.mubr.f32.mxu0 0.0
      %4805 = vmatmul.mubr.f32.gmra.mxu0 %v4708
      %v4806 = vpop.f32.mrf.mxu0
      %v4807 = vadd.f32 0.0, %v4806
      %v4808 = vpop.f32.mrf.mxu0
      %4809 = vmatprep.mubr.f32.mxu0 0.0
      %4810 = vmatmul.mubr.f32.gmra.mxu0 %v4710
      %v4811 = vpop.f32.mrf.mxu0
      %v4812 = vadd.f32 0.0, %v4811
      %v4813 = vpop.f32.mrf.mxu0
      %4814 = vmatprep.mubr.f32.mxu0 0.0
      %4815 = vmatmul.mubr.f32.gmra.mxu0 %v4712
      %v4816 = vpop.f32.mrf.mxu0
      %v4817 = vadd.f32 0.0, %v4816
      %v4818 = vpop.f32.mrf.mxu0
      %4819 = vmatprep.mubr.f32.mxu0 0.0
      %4820 = vmatmul.mubr.f32.gmra.mxu0 %v4714
      %v4821 = vpop.f32.mrf.mxu0
      %v4822 = vadd.f32 0.0, %v4821
      %v4823 = vpop.f32.mrf.mxu0
      %4824 = vmatprep.mubr.f32.mxu0 0.0
      %4825 = vmatmul.mubr.f32.gmra.mxu0 %v4716
      %v4826 = vpop.f32.mrf.mxu0
      %v4827 = vadd.f32 0.0, %v4826
      %v4828 = vpop.f32.mrf.mxu0
      %4829 = vmatprep.mubr.f32.mxu0 0.0
      %4830 = vmatmul.mubr.f32.gmra.mxu0 %v4718
      %v4831 = vpop.f32.mrf.mxu0
      %v4832 = vadd.f32 0.0, %v4831
      %v4833 = vpop.f32.mrf.mxu0
      %4834 = vmatprep.mubr.f32.mxu0 0.0
      %4835 = vmatmul.mubr.f32.gmra.mxu0 %v4720
      %v4836 = vpop.f32.mrf.mxu0
      %v4837 = vadd.f32 0.0, %v4836
      %v4838 = vpop.f32.mrf.mxu0
      %4839 = vmatprep.mubr.f32.mxu0 0.0
      %4840 = vmatmul.mubr.f32.gmra.mxu0 %v4722
      %v4841 = vpop.f32.mrf.mxu0
      %v4842 = vadd.f32 0.0, %v4841
      %v4843 = vpop.f32.mrf.mxu0
      %4844 = vdwg.mxu0
      %4845 = vrot.lane.b32.xlu0 %v1016, 124
      %v4846 = vpop.permute.xlu0 %4845
      %4847 = vrot.lane.b32.xlu0 %v1017, 124
      %v4848 = vpop.permute.xlu0 %4847
      %4849 = vrot.lane.b32.xlu0 %v1018, 124
      %v4850 = vpop.permute.xlu0 %4849
      %4851 = vrot.lane.b32.xlu0 %v1019, 124
      %v4852 = vpop.permute.xlu0 %4851
      %4853 = vrot.lane.b32.xlu0 %v1020, 124
      %v4854 = vpop.permute.xlu0 %4853
      %4855 = vrot.lane.b32.xlu0 %v1021, 124
      %v4856 = vpop.permute.xlu0 %4855
      %4857 = vrot.lane.b32.xlu0 %v1022, 124
      %v4858 = vpop.permute.xlu0 %4857
      %4859 = vrot.lane.b32.xlu0 %v1023, 124
      %v4860 = vpop.permute.xlu0 %4859
      %4861 = vrot.lane.b32.xlu0 %v793, 116
      %v4862 = vpop.permute.xlu0 %4861
      %4863 = vrot.lane.b32.xlu0 %v798, 116
      %v4864 = vpop.permute.xlu0 %4863
      %4865 = vrot.lane.b32.xlu0 %v803, 116
      %v4866 = vpop.permute.xlu0 %4865
      %4867 = vrot.lane.b32.xlu0 %v808, 116
      %v4868 = vpop.permute.xlu0 %4867
      %4869 = vrot.lane.b32.xlu0 %v813, 116
      %v4870 = vpop.permute.xlu0 %4869
      %4871 = vrot.lane.b32.xlu0 %v818, 116
      %v4872 = vpop.permute.xlu0 %4871
      %4873 = vrot.lane.b32.xlu0 %v823, 116
      %v4874 = vpop.permute.xlu0 %4873
      %4875 = vrot.lane.b32.xlu0 %v828, 116
      %v4876 = vpop.permute.xlu0 %4875
      %v4877 = vsel %vm1080, %v4846, 0
      %v4879 = vsel %vm1080, %v4848, 0
      %v4881 = vsel %vm1080, %v4850, 0
      %v4883 = vsel %vm1080, %v4852, 0
      %v4885 = vsel %vm1080, %v4854, 0
      %v4887 = vsel %vm1080, %v4856, 0
      %v4889 = vsel %vm1080, %v4858, 0
      %v4891 = vsel %vm1080, %v4860, 0
      %v4893 = vsel %vm1080, %v4862, 0
      %v4895 = vsel %vm1080, %v4864, 0
      %v4897 = vsel %vm1080, %v4866, 0
      %v4899 = vsel %vm1080, %v4868, 0
      %v4901 = vsel %vm1080, %v4870, 0
      %v4903 = vsel %vm1080, %v4872, 0
      %v4905 = vsel %vm1080, %v4874, 0
      %v4907 = vsel %vm1080, %v4876, 0
      %4909 = vmatprep.subr.mxu0 0.0
      %4910 = vmatpush1.xpose.msra.mxu0 0.0
      %4911 = vmatprep.subr.mxu0 0.0
      %4912 = vmatpush1.xpose.msra.mxu0 0.0
      %4913 = vmatprep.subr.mxu0 0.0
      %4914 = vmatpush1.xpose.msra.mxu0 0.0
      %4915 = vmatprep.subr.mxu0 0.0
      %4916 = vmatpush1.xpose.msra.mxu0 0.0
      %4917 = vmatprep.subr.mxu0 0.0
      %4918 = vmatpush1.xpose.msra.mxu0 0.0
      %4919 = vmatprep.subr.mxu0 0.0
      %4920 = vmatpush1.xpose.msra.mxu0 0.0
      %4921 = vmatprep.subr.mxu0 0.0
      %4922 = vmatpush1.xpose.msra.mxu0 0.0
      %4923 = vmatprep.subr.mxu0 0.0
      %4924 = vmatpush1.xpose.msra.mxu0 0.0
      %4925 = vmatprep.subr.mxu0 0.0
      %4926 = vmatpush1.xpose.msra.mxu0 %v4907
      %4927 = vmatprep.subr.mxu0 0.0
      %4928 = vmatpush1.xpose.msra.mxu0 %v4905
      %4929 = vmatprep.subr.mxu0 0.0
      %4930 = vmatpush1.xpose.msra.mxu0 %v4903
      %4931 = vmatprep.subr.mxu0 0.0
      %4932 = vmatpush1.xpose.msra.mxu0 %v4901
      %4933 = vmatprep.subr.mxu0 0.0
      %4934 = vmatpush1.xpose.msra.mxu0 %v4899
      %4935 = vmatprep.subr.mxu0 0.0
      %4936 = vmatpush1.xpose.msra.mxu0 %v4897
      %4937 = vmatprep.subr.mxu0 0.0
      %4938 = vmatpush1.xpose.msra.mxu0 %v4895
      %4939 = vmatprep.subr.mxu0 0.0
      %4940 = vmatpush1.xpose.msra.mxu0 %v4893
      %4941 = vmatprep.subr.mxu0 0.0
      %4942 = vmatpush2.xpose.msra.mxu0 0.0
      %4943 = vmatprep.subr.mxu0 0.0
      %4944 = vmatpush2.xpose.msra.mxu0 0.0
      %4945 = vmatprep.subr.mxu0 0.0
      %4946 = vmatpush2.xpose.msra.mxu0 0.0
      %4947 = vmatprep.subr.mxu0 0.0
      %4948 = vmatpush2.xpose.msra.mxu0 0.0
      %4949 = vmatprep.subr.mxu0 0.0
      %4950 = vmatpush2.xpose.msra.mxu0 0.0
      %4951 = vmatprep.subr.mxu0 0.0
      %4952 = vmatpush2.xpose.msra.mxu0 0.0
      %4953 = vmatprep.subr.mxu0 0.0
      %4954 = vmatpush2.xpose.msra.mxu0 0.0
      %4955 = vmatprep.subr.mxu0 0.0
      %4956 = vmatpush2.xpose.msra.mxu0 0.0
      %4957 = vmatprep.subr.mxu0 0.0
      %4958 = vmatpush2.xpose.msra.mxu0 0.0
      %4959 = vmatprep.subr.mxu0 0.0
      %4960 = vmatpush2.xpose.msra.mxu0 0.0
      %4961 = vmatprep.subr.mxu0 0.0
      %4962 = vmatpush2.xpose.msra.mxu0 0.0
      %4963 = vmatprep.subr.mxu0 0.0
      %4964 = vmatpush2.xpose.msra.mxu0 0.0
      %4965 = vmatprep.subr.mxu0 0.0
      %4966 = vmatpush2.xpose.msra.mxu0 0.0
      %4967 = vmatprep.subr.mxu0 0.0
      %4968 = vmatpush2.xpose.msra.mxu0 0.0
      %4969 = vmatprep.subr.mxu0 0.0
      %4970 = vmatpush2.xpose.msra.mxu0 0.0
      %4971 = vmatprep.subr.mxu0 0.0
      %4972 = vmatpush2.xpose.msra.mxu0 0.0
      %4973 = vmatprep.mubr.f32.mxu0 0.0
      %4974 = vmatmul.mubr.f32.gmra.mxu0 %v4877
      %v4975 = vpop.f32.mrf.mxu0
      %v4976 = vadd.f32 0.0, %v4975
      %v4977 = vpop.f32.mrf.mxu0
      %4978 = vmatprep.mubr.f32.mxu0 0.0
      %4979 = vmatmul.mubr.f32.gmra.mxu0 %v4879
      %v4980 = vpop.f32.mrf.mxu0
      %v4981 = vadd.f32 0.0, %v4980
      %v4982 = vpop.f32.mrf.mxu0
      %4983 = vmatprep.mubr.f32.mxu0 0.0
      %4984 = vmatmul.mubr.f32.gmra.mxu0 %v4881
      %v4985 = vpop.f32.mrf.mxu0
      %v4986 = vadd.f32 0.0, %v4985
      %v4987 = vpop.f32.mrf.mxu0
      %4988 = vmatprep.mubr.f32.mxu0 0.0
      %4989 = vmatmul.mubr.f32.gmra.mxu0 %v4883
      %v4990 = vpop.f32.mrf.mxu0
      %v4991 = vadd.f32 0.0, %v4990
      %v4992 = vpop.f32.mrf.mxu0
      %4993 = vmatprep.mubr.f32.mxu0 0.0
      %4994 = vmatmul.mubr.f32.gmra.mxu0 %v4885
      %v4995 = vpop.f32.mrf.mxu0
      %v4996 = vadd.f32 0.0, %v4995
      %v4997 = vpop.f32.mrf.mxu0
      %4998 = vmatprep.mubr.f32.mxu0 0.0
      %4999 = vmatmul.mubr.f32.gmra.mxu0 %v4887
      %v5000 = vpop.f32.mrf.mxu0
      %v5001 = vadd.f32 0.0, %v5000
      %v5002 = vpop.f32.mrf.mxu0
      %5003 = vmatprep.mubr.f32.mxu0 0.0
      %5004 = vmatmul.mubr.f32.gmra.mxu0 %v4889
      %v5005 = vpop.f32.mrf.mxu0
      %v5006 = vadd.f32 0.0, %v5005
      %v5007 = vpop.f32.mrf.mxu0
      %5008 = vmatprep.mubr.f32.mxu0 0.0
      %5009 = vmatmul.mubr.f32.gmra.mxu0 %v4891
      %v5010 = vpop.f32.mrf.mxu0
      %v5011 = vadd.f32 0.0, %v5010
      %v5012 = vpop.f32.mrf.mxu0
      %5013 = vdwg.mxu0
      %5014 = vrot.lane.b32.xlu0 %v1024, 124
      %v5015 = vpop.permute.xlu0 %5014
      %5016 = vrot.lane.b32.xlu0 %v1025, 124
      %v5017 = vpop.permute.xlu0 %5016
      %5018 = vrot.lane.b32.xlu0 %v1026, 124
      %v5019 = vpop.permute.xlu0 %5018
      %5020 = vrot.lane.b32.xlu0 %v1027, 124
      %v5021 = vpop.permute.xlu0 %5020
      %5022 = vrot.lane.b32.xlu0 %v1028, 124
      %v5023 = vpop.permute.xlu0 %5022
      %5024 = vrot.lane.b32.xlu0 %v1029, 124
      %v5025 = vpop.permute.xlu0 %5024
      %5026 = vrot.lane.b32.xlu0 %v1030, 124
      %v5027 = vpop.permute.xlu0 %5026
      %5028 = vrot.lane.b32.xlu0 %v1031, 124
      %v5029 = vpop.permute.xlu0 %5028
      %5030 = vrot.lane.b32.xlu0 %v833, 116
      %v5031 = vpop.permute.xlu0 %5030
      %5032 = vrot.lane.b32.xlu0 %v838, 116
      %v5033 = vpop.permute.xlu0 %5032
      %5034 = vrot.lane.b32.xlu0 %v843, 116
      %v5035 = vpop.permute.xlu0 %5034
      %5036 = vrot.lane.b32.xlu0 %v848, 116
      %v5037 = vpop.permute.xlu0 %5036
      %5038 = vrot.lane.b32.xlu0 %v853, 116
      %v5039 = vpop.permute.xlu0 %5038
      %5040 = vrot.lane.b32.xlu0 %v858, 116
      %v5041 = vpop.permute.xlu0 %5040
      %5042 = vrot.lane.b32.xlu0 %v863, 116
      %v5043 = vpop.permute.xlu0 %5042
      %5044 = vrot.lane.b32.xlu0 %v868, 116
      %v5045 = vpop.permute.xlu0 %5044
      %v5046 = vsel %vm1080, %v5015, 0
      %v5048 = vsel %vm1080, %v5017, 0
      %v5050 = vsel %vm1080, %v5019, 0
      %v5052 = vsel %vm1080, %v5021, 0
      %v5054 = vsel %vm1080, %v5023, 0
      %v5056 = vsel %vm1080, %v5025, 0
      %v5058 = vsel %vm1080, %v5027, 0
      %v5060 = vsel %vm1080, %v5029, 0
      %v5062 = vsel %vm1080, %v5031, 0
      %v5064 = vsel %vm1080, %v5033, 0
      %v5066 = vsel %vm1080, %v5035, 0
      %v5068 = vsel %vm1080, %v5037, 0
      %v5070 = vsel %vm1080, %v5039, 0
      %v5072 = vsel %vm1080, %v5041, 0
      %v5074 = vsel %vm1080, %v5043, 0
      %v5076 = vsel %vm1080, %v5045, 0
      %5078 = vmatprep.subr.mxu0 0.0
      %5079 = vmatpush1.xpose.msra.mxu0 0.0
      %5080 = vmatprep.subr.mxu0 0.0
      %5081 = vmatpush1.xpose.msra.mxu0 0.0
      %5082 = vmatprep.subr.mxu0 0.0
      %5083 = vmatpush1.xpose.msra.mxu0 0.0
      %5084 = vmatprep.subr.mxu0 0.0
      %5085 = vmatpush1.xpose.msra.mxu0 0.0
      %5086 = vmatprep.subr.mxu0 0.0
      %5087 = vmatpush1.xpose.msra.mxu0 0.0
      %5088 = vmatprep.subr.mxu0 0.0
      %5089 = vmatpush1.xpose.msra.mxu0 0.0
      %5090 = vmatprep.subr.mxu0 0.0
      %5091 = vmatpush1.xpose.msra.mxu0 0.0
      %5092 = vmatprep.subr.mxu0 0.0
      %5093 = vmatpush1.xpose.msra.mxu0 0.0
      %5094 = vmatprep.subr.mxu0 0.0
      %5095 = vmatpush1.xpose.msra.mxu0 %v5076
      %5096 = vmatprep.subr.mxu0 0.0
      %5097 = vmatpush1.xpose.msra.mxu0 %v5074
      %5098 = vmatprep.subr.mxu0 0.0
      %5099 = vmatpush1.xpose.msra.mxu0 %v5072
      %5100 = vmatprep.subr.mxu0 0.0
      %5101 = vmatpush1.xpose.msra.mxu0 %v5070
      %5102 = vmatprep.subr.mxu0 0.0
      %5103 = vmatpush1.xpose.msra.mxu0 %v5068
      %5104 = vmatprep.subr.mxu0 0.0
      %5105 = vmatpush1.xpose.msra.mxu0 %v5066
      %5106 = vmatprep.subr.mxu0 0.0
      %5107 = vmatpush1.xpose.msra.mxu0 %v5064
      %5108 = vmatprep.subr.mxu0 0.0
      %5109 = vmatpush1.xpose.msra.mxu0 %v5062
      %5110 = vmatprep.subr.mxu0 0.0
      %5111 = vmatpush2.xpose.msra.mxu0 0.0
      %5112 = vmatprep.subr.mxu0 0.0
      %5113 = vmatpush2.xpose.msra.mxu0 0.0
      %5114 = vmatprep.subr.mxu0 0.0
      %5115 = vmatpush2.xpose.msra.mxu0 0.0
      %5116 = vmatprep.subr.mxu0 0.0
      %5117 = vmatpush2.xpose.msra.mxu0 0.0
      %5118 = vmatprep.subr.mxu0 0.0
      %5119 = vmatpush2.xpose.msra.mxu0 0.0
      %5120 = vmatprep.subr.mxu0 0.0
      %5121 = vmatpush2.xpose.msra.mxu0 0.0
      %5122 = vmatprep.subr.mxu0 0.0
      %5123 = vmatpush2.xpose.msra.mxu0 0.0
      %5124 = vmatprep.subr.mxu0 0.0
      %5125 = vmatpush2.xpose.msra.mxu0 0.0
      %5126 = vmatprep.subr.mxu0 0.0
      %5127 = vmatpush2.xpose.msra.mxu0 0.0
      %5128 = vmatprep.subr.mxu0 0.0
      %5129 = vmatpush2.xpose.msra.mxu0 0.0
      %5130 = vmatprep.subr.mxu0 0.0
      %5131 = vmatpush2.xpose.msra.mxu0 0.0
      %5132 = vmatprep.subr.mxu0 0.0
      %5133 = vmatpush2.xpose.msra.mxu0 0.0
      %5134 = vmatprep.subr.mxu0 0.0
      %5135 = vmatpush2.xpose.msra.mxu0 0.0
      %5136 = vmatprep.subr.mxu0 0.0
      %5137 = vmatpush2.xpose.msra.mxu0 0.0
      %5138 = vmatprep.subr.mxu0 0.0
      %5139 = vmatpush2.xpose.msra.mxu0 0.0
      %5140 = vmatprep.subr.mxu0 0.0
      %5141 = vmatpush2.xpose.msra.mxu0 0.0
      %5142 = vmatprep.mubr.f32.mxu0 0.0
      %5143 = vmatmul.mubr.f32.gmra.mxu0 %v5046
      %v5144 = vpop.f32.mrf.mxu0
      %v5145 = vadd.f32 0.0, %v5144
      %v5146 = vpop.f32.mrf.mxu0
      %5147 = vmatprep.mubr.f32.mxu0 0.0
      %5148 = vmatmul.mubr.f32.gmra.mxu0 %v5048
      %v5149 = vpop.f32.mrf.mxu0
      %v5150 = vadd.f32 0.0, %v5149
      %v5151 = vpop.f32.mrf.mxu0
      %5152 = vmatprep.mubr.f32.mxu0 0.0
      %5153 = vmatmul.mubr.f32.gmra.mxu0 %v5050
      %v5154 = vpop.f32.mrf.mxu0
      %v5155 = vadd.f32 0.0, %v5154
      %v5156 = vpop.f32.mrf.mxu0
      %5157 = vmatprep.mubr.f32.mxu0 0.0
      %5158 = vmatmul.mubr.f32.gmra.mxu0 %v5052
      %v5159 = vpop.f32.mrf.mxu0
      %v5160 = vadd.f32 0.0, %v5159
      %v5161 = vpop.f32.mrf.mxu0
      %5162 = vmatprep.mubr.f32.mxu0 0.0
      %5163 = vmatmul.mubr.f32.gmra.mxu0 %v5054
      %v5164 = vpop.f32.mrf.mxu0
      %v5165 = vadd.f32 0.0, %v5164
      %v5166 = vpop.f32.mrf.mxu0
      %5167 = vmatprep.mubr.f32.mxu0 0.0
      %5168 = vmatmul.mubr.f32.gmra.mxu0 %v5056
      %v5169 = vpop.f32.mrf.mxu0
      %v5170 = vadd.f32 0.0, %v5169
      %v5171 = vpop.f32.mrf.mxu0
      %5172 = vmatprep.mubr.f32.mxu0 0.0
      %5173 = vmatmul.mubr.f32.gmra.mxu0 %v5058
      %v5174 = vpop.f32.mrf.mxu0
      %v5175 = vadd.f32 0.0, %v5174
      %v5176 = vpop.f32.mrf.mxu0
      %5177 = vmatprep.mubr.f32.mxu0 0.0
      %5178 = vmatmul.mubr.f32.gmra.mxu0 %v5060
      %v5179 = vpop.f32.mrf.mxu0
      %v5180 = vadd.f32 0.0, %v5179
      %v5181 = vpop.f32.mrf.mxu0
      %5182 = vdwg.mxu0
      %5183 = vrot.lane.b32.xlu0 %v1032, 124
      %v5184 = vpop.permute.xlu0 %5183
      %5185 = vrot.lane.b32.xlu0 %v1033, 124
      %v5186 = vpop.permute.xlu0 %5185
      %5187 = vrot.lane.b32.xlu0 %v1034, 124
      %v5188 = vpop.permute.xlu0 %5187
      %5189 = vrot.lane.b32.xlu0 %v1035, 124
      %v5190 = vpop.permute.xlu0 %5189
      %5191 = vrot.lane.b32.xlu0 %v1036, 124
      %v5192 = vpop.permute.xlu0 %5191
      %5193 = vrot.lane.b32.xlu0 %v1037, 124
      %v5194 = vpop.permute.xlu0 %5193
      %5195 = vrot.lane.b32.xlu0 %v1038, 124
      %v5196 = vpop.permute.xlu0 %5195
      %5197 = vrot.lane.b32.xlu0 %v1039, 124
      %v5198 = vpop.permute.xlu0 %5197
      %5199 = vrot.lane.b32.xlu0 %v873, 116
      %v5200 = vpop.permute.xlu0 %5199
      %5201 = vrot.lane.b32.xlu0 %v878, 116
      %v5202 = vpop.permute.xlu0 %5201
      %5203 = vrot.lane.b32.xlu0 %v883, 116
      %v5204 = vpop.permute.xlu0 %5203
      %5205 = vrot.lane.b32.xlu0 %v888, 116
      %v5206 = vpop.permute.xlu0 %5205
      %5207 = vrot.lane.b32.xlu0 %v893, 116
      %v5208 = vpop.permute.xlu0 %5207
      %5209 = vrot.lane.b32.xlu0 %v898, 116
      %v5210 = vpop.permute.xlu0 %5209
      %5211 = vrot.lane.b32.xlu0 %v903, 116
      %v5212 = vpop.permute.xlu0 %5211
      %5213 = vrot.lane.b32.xlu0 %v908, 116
      %v5214 = vpop.permute.xlu0 %5213
      %v5215 = vsel %vm1080, %v5184, 0
      %v5217 = vsel %vm1080, %v5186, 0
      %v5219 = vsel %vm1080, %v5188, 0
      %v5221 = vsel %vm1080, %v5190, 0
      %v5223 = vsel %vm1080, %v5192, 0
      %v5225 = vsel %vm1080, %v5194, 0
      %v5227 = vsel %vm1080, %v5196, 0
      %v5229 = vsel %vm1080, %v5198, 0
      %v5231 = vsel %vm1080, %v5200, 0
      %v5233 = vsel %vm1080, %v5202, 0
      %v5235 = vsel %vm1080, %v5204, 0
      %v5237 = vsel %vm1080, %v5206, 0
      %v5239 = vsel %vm1080, %v5208, 0
      %v5241 = vsel %vm1080, %v5210, 0
      %v5243 = vsel %vm1080, %v5212, 0
      %v5245 = vsel %vm1080, %v5214, 0
      %5247 = vmatprep.subr.mxu0 0.0
      %5248 = vmatpush1.xpose.msra.mxu0 0.0
      %5249 = vmatprep.subr.mxu0 0.0
      %5250 = vmatpush1.xpose.msra.mxu0 0.0
      %5251 = vmatprep.subr.mxu0 0.0
      %5252 = vmatpush1.xpose.msra.mxu0 0.0
      %5253 = vmatprep.subr.mxu0 0.0
      %5254 = vmatpush1.xpose.msra.mxu0 0.0
      %5255 = vmatprep.subr.mxu0 0.0
      %5256 = vmatpush1.xpose.msra.mxu0 0.0
      %5257 = vmatprep.subr.mxu0 0.0
      %5258 = vmatpush1.xpose.msra.mxu0 0.0
      %5259 = vmatprep.subr.mxu0 0.0
      %5260 = vmatpush1.xpose.msra.mxu0 0.0
      %5261 = vmatprep.subr.mxu0 0.0
      %5262 = vmatpush1.xpose.msra.mxu0 0.0
      %5263 = vmatprep.subr.mxu0 0.0
      %5264 = vmatpush1.xpose.msra.mxu0 %v5245
      %5265 = vmatprep.subr.mxu0 0.0
      %5266 = vmatpush1.xpose.msra.mxu0 %v5243
      %5267 = vmatprep.subr.mxu0 0.0
      %5268 = vmatpush1.xpose.msra.mxu0 %v5241
      %5269 = vmatprep.subr.mxu0 0.0
      %5270 = vmatpush1.xpose.msra.mxu0 %v5239
      %5271 = vmatprep.subr.mxu0 0.0
      %5272 = vmatpush1.xpose.msra.mxu0 %v5237
      %5273 = vmatprep.subr.mxu0 0.0
      %5274 = vmatpush1.xpose.msra.mxu0 %v5235
      %5275 = vmatprep.subr.mxu0 0.0
      %5276 = vmatpush1.xpose.msra.mxu0 %v5233
      %5277 = vmatprep.subr.mxu0 0.0
      %5278 = vmatpush1.xpose.msra.mxu0 %v5231
      %5279 = vmatprep.subr.mxu0 0.0
      %5280 = vmatpush2.xpose.msra.mxu0 0.0
      %5281 = vmatprep.subr.mxu0 0.0
      %5282 = vmatpush2.xpose.msra.mxu0 0.0
      %5283 = vmatprep.subr.mxu0 0.0
      %5284 = vmatpush2.xpose.msra.mxu0 0.0
      %5285 = vmatprep.subr.mxu0 0.0
      %5286 = vmatpush2.xpose.msra.mxu0 0.0
      %5287 = vmatprep.subr.mxu0 0.0
      %5288 = vmatpush2.xpose.msra.mxu0 0.0
      %5289 = vmatprep.subr.mxu0 0.0
      %5290 = vmatpush2.xpose.msra.mxu0 0.0
      %5291 = vmatprep.subr.mxu0 0.0
      %5292 = vmatpush2.xpose.msra.mxu0 0.0
      %5293 = vmatprep.subr.mxu0 0.0
      %5294 = vmatpush2.xpose.msra.mxu0 0.0
      %5295 = vmatprep.subr.mxu0 0.0
      %5296 = vmatpush2.xpose.msra.mxu0 0.0
      %5297 = vmatprep.subr.mxu0 0.0
      %5298 = vmatpush2.xpose.msra.mxu0 0.0
      %5299 = vmatprep.subr.mxu0 0.0
      %5300 = vmatpush2.xpose.msra.mxu0 0.0
      %5301 = vmatprep.subr.mxu0 0.0
      %5302 = vmatpush2.xpose.msra.mxu0 0.0
      %5303 = vmatprep.subr.mxu0 0.0
      %5304 = vmatpush2.xpose.msra.mxu0 0.0
      %5305 = vmatprep.subr.mxu0 0.0
      %5306 = vmatpush2.xpose.msra.mxu0 0.0
      %5307 = vmatprep.subr.mxu0 0.0
      %5308 = vmatpush2.xpose.msra.mxu0 0.0
      %5309 = vmatprep.subr.mxu0 0.0
      %5310 = vmatpush2.xpose.msra.mxu0 0.0
      %5311 = vmatprep.mubr.f32.mxu0 0.0
      %5312 = vmatmul.mubr.f32.gmra.mxu0 %v5215
      %v5313 = vpop.f32.mrf.mxu0
      %v5314 = vadd.f32 0.0, %v5313
      %v5315 = vpop.f32.mrf.mxu0
      %5316 = vmatprep.mubr.f32.mxu0 0.0
      %5317 = vmatmul.mubr.f32.gmra.mxu0 %v5217
      %v5318 = vpop.f32.mrf.mxu0
      %v5319 = vadd.f32 0.0, %v5318
      %v5320 = vpop.f32.mrf.mxu0
      %5321 = vmatprep.mubr.f32.mxu0 0.0
      %5322 = vmatmul.mubr.f32.gmra.mxu0 %v5219
      %v5323 = vpop.f32.mrf.mxu0
      %v5324 = vadd.f32 0.0, %v5323
      %v5325 = vpop.f32.mrf.mxu0
      %5326 = vmatprep.mubr.f32.mxu0 0.0
      %5327 = vmatmul.mubr.f32.gmra.mxu0 %v5221
      %v5328 = vpop.f32.mrf.mxu0
      %v5329 = vadd.f32 0.0, %v5328
      %v5330 = vpop.f32.mrf.mxu0
      %5331 = vmatprep.mubr.f32.mxu0 0.0
      %5332 = vmatmul.mubr.f32.gmra.mxu0 %v5223
      %v5333 = vpop.f32.mrf.mxu0
      %v5334 = vadd.f32 0.0, %v5333
      %v5335 = vpop.f32.mrf.mxu0
      %5336 = vmatprep.mubr.f32.mxu0 0.0
      %5337 = vmatmul.mubr.f32.gmra.mxu0 %v5225
      %v5338 = vpop.f32.mrf.mxu0
      %v5339 = vadd.f32 0.0, %v5338
      %v5340 = vpop.f32.mrf.mxu0
      %5341 = vmatprep.mubr.f32.mxu0 0.0
      %5342 = vmatmul.mubr.f32.gmra.mxu0 %v5227
      %v5343 = vpop.f32.mrf.mxu0
      %v5344 = vadd.f32 0.0, %v5343
      %v5345 = vpop.f32.mrf.mxu0
      %5346 = vmatprep.mubr.f32.mxu0 0.0
      %5347 = vmatmul.mubr.f32.gmra.mxu0 %v5229
      %v5348 = vpop.f32.mrf.mxu0
      %v5349 = vadd.f32 0.0, %v5348
      %v5350 = vpop.f32.mrf.mxu0
      %5351 = vdwg.mxu0
      %5352 = vrot.lane.b32.xlu0 %v1040, 124
      %v5353 = vpop.permute.xlu0 %5352
      %5354 = vrot.lane.b32.xlu0 %v1041, 124
      %v5355 = vpop.permute.xlu0 %5354
      %5356 = vrot.lane.b32.xlu0 %v1042, 124
      %v5357 = vpop.permute.xlu0 %5356
      %5358 = vrot.lane.b32.xlu0 %v1043, 124
      %v5359 = vpop.permute.xlu0 %5358
      %5360 = vrot.lane.b32.xlu0 %v1044, 124
      %v5361 = vpop.permute.xlu0 %5360
      %5362 = vrot.lane.b32.xlu0 %v1045, 124
      %v5363 = vpop.permute.xlu0 %5362
      %5364 = vrot.lane.b32.xlu0 %v1046, 124
      %v5365 = vpop.permute.xlu0 %5364
      %5366 = vrot.lane.b32.xlu0 %v1047, 124
      %v5367 = vpop.permute.xlu0 %5366
      %5368 = vrot.lane.b32.xlu0 %v913, 116
      %v5369 = vpop.permute.xlu0 %5368
      %5370 = vrot.lane.b32.xlu0 %v918, 116
      %v5371 = vpop.permute.xlu0 %5370
      %5372 = vrot.lane.b32.xlu0 %v923, 116
      %v5373 = vpop.permute.xlu0 %5372
      %5374 = vrot.lane.b32.xlu0 %v928, 116
      %v5375 = vpop.permute.xlu0 %5374
      %5376 = vrot.lane.b32.xlu0 %v933, 116
      %v5377 = vpop.permute.xlu0 %5376
      %5378 = vrot.lane.b32.xlu0 %v938, 116
      %v5379 = vpop.permute.xlu0 %5378
      %5380 = vrot.lane.b32.xlu0 %v943, 116
      %v5381 = vpop.permute.xlu0 %5380
      %5382 = vrot.lane.b32.xlu0 %v948, 116
      %v5383 = vpop.permute.xlu0 %5382
      %v5384 = vsel %vm1080, %v5353, 0
      %v5386 = vsel %vm1080, %v5355, 0
      %v5388 = vsel %vm1080, %v5357, 0
      %v5390 = vsel %vm1080, %v5359, 0
      %v5392 = vsel %vm1080, %v5361, 0
      %v5394 = vsel %vm1080, %v5363, 0
      %v5396 = vsel %vm1080, %v5365, 0
      %v5398 = vsel %vm1080, %v5367, 0
      %v5400 = vsel %vm1080, %v5369, 0
      %v5402 = vsel %vm1080, %v5371, 0
      %v5404 = vsel %vm1080, %v5373, 0
      %v5406 = vsel %vm1080, %v5375, 0
      %v5408 = vsel %vm1080, %v5377, 0
      %v5410 = vsel %vm1080, %v5379, 0
      %v5412 = vsel %vm1080, %v5381, 0
      %v5414 = vsel %vm1080, %v5383, 0
      %5416 = vmatprep.subr.mxu0 0.0
      %5417 = vmatpush1.xpose.msra.mxu0 0.0
      %5418 = vmatprep.subr.mxu0 0.0
      %5419 = vmatpush1.xpose.msra.mxu0 0.0
      %5420 = vmatprep.subr.mxu0 0.0
      %5421 = vmatpush1.xpose.msra.mxu0 0.0
      %5422 = vmatprep.subr.mxu0 0.0
      %5423 = vmatpush1.xpose.msra.mxu0 0.0
      %5424 = vmatprep.subr.mxu0 0.0
      %5425 = vmatpush1.xpose.msra.mxu0 0.0
      %5426 = vmatprep.subr.mxu0 0.0
      %5427 = vmatpush1.xpose.msra.mxu0 0.0
      %5428 = vmatprep.subr.mxu0 0.0
      %5429 = vmatpush1.xpose.msra.mxu0 0.0
      %5430 = vmatprep.subr.mxu0 0.0
      %5431 = vmatpush1.xpose.msra.mxu0 0.0
      %5432 = vmatprep.subr.mxu0 0.0
      %5433 = vmatpush1.xpose.msra.mxu0 %v5414
      %5434 = vmatprep.subr.mxu0 0.0
      %5435 = vmatpush1.xpose.msra.mxu0 %v5412
      %5436 = vmatprep.subr.mxu0 0.0
      %5437 = vmatpush1.xpose.msra.mxu0 %v5410
      %5438 = vmatprep.subr.mxu0 0.0
      %5439 = vmatpush1.xpose.msra.mxu0 %v5408
      %5440 = vmatprep.subr.mxu0 0.0
      %5441 = vmatpush1.xpose.msra.mxu0 %v5406
      %5442 = vmatprep.subr.mxu0 0.0
      %5443 = vmatpush1.xpose.msra.mxu0 %v5404
      %5444 = vmatprep.subr.mxu0 0.0
      %5445 = vmatpush1.xpose.msra.mxu0 %v5402
      %5446 = vmatprep.subr.mxu0 0.0
      %5447 = vmatpush1.xpose.msra.mxu0 %v5400
      %5448 = vmatprep.subr.mxu0 0.0
      %5449 = vmatpush2.xpose.msra.mxu0 0.0
      %5450 = vmatprep.subr.mxu0 0.0
      %5451 = vmatpush2.xpose.msra.mxu0 0.0
      %5452 = vmatprep.subr.mxu0 0.0
      %5453 = vmatpush2.xpose.msra.mxu0 0.0
      %5454 = vmatprep.subr.mxu0 0.0
      %5455 = vmatpush2.xpose.msra.mxu0 0.0
      %5456 = vmatprep.subr.mxu0 0.0
      %5457 = vmatpush2.xpose.msra.mxu0 0.0
      %5458 = vmatprep.subr.mxu0 0.0
      %5459 = vmatpush2.xpose.msra.mxu0 0.0
      %5460 = vmatprep.subr.mxu0 0.0
      %5461 = vmatpush2.xpose.msra.mxu0 0.0
      %5462 = vmatprep.subr.mxu0 0.0
      %5463 = vmatpush2.xpose.msra.mxu0 0.0
      %5464 = vmatprep.subr.mxu0 0.0
      %5465 = vmatpush2.xpose.msra.mxu0 0.0
      %5466 = vmatprep.subr.mxu0 0.0
      %5467 = vmatpush2.xpose.msra.mxu0 0.0
      %5468 = vmatprep.subr.mxu0 0.0
      %5469 = vmatpush2.xpose.msra.mxu0 0.0
      %5470 = vmatprep.subr.mxu0 0.0
      %5471 = vmatpush2.xpose.msra.mxu0 0.0
      %5472 = vmatprep.subr.mxu0 0.0
      %5473 = vmatpush2.xpose.msra.mxu0 0.0
      %5474 = vmatprep.subr.mxu0 0.0
      %5475 = vmatpush2.xpose.msra.mxu0 0.0
      %5476 = vmatprep.subr.mxu0 0.0
      %5477 = vmatpush2.xpose.msra.mxu0 0.0
      %5478 = vmatprep.subr.mxu0 0.0
      %5479 = vmatpush2.xpose.msra.mxu0 0.0
      %5480 = vmatprep.mubr.f32.mxu0 0.0
      %5481 = vmatmul.mubr.f32.gmra.mxu0 %v5384
      %v5482 = vpop.f32.mrf.mxu0
      %v5483 = vadd.f32 0.0, %v5482
      %v5484 = vpop.f32.mrf.mxu0
      %5485 = vmatprep.mubr.f32.mxu0 0.0
      %5486 = vmatmul.mubr.f32.gmra.mxu0 %v5386
      %v5487 = vpop.f32.mrf.mxu0
      %v5488 = vadd.f32 0.0, %v5487
      %v5489 = vpop.f32.mrf.mxu0
      %5490 = vmatprep.mubr.f32.mxu0 0.0
      %5491 = vmatmul.mubr.f32.gmra.mxu0 %v5388
      %v5492 = vpop.f32.mrf.mxu0
      %v5493 = vadd.f32 0.0, %v5492
      %v5494 = vpop.f32.mrf.mxu0
      %5495 = vmatprep.mubr.f32.mxu0 0.0
      %5496 = vmatmul.mubr.f32.gmra.mxu0 %v5390
      %v5497 = vpop.f32.mrf.mxu0
      %v5498 = vadd.f32 0.0, %v5497
      %v5499 = vpop.f32.mrf.mxu0
      %5500 = vmatprep.mubr.f32.mxu0 0.0
      %5501 = vmatmul.mubr.f32.gmra.mxu0 %v5392
      %v5502 = vpop.f32.mrf.mxu0
      %v5503 = vadd.f32 0.0, %v5502
      %v5504 = vpop.f32.mrf.mxu0
      %5505 = vmatprep.mubr.f32.mxu0 0.0
      %5506 = vmatmul.mubr.f32.gmra.mxu0 %v5394
      %v5507 = vpop.f32.mrf.mxu0
      %v5508 = vadd.f32 0.0, %v5507
      %v5509 = vpop.f32.mrf.mxu0
      %5510 = vmatprep.mubr.f32.mxu0 0.0
      %5511 = vmatmul.mubr.f32.gmra.mxu0 %v5396
      %v5512 = vpop.f32.mrf.mxu0
      %v5513 = vadd.f32 0.0, %v5512
      %v5514 = vpop.f32.mrf.mxu0
      %5515 = vmatprep.mubr.f32.mxu0 0.0
      %5516 = vmatmul.mubr.f32.gmra.mxu0 %v5398
      %v5517 = vpop.f32.mrf.mxu0
      %v5518 = vadd.f32 0.0, %v5517
      %v5519 = vpop.f32.mrf.mxu0
      %5520 = vdwg.mxu0
      %5521 = vrot.lane.b32.xlu0 %v1048, 124
      %v5522 = vpop.permute.xlu0 %5521
      %5523 = vrot.lane.b32.xlu0 %v1049, 124
      %v5524 = vpop.permute.xlu0 %5523
      %5525 = vrot.lane.b32.xlu0 %v1050, 124
      %v5526 = vpop.permute.xlu0 %5525
      %5527 = vrot.lane.b32.xlu0 %v1051, 124
      %v5528 = vpop.permute.xlu0 %5527
      %5529 = vrot.lane.b32.xlu0 %v1052, 124
      %v5530 = vpop.permute.xlu0 %5529
      %5531 = vrot.lane.b32.xlu0 %v1053, 124
      %v5532 = vpop.permute.xlu0 %5531
      %5533 = vrot.lane.b32.xlu0 %v1054, 124
      %v5534 = vpop.permute.xlu0 %5533
      %5535 = vrot.lane.b32.xlu0 %v1055, 124
      %v5536 = vpop.permute.xlu0 %5535
      %5537 = vrot.lane.b32.xlu0 %v953, 116
      %v5538 = vpop.permute.xlu0 %5537
      %5539 = vrot.lane.b32.xlu0 %v958, 116
      %v5540 = vpop.permute.xlu0 %5539
      %5541 = vrot.lane.b32.xlu0 %v963, 116
      %v5542 = vpop.permute.xlu0 %5541
      %5543 = vrot.lane.b32.xlu0 %v968, 116
      %v5544 = vpop.permute.xlu0 %5543
      %5545 = vrot.lane.b32.xlu0 %v973, 116
      %v5546 = vpop.permute.xlu0 %5545
      %5547 = vrot.lane.b32.xlu0 %v978, 116
      %v5548 = vpop.permute.xlu0 %5547
      %5549 = vrot.lane.b32.xlu0 %v983, 116
      %v5550 = vpop.permute.xlu0 %5549
      %5551 = vrot.lane.b32.xlu0 %v988, 116
      %v5552 = vpop.permute.xlu0 %5551
      %v5553 = vsel %vm1080, %v5522, 0
      %v5555 = vsel %vm1080, %v5524, 0
      %v5557 = vsel %vm1080, %v5526, 0
      %v5559 = vsel %vm1080, %v5528, 0
      %v5561 = vsel %vm1080, %v5530, 0
      %v5563 = vsel %vm1080, %v5532, 0
      %v5565 = vsel %vm1080, %v5534, 0
      %v5567 = vsel %vm1080, %v5536, 0
      %v5569 = vsel %vm1080, %v5538, 0
      %v5571 = vsel %vm1080, %v5540, 0
      %v5573 = vsel %vm1080, %v5542, 0
      %v5575 = vsel %vm1080, %v5544, 0
      %v5577 = vsel %vm1080, %v5546, 0
      %v5579 = vsel %vm1080, %v5548, 0
      %v5581 = vsel %vm1080, %v5550, 0
      %v5583 = vsel %vm1080, %v5552, 0
      %5585 = vmatprep.subr.mxu0 0.0
      %5586 = vmatpush1.xpose.msra.mxu0 0.0
      %5587 = vmatprep.subr.mxu0 0.0
      %5588 = vmatpush1.xpose.msra.mxu0 0.0
      %5589 = vmatprep.subr.mxu0 0.0
      %5590 = vmatpush1.xpose.msra.mxu0 0.0
      %5591 = vmatprep.subr.mxu0 0.0
      %5592 = vmatpush1.xpose.msra.mxu0 0.0
      %5593 = vmatprep.subr.mxu0 0.0
      %5594 = vmatpush1.xpose.msra.mxu0 0.0
      %5595 = vmatprep.subr.mxu0 0.0
      %5596 = vmatpush1.xpose.msra.mxu0 0.0
      %5597 = vmatprep.subr.mxu0 0.0
      %5598 = vmatpush1.xpose.msra.mxu0 0.0
      %5599 = vmatprep.subr.mxu0 0.0
      %5600 = vmatpush1.xpose.msra.mxu0 0.0
      %5601 = vmatprep.subr.mxu0 0.0
      %5602 = vmatpush1.xpose.msra.mxu0 %v5583
      %5603 = vmatprep.subr.mxu0 0.0
      %5604 = vmatpush1.xpose.msra.mxu0 %v5581
      %5605 = vmatprep.subr.mxu0 0.0
      %5606 = vmatpush1.xpose.msra.mxu0 %v5579
      %5607 = vmatprep.subr.mxu0 0.0
      %5608 = vmatpush1.xpose.msra.mxu0 %v5577
      %5609 = vmatprep.subr.mxu0 0.0
      %5610 = vmatpush1.xpose.msra.mxu0 %v5575
      %5611 = vmatprep.subr.mxu0 0.0
      %5612 = vmatpush1.xpose.msra.mxu0 %v5573
      %5613 = vmatprep.subr.mxu0 0.0
      %5614 = vmatpush1.xpose.msra.mxu0 %v5571
      %5615 = vmatprep.subr.mxu0 0.0
      %5616 = vmatpush1.xpose.msra.mxu0 %v5569
      %5617 = vmatprep.subr.mxu0 0.0
      %5618 = vmatpush2.xpose.msra.mxu0 0.0
      %5619 = vmatprep.subr.mxu0 0.0
      %5620 = vmatpush2.xpose.msra.mxu0 0.0
      %5621 = vmatprep.subr.mxu0 0.0
      %5622 = vmatpush2.xpose.msra.mxu0 0.0
      %5623 = vmatprep.subr.mxu0 0.0
      %5624 = vmatpush2.xpose.msra.mxu0 0.0
      %5625 = vmatprep.subr.mxu0 0.0
      %5626 = vmatpush2.xpose.msra.mxu0 0.0
      %5627 = vmatprep.subr.mxu0 0.0
      %5628 = vmatpush2.xpose.msra.mxu0 0.0
      %5629 = vmatprep.subr.mxu0 0.0
      %5630 = vmatpush2.xpose.msra.mxu0 0.0
      %5631 = vmatprep.subr.mxu0 0.0
      %5632 = vmatpush2.xpose.msra.mxu0 0.0
      %5633 = vmatprep.subr.mxu0 0.0
      %5634 = vmatpush2.xpose.msra.mxu0 0.0
      %5635 = vmatprep.subr.mxu0 0.0
      %5636 = vmatpush2.xpose.msra.mxu0 0.0
      %5637 = vmatprep.subr.mxu0 0.0
      %5638 = vmatpush2.xpose.msra.mxu0 0.0
      %5639 = vmatprep.subr.mxu0 0.0
      %5640 = vmatpush2.xpose.msra.mxu0 0.0
      %5641 = vmatprep.subr.mxu0 0.0
      %5642 = vmatpush2.xpose.msra.mxu0 0.0
      %5643 = vmatprep.subr.mxu0 0.0
      %5644 = vmatpush2.xpose.msra.mxu0 0.0
      %5645 = vmatprep.subr.mxu0 0.0
      %5646 = vmatpush2.xpose.msra.mxu0 0.0
      %5647 = vmatprep.subr.mxu0 0.0
      %5648 = vmatpush2.xpose.msra.mxu0 0.0
      %5649 = vmatprep.mubr.f32.mxu0 0.0
      %5650 = vmatmul.mubr.f32.gmra.mxu0 %v5553
      %v5651 = vpop.f32.mrf.mxu0
      %v5652 = vadd.f32 0.0, %v5651
      %v5653 = vpop.f32.mrf.mxu0
      %5654 = vmatprep.mubr.f32.mxu0 0.0
      %5655 = vmatmul.mubr.f32.gmra.mxu0 %v5555
      %v5656 = vpop.f32.mrf.mxu0
      %v5657 = vadd.f32 0.0, %v5656
      %v5658 = vpop.f32.mrf.mxu0
      %5659 = vmatprep.mubr.f32.mxu0 0.0
      %5660 = vmatmul.mubr.f32.gmra.mxu0 %v5557
      %v5661 = vpop.f32.mrf.mxu0
      %v5662 = vadd.f32 0.0, %v5661
      %v5663 = vpop.f32.mrf.mxu0
      %5664 = vmatprep.mubr.f32.mxu0 0.0
      %5665 = vmatmul.mubr.f32.gmra.mxu0 %v5559
      %v5666 = vpop.f32.mrf.mxu0
      %v5667 = vadd.f32 0.0, %v5666
      %v5668 = vpop.f32.mrf.mxu0
      %5669 = vmatprep.mubr.f32.mxu0 0.0
      %5670 = vmatmul.mubr.f32.gmra.mxu0 %v5561
      %v5671 = vpop.f32.mrf.mxu0
      %v5672 = vadd.f32 0.0, %v5671
      %v5673 = vpop.f32.mrf.mxu0
      %5674 = vmatprep.mubr.f32.mxu0 0.0
      %5675 = vmatmul.mubr.f32.gmra.mxu0 %v5563
      %v5676 = vpop.f32.mrf.mxu0
      %v5677 = vadd.f32 0.0, %v5676
      %v5678 = vpop.f32.mrf.mxu0
      %5679 = vmatprep.mubr.f32.mxu0 0.0
      %5680 = vmatmul.mubr.f32.gmra.mxu0 %v5565
      %v5681 = vpop.f32.mrf.mxu0
      %v5682 = vadd.f32 0.0, %v5681
      %v5683 = vpop.f32.mrf.mxu0
      %5684 = vmatprep.mubr.f32.mxu0 0.0
      %5685 = vmatmul.mubr.f32.gmra.mxu0 %v5567
      %v5686 = vpop.f32.mrf.mxu0
      %v5687 = vadd.f32 0.0, %v5686
      %v5688 = vpop.f32.mrf.mxu0
      %5689 = vdwg.mxu0
      %v5690 = vsel %vm2409, %v4469, -inf
      %5691 = vmax.xlane.f32.xlu0 %v5690
      %v5692 = vpop.xlane.xlu0 %5691
      %v5693 = vsel %vm2409, %v4474, -inf
      %5694 = vmax.xlane.f32.xlu0 %v5693
      %v5695 = vpop.xlane.xlu0 %5694
      %v5696 = vsel %vm2409, %v4479, -inf
      %5697 = vmax.xlane.f32.xlu0 %v5696
      %v5698 = vpop.xlane.xlu0 %5697
      %v5699 = vsel %vm2409, %v4484, -inf
      %5700 = vmax.xlane.f32.xlu0 %v5699
      %v5701 = vpop.xlane.xlu0 %5700
      %v5702 = vsel %vm2409, %v4489, -inf
      %5703 = vmax.xlane.f32.xlu0 %v5702
      %v5704 = vpop.xlane.xlu0 %5703
      %v5705 = vsel %vm2409, %v4494, -inf
      %5706 = vmax.xlane.f32.xlu0 %v5705
      %v5707 = vpop.xlane.xlu0 %5706
      %v5708 = vsel %vm2409, %v4499, -inf
      %5709 = vmax.xlane.f32.xlu0 %v5708
      %v5710 = vpop.xlane.xlu0 %5709
      %v5711 = vsel %vm2409, %v4504, -inf
      %5712 = vmax.xlane.f32.xlu0 %v5711
      %v5713 = vpop.xlane.xlu0 %5712
      %v5714 = vsel %vm2409, %v4638, -inf
      %5715 = vmax.xlane.f32.xlu0 %v5714
      %v5716 = vpop.xlane.xlu0 %5715
      %v5717 = vsel %vm2409, %v4643, -inf
      %5718 = vmax.xlane.f32.xlu0 %v5717
      %v5719 = vpop.xlane.xlu0 %5718
      %v5720 = vsel %vm2409, %v4648, -inf
      %5721 = vmax.xlane.f32.xlu0 %v5720
      %v5722 = vpop.xlane.xlu0 %5721
      %v5723 = vsel %vm2409, %v4653, -inf
      %5724 = vmax.xlane.f32.xlu0 %v5723
      %v5725 = vpop.xlane.xlu0 %5724
      %v5726 = vsel %vm2409, %v4658, -inf
      %5727 = vmax.xlane.f32.xlu0 %v5726
      %v5728 = vpop.xlane.xlu0 %5727
      %v5729 = vsel %vm2409, %v4663, -inf
      %5730 = vmax.xlane.f32.xlu0 %v5729
      %v5731 = vpop.xlane.xlu0 %5730
      %v5732 = vsel %vm2409, %v4668, -inf
      %5733 = vmax.xlane.f32.xlu0 %v5732
      %v5734 = vpop.xlane.xlu0 %5733
      %v5735 = vsel %vm2409, %v4673, -inf
      %5736 = vmax.xlane.f32.xlu0 %v5735
      %v5737 = vpop.xlane.xlu0 %5736
      %v5738 = vsel %vm2409, %v4807, -inf
      %5739 = vmax.xlane.f32.xlu0 %v5738
      %v5740 = vpop.xlane.xlu0 %5739
      %v5741 = vsel %vm2409, %v4812, -inf
      %5742 = vmax.xlane.f32.xlu0 %v5741
      %v5743 = vpop.xlane.xlu0 %5742
      %v5744 = vsel %vm2409, %v4817, -inf
      %5745 = vmax.xlane.f32.xlu0 %v5744
      %v5746 = vpop.xlane.xlu0 %5745
      %v5747 = vsel %vm2409, %v4822, -inf
      %5748 = vmax.xlane.f32.xlu0 %v5747
      %v5749 = vpop.xlane.xlu0 %5748
      %v5750 = vsel %vm2409, %v4827, -inf
      %5751 = vmax.xlane.f32.xlu0 %v5750
      %v5752 = vpop.xlane.xlu0 %5751
      %v5753 = vsel %vm2409, %v4832, -inf
      %5754 = vmax.xlane.f32.xlu0 %v5753
      %v5755 = vpop.xlane.xlu0 %5754
      %v5756 = vsel %vm2409, %v4837, -inf
      %5757 = vmax.xlane.f32.xlu0 %v5756
      %v5758 = vpop.xlane.xlu0 %5757
      %v5759 = vsel %vm2409, %v4842, -inf
      %5760 = vmax.xlane.f32.xlu0 %v5759
      %v5761 = vpop.xlane.xlu0 %5760
      %v5762 = vsel %vm2409, %v4976, -inf
      %5763 = vmax.xlane.f32.xlu0 %v5762
      %v5764 = vpop.xlane.xlu0 %5763
      %v5765 = vsel %vm2409, %v4981, -inf
      %5766 = vmax.xlane.f32.xlu0 %v5765
      %v5767 = vpop.xlane.xlu0 %5766
      %v5768 = vsel %vm2409, %v4986, -inf
      %5769 = vmax.xlane.f32.xlu0 %v5768
      %v5770 = vpop.xlane.xlu0 %5769
      %v5771 = vsel %vm2409, %v4991, -inf
      %5772 = vmax.xlane.f32.xlu0 %v5771
      %v5773 = vpop.xlane.xlu0 %5772
      %v5774 = vsel %vm2409, %v4996, -inf
      %5775 = vmax.xlane.f32.xlu0 %v5774
      %v5776 = vpop.xlane.xlu0 %5775
      %v5777 = vsel %vm2409, %v5001, -inf
      %5778 = vmax.xlane.f32.xlu0 %v5777
      %v5779 = vpop.xlane.xlu0 %5778
      %v5780 = vsel %vm2409, %v5006, -inf
      %5781 = vmax.xlane.f32.xlu0 %v5780
      %v5782 = vpop.xlane.xlu0 %5781
      %v5783 = vsel %vm2409, %v5011, -inf
      %5784 = vmax.xlane.f32.xlu0 %v5783
      %v5785 = vpop.xlane.xlu0 %5784
      %v5786 = vsel %vm2409, %v5145, -inf
      %5787 = vmax.xlane.f32.xlu0 %v5786
      %v5788 = vpop.xlane.xlu0 %5787
      %v5789 = vsel %vm2409, %v5150, -inf
      %5790 = vmax.xlane.f32.xlu0 %v5789
      %v5791 = vpop.xlane.xlu0 %5790
      %v5792 = vsel %vm2409, %v5155, -inf
      %5793 = vmax.xlane.f32.xlu0 %v5792
      %v5794 = vpop.xlane.xlu0 %5793
      %v5795 = vsel %vm2409, %v5160, -inf
      %5796 = vmax.xlane.f32.xlu0 %v5795
      %v5797 = vpop.xlane.xlu0 %5796
      %v5798 = vsel %vm2409, %v5165, -inf
      %5799 = vmax.xlane.f32.xlu0 %v5798
      %v5800 = vpop.xlane.xlu0 %5799
      %v5801 = vsel %vm2409, %v5170, -inf
      %5802 = vmax.xlane.f32.xlu0 %v5801
      %v5803 = vpop.xlane.xlu0 %5802
      %v5804 = vsel %vm2409, %v5175, -inf
      %5805 = vmax.xlane.f32.xlu0 %v5804
      %v5806 = vpop.xlane.xlu0 %5805
      %v5807 = vsel %vm2409, %v5180, -inf
      %5808 = vmax.xlane.f32.xlu0 %v5807
      %v5809 = vpop.xlane.xlu0 %5808
      %v5810 = vsel %vm2409, %v5314, -inf
      %5811 = vmax.xlane.f32.xlu0 %v5810
      %v5812 = vpop.xlane.xlu0 %5811
      %v5813 = vsel %vm2409, %v5319, -inf
      %5814 = vmax.xlane.f32.xlu0 %v5813
      %v5815 = vpop.xlane.xlu0 %5814
      %v5816 = vsel %vm2409, %v5324, -inf
      %5817 = vmax.xlane.f32.xlu0 %v5816
      %v5818 = vpop.xlane.xlu0 %5817
      %v5819 = vsel %vm2409, %v5329, -inf
      %5820 = vmax.xlane.f32.xlu0 %v5819
      %v5821 = vpop.xlane.xlu0 %5820
      %v5822 = vsel %vm2409, %v5334, -inf
      %5823 = vmax.xlane.f32.xlu0 %v5822
      %v5824 = vpop.xlane.xlu0 %5823
      %v5825 = vsel %vm2409, %v5339, -inf
      %5826 = vmax.xlane.f32.xlu0 %v5825
      %v5827 = vpop.xlane.xlu0 %5826
      %v5828 = vsel %vm2409, %v5344, -inf
      %5829 = vmax.xlane.f32.xlu0 %v5828
      %v5830 = vpop.xlane.xlu0 %5829
      %v5831 = vsel %vm2409, %v5349, -inf
      %5832 = vmax.xlane.f32.xlu0 %v5831
      %v5833 = vpop.xlane.xlu0 %5832
      %v5834 = vsel %vm2409, %v5483, -inf
      %5835 = vmax.xlane.f32.xlu0 %v5834
      %v5836 = vpop.xlane.xlu0 %5835
      %v5837 = vsel %vm2409, %v5488, -inf
      %5838 = vmax.xlane.f32.xlu0 %v5837
      %v5839 = vpop.xlane.xlu0 %5838
      %v5840 = vsel %vm2409, %v5493, -inf
      %5841 = vmax.xlane.f32.xlu0 %v5840
      %v5842 = vpop.xlane.xlu0 %5841
      %v5843 = vsel %vm2409, %v5498, -inf
      %5844 = vmax.xlane.f32.xlu0 %v5843
      %v5845 = vpop.xlane.xlu0 %5844
      %v5846 = vsel %vm2409, %v5503, -inf
      %5847 = vmax.xlane.f32.xlu0 %v5846
      %v5848 = vpop.xlane.xlu0 %5847
      %v5849 = vsel %vm2409, %v5508, -inf
      %5850 = vmax.xlane.f32.xlu0 %v5849
      %v5851 = vpop.xlane.xlu0 %5850
      %v5852 = vsel %vm2409, %v5513, -inf
      %5853 = vmax.xlane.f32.xlu0 %v5852
      %v5854 = vpop.xlane.xlu0 %5853
      %v5855 = vsel %vm2409, %v5518, -inf
      %5856 = vmax.xlane.f32.xlu0 %v5855
      %v5857 = vpop.xlane.xlu0 %5856
      %v5858 = vsel %vm2409, %v5652, -inf
      %5859 = vmax.xlane.f32.xlu0 %v5858
      %v5860 = vpop.xlane.xlu0 %5859
      %v5861 = vsel %vm2409, %v5657, -inf
      %5862 = vmax.xlane.f32.xlu0 %v5861
      %v5863 = vpop.xlane.xlu0 %5862
      %v5864 = vsel %vm2409, %v5662, -inf
      %5865 = vmax.xlane.f32.xlu0 %v5864
      %v5866 = vpop.xlane.xlu0 %5865
      %v5867 = vsel %vm2409, %v5667, -inf
      %5868 = vmax.xlane.f32.xlu0 %v5867
      %v5869 = vpop.xlane.xlu0 %5868
      %v5870 = vsel %vm2409, %v5672, -inf
      %5871 = vmax.xlane.f32.xlu0 %v5870
      %v5872 = vpop.xlane.xlu0 %5871
      %v5873 = vsel %vm2409, %v5677, -inf
      %5874 = vmax.xlane.f32.xlu0 %v5873
      %v5875 = vpop.xlane.xlu0 %5874
      %v5876 = vsel %vm2409, %v5682, -inf
      %5877 = vmax.xlane.f32.xlu0 %v5876
      %v5878 = vpop.xlane.xlu0 %5877
      %v5879 = vsel %vm2409, %v5687, -inf
      %5880 = vmax.xlane.f32.xlu0 %v5879
      %v5881 = vpop.xlane.xlu0 %5880
      %v5882 = vsub.f32 %v4469, %v5692
      %v5883 = vsub.f32 %v4474, %v5695
      %v5884 = vsub.f32 %v4479, %v5698
      %v5885 = vsub.f32 %v4484, %v5701
      %v5886 = vsub.f32 %v4489, %v5704
      %v5887 = vsub.f32 %v4494, %v5707
      %v5888 = vsub.f32 %v4499, %v5710
      %v5889 = vsub.f32 %v4504, %v5713
      %v5890 = vsub.f32 %v4638, %v5716
      %v5891 = vsub.f32 %v4643, %v5719
      %v5892 = vsub.f32 %v4648, %v5722
      %v5893 = vsub.f32 %v4653, %v5725
      %v5894 = vsub.f32 %v4658, %v5728
      %v5895 = vsub.f32 %v4663, %v5731
      %v5896 = vsub.f32 %v4668, %v5734
      %v5897 = vsub.f32 %v4673, %v5737
      %v5898 = vsub.f32 %v4807, %v5740
      %v5899 = vsub.f32 %v4812, %v5743
      %v5900 = vsub.f32 %v4817, %v5746
      %v5901 = vsub.f32 %v4822, %v5749
      %v5902 = vsub.f32 %v4827, %v5752
      %v5903 = vsub.f32 %v4832, %v5755
      %v5904 = vsub.f32 %v4837, %v5758
      %v5905 = vsub.f32 %v4842, %v5761
      %v5906 = vsub.f32 %v4976, %v5764
      %v5907 = vsub.f32 %v4981, %v5767
      %v5908 = vsub.f32 %v4986, %v5770
      %v5909 = vsub.f32 %v4991, %v5773
      %v5910 = vsub.f32 %v4996, %v5776
      %v5911 = vsub.f32 %v5001, %v5779
      %v5912 = vsub.f32 %v5006, %v5782
      %v5913 = vsub.f32 %v5011, %v5785
      %v5914 = vsub.f32 %v5145, %v5788
      %v5915 = vsub.f32 %v5150, %v5791
      %v5916 = vsub.f32 %v5155, %v5794
      %v5917 = vsub.f32 %v5160, %v5797
      %v5918 = vsub.f32 %v5165, %v5800
      %v5919 = vsub.f32 %v5170, %v5803
      %v5920 = vsub.f32 %v5175, %v5806
      %v5921 = vsub.f32 %v5180, %v5809
      %v5922 = vsub.f32 %v5314, %v5812
      %v5923 = vsub.f32 %v5319, %v5815
      %v5924 = vsub.f32 %v5324, %v5818
      %v5925 = vsub.f32 %v5329, %v5821
      %v5926 = vsub.f32 %v5334, %v5824
      %v5927 = vsub.f32 %v5339, %v5827
      %v5928 = vsub.f32 %v5344, %v5830
      %v5929 = vsub.f32 %v5349, %v5833
      %v5930 = vsub.f32 %v5483, %v5836
      %v5931 = vsub.f32 %v5488, %v5839
      %v5932 = vsub.f32 %v5493, %v5842
      %v5933 = vsub.f32 %v5498, %v5845
      %v5934 = vsub.f32 %v5503, %v5848
      %v5935 = vsub.f32 %v5508, %v5851
      %v5936 = vsub.f32 %v5513, %v5854
      %v5937 = vsub.f32 %v5518, %v5857
      %v5938 = vsub.f32 %v5652, %v5860
      %v5939 = vsub.f32 %v5657, %v5863
      %v5940 = vsub.f32 %v5662, %v5866
      %v5941 = vsub.f32 %v5667, %v5869
      %v5942 = vsub.f32 %v5672, %v5872
      %v5943 = vsub.f32 %v5677, %v5875
      %v5944 = vsub.f32 %v5682, %v5878
      %v5945 = vsub.f32 %v5687, %v5881
      %v5946 = vmul.f32 %v5882, 1.442695
      %v5947 = vpow.pop %v5946
      %v5948 = vmul.f32 %v5883, 1.442695
      %v5949 = vpow.pop %v5948
      %v5950 = vmul.f32 %v5884, 1.442695
      %v5951 = vpow.pop %v5950
      %v5952 = vmul.f32 %v5885, 1.442695
      %v5953 = vpow.pop %v5952
      %v5954 = vmul.f32 %v5886, 1.442695
      %v5955 = vpow.pop %v5954
      %v5956 = vmul.f32 %v5887, 1.442695
      %v5957 = vpow.pop %v5956
      %v5958 = vmul.f32 %v5888, 1.442695
      %v5959 = vpow.pop %v5958
      %v5960 = vmul.f32 %v5889, 1.442695
      %v5961 = vpow.pop %v5960
      %v5962 = vmul.f32 %v5890, 1.442695
      %v5963 = vpow.pop %v5962
      %v5964 = vmul.f32 %v5891, 1.442695
      %v5965 = vpow.pop %v5964
      %v5966 = vmul.f32 %v5892, 1.442695
      %v5967 = vpow.pop %v5966
      %v5968 = vmul.f32 %v5893, 1.442695
      %v5969 = vpow.pop %v5968
      %v5970 = vmul.f32 %v5894, 1.442695
      %v5971 = vpow.pop %v5970
      %v5972 = vmul.f32 %v5895, 1.442695
      %v5973 = vpow.pop %v5972
      %v5974 = vmul.f32 %v5896, 1.442695
      %v5975 = vpow.pop %v5974
      %v5976 = vmul.f32 %v5897, 1.442695
      %v5977 = vpow.pop %v5976
      %v5978 = vmul.f32 %v5898, 1.442695
      %v5979 = vpow.pop %v5978
      %v5980 = vmul.f32 %v5899, 1.442695
      %v5981 = vpow.pop %v5980
      %v5982 = vmul.f32 %v5900, 1.442695
      %v5983 = vpow.pop %v5982
      %v5984 = vmul.f32 %v5901, 1.442695
      %v5985 = vpow.pop %v5984
      %v5986 = vmul.f32 %v5902, 1.442695
      %v5987 = vpow.pop %v5986
      %v5988 = vmul.f32 %v5903, 1.442695
      %v5989 = vpow.pop %v5988
      %v5990 = vmul.f32 %v5904, 1.442695
      %v5991 = vpow.pop %v5990
      %v5992 = vmul.f32 %v5905, 1.442695
      %v5993 = vpow.pop %v5992
      %v5994 = vmul.f32 %v5906, 1.442695
      %v5995 = vpow.pop %v5994
      %v5996 = vmul.f32 %v5907, 1.442695
      %v5997 = vpow.pop %v5996
      %v5998 = vmul.f32 %v5908, 1.442695
      %v5999 = vpow.pop %v5998
      %v6000 = vmul.f32 %v5909, 1.442695
      %v6001 = vpow.pop %v6000
      %v6002 = vmul.f32 %v5910, 1.442695
      %v6003 = vpow.pop %v6002
      %v6004 = vmul.f32 %v5911, 1.442695
      %v6005 = vpow.pop %v6004
      %v6006 = vmul.f32 %v5912, 1.442695
      %v6007 = vpow.pop %v6006
      %v6008 = vmul.f32 %v5913, 1.442695
      %v6009 = vpow.pop %v6008
      %v6010 = vmul.f32 %v5914, 1.442695
      %v6011 = vpow.pop %v6010
      %v6012 = vmul.f32 %v5915, 1.442695
      %v6013 = vpow.pop %v6012
      %v6014 = vmul.f32 %v5916, 1.442695
      %v6015 = vpow.pop %v6014
      %v6016 = vmul.f32 %v5917, 1.442695
      %v6017 = vpow.pop %v6016
      %v6018 = vmul.f32 %v5918, 1.442695
      %v6019 = vpow.pop %v6018
      %v6020 = vmul.f32 %v5919, 1.442695
      %v6021 = vpow.pop %v6020
      %v6022 = vmul.f32 %v5920, 1.442695
      %v6023 = vpow.pop %v6022
      %v6024 = vmul.f32 %v5921, 1.442695
      %v6025 = vpow.pop %v6024
      %v6026 = vmul.f32 %v5922, 1.442695
      %v6027 = vpow.pop %v6026
      %v6028 = vmul.f32 %v5923, 1.442695
      %v6029 = vpow.pop %v6028
      %v6030 = vmul.f32 %v5924, 1.442695
      %v6031 = vpow.pop %v6030
      %v6032 = vmul.f32 %v5925, 1.442695
      %v6033 = vpow.pop %v6032
      %v6034 = vmul.f32 %v5926, 1.442695
      %v6035 = vpow.pop %v6034
      %v6036 = vmul.f32 %v5927, 1.442695
      %v6037 = vpow.pop %v6036
      %v6038 = vmul.f32 %v5928, 1.442695
      %v6039 = vpow.pop %v6038
      %v6040 = vmul.f32 %v5929, 1.442695
      %v6041 = vpow.pop %v6040
      %v6042 = vmul.f32 %v5930, 1.442695
      %v6043 = vpow.pop %v6042
      %v6044 = vmul.f32 %v5931, 1.442695
      %v6045 = vpow.pop %v6044
      %v6046 = vmul.f32 %v5932, 1.442695
      %v6047 = vpow.pop %v6046
      %v6048 = vmul.f32 %v5933, 1.442695
      %v6049 = vpow.pop %v6048
      %v6050 = vmul.f32 %v5934, 1.442695
      %v6051 = vpow.pop %v6050
      %v6052 = vmul.f32 %v5935, 1.442695
      %v6053 = vpow.pop %v6052
      %v6054 = vmul.f32 %v5936, 1.442695
      %v6055 = vpow.pop %v6054
      %v6056 = vmul.f32 %v5937, 1.442695
      %v6057 = vpow.pop %v6056
      %v6058 = vmul.f32 %v5938, 1.442695
      %v6059 = vpow.pop %v6058
      %v6060 = vmul.f32 %v5939, 1.442695
      %v6061 = vpow.pop %v6060
      %v6062 = vmul.f32 %v5940, 1.442695
      %v6063 = vpow.pop %v6062
      %v6064 = vmul.f32 %v5941, 1.442695
      %v6065 = vpow.pop %v6064
      %v6066 = vmul.f32 %v5942, 1.442695
      %v6067 = vpow.pop %v6066
      %v6068 = vmul.f32 %v5943, 1.442695
      %v6069 = vpow.pop %v6068
      %v6070 = vmul.f32 %v5944, 1.442695
      %v6071 = vpow.pop %v6070
      %v6072 = vmul.f32 %v5945, 1.442695
      %v6073 = vpow.pop %v6072
      %v6074 = vsel %vm2409, %v5947, 0.0
      %6075 = vadd.xlane.f32.xlu0 %v6074
      %v6076 = vpop.xlane.xlu0 %6075
      %v6077 = vsel %vm2409, %v5949, 0.0
      %6078 = vadd.xlane.f32.xlu0 %v6077
      %v6079 = vpop.xlane.xlu0 %6078
      %v6080 = vsel %vm2409, %v5951, 0.0
      %6081 = vadd.xlane.f32.xlu0 %v6080
      %v6082 = vpop.xlane.xlu0 %6081
      %v6083 = vsel %vm2409, %v5953, 0.0
      %6084 = vadd.xlane.f32.xlu0 %v6083
      %v6085 = vpop.xlane.xlu0 %6084
      %v6086 = vsel %vm2409, %v5955, 0.0
      %6087 = vadd.xlane.f32.xlu0 %v6086
      %v6088 = vpop.xlane.xlu0 %6087
      %v6089 = vsel %vm2409, %v5957, 0.0
      %6090 = vadd.xlane.f32.xlu0 %v6089
      %v6091 = vpop.xlane.xlu0 %6090
      %v6092 = vsel %vm2409, %v5959, 0.0
      %6093 = vadd.xlane.f32.xlu0 %v6092
      %v6094 = vpop.xlane.xlu0 %6093
      %v6095 = vsel %vm2409, %v5961, 0.0
      %6096 = vadd.xlane.f32.xlu0 %v6095
      %v6097 = vpop.xlane.xlu0 %6096
      %v6098 = vsel %vm2409, %v5963, 0.0
      %6099 = vadd.xlane.f32.xlu0 %v6098
      %v6100 = vpop.xlane.xlu0 %6099
      %v6101 = vsel %vm2409, %v5965, 0.0
      %6102 = vadd.xlane.f32.xlu0 %v6101
      %v6103 = vpop.xlane.xlu0 %6102
      %v6104 = vsel %vm2409, %v5967, 0.0
      %6105 = vadd.xlane.f32.xlu0 %v6104
      %v6106 = vpop.xlane.xlu0 %6105
      %v6107 = vsel %vm2409, %v5969, 0.0
      %6108 = vadd.xlane.f32.xlu0 %v6107
      %v6109 = vpop.xlane.xlu0 %6108
      %v6110 = vsel %vm2409, %v5971, 0.0
      %6111 = vadd.xlane.f32.xlu0 %v6110
      %v6112 = vpop.xlane.xlu0 %6111
      %v6113 = vsel %vm2409, %v5973, 0.0
      %6114 = vadd.xlane.f32.xlu0 %v6113
      %v6115 = vpop.xlane.xlu0 %6114
      %v6116 = vsel %vm2409, %v5975, 0.0
      %6117 = vadd.xlane.f32.xlu0 %v6116
      %v6118 = vpop.xlane.xlu0 %6117
      %v6119 = vsel %vm2409, %v5977, 0.0
      %6120 = vadd.xlane.f32.xlu0 %v6119
      %v6121 = vpop.xlane.xlu0 %6120
      %v6122 = vsel %vm2409, %v5979, 0.0
      %6123 = vadd.xlane.f32.xlu0 %v6122
      %v6124 = vpop.xlane.xlu0 %6123
      %v6125 = vsel %vm2409, %v5981, 0.0
      %6126 = vadd.xlane.f32.xlu0 %v6125
      %v6127 = vpop.xlane.xlu0 %6126
      %v6128 = vsel %vm2409, %v5983, 0.0
      %6129 = vadd.xlane.f32.xlu0 %v6128
      %v6130 = vpop.xlane.xlu0 %6129
      %v6131 = vsel %vm2409, %v5985, 0.0
      %6132 = vadd.xlane.f32.xlu0 %v6131
      %v6133 = vpop.xlane.xlu0 %6132
      %v6134 = vsel %vm2409, %v5987, 0.0
      %6135 = vadd.xlane.f32.xlu0 %v6134
      %v6136 = vpop.xlane.xlu0 %6135
      %v6137 = vsel %vm2409, %v5989, 0.0
      %6138 = vadd.xlane.f32.xlu0 %v6137
      %v6139 = vpop.xlane.xlu0 %6138
      %v6140 = vsel %vm2409, %v5991, 0.0
      %6141 = vadd.xlane.f32.xlu0 %v6140
      %v6142 = vpop.xlane.xlu0 %6141
      %v6143 = vsel %vm2409, %v5993, 0.0
      %6144 = vadd.xlane.f32.xlu0 %v6143
      %v6145 = vpop.xlane.xlu0 %6144
      %v6146 = vsel %vm2409, %v5995, 0.0
      %6147 = vadd.xlane.f32.xlu0 %v6146
      %v6148 = vpop.xlane.xlu0 %6147
      %v6149 = vsel %vm2409, %v5997, 0.0
      %6150 = vadd.xlane.f32.xlu0 %v6149
      %v6151 = vpop.xlane.xlu0 %6150
      %v6152 = vsel %vm2409, %v5999, 0.0
      %6153 = vadd.xlane.f32.xlu0 %v6152
      %v6154 = vpop.xlane.xlu0 %6153
      %v6155 = vsel %vm2409, %v6001, 0.0
      %6156 = vadd.xlane.f32.xlu0 %v6155
      %v6157 = vpop.xlane.xlu0 %6156
      %v6158 = vsel %vm2409, %v6003, 0.0
      %6159 = vadd.xlane.f32.xlu0 %v6158
      %v6160 = vpop.xlane.xlu0 %6159
      %v6161 = vsel %vm2409, %v6005, 0.0
      %6162 = vadd.xlane.f32.xlu0 %v6161
      %v6163 = vpop.xlane.xlu0 %6162
      %v6164 = vsel %vm2409, %v6007, 0.0
      %6165 = vadd.xlane.f32.xlu0 %v6164
      %v6166 = vpop.xlane.xlu0 %6165
      %v6167 = vsel %vm2409, %v6009, 0.0
      %6168 = vadd.xlane.f32.xlu0 %v6167
      %v6169 = vpop.xlane.xlu0 %6168
      %v6170 = vsel %vm2409, %v6011, 0.0
      %6171 = vadd.xlane.f32.xlu0 %v6170
      %v6172 = vpop.xlane.xlu0 %6171
      %v6173 = vsel %vm2409, %v6013, 0.0
      %6174 = vadd.xlane.f32.xlu0 %v6173
      %v6175 = vpop.xlane.xlu0 %6174
      %v6176 = vsel %vm2409, %v6015, 0.0
      %6177 = vadd.xlane.f32.xlu0 %v6176
      %v6178 = vpop.xlane.xlu0 %6177
      %v6179 = vsel %vm2409, %v6017, 0.0
      %6180 = vadd.xlane.f32.xlu0 %v6179
      %v6181 = vpop.xlane.xlu0 %6180
      %v6182 = vsel %vm2409, %v6019, 0.0
      %6183 = vadd.xlane.f32.xlu0 %v6182
      %v6184 = vpop.xlane.xlu0 %6183
      %v6185 = vsel %vm2409, %v6021, 0.0
      %6186 = vadd.xlane.f32.xlu0 %v6185
      %v6187 = vpop.xlane.xlu0 %6186
      %v6188 = vsel %vm2409, %v6023, 0.0
      %6189 = vadd.xlane.f32.xlu0 %v6188
      %v6190 = vpop.xlane.xlu0 %6189
      %v6191 = vsel %vm2409, %v6025, 0.0
      %6192 = vadd.xlane.f32.xlu0 %v6191
      %v6193 = vpop.xlane.xlu0 %6192
      %v6194 = vsel %vm2409, %v6027, 0.0
      %6195 = vadd.xlane.f32.xlu0 %v6194
      %v6196 = vpop.xlane.xlu0 %6195
      %v6197 = vsel %vm2409, %v6029, 0.0
      %6198 = vadd.xlane.f32.xlu0 %v6197
      %v6199 = vpop.xlane.xlu0 %6198
      %v6200 = vsel %vm2409, %v6031, 0.0
      %6201 = vadd.xlane.f32.xlu0 %v6200
      %v6202 = vpop.xlane.xlu0 %6201
      %v6203 = vsel %vm2409, %v6033, 0.0
      %6204 = vadd.xlane.f32.xlu0 %v6203
      %v6205 = vpop.xlane.xlu0 %6204
      %v6206 = vsel %vm2409, %v6035, 0.0
      %6207 = vadd.xlane.f32.xlu0 %v6206
      %v6208 = vpop.xlane.xlu0 %6207
      %v6209 = vsel %vm2409, %v6037, 0.0
      %6210 = vadd.xlane.f32.xlu0 %v6209
      %v6211 = vpop.xlane.xlu0 %6210
      %v6212 = vsel %vm2409, %v6039, 0.0
      %6213 = vadd.xlane.f32.xlu0 %v6212
      %v6214 = vpop.xlane.xlu0 %6213
      %v6215 = vsel %vm2409, %v6041, 0.0
      %6216 = vadd.xlane.f32.xlu0 %v6215
      %v6217 = vpop.xlane.xlu0 %6216
      %v6218 = vsel %vm2409, %v6043, 0.0
      %6219 = vadd.xlane.f32.xlu0 %v6218
      %v6220 = vpop.xlane.xlu0 %6219
      %v6221 = vsel %vm2409, %v6045, 0.0
      %6222 = vadd.xlane.f32.xlu0 %v6221
      %v6223 = vpop.xlane.xlu0 %6222
      %v6224 = vsel %vm2409, %v6047, 0.0
      %6225 = vadd.xlane.f32.xlu0 %v6224
      %v6226 = vpop.xlane.xlu0 %6225
      %v6227 = vsel %vm2409, %v6049, 0.0
      %6228 = vadd.xlane.f32.xlu0 %v6227
      %v6229 = vpop.xlane.xlu0 %6228
      %v6230 = vsel %vm2409, %v6051, 0.0
      %6231 = vadd.xlane.f32.xlu0 %v6230
      %v6232 = vpop.xlane.xlu0 %6231
      %v6233 = vsel %vm2409, %v6053, 0.0
      %6234 = vadd.xlane.f32.xlu0 %v6233
      %v6235 = vpop.xlane.xlu0 %6234
      %v6236 = vsel %vm2409, %v6055, 0.0
      %6237 = vadd.xlane.f32.xlu0 %v6236
      %v6238 = vpop.xlane.xlu0 %6237
      %v6239 = vsel %vm2409, %v6057, 0.0
      %6240 = vadd.xlane.f32.xlu0 %v6239
      %v6241 = vpop.xlane.xlu0 %6240
      %v6242 = vsel %vm2409, %v6059, 0.0
      %6243 = vadd.xlane.f32.xlu0 %v6242
      %v6244 = vpop.xlane.xlu0 %6243
      %v6245 = vsel %vm2409, %v6061, 0.0
      %6246 = vadd.xlane.f32.xlu0 %v6245
      %v6247 = vpop.xlane.xlu0 %6246
      %v6248 = vsel %vm2409, %v6063, 0.0
      %6249 = vadd.xlane.f32.xlu0 %v6248
      %v6250 = vpop.xlane.xlu0 %6249
      %v6251 = vsel %vm2409, %v6065, 0.0
      %6252 = vadd.xlane.f32.xlu0 %v6251
      %v6253 = vpop.xlane.xlu0 %6252
      %v6254 = vsel %vm2409, %v6067, 0.0
      %6255 = vadd.xlane.f32.xlu0 %v6254
      %v6256 = vpop.xlane.xlu0 %6255
      %v6257 = vsel %vm2409, %v6069, 0.0
      %6258 = vadd.xlane.f32.xlu0 %v6257
      %v6259 = vpop.xlane.xlu0 %6258
      %v6260 = vsel %vm2409, %v6071, 0.0
      %6261 = vadd.xlane.f32.xlu0 %v6260
      %v6262 = vpop.xlane.xlu0 %6261
      %v6263 = vsel %vm2409, %v6073, 0.0
      %6264 = vadd.xlane.f32.xlu0 %v6263
      %v6265 = vpop.xlane.xlu0 %6264
      %v6266 = vrcp.pop %v6076
      %v6267 = vrcp.pop %v6079
      %v6268 = vrcp.pop %v6082
      %v6269 = vrcp.pop %v6085
      %v6270 = vrcp.pop %v6088
      %v6271 = vrcp.pop %v6091
      %v6272 = vrcp.pop %v6094
      %v6273 = vrcp.pop %v6097
      %v6274 = vrcp.pop %v6100
      %v6275 = vrcp.pop %v6103
      %v6276 = vrcp.pop %v6106
      %v6277 = vrcp.pop %v6109
      %v6278 = vrcp.pop %v6112
      %v6279 = vrcp.pop %v6115
      %v6280 = vrcp.pop %v6118
      %v6281 = vrcp.pop %v6121
      %v6282 = vrcp.pop %v6124
      %v6283 = vrcp.pop %v6127
      %v6284 = vrcp.pop %v6130
      %v6285 = vrcp.pop %v6133
      %v6286 = vrcp.pop %v6136
      %v6287 = vrcp.pop %v6139
      %v6288 = vrcp.pop %v6142
      %v6289 = vrcp.pop %v6145
      %v6290 = vrcp.pop %v6148
      %v6291 = vrcp.pop %v6151
      %v6292 = vrcp.pop %v6154
      %v6293 = vrcp.pop %v6157
      %v6294 = vrcp.pop %v6160
      %v6295 = vrcp.pop %v6163
      %v6296 = vrcp.pop %v6166
      %v6297 = vrcp.pop %v6169
      %v6298 = vrcp.pop %v6172
      %v6299 = vrcp.pop %v6175
      %v6300 = vrcp.pop %v6178
      %v6301 = vrcp.pop %v6181
      %v6302 = vrcp.pop %v6184
      %v6303 = vrcp.pop %v6187
      %v6304 = vrcp.pop %v6190
      %v6305 = vrcp.pop %v6193
      %v6306 = vrcp.pop %v6196
      %v6307 = vrcp.pop %v6199
      %v6308 = vrcp.pop %v6202
      %v6309 = vrcp.pop %v6205
      %v6310 = vrcp.pop %v6208
      %v6311 = vrcp.pop %v6211
      %v6312 = vrcp.pop %v6214
      %v6313 = vrcp.pop %v6217
      %v6314 = vrcp.pop %v6220
      %v6315 = vrcp.pop %v6223
      %v6316 = vrcp.pop %v6226
      %v6317 = vrcp.pop %v6229
      %v6318 = vrcp.pop %v6232
      %v6319 = vrcp.pop %v6235
      %v6320 = vrcp.pop %v6238
      %v6321 = vrcp.pop %v6241
      %v6322 = vrcp.pop %v6244
      %v6323 = vrcp.pop %v6247
      %v6324 = vrcp.pop %v6250
      %v6325 = vrcp.pop %v6253
      %v6326 = vrcp.pop %v6256
      %v6327 = vrcp.pop %v6259
      %v6328 = vrcp.pop %v6262
      %v6329 = vrcp.pop %v6265
      %v6330 = vmul.f32 %v5947, %v6266
      %v6331 = vmul.f32 %v5949, %v6267
      %v6332 = vmul.f32 %v5951, %v6268
      %v6333 = vmul.f32 %v5953, %v6269
      %v6334 = vmul.f32 %v5955, %v6270
      %v6335 = vmul.f32 %v5957, %v6271
      %v6336 = vmul.f32 %v5959, %v6272
      %v6337 = vmul.f32 %v5961, %v6273
      %v6338 = vmul.f32 %v5963, %v6274
      %v6339 = vmul.f32 %v5965, %v6275
      %v6340 = vmul.f32 %v5967, %v6276
      %v6341 = vmul.f32 %v5969, %v6277
      %v6342 = vmul.f32 %v5971, %v6278
      %v6343 = vmul.f32 %v5973, %v6279
      %v6344 = vmul.f32 %v5975, %v6280
      %v6345 = vmul.f32 %v5977, %v6281
      %v6346 = vmul.f32 %v5979, %v6282
      %v6347 = vmul.f32 %v5981, %v6283
      %v6348 = vmul.f32 %v5983, %v6284
      %v6349 = vmul.f32 %v5985, %v6285
      %v6350 = vmul.f32 %v5987, %v6286
      %v6351 = vmul.f32 %v5989, %v6287
      %v6352 = vmul.f32 %v5991, %v6288
      %v6353 = vmul.f32 %v5993, %v6289
      %v6354 = vmul.f32 %v5995, %v6290
      %v6355 = vmul.f32 %v5997, %v6291
      %v6356 = vmul.f32 %v5999, %v6292
      %v6357 = vmul.f32 %v6001, %v6293
      %v6358 = vmul.f32 %v6003, %v6294
      %v6359 = vmul.f32 %v6005, %v6295
      %v6360 = vmul.f32 %v6007, %v6296
      %v6361 = vmul.f32 %v6009, %v6297
      %v6362 = vmul.f32 %v6011, %v6298
      %v6363 = vmul.f32 %v6013, %v6299
      %v6364 = vmul.f32 %v6015, %v6300
      %v6365 = vmul.f32 %v6017, %v6301
      %v6366 = vmul.f32 %v6019, %v6302
      %v6367 = vmul.f32 %v6021, %v6303
      %v6368 = vmul.f32 %v6023, %v6304
      %v6369 = vmul.f32 %v6025, %v6305
      %v6370 = vmul.f32 %v6027, %v6306
      %v6371 = vmul.f32 %v6029, %v6307
      %v6372 = vmul.f32 %v6031, %v6308
      %v6373 = vmul.f32 %v6033, %v6309
      %v6374 = vmul.f32 %v6035, %v6310
      %v6375 = vmul.f32 %v6037, %v6311
      %v6376 = vmul.f32 %v6039, %v6312
      %v6377 = vmul.f32 %v6041, %v6313
      %v6378 = vmul.f32 %v6043, %v6314
      %v6379 = vmul.f32 %v6045, %v6315
      %v6380 = vmul.f32 %v6047, %v6316
      %v6381 = vmul.f32 %v6049, %v6317
      %v6382 = vmul.f32 %v6051, %v6318
      %v6383 = vmul.f32 %v6053, %v6319
      %v6384 = vmul.f32 %v6055, %v6320
      %v6385 = vmul.f32 %v6057, %v6321
      %v6386 = vmul.f32 %v6059, %v6322
      %v6387 = vmul.f32 %v6061, %v6323
      %v6388 = vmul.f32 %v6063, %v6324
      %v6389 = vmul.f32 %v6065, %v6325
      %v6390 = vmul.f32 %v6067, %v6326
      %v6391 = vmul.f32 %v6069, %v6327
      %v6392 = vmul.f32 %v6071, %v6328
      %v6393 = vmul.f32 %v6073, %v6329
      %6394 = vrot.lane.b32.xlu0 %v673, 108
      %v6395 = vpop.permute.xlu0 %6394
      %6396 = vrot.lane.b32.xlu0 %v678, 108
      %v6397 = vpop.permute.xlu0 %6396
      %6398 = vrot.lane.b32.xlu0 %v683, 108
      %v6399 = vpop.permute.xlu0 %6398
      %6400 = vrot.lane.b32.xlu0 %v688, 108
      %v6401 = vpop.permute.xlu0 %6400
      %6402 = vrot.lane.b32.xlu0 %v693, 108
      %v6403 = vpop.permute.xlu0 %6402
      %6404 = vrot.lane.b32.xlu0 %v698, 108
      %v6405 = vpop.permute.xlu0 %6404
      %6406 = vrot.lane.b32.xlu0 %v703, 108
      %v6407 = vpop.permute.xlu0 %6406
      %6408 = vrot.lane.b32.xlu0 %v708, 108
      %v6409 = vpop.permute.xlu0 %6408
      %v6419 = vsel %vm2409, %v6330, 0
      %v6422 = vsel %vm2409, %v6331, 0
      %v6425 = vsel %vm2409, %v6332, 0
      %v6428 = vsel %vm2409, %v6333, 0
      %v6431 = vsel %vm2409, %v6334, 0
      %v6434 = vsel %vm2409, %v6335, 0
      %v6437 = vsel %vm2409, %v6336, 0
      %v6440 = vsel %vm2409, %v6337, 0
      %6442 = vmatprep.subr.mxu0 0.0
      %6443 = vmatpush1.msra.mxu0 0.0
      %6444 = vmatprep.subr.mxu0 0.0
      %6445 = vmatpush1.msra.mxu0 0.0
      %6446 = vmatprep.subr.mxu0 0.0
      %6447 = vmatpush1.msra.mxu0 0.0
      %6448 = vmatprep.subr.mxu0 0.0
      %6449 = vmatpush1.msra.mxu0 0.0
      %6450 = vmatprep.subr.mxu0 0.0
      %6451 = vmatpush1.msra.mxu0 0.0
      %6452 = vmatprep.subr.mxu0 0.0
      %6453 = vmatpush1.msra.mxu0 0.0
      %6454 = vmatprep.subr.mxu0 0.0
      %6455 = vmatpush1.msra.mxu0 0.0
      %6456 = vmatprep.subr.mxu0 0.0
      %6457 = vmatpush1.msra.mxu0 0.0
      %6458 = vmatprep.subr.mxu0 0.0
      %6459 = vmatpush1.msra.mxu0 %v6409
      %6460 = vmatprep.subr.mxu0 0.0
      %6461 = vmatpush1.msra.mxu0 %v6407
      %6462 = vmatprep.subr.mxu0 0.0
      %6463 = vmatpush1.msra.mxu0 %v6405
      %6464 = vmatprep.subr.mxu0 0.0
      %6465 = vmatpush1.msra.mxu0 %v6403
      %6466 = vmatprep.subr.mxu0 0.0
      %6467 = vmatpush1.msra.mxu0 %v6401
      %6468 = vmatprep.subr.mxu0 0.0
      %6469 = vmatpush1.msra.mxu0 %v6399
      %6470 = vmatprep.subr.mxu0 0.0
      %6471 = vmatpush1.msra.mxu0 %v6397
      %6472 = vmatprep.subr.mxu0 0.0
      %6473 = vmatpush1.msra.mxu0 %v6395
      %6474 = vmatprep.subr.mxu0 0.0
      %6475 = vmatpush2.msra.mxu0 0.0
      %6476 = vmatprep.subr.mxu0 0.0
      %6477 = vmatpush2.msra.mxu0 0.0
      %6478 = vmatprep.subr.mxu0 0.0
      %6479 = vmatpush2.msra.mxu0 0.0
      %6480 = vmatprep.subr.mxu0 0.0
      %6481 = vmatpush2.msra.mxu0 0.0
      %6482 = vmatprep.subr.mxu0 0.0
      %6483 = vmatpush2.msra.mxu0 0.0
      %6484 = vmatprep.subr.mxu0 0.0
      %6485 = vmatpush2.msra.mxu0 0.0
      %6486 = vmatprep.subr.mxu0 0.0
      %6487 = vmatpush2.msra.mxu0 0.0
      %6488 = vmatprep.subr.mxu0 0.0
      %6489 = vmatpush2.msra.mxu0 0.0
      %6490 = vmatprep.subr.mxu0 0.0
      %6491 = vmatpush2.msra.mxu0 0.0
      %6492 = vmatprep.subr.mxu0 0.0
      %6493 = vmatpush2.msra.mxu0 0.0
      %6494 = vmatprep.subr.mxu0 0.0
      %6495 = vmatpush2.msra.mxu0 0.0
      %6496 = vmatprep.subr.mxu0 0.0
      %6497 = vmatpush2.msra.mxu0 0.0
      %6498 = vmatprep.subr.mxu0 0.0
      %6499 = vmatpush2.msra.mxu0 0.0
      %6500 = vmatprep.subr.mxu0 0.0
      %6501 = vmatpush2.msra.mxu0 0.0
      %6502 = vmatprep.subr.mxu0 0.0
      %6503 = vmatpush2.msra.mxu0 0.0
      %6504 = vmatprep.subr.mxu0 0.0
      %6505 = vmatpush2.msra.mxu0 0.0
      %6506 = vmatprep.mubr.f32.mxu0 0.0
      %6507 = vmatmul.mubr.f32.gmra.mxu0 %v6419
      %v6508 = vpop.f32.mrf.mxu0
      %v6509 = vadd.f32 0.0, %v6508
      %v6510 = vpop.f32.mrf.mxu0
      %6511 = vmatprep.mubr.f32.mxu0 0.0
      %6512 = vmatmul.mubr.f32.gmra.mxu0 %v6422
      %v6513 = vpop.f32.mrf.mxu0
      %v6514 = vadd.f32 0.0, %v6513
      %v6515 = vpop.f32.mrf.mxu0
      %6516 = vmatprep.mubr.f32.mxu0 0.0
      %6517 = vmatmul.mubr.f32.gmra.mxu0 %v6425
      %v6518 = vpop.f32.mrf.mxu0
      %v6519 = vadd.f32 0.0, %v6518
      %v6520 = vpop.f32.mrf.mxu0
      %6521 = vmatprep.mubr.f32.mxu0 0.0
      %6522 = vmatmul.mubr.f32.gmra.mxu0 %v6428
      %v6523 = vpop.f32.mrf.mxu0
      %v6524 = vadd.f32 0.0, %v6523
      %v6525 = vpop.f32.mrf.mxu0
      %6526 = vmatprep.mubr.f32.mxu0 0.0
      %6527 = vmatmul.mubr.f32.gmra.mxu0 %v6431
      %v6528 = vpop.f32.mrf.mxu0
      %v6529 = vadd.f32 0.0, %v6528
      %v6530 = vpop.f32.mrf.mxu0
      %6531 = vmatprep.mubr.f32.mxu0 0.0
      %6532 = vmatmul.mubr.f32.gmra.mxu0 %v6434
      %v6533 = vpop.f32.mrf.mxu0
      %v6534 = vadd.f32 0.0, %v6533
      %v6535 = vpop.f32.mrf.mxu0
      %6536 = vmatprep.mubr.f32.mxu0 0.0
      %6537 = vmatmul.mubr.f32.gmra.mxu0 %v6437
      %v6538 = vpop.f32.mrf.mxu0
      %v6539 = vadd.f32 0.0, %v6538
      %v6540 = vpop.f32.mrf.mxu0
      %6541 = vmatprep.mubr.f32.mxu0 0.0
      %6542 = vmatmul.mubr.f32.gmra.mxu0 %v6440
      %v6543 = vpop.f32.mrf.mxu0
      %v6544 = vadd.f32 0.0, %v6543
      %v6545 = vpop.f32.mrf.mxu0
      %6546 = vdwg.mxu0
      %6547 = vrot.lane.b32.xlu0 %v713, 108
      %v6548 = vpop.permute.xlu0 %6547
      %6549 = vrot.lane.b32.xlu0 %v718, 108
      %v6550 = vpop.permute.xlu0 %6549
      %6551 = vrot.lane.b32.xlu0 %v723, 108
      %v6552 = vpop.permute.xlu0 %6551
      %6553 = vrot.lane.b32.xlu0 %v728, 108
      %v6554 = vpop.permute.xlu0 %6553
      %6555 = vrot.lane.b32.xlu0 %v733, 108
      %v6556 = vpop.permute.xlu0 %6555
      %6557 = vrot.lane.b32.xlu0 %v738, 108
      %v6558 = vpop.permute.xlu0 %6557
      %6559 = vrot.lane.b32.xlu0 %v743, 108
      %v6560 = vpop.permute.xlu0 %6559
      %6561 = vrot.lane.b32.xlu0 %v748, 108
      %v6562 = vpop.permute.xlu0 %6561
      %v6572 = vsel %vm2409, %v6338, 0
      %v6575 = vsel %vm2409, %v6339, 0
      %v6578 = vsel %vm2409, %v6340, 0
      %v6581 = vsel %vm2409, %v6341, 0
      %v6584 = vsel %vm2409, %v6342, 0
      %v6587 = vsel %vm2409, %v6343, 0
      %v6590 = vsel %vm2409, %v6344, 0
      %v6593 = vsel %vm2409, %v6345, 0
      %6595 = vmatprep.subr.mxu0 0.0
      %6596 = vmatpush1.msra.mxu0 0.0
      %6597 = vmatprep.subr.mxu0 0.0
      %6598 = vmatpush1.msra.mxu0 0.0
      %6599 = vmatprep.subr.mxu0 0.0
      %6600 = vmatpush1.msra.mxu0 0.0
      %6601 = vmatprep.subr.mxu0 0.0
      %6602 = vmatpush1.msra.mxu0 0.0
      %6603 = vmatprep.subr.mxu0 0.0
      %6604 = vmatpush1.msra.mxu0 0.0
      %6605 = vmatprep.subr.mxu0 0.0
      %6606 = vmatpush1.msra.mxu0 0.0
      %6607 = vmatprep.subr.mxu0 0.0
      %6608 = vmatpush1.msra.mxu0 0.0
      %6609 = vmatprep.subr.mxu0 0.0
      %6610 = vmatpush1.msra.mxu0 0.0
      %6611 = vmatprep.subr.mxu0 0.0
      %6612 = vmatpush1.msra.mxu0 %v6562
      %6613 = vmatprep.subr.mxu0 0.0
      %6614 = vmatpush1.msra.mxu0 %v6560
      %6615 = vmatprep.subr.mxu0 0.0
      %6616 = vmatpush1.msra.mxu0 %v6558
      %6617 = vmatprep.subr.mxu0 0.0
      %6618 = vmatpush1.msra.mxu0 %v6556
      %6619 = vmatprep.subr.mxu0 0.0
      %6620 = vmatpush1.msra.mxu0 %v6554
      %6621 = vmatprep.subr.mxu0 0.0
      %6622 = vmatpush1.msra.mxu0 %v6552
      %6623 = vmatprep.subr.mxu0 0.0
      %6624 = vmatpush1.msra.mxu0 %v6550
      %6625 = vmatprep.subr.mxu0 0.0
      %6626 = vmatpush1.msra.mxu0 %v6548
      %6627 = vmatprep.subr.mxu0 0.0
      %6628 = vmatpush2.msra.mxu0 0.0
      %6629 = vmatprep.subr.mxu0 0.0
      %6630 = vmatpush2.msra.mxu0 0.0
      %6631 = vmatprep.subr.mxu0 0.0
      %6632 = vmatpush2.msra.mxu0 0.0
      %6633 = vmatprep.subr.mxu0 0.0
      %6634 = vmatpush2.msra.mxu0 0.0
      %6635 = vmatprep.subr.mxu0 0.0
      %6636 = vmatpush2.msra.mxu0 0.0
      %6637 = vmatprep.subr.mxu0 0.0
      %6638 = vmatpush2.msra.mxu0 0.0
      %6639 = vmatprep.subr.mxu0 0.0
      %6640 = vmatpush2.msra.mxu0 0.0
      %6641 = vmatprep.subr.mxu0 0.0
      %6642 = vmatpush2.msra.mxu0 0.0
      %6643 = vmatprep.subr.mxu0 0.0
      %6644 = vmatpush2.msra.mxu0 0.0
      %6645 = vmatprep.subr.mxu0 0.0
      %6646 = vmatpush2.msra.mxu0 0.0
      %6647 = vmatprep.subr.mxu0 0.0
      %6648 = vmatpush2.msra.mxu0 0.0
      %6649 = vmatprep.subr.mxu0 0.0
      %6650 = vmatpush2.msra.mxu0 0.0
      %6651 = vmatprep.subr.mxu0 0.0
      %6652 = vmatpush2.msra.mxu0 0.0
      %6653 = vmatprep.subr.mxu0 0.0
      %6654 = vmatpush2.msra.mxu0 0.0
      %6655 = vmatprep.subr.mxu0 0.0
      %6656 = vmatpush2.msra.mxu0 0.0
      %6657 = vmatprep.subr.mxu0 0.0
      %6658 = vmatpush2.msra.mxu0 0.0
      %6659 = vmatprep.mubr.f32.mxu0 0.0
      %6660 = vmatmul.mubr.f32.gmra.mxu0 %v6572
      %v6661 = vpop.f32.mrf.mxu0
      %v6662 = vadd.f32 0.0, %v6661
      %v6663 = vpop.f32.mrf.mxu0
      %6664 = vmatprep.mubr.f32.mxu0 0.0
      %6665 = vmatmul.mubr.f32.gmra.mxu0 %v6575
      %v6666 = vpop.f32.mrf.mxu0
      %v6667 = vadd.f32 0.0, %v6666
      %v6668 = vpop.f32.mrf.mxu0
      %6669 = vmatprep.mubr.f32.mxu0 0.0
      %6670 = vmatmul.mubr.f32.gmra.mxu0 %v6578
      %v6671 = vpop.f32.mrf.mxu0
      %v6672 = vadd.f32 0.0, %v6671
      %v6673 = vpop.f32.mrf.mxu0
      %6674 = vmatprep.mubr.f32.mxu0 0.0
      %6675 = vmatmul.mubr.f32.gmra.mxu0 %v6581
      %v6676 = vpop.f32.mrf.mxu0
      %v6677 = vadd.f32 0.0, %v6676
      %v6678 = vpop.f32.mrf.mxu0
      %6679 = vmatprep.mubr.f32.mxu0 0.0
      %6680 = vmatmul.mubr.f32.gmra.mxu0 %v6584
      %v6681 = vpop.f32.mrf.mxu0
      %v6682 = vadd.f32 0.0, %v6681
      %v6683 = vpop.f32.mrf.mxu0
      %6684 = vmatprep.mubr.f32.mxu0 0.0
      %6685 = vmatmul.mubr.f32.gmra.mxu0 %v6587
      %v6686 = vpop.f32.mrf.mxu0
      %v6687 = vadd.f32 0.0, %v6686
      %v6688 = vpop.f32.mrf.mxu0
      %6689 = vmatprep.mubr.f32.mxu0 0.0
      %6690 = vmatmul.mubr.f32.gmra.mxu0 %v6590
      %v6691 = vpop.f32.mrf.mxu0
      %v6692 = vadd.f32 0.0, %v6691
      %v6693 = vpop.f32.mrf.mxu0
      %6694 = vmatprep.mubr.f32.mxu0 0.0
      %6695 = vmatmul.mubr.f32.gmra.mxu0 %v6593
      %v6696 = vpop.f32.mrf.mxu0
      %v6697 = vadd.f32 0.0, %v6696
      %v6698 = vpop.f32.mrf.mxu0
      %6699 = vdwg.mxu0
      %6700 = vrot.lane.b32.xlu0 %v753, 108
      %v6701 = vpop.permute.xlu0 %6700
      %6702 = vrot.lane.b32.xlu0 %v758, 108
      %v6703 = vpop.permute.xlu0 %6702
      %6704 = vrot.lane.b32.xlu0 %v763, 108
      %v6705 = vpop.permute.xlu0 %6704
      %6706 = vrot.lane.b32.xlu0 %v768, 108
      %v6707 = vpop.permute.xlu0 %6706
      %6708 = vrot.lane.b32.xlu0 %v773, 108
      %v6709 = vpop.permute.xlu0 %6708
      %6710 = vrot.lane.b32.xlu0 %v778, 108
      %v6711 = vpop.permute.xlu0 %6710
      %6712 = vrot.lane.b32.xlu0 %v783, 108
      %v6713 = vpop.permute.xlu0 %6712
      %6714 = vrot.lane.b32.xlu0 %v788, 108
      %v6715 = vpop.permute.xlu0 %6714
      %v6725 = vsel %vm2409, %v6346, 0
      %v6728 = vsel %vm2409, %v6347, 0
      %v6731 = vsel %vm2409, %v6348, 0
      %v6734 = vsel %vm2409, %v6349, 0
      %v6737 = vsel %vm2409, %v6350, 0
      %v6740 = vsel %vm2409, %v6351, 0
      %v6743 = vsel %vm2409, %v6352, 0
      %v6746 = vsel %vm2409, %v6353, 0
      %6748 = vmatprep.subr.mxu0 0.0
      %6749 = vmatpush1.msra.mxu0 0.0
      %6750 = vmatprep.subr.mxu0 0.0
      %6751 = vmatpush1.msra.mxu0 0.0
      %6752 = vmatprep.subr.mxu0 0.0
      %6753 = vmatpush1.msra.mxu0 0.0
      %6754 = vmatprep.subr.mxu0 0.0
      %6755 = vmatpush1.msra.mxu0 0.0
      %6756 = vmatprep.subr.mxu0 0.0
      %6757 = vmatpush1.msra.mxu0 0.0
      %6758 = vmatprep.subr.mxu0 0.0
      %6759 = vmatpush1.msra.mxu0 0.0
      %6760 = vmatprep.subr.mxu0 0.0
      %6761 = vmatpush1.msra.mxu0 0.0
      %6762 = vmatprep.subr.mxu0 0.0
      %6763 = vmatpush1.msra.mxu0 0.0
      %6764 = vmatprep.subr.mxu0 0.0
      %6765 = vmatpush1.msra.mxu0 %v6715
      %6766 = vmatprep.subr.mxu0 0.0
      %6767 = vmatpush1.msra.mxu0 %v6713
      %6768 = vmatprep.subr.mxu0 0.0
      %6769 = vmatpush1.msra.mxu0 %v6711
      %6770 = vmatprep.subr.mxu0 0.0
      %6771 = vmatpush1.msra.mxu0 %v6709
      %6772 = vmatprep.subr.mxu0 0.0
      %6773 = vmatpush1.msra.mxu0 %v6707
      %6774 = vmatprep.subr.mxu0 0.0
      %6775 = vmatpush1.msra.mxu0 %v6705
      %6776 = vmatprep.subr.mxu0 0.0
      %6777 = vmatpush1.msra.mxu0 %v6703
      %6778 = vmatprep.subr.mxu0 0.0
      %6779 = vmatpush1.msra.mxu0 %v6701
      %6780 = vmatprep.subr.mxu0 0.0
      %6781 = vmatpush2.msra.mxu0 0.0
      %6782 = vmatprep.subr.mxu0 0.0
      %6783 = vmatpush2.msra.mxu0 0.0
      %6784 = vmatprep.subr.mxu0 0.0
      %6785 = vmatpush2.msra.mxu0 0.0
      %6786 = vmatprep.subr.mxu0 0.0
      %6787 = vmatpush2.msra.mxu0 0.0
      %6788 = vmatprep.subr.mxu0 0.0
      %6789 = vmatpush2.msra.mxu0 0.0
      %6790 = vmatprep.subr.mxu0 0.0
      %6791 = vmatpush2.msra.mxu0 0.0
      %6792 = vmatprep.subr.mxu0 0.0
      %6793 = vmatpush2.msra.mxu0 0.0
      %6794 = vmatprep.subr.mxu0 0.0
      %6795 = vmatpush2.msra.mxu0 0.0
      %6796 = vmatprep.subr.mxu0 0.0
      %6797 = vmatpush2.msra.mxu0 0.0
      %6798 = vmatprep.subr.mxu0 0.0
      %6799 = vmatpush2.msra.mxu0 0.0
      %6800 = vmatprep.subr.mxu0 0.0
      %6801 = vmatpush2.msra.mxu0 0.0
      %6802 = vmatprep.subr.mxu0 0.0
      %6803 = vmatpush2.msra.mxu0 0.0
      %6804 = vmatprep.subr.mxu0 0.0
      %6805 = vmatpush2.msra.mxu0 0.0
      %6806 = vmatprep.subr.mxu0 0.0
      %6807 = vmatpush2.msra.mxu0 0.0
      %6808 = vmatprep.subr.mxu0 0.0
      %6809 = vmatpush2.msra.mxu0 0.0
      %6810 = vmatprep.subr.mxu0 0.0
      %6811 = vmatpush2.msra.mxu0 0.0
      %6812 = vmatprep.mubr.f32.mxu0 0.0
      %6813 = vmatmul.mubr.f32.gmra.mxu0 %v6725
      %v6814 = vpop.f32.mrf.mxu0
      %v6815 = vadd.f32 0.0, %v6814
      %v6816 = vpop.f32.mrf.mxu0
      %6817 = vmatprep.mubr.f32.mxu0 0.0
      %6818 = vmatmul.mubr.f32.gmra.mxu0 %v6728
      %v6819 = vpop.f32.mrf.mxu0
      %v6820 = vadd.f32 0.0, %v6819
      %v6821 = vpop.f32.mrf.mxu0
      %6822 = vmatprep.mubr.f32.mxu0 0.0
      %6823 = vmatmul.mubr.f32.gmra.mxu0 %v6731
      %v6824 = vpop.f32.mrf.mxu0
      %v6825 = vadd.f32 0.0, %v6824
      %v6826 = vpop.f32.mrf.mxu0
      %6827 = vmatprep.mubr.f32.mxu0 0.0
      %6828 = vmatmul.mubr.f32.gmra.mxu0 %v6734
      %v6829 = vpop.f32.mrf.mxu0
      %v6830 = vadd.f32 0.0, %v6829
      %v6831 = vpop.f32.mrf.mxu0
      %6832 = vmatprep.mubr.f32.mxu0 0.0
      %6833 = vmatmul.mubr.f32.gmra.mxu0 %v6737
      %v6834 = vpop.f32.mrf.mxu0
      %v6835 = vadd.f32 0.0, %v6834
      %v6836 = vpop.f32.mrf.mxu0
      %6837 = vmatprep.mubr.f32.mxu0 0.0
      %6838 = vmatmul.mubr.f32.gmra.mxu0 %v6740
      %v6839 = vpop.f32.mrf.mxu0
      %v6840 = vadd.f32 0.0, %v6839
      %v6841 = vpop.f32.mrf.mxu0
      %6842 = vmatprep.mubr.f32.mxu0 0.0
      %6843 = vmatmul.mubr.f32.gmra.mxu0 %v6743
      %v6844 = vpop.f32.mrf.mxu0
      %v6845 = vadd.f32 0.0, %v6844
      %v6846 = vpop.f32.mrf.mxu0
      %6847 = vmatprep.mubr.f32.mxu0 0.0
      %6848 = vmatmul.mubr.f32.gmra.mxu0 %v6746
      %v6849 = vpop.f32.mrf.mxu0
      %v6850 = vadd.f32 0.0, %v6849
      %v6851 = vpop.f32.mrf.mxu0
      %6852 = vdwg.mxu0
      %6853 = vrot.lane.b32.xlu0 %v793, 108
      %v6854 = vpop.permute.xlu0 %6853
      %6855 = vrot.lane.b32.xlu0 %v798, 108
      %v6856 = vpop.permute.xlu0 %6855
      %6857 = vrot.lane.b32.xlu0 %v803, 108
      %v6858 = vpop.permute.xlu0 %6857
      %6859 = vrot.lane.b32.xlu0 %v808, 108
      %v6860 = vpop.permute.xlu0 %6859
      %6861 = vrot.lane.b32.xlu0 %v813, 108
      %v6862 = vpop.permute.xlu0 %6861
      %6863 = vrot.lane.b32.xlu0 %v818, 108
      %v6864 = vpop.permute.xlu0 %6863
      %6865 = vrot.lane.b32.xlu0 %v823, 108
      %v6866 = vpop.permute.xlu0 %6865
      %6867 = vrot.lane.b32.xlu0 %v828, 108
      %v6868 = vpop.permute.xlu0 %6867
      %v6878 = vsel %vm2409, %v6354, 0
      %v6881 = vsel %vm2409, %v6355, 0
      %v6884 = vsel %vm2409, %v6356, 0
      %v6887 = vsel %vm2409, %v6357, 0
      %v6890 = vsel %vm2409, %v6358, 0
      %v6893 = vsel %vm2409, %v6359, 0
      %v6896 = vsel %vm2409, %v6360, 0
      %v6899 = vsel %vm2409, %v6361, 0
      %6901 = vmatprep.subr.mxu0 0.0
      %6902 = vmatpush1.msra.mxu0 0.0
      %6903 = vmatprep.subr.mxu0 0.0
      %6904 = vmatpush1.msra.mxu0 0.0
      %6905 = vmatprep.subr.mxu0 0.0
      %6906 = vmatpush1.msra.mxu0 0.0
      %6907 = vmatprep.subr.mxu0 0.0
      %6908 = vmatpush1.msra.mxu0 0.0
      %6909 = vmatprep.subr.mxu0 0.0
      %6910 = vmatpush1.msra.mxu0 0.0
      %6911 = vmatprep.subr.mxu0 0.0
      %6912 = vmatpush1.msra.mxu0 0.0
      %6913 = vmatprep.subr.mxu0 0.0
      %6914 = vmatpush1.msra.mxu0 0.0
      %6915 = vmatprep.subr.mxu0 0.0
      %6916 = vmatpush1.msra.mxu0 0.0
      %6917 = vmatprep.subr.mxu0 0.0
      %6918 = vmatpush1.msra.mxu0 %v6868
      %6919 = vmatprep.subr.mxu0 0.0
      %6920 = vmatpush1.msra.mxu0 %v6866
      %6921 = vmatprep.subr.mxu0 0.0
      %6922 = vmatpush1.msra.mxu0 %v6864
      %6923 = vmatprep.subr.mxu0 0.0
      %6924 = vmatpush1.msra.mxu0 %v6862
      %6925 = vmatprep.subr.mxu0 0.0
      %6926 = vmatpush1.msra.mxu0 %v6860
      %6927 = vmatprep.subr.mxu0 0.0
      %6928 = vmatpush1.msra.mxu0 %v6858
      %6929 = vmatprep.subr.mxu0 0.0
      %6930 = vmatpush1.msra.mxu0 %v6856
      %6931 = vmatprep.subr.mxu0 0.0
      %6932 = vmatpush1.msra.mxu0 %v6854
      %6933 = vmatprep.subr.mxu0 0.0
      %6934 = vmatpush2.msra.mxu0 0.0
      %6935 = vmatprep.subr.mxu0 0.0
      %6936 = vmatpush2.msra.mxu0 0.0
      %6937 = vmatprep.subr.mxu0 0.0
      %6938 = vmatpush2.msra.mxu0 0.0
      %6939 = vmatprep.subr.mxu0 0.0
      %6940 = vmatpush2.msra.mxu0 0.0
      %6941 = vmatprep.subr.mxu0 0.0
      %6942 = vmatpush2.msra.mxu0 0.0
      %6943 = vmatprep.subr.mxu0 0.0
      %6944 = vmatpush2.msra.mxu0 0.0
      %6945 = vmatprep.subr.mxu0 0.0
      %6946 = vmatpush2.msra.mxu0 0.0
      %6947 = vmatprep.subr.mxu0 0.0
      %6948 = vmatpush2.msra.mxu0 0.0
      %6949 = vmatprep.subr.mxu0 0.0
      %6950 = vmatpush2.msra.mxu0 0.0
      %6951 = vmatprep.subr.mxu0 0.0
      %6952 = vmatpush2.msra.mxu0 0.0
      %6953 = vmatprep.subr.mxu0 0.0
      %6954 = vmatpush2.msra.mxu0 0.0
      %6955 = vmatprep.subr.mxu0 0.0
      %6956 = vmatpush2.msra.mxu0 0.0
      %6957 = vmatprep.subr.mxu0 0.0
      %6958 = vmatpush2.msra.mxu0 0.0
      %6959 = vmatprep.subr.mxu0 0.0
      %6960 = vmatpush2.msra.mxu0 0.0
      %6961 = vmatprep.subr.mxu0 0.0
      %6962 = vmatpush2.msra.mxu0 0.0
      %6963 = vmatprep.subr.mxu0 0.0
      %6964 = vmatpush2.msra.mxu0 0.0
      %6965 = vmatprep.mubr.f32.mxu0 0.0
      %6966 = vmatmul.mubr.f32.gmra.mxu0 %v6878
      %v6967 = vpop.f32.mrf.mxu0
      %v6968 = vadd.f32 0.0, %v6967
      %v6969 = vpop.f32.mrf.mxu0
      %6970 = vmatprep.mubr.f32.mxu0 0.0
      %6971 = vmatmul.mubr.f32.gmra.mxu0 %v6881
      %v6972 = vpop.f32.mrf.mxu0
      %v6973 = vadd.f32 0.0, %v6972
      %v6974 = vpop.f32.mrf.mxu0
      %6975 = vmatprep.mubr.f32.mxu0 0.0
      %6976 = vmatmul.mubr.f32.gmra.mxu0 %v6884
      %v6977 = vpop.f32.mrf.mxu0
      %v6978 = vadd.f32 0.0, %v6977
      %v6979 = vpop.f32.mrf.mxu0
      %6980 = vmatprep.mubr.f32.mxu0 0.0
      %6981 = vmatmul.mubr.f32.gmra.mxu0 %v6887
      %v6982 = vpop.f32.mrf.mxu0
      %v6983 = vadd.f32 0.0, %v6982
      %v6984 = vpop.f32.mrf.mxu0
      %6985 = vmatprep.mubr.f32.mxu0 0.0
      %6986 = vmatmul.mubr.f32.gmra.mxu0 %v6890
      %v6987 = vpop.f32.mrf.mxu0
      %v6988 = vadd.f32 0.0, %v6987
      %v6989 = vpop.f32.mrf.mxu0
      %6990 = vmatprep.mubr.f32.mxu0 0.0
      %6991 = vmatmul.mubr.f32.gmra.mxu0 %v6893
      %v6992 = vpop.f32.mrf.mxu0
      %v6993 = vadd.f32 0.0, %v6992
      %v6994 = vpop.f32.mrf.mxu0
      %6995 = vmatprep.mubr.f32.mxu0 0.0
      %6996 = vmatmul.mubr.f32.gmra.mxu0 %v6896
      %v6997 = vpop.f32.mrf.mxu0
      %v6998 = vadd.f32 0.0, %v6997
      %v6999 = vpop.f32.mrf.mxu0
      %7000 = vmatprep.mubr.f32.mxu0 0.0
      %7001 = vmatmul.mubr.f32.gmra.mxu0 %v6899
      %v7002 = vpop.f32.mrf.mxu0
      %v7003 = vadd.f32 0.0, %v7002
      %v7004 = vpop.f32.mrf.mxu0
      %7005 = vdwg.mxu0
      %7006 = vrot.lane.b32.xlu0 %v833, 108
      %v7007 = vpop.permute.xlu0 %7006
      %7008 = vrot.lane.b32.xlu0 %v838, 108
      %v7009 = vpop.permute.xlu0 %7008
      %7010 = vrot.lane.b32.xlu0 %v843, 108
      %v7011 = vpop.permute.xlu0 %7010
      %7012 = vrot.lane.b32.xlu0 %v848, 108
      %v7013 = vpop.permute.xlu0 %7012
      %7014 = vrot.lane.b32.xlu0 %v853, 108
      %v7015 = vpop.permute.xlu0 %7014
      %7016 = vrot.lane.b32.xlu0 %v858, 108
      %v7017 = vpop.permute.xlu0 %7016
      %7018 = vrot.lane.b32.xlu0 %v863, 108
      %v7019 = vpop.permute.xlu0 %7018
      %7020 = vrot.lane.b32.xlu0 %v868, 108
      %v7021 = vpop.permute.xlu0 %7020
      %v7031 = vsel %vm2409, %v6362, 0
      %v7034 = vsel %vm2409, %v6363, 0
      %v7037 = vsel %vm2409, %v6364, 0
      %v7040 = vsel %vm2409, %v6365, 0
      %v7043 = vsel %vm2409, %v6366, 0
      %v7046 = vsel %vm2409, %v6367, 0
      %v7049 = vsel %vm2409, %v6368, 0
      %v7052 = vsel %vm2409, %v6369, 0
      %7054 = vmatprep.subr.mxu0 0.0
      %7055 = vmatpush1.msra.mxu0 0.0
      %7056 = vmatprep.subr.mxu0 0.0
      %7057 = vmatpush1.msra.mxu0 0.0
      %7058 = vmatprep.subr.mxu0 0.0
      %7059 = vmatpush1.msra.mxu0 0.0
      %7060 = vmatprep.subr.mxu0 0.0
      %7061 = vmatpush1.msra.mxu0 0.0
      %7062 = vmatprep.subr.mxu0 0.0
      %7063 = vmatpush1.msra.mxu0 0.0
      %7064 = vmatprep.subr.mxu0 0.0
      %7065 = vmatpush1.msra.mxu0 0.0
      %7066 = vmatprep.subr.mxu0 0.0
      %7067 = vmatpush1.msra.mxu0 0.0
      %7068 = vmatprep.subr.mxu0 0.0
      %7069 = vmatpush1.msra.mxu0 0.0
      %7070 = vmatprep.subr.mxu0 0.0
      %7071 = vmatpush1.msra.mxu0 %v7021
      %7072 = vmatprep.subr.mxu0 0.0
      %7073 = vmatpush1.msra.mxu0 %v7019
      %7074 = vmatprep.subr.mxu0 0.0
      %7075 = vmatpush1.msra.mxu0 %v7017
      %7076 = vmatprep.subr.mxu0 0.0
      %7077 = vmatpush1.msra.mxu0 %v7015
      %7078 = vmatprep.subr.mxu0 0.0
      %7079 = vmatpush1.msra.mxu0 %v7013
      %7080 = vmatprep.subr.mxu0 0.0
      %7081 = vmatpush1.msra.mxu0 %v7011
      %7082 = vmatprep.subr.mxu0 0.0
      %7083 = vmatpush1.msra.mxu0 %v7009
      %7084 = vmatprep.subr.mxu0 0.0
      %7085 = vmatpush1.msra.mxu0 %v7007
      %7086 = vmatprep.subr.mxu0 0.0
      %7087 = vmatpush2.msra.mxu0 0.0
      %7088 = vmatprep.subr.mxu0 0.0
      %7089 = vmatpush2.msra.mxu0 0.0
      %7090 = vmatprep.subr.mxu0 0.0
      %7091 = vmatpush2.msra.mxu0 0.0
      %7092 = vmatprep.subr.mxu0 0.0
      %7093 = vmatpush2.msra.mxu0 0.0
      %7094 = vmatprep.subr.mxu0 0.0
      %7095 = vmatpush2.msra.mxu0 0.0
      %7096 = vmatprep.subr.mxu0 0.0
      %7097 = vmatpush2.msra.mxu0 0.0
      %7098 = vmatprep.subr.mxu0 0.0
      %7099 = vmatpush2.msra.mxu0 0.0
      %7100 = vmatprep.subr.mxu0 0.0
      %7101 = vmatpush2.msra.mxu0 0.0
      %7102 = vmatprep.subr.mxu0 0.0
      %7103 = vmatpush2.msra.mxu0 0.0
      %7104 = vmatprep.subr.mxu0 0.0
      %7105 = vmatpush2.msra.mxu0 0.0
      %7106 = vmatprep.subr.mxu0 0.0
      %7107 = vmatpush2.msra.mxu0 0.0
      %7108 = vmatprep.subr.mxu0 0.0
      %7109 = vmatpush2.msra.mxu0 0.0
      %7110 = vmatprep.subr.mxu0 0.0
      %7111 = vmatpush2.msra.mxu0 0.0
      %7112 = vmatprep.subr.mxu0 0.0
      %7113 = vmatpush2.msra.mxu0 0.0
      %7114 = vmatprep.subr.mxu0 0.0
      %7115 = vmatpush2.msra.mxu0 0.0
      %7116 = vmatprep.subr.mxu0 0.0
      %7117 = vmatpush2.msra.mxu0 0.0
      %7118 = vmatprep.mubr.f32.mxu0 0.0
      %7119 = vmatmul.mubr.f32.gmra.mxu0 %v7031
      %v7120 = vpop.f32.mrf.mxu0
      %v7121 = vadd.f32 0.0, %v7120
      %v7122 = vpop.f32.mrf.mxu0
      %7123 = vmatprep.mubr.f32.mxu0 0.0
      %7124 = vmatmul.mubr.f32.gmra.mxu0 %v7034
      %v7125 = vpop.f32.mrf.mxu0
      %v7126 = vadd.f32 0.0, %v7125
      %v7127 = vpop.f32.mrf.mxu0
      %7128 = vmatprep.mubr.f32.mxu0 0.0
      %7129 = vmatmul.mubr.f32.gmra.mxu0 %v7037
      %v7130 = vpop.f32.mrf.mxu0
      %v7131 = vadd.f32 0.0, %v7130
      %v7132 = vpop.f32.mrf.mxu0
      %7133 = vmatprep.mubr.f32.mxu0 0.0
      %7134 = vmatmul.mubr.f32.gmra.mxu0 %v7040
      %v7135 = vpop.f32.mrf.mxu0
      %v7136 = vadd.f32 0.0, %v7135
      %v7137 = vpop.f32.mrf.mxu0
      %7138 = vmatprep.mubr.f32.mxu0 0.0
      %7139 = vmatmul.mubr.f32.gmra.mxu0 %v7043
      %v7140 = vpop.f32.mrf.mxu0
      %v7141 = vadd.f32 0.0, %v7140
      %v7142 = vpop.f32.mrf.mxu0
      %7143 = vmatprep.mubr.f32.mxu0 0.0
      %7144 = vmatmul.mubr.f32.gmra.mxu0 %v7046
      %v7145 = vpop.f32.mrf.mxu0
      %v7146 = vadd.f32 0.0, %v7145
      %v7147 = vpop.f32.mrf.mxu0
      %7148 = vmatprep.mubr.f32.mxu0 0.0
      %7149 = vmatmul.mubr.f32.gmra.mxu0 %v7049
      %v7150 = vpop.f32.mrf.mxu0
      %v7151 = vadd.f32 0.0, %v7150
      %v7152 = vpop.f32.mrf.mxu0
      %7153 = vmatprep.mubr.f32.mxu0 0.0
      %7154 = vmatmul.mubr.f32.gmra.mxu0 %v7052
      %v7155 = vpop.f32.mrf.mxu0
      %v7156 = vadd.f32 0.0, %v7155
      %v7157 = vpop.f32.mrf.mxu0
      %7158 = vdwg.mxu0
      %7159 = vrot.lane.b32.xlu0 %v873, 108
      %v7160 = vpop.permute.xlu0 %7159
      %7161 = vrot.lane.b32.xlu0 %v878, 108
      %v7162 = vpop.permute.xlu0 %7161
      %7163 = vrot.lane.b32.xlu0 %v883, 108
      %v7164 = vpop.permute.xlu0 %7163
      %7165 = vrot.lane.b32.xlu0 %v888, 108
      %v7166 = vpop.permute.xlu0 %7165
      %7167 = vrot.lane.b32.xlu0 %v893, 108
      %v7168 = vpop.permute.xlu0 %7167
      %7169 = vrot.lane.b32.xlu0 %v898, 108
      %v7170 = vpop.permute.xlu0 %7169
      %7171 = vrot.lane.b32.xlu0 %v903, 108
      %v7172 = vpop.permute.xlu0 %7171
      %7173 = vrot.lane.b32.xlu0 %v908, 108
      %v7174 = vpop.permute.xlu0 %7173
      %v7184 = vsel %vm2409, %v6370, 0
      %v7187 = vsel %vm2409, %v6371, 0
      %v7190 = vsel %vm2409, %v6372, 0
      %v7193 = vsel %vm2409, %v6373, 0
      %v7196 = vsel %vm2409, %v6374, 0
      %v7199 = vsel %vm2409, %v6375, 0
      %v7202 = vsel %vm2409, %v6376, 0
      %v7205 = vsel %vm2409, %v6377, 0
      %7207 = vmatprep.subr.mxu0 0.0
      %7208 = vmatpush1.msra.mxu0 0.0
      %7209 = vmatprep.subr.mxu0 0.0
      %7210 = vmatpush1.msra.mxu0 0.0
      %7211 = vmatprep.subr.mxu0 0.0
      %7212 = vmatpush1.msra.mxu0 0.0
      %7213 = vmatprep.subr.mxu0 0.0
      %7214 = vmatpush1.msra.mxu0 0.0
      %7215 = vmatprep.subr.mxu0 0.0
      %7216 = vmatpush1.msra.mxu0 0.0
      %7217 = vmatprep.subr.mxu0 0.0
      %7218 = vmatpush1.msra.mxu0 0.0
      %7219 = vmatprep.subr.mxu0 0.0
      %7220 = vmatpush1.msra.mxu0 0.0
      %7221 = vmatprep.subr.mxu0 0.0
      %7222 = vmatpush1.msra.mxu0 0.0
      %7223 = vmatprep.subr.mxu0 0.0
      %7224 = vmatpush1.msra.mxu0 %v7174
      %7225 = vmatprep.subr.mxu0 0.0
      %7226 = vmatpush1.msra.mxu0 %v7172
      %7227 = vmatprep.subr.mxu0 0.0
      %7228 = vmatpush1.msra.mxu0 %v7170
      %7229 = vmatprep.subr.mxu0 0.0
      %7230 = vmatpush1.msra.mxu0 %v7168
      %7231 = vmatprep.subr.mxu0 0.0
      %7232 = vmatpush1.msra.mxu0 %v7166
      %7233 = vmatprep.subr.mxu0 0.0
      %7234 = vmatpush1.msra.mxu0 %v7164
      %7235 = vmatprep.subr.mxu0 0.0
      %7236 = vmatpush1.msra.mxu0 %v7162
      %7237 = vmatprep.subr.mxu0 0.0
      %7238 = vmatpush1.msra.mxu0 %v7160
      %7239 = vmatprep.subr.mxu0 0.0
      %7240 = vmatpush2.msra.mxu0 0.0
      %7241 = vmatprep.subr.mxu0 0.0
      %7242 = vmatpush2.msra.mxu0 0.0
      %7243 = vmatprep.subr.mxu0 0.0
      %7244 = vmatpush2.msra.mxu0 0.0
      %7245 = vmatprep.subr.mxu0 0.0
      %7246 = vmatpush2.msra.mxu0 0.0
      %7247 = vmatprep.subr.mxu0 0.0
      %7248 = vmatpush2.msra.mxu0 0.0
      %7249 = vmatprep.subr.mxu0 0.0
      %7250 = vmatpush2.msra.mxu0 0.0
      %7251 = vmatprep.subr.mxu0 0.0
      %7252 = vmatpush2.msra.mxu0 0.0
      %7253 = vmatprep.subr.mxu0 0.0
      %7254 = vmatpush2.msra.mxu0 0.0
      %7255 = vmatprep.subr.mxu0 0.0
      %7256 = vmatpush2.msra.mxu0 0.0
      %7257 = vmatprep.subr.mxu0 0.0
      %7258 = vmatpush2.msra.mxu0 0.0
      %7259 = vmatprep.subr.mxu0 0.0
      %7260 = vmatpush2.msra.mxu0 0.0
      %7261 = vmatprep.subr.mxu0 0.0
      %7262 = vmatpush2.msra.mxu0 0.0
      %7263 = vmatprep.subr.mxu0 0.0
      %7264 = vmatpush2.msra.mxu0 0.0
      %7265 = vmatprep.subr.mxu0 0.0
      %7266 = vmatpush2.msra.mxu0 0.0
      %7267 = vmatprep.subr.mxu0 0.0
      %7268 = vmatpush2.msra.mxu0 0.0
      %7269 = vmatprep.subr.mxu0 0.0
      %7270 = vmatpush2.msra.mxu0 0.0
      %7271 = vmatprep.mubr.f32.mxu0 0.0
      %7272 = vmatmul.mubr.f32.gmra.mxu0 %v7184
      %v7273 = vpop.f32.mrf.mxu0
      %v7274 = vadd.f32 0.0, %v7273
      %v7275 = vpop.f32.mrf.mxu0
      %7276 = vmatprep.mubr.f32.mxu0 0.0
      %7277 = vmatmul.mubr.f32.gmra.mxu0 %v7187
      %v7278 = vpop.f32.mrf.mxu0
      %v7279 = vadd.f32 0.0, %v7278
      %v7280 = vpop.f32.mrf.mxu0
      %7281 = vmatprep.mubr.f32.mxu0 0.0
      %7282 = vmatmul.mubr.f32.gmra.mxu0 %v7190
      %v7283 = vpop.f32.mrf.mxu0
      %v7284 = vadd.f32 0.0, %v7283
      %v7285 = vpop.f32.mrf.mxu0
      %7286 = vmatprep.mubr.f32.mxu0 0.0
      %7287 = vmatmul.mubr.f32.gmra.mxu0 %v7193
      %v7288 = vpop.f32.mrf.mxu0
      %v7289 = vadd.f32 0.0, %v7288
      %v7290 = vpop.f32.mrf.mxu0
      %7291 = vmatprep.mubr.f32.mxu0 0.0
      %7292 = vmatmul.mubr.f32.gmra.mxu0 %v7196
      %v7293 = vpop.f32.mrf.mxu0
      %v7294 = vadd.f32 0.0, %v7293
      %v7295 = vpop.f32.mrf.mxu0
      %7296 = vmatprep.mubr.f32.mxu0 0.0
      %7297 = vmatmul.mubr.f32.gmra.mxu0 %v7199
      %v7298 = vpop.f32.mrf.mxu0
      %v7299 = vadd.f32 0.0, %v7298
      %v7300 = vpop.f32.mrf.mxu0
      %7301 = vmatprep.mubr.f32.mxu0 0.0
      %7302 = vmatmul.mubr.f32.gmra.mxu0 %v7202
      %v7303 = vpop.f32.mrf.mxu0
      %v7304 = vadd.f32 0.0, %v7303
      %v7305 = vpop.f32.mrf.mxu0
      %7306 = vmatprep.mubr.f32.mxu0 0.0
      %7307 = vmatmul.mubr.f32.gmra.mxu0 %v7205
      %v7308 = vpop.f32.mrf.mxu0
      %v7309 = vadd.f32 0.0, %v7308
      %v7310 = vpop.f32.mrf.mxu0
      %7311 = vdwg.mxu0
      %7312 = vrot.lane.b32.xlu0 %v913, 108
      %v7313 = vpop.permute.xlu0 %7312
      %7314 = vrot.lane.b32.xlu0 %v918, 108
      %v7315 = vpop.permute.xlu0 %7314
      %7316 = vrot.lane.b32.xlu0 %v923, 108
      %v7317 = vpop.permute.xlu0 %7316
      %7318 = vrot.lane.b32.xlu0 %v928, 108
      %v7319 = vpop.permute.xlu0 %7318
      %7320 = vrot.lane.b32.xlu0 %v933, 108
      %v7321 = vpop.permute.xlu0 %7320
      %7322 = vrot.lane.b32.xlu0 %v938, 108
      %v7323 = vpop.permute.xlu0 %7322
      %7324 = vrot.lane.b32.xlu0 %v943, 108
      %v7325 = vpop.permute.xlu0 %7324
      %7326 = vrot.lane.b32.xlu0 %v948, 108
      %v7327 = vpop.permute.xlu0 %7326
      %v7337 = vsel %vm2409, %v6378, 0
      %v7340 = vsel %vm2409, %v6379, 0
      %v7343 = vsel %vm2409, %v6380, 0
      %v7346 = vsel %vm2409, %v6381, 0
      %v7349 = vsel %vm2409, %v6382, 0
      %v7352 = vsel %vm2409, %v6383, 0
      %v7355 = vsel %vm2409, %v6384, 0
      %v7358 = vsel %vm2409, %v6385, 0
      %7360 = vmatprep.subr.mxu0 0.0
      %7361 = vmatpush1.msra.mxu0 0.0
      %7362 = vmatprep.subr.mxu0 0.0
      %7363 = vmatpush1.msra.mxu0 0.0
      %7364 = vmatprep.subr.mxu0 0.0
      %7365 = vmatpush1.msra.mxu0 0.0
      %7366 = vmatprep.subr.mxu0 0.0
      %7367 = vmatpush1.msra.mxu0 0.0
      %7368 = vmatprep.subr.mxu0 0.0
      %7369 = vmatpush1.msra.mxu0 0.0
      %7370 = vmatprep.subr.mxu0 0.0
      %7371 = vmatpush1.msra.mxu0 0.0
      %7372 = vmatprep.subr.mxu0 0.0
      %7373 = vmatpush1.msra.mxu0 0.0
      %7374 = vmatprep.subr.mxu0 0.0
      %7375 = vmatpush1.msra.mxu0 0.0
      %7376 = vmatprep.subr.mxu0 0.0
      %7377 = vmatpush1.msra.mxu0 %v7327
      %7378 = vmatprep.subr.mxu0 0.0
      %7379 = vmatpush1.msra.mxu0 %v7325
      %7380 = vmatprep.subr.mxu0 0.0
      %7381 = vmatpush1.msra.mxu0 %v7323
      %7382 = vmatprep.subr.mxu0 0.0
      %7383 = vmatpush1.msra.mxu0 %v7321
      %7384 = vmatprep.subr.mxu0 0.0
      %7385 = vmatpush1.msra.mxu0 %v7319
      %7386 = vmatprep.subr.mxu0 0.0
      %7387 = vmatpush1.msra.mxu0 %v7317
      %7388 = vmatprep.subr.mxu0 0.0
      %7389 = vmatpush1.msra.mxu0 %v7315
      %7390 = vmatprep.subr.mxu0 0.0
      %7391 = vmatpush1.msra.mxu0 %v7313
      %7392 = vmatprep.subr.mxu0 0.0
      %7393 = vmatpush2.msra.mxu0 0.0
      %7394 = vmatprep.subr.mxu0 0.0
      %7395 = vmatpush2.msra.mxu0 0.0
      %7396 = vmatprep.subr.mxu0 0.0
      %7397 = vmatpush2.msra.mxu0 0.0
      %7398 = vmatprep.subr.mxu0 0.0
      %7399 = vmatpush2.msra.mxu0 0.0
      %7400 = vmatprep.subr.mxu0 0.0
      %7401 = vmatpush2.msra.mxu0 0.0
      %7402 = vmatprep.subr.mxu0 0.0
      %7403 = vmatpush2.msra.mxu0 0.0
      %7404 = vmatprep.subr.mxu0 0.0
      %7405 = vmatpush2.msra.mxu0 0.0
      %7406 = vmatprep.subr.mxu0 0.0
      %7407 = vmatpush2.msra.mxu0 0.0
      %7408 = vmatprep.subr.mxu0 0.0
      %7409 = vmatpush2.msra.mxu0 0.0
      %7410 = vmatprep.subr.mxu0 0.0
      %7411 = vmatpush2.msra.mxu0 0.0
      %7412 = vmatprep.subr.mxu0 0.0
      %7413 = vmatpush2.msra.mxu0 0.0
      %7414 = vmatprep.subr.mxu0 0.0
      %7415 = vmatpush2.msra.mxu0 0.0
      %7416 = vmatprep.subr.mxu0 0.0
      %7417 = vmatpush2.msra.mxu0 0.0
      %7418 = vmatprep.subr.mxu0 0.0
      %7419 = vmatpush2.msra.mxu0 0.0
      %7420 = vmatprep.subr.mxu0 0.0
      %7421 = vmatpush2.msra.mxu0 0.0
      %7422 = vmatprep.subr.mxu0 0.0
      %7423 = vmatpush2.msra.mxu0 0.0
      %7424 = vmatprep.mubr.f32.mxu0 0.0
      %7425 = vmatmul.mubr.f32.gmra.mxu0 %v7337
      %v7426 = vpop.f32.mrf.mxu0
      %v7427 = vadd.f32 0.0, %v7426
      %v7428 = vpop.f32.mrf.mxu0
      %7429 = vmatprep.mubr.f32.mxu0 0.0
      %7430 = vmatmul.mubr.f32.gmra.mxu0 %v7340
      %v7431 = vpop.f32.mrf.mxu0
      %v7432 = vadd.f32 0.0, %v7431
      %v7433 = vpop.f32.mrf.mxu0
      %7434 = vmatprep.mubr.f32.mxu0 0.0
      %7435 = vmatmul.mubr.f32.gmra.mxu0 %v7343
      %v7436 = vpop.f32.mrf.mxu0
      %v7437 = vadd.f32 0.0, %v7436
      %v7438 = vpop.f32.mrf.mxu0
      %7439 = vmatprep.mubr.f32.mxu0 0.0
      %7440 = vmatmul.mubr.f32.gmra.mxu0 %v7346
      %v7441 = vpop.f32.mrf.mxu0
      %v7442 = vadd.f32 0.0, %v7441
      %v7443 = vpop.f32.mrf.mxu0
      %7444 = vmatprep.mubr.f32.mxu0 0.0
      %7445 = vmatmul.mubr.f32.gmra.mxu0 %v7349
      %v7446 = vpop.f32.mrf.mxu0
      %v7447 = vadd.f32 0.0, %v7446
      %v7448 = vpop.f32.mrf.mxu0
      %7449 = vmatprep.mubr.f32.mxu0 0.0
      %7450 = vmatmul.mubr.f32.gmra.mxu0 %v7352
      %v7451 = vpop.f32.mrf.mxu0
      %v7452 = vadd.f32 0.0, %v7451
      %v7453 = vpop.f32.mrf.mxu0
      %7454 = vmatprep.mubr.f32.mxu0 0.0
      %7455 = vmatmul.mubr.f32.gmra.mxu0 %v7355
      %v7456 = vpop.f32.mrf.mxu0
      %v7457 = vadd.f32 0.0, %v7456
      %v7458 = vpop.f32.mrf.mxu0
      %7459 = vmatprep.mubr.f32.mxu0 0.0
      %7460 = vmatmul.mubr.f32.gmra.mxu0 %v7358
      %v7461 = vpop.f32.mrf.mxu0
      %v7462 = vadd.f32 0.0, %v7461
      %v7463 = vpop.f32.mrf.mxu0
      %7464 = vdwg.mxu0
      %7465 = vrot.lane.b32.xlu0 %v953, 108
      %v7466 = vpop.permute.xlu0 %7465
      %7467 = vrot.lane.b32.xlu0 %v958, 108
      %v7468 = vpop.permute.xlu0 %7467
      %7469 = vrot.lane.b32.xlu0 %v963, 108
      %v7470 = vpop.permute.xlu0 %7469
      %7471 = vrot.lane.b32.xlu0 %v968, 108
      %v7472 = vpop.permute.xlu0 %7471
      %7473 = vrot.lane.b32.xlu0 %v973, 108
      %v7474 = vpop.permute.xlu0 %7473
      %7475 = vrot.lane.b32.xlu0 %v978, 108
      %v7476 = vpop.permute.xlu0 %7475
      %7477 = vrot.lane.b32.xlu0 %v983, 108
      %v7478 = vpop.permute.xlu0 %7477
      %7479 = vrot.lane.b32.xlu0 %v988, 108
      %v7480 = vpop.permute.xlu0 %7479
      %v7490 = vsel %vm2409, %v6386, 0
      %v7493 = vsel %vm2409, %v6387, 0
      %v7496 = vsel %vm2409, %v6388, 0
      %v7499 = vsel %vm2409, %v6389, 0
      %v7502 = vsel %vm2409, %v6390, 0
      %v7505 = vsel %vm2409, %v6391, 0
      %v7508 = vsel %vm2409, %v6392, 0
      %v7511 = vsel %vm2409, %v6393, 0
      %7513 = vmatprep.subr.mxu0 0.0
      %7514 = vmatpush1.msra.mxu0 0.0
      %7515 = vmatprep.subr.mxu0 0.0
      %7516 = vmatpush1.msra.mxu0 0.0
      %7517 = vmatprep.subr.mxu0 0.0
      %7518 = vmatpush1.msra.mxu0 0.0
      %7519 = vmatprep.subr.mxu0 0.0
      %7520 = vmatpush1.msra.mxu0 0.0
      %7521 = vmatprep.subr.mxu0 0.0
      %7522 = vmatpush1.msra.mxu0 0.0
      %7523 = vmatprep.subr.mxu0 0.0
      %7524 = vmatpush1.msra.mxu0 0.0
      %7525 = vmatprep.subr.mxu0 0.0
      %7526 = vmatpush1.msra.mxu0 0.0
      %7527 = vmatprep.subr.mxu0 0.0
      %7528 = vmatpush1.msra.mxu0 0.0
      %7529 = vmatprep.subr.mxu0 0.0
      %7530 = vmatpush1.msra.mxu0 %v7480
      %7531 = vmatprep.subr.mxu0 0.0
      %7532 = vmatpush1.msra.mxu0 %v7478
      %7533 = vmatprep.subr.mxu0 0.0
      %7534 = vmatpush1.msra.mxu0 %v7476
      %7535 = vmatprep.subr.mxu0 0.0
      %7536 = vmatpush1.msra.mxu0 %v7474
      %7537 = vmatprep.subr.mxu0 0.0
      %7538 = vmatpush1.msra.mxu0 %v7472
      %7539 = vmatprep.subr.mxu0 0.0
      %7540 = vmatpush1.msra.mxu0 %v7470
      %7541 = vmatprep.subr.mxu0 0.0
      %7542 = vmatpush1.msra.mxu0 %v7468
      %7543 = vmatprep.subr.mxu0 0.0
      %7544 = vmatpush1.msra.mxu0 %v7466
      %7545 = vmatprep.subr.mxu0 0.0
      %7546 = vmatpush2.msra.mxu0 0.0
      %7547 = vmatprep.subr.mxu0 0.0
      %7548 = vmatpush2.msra.mxu0 0.0
      %7549 = vmatprep.subr.mxu0 0.0
      %7550 = vmatpush2.msra.mxu0 0.0
      %7551 = vmatprep.subr.mxu0 0.0
      %7552 = vmatpush2.msra.mxu0 0.0
      %7553 = vmatprep.subr.mxu0 0.0
      %7554 = vmatpush2.msra.mxu0 0.0
      %7555 = vmatprep.subr.mxu0 0.0
      %7556 = vmatpush2.msra.mxu0 0.0
      %7557 = vmatprep.subr.mxu0 0.0
      %7558 = vmatpush2.msra.mxu0 0.0
      %7559 = vmatprep.subr.mxu0 0.0
      %7560 = vmatpush2.msra.mxu0 0.0
      %7561 = vmatprep.subr.mxu0 0.0
      %7562 = vmatpush2.msra.mxu0 0.0
      %7563 = vmatprep.subr.mxu0 0.0
      %7564 = vmatpush2.msra.mxu0 0.0
      %7565 = vmatprep.subr.mxu0 0.0
      %7566 = vmatpush2.msra.mxu0 0.0
      %7567 = vmatprep.subr.mxu0 0.0
      %7568 = vmatpush2.msra.mxu0 0.0
      %7569 = vmatprep.subr.mxu0 0.0
      %7570 = vmatpush2.msra.mxu0 0.0
      %7571 = vmatprep.subr.mxu0 0.0
      %7572 = vmatpush2.msra.mxu0 0.0
      %7573 = vmatprep.subr.mxu0 0.0
      %7574 = vmatpush2.msra.mxu0 0.0
      %7575 = vmatprep.subr.mxu0 0.0
      %7576 = vmatpush2.msra.mxu0 0.0
      %7577 = vmatprep.mubr.f32.mxu0 0.0
      %7578 = vmatmul.mubr.f32.gmra.mxu0 %v7490
      %v7579 = vpop.f32.mrf.mxu0
      %v7580 = vadd.f32 0.0, %v7579
      %v7581 = vpop.f32.mrf.mxu0
      %7582 = vmatprep.mubr.f32.mxu0 0.0
      %7583 = vmatmul.mubr.f32.gmra.mxu0 %v7493
      %v7584 = vpop.f32.mrf.mxu0
      %v7585 = vadd.f32 0.0, %v7584
      %v7586 = vpop.f32.mrf.mxu0
      %7587 = vmatprep.mubr.f32.mxu0 0.0
      %7588 = vmatmul.mubr.f32.gmra.mxu0 %v7496
      %v7589 = vpop.f32.mrf.mxu0
      %v7590 = vadd.f32 0.0, %v7589
      %v7591 = vpop.f32.mrf.mxu0
      %7592 = vmatprep.mubr.f32.mxu0 0.0
      %7593 = vmatmul.mubr.f32.gmra.mxu0 %v7499
      %v7594 = vpop.f32.mrf.mxu0
      %v7595 = vadd.f32 0.0, %v7594
      %v7596 = vpop.f32.mrf.mxu0
      %7597 = vmatprep.mubr.f32.mxu0 0.0
      %7598 = vmatmul.mubr.f32.gmra.mxu0 %v7502
      %v7599 = vpop.f32.mrf.mxu0
      %v7600 = vadd.f32 0.0, %v7599
      %v7601 = vpop.f32.mrf.mxu0
      %7602 = vmatprep.mubr.f32.mxu0 0.0
      %7603 = vmatmul.mubr.f32.gmra.mxu0 %v7505
      %v7604 = vpop.f32.mrf.mxu0
      %v7605 = vadd.f32 0.0, %v7604
      %v7606 = vpop.f32.mrf.mxu0
      %7607 = vmatprep.mubr.f32.mxu0 0.0
      %7608 = vmatmul.mubr.f32.gmra.mxu0 %v7508
      %v7609 = vpop.f32.mrf.mxu0
      %v7610 = vadd.f32 0.0, %v7609
      %v7611 = vpop.f32.mrf.mxu0
      %7612 = vmatprep.mubr.f32.mxu0 0.0
      %7613 = vmatmul.mubr.f32.gmra.mxu0 %v7511
      %v7614 = vpop.f32.mrf.mxu0
      %v7615 = vadd.f32 0.0, %v7614
      %v7616 = vpop.f32.mrf.mxu0
      %7617 = vdwg.mxu0
      %v7619 = vrot.slane %v991, 4
      %v7621 = vsel %vm1080, %v6509, 0
      %v7624 = vsel %vm1080, %v6514, 0
      %v7627 = vsel %vm1080, %v6519, 0
      %v7630 = vsel %vm1080, %v6524, 0
      %v7633 = vsel %vm1080, %v6529, 0
      %v7636 = vsel %vm1080, %v6534, 0
      %v7639 = vsel %vm1080, %v6539, 0
      %v7642 = vsel %vm1080, %v6544, 0
      %v7645 = vsel %vm1080, %v6662, 0
      %v7648 = vsel %vm1080, %v6667, 0
      %v7651 = vsel %vm1080, %v6672, 0
      %v7654 = vsel %vm1080, %v6677, 0
      %v7657 = vsel %vm1080, %v6682, 0
      %v7660 = vsel %vm1080, %v6687, 0
      %v7663 = vsel %vm1080, %v6692, 0
      %v7666 = vsel %vm1080, %v6697, 0
      %v7669 = vsel %vm1080, %v6815, 0
      %v7672 = vsel %vm1080, %v6820, 0
      %v7675 = vsel %vm1080, %v6825, 0
      %v7678 = vsel %vm1080, %v6830, 0
      %v7681 = vsel %vm1080, %v6835, 0
      %v7684 = vsel %vm1080, %v6840, 0
      %v7687 = vsel %vm1080, %v6845, 0
      %v7690 = vsel %vm1080, %v6850, 0
      %v7693 = vsel %vm1080, %v6968, 0
      %v7696 = vsel %vm1080, %v6973, 0
      %v7699 = vsel %vm1080, %v6978, 0
      %v7702 = vsel %vm1080, %v6983, 0
      %v7705 = vsel %vm1080, %v6988, 0
      %v7708 = vsel %vm1080, %v6993, 0
      %v7711 = vsel %vm1080, %v6998, 0
      %v7714 = vsel %vm1080, %v7003, 0
      %v7717 = vsel %vm1080, %v7121, 0
      %v7720 = vsel %vm1080, %v7126, 0
      %v7723 = vsel %vm1080, %v7131, 0
      %v7726 = vsel %vm1080, %v7136, 0
      %v7729 = vsel %vm1080, %v7141, 0
      %v7732 = vsel %vm1080, %v7146, 0
      %v7735 = vsel %vm1080, %v7151, 0
      %v7738 = vsel %vm1080, %v7156, 0
      %v7741 = vsel %vm1080, %v7274, 0
      %v7744 = vsel %vm1080, %v7279, 0
      %v7747 = vsel %vm1080, %v7284, 0
      %v7750 = vsel %vm1080, %v7289, 0
      %v7753 = vsel %vm1080, %v7294, 0
      %v7756 = vsel %vm1080, %v7299, 0
      %v7759 = vsel %vm1080, %v7304, 0
      %v7762 = vsel %vm1080, %v7309, 0
      %v7765 = vsel %vm1080, %v7427, 0
      %v7768 = vsel %vm1080, %v7432, 0
      %v7771 = vsel %vm1080, %v7437, 0
      %v7774 = vsel %vm1080, %v7442, 0
      %v7777 = vsel %vm1080, %v7447, 0
      %v7780 = vsel %vm1080, %v7452, 0
      %v7783 = vsel %vm1080, %v7457, 0
      %v7786 = vsel %vm1080, %v7462, 0
      %v7789 = vsel %vm1080, %v7580, 0
      %v7792 = vsel %vm1080, %v7585, 0
      %v7795 = vsel %vm1080, %v7590, 0
      %v7798 = vsel %vm1080, %v7595, 0
      %v7801 = vsel %vm1080, %v7600, 0
      %v7804 = vsel %vm1080, %v7605, 0
      %v7807 = vsel %vm1080, %v7610, 0
      %v7810 = vsel %vm1080, %v7615, 0
      %vm7812 = vcmask 1043456
      %v7813 = vsel %vm7812, %v7619, 0
      %7815 = vmatprep.subr.mxu0 0.0
      %7816 = vmatpush1.msra.mxu0 0.0
      %7817 = vmatprep.subr.mxu0 0.0
      %7818 = vmatpush1.msra.mxu0 0.0
      %7819 = vmatprep.subr.mxu0 0.0
      %7820 = vmatpush1.msra.mxu0 0.0
      %7821 = vmatprep.subr.mxu0 0.0
      %7822 = vmatpush1.msra.mxu0 0.0
      %7823 = vmatprep.subr.mxu0 0.0
      %7824 = vmatpush1.msra.mxu0 0.0
      %7825 = vmatprep.subr.mxu0 0.0
      %7826 = vmatpush1.msra.mxu0 0.0
      %7827 = vmatprep.subr.mxu0 0.0
      %7828 = vmatpush1.msra.mxu0 0.0
      %7829 = vmatprep.subr.mxu0 0.0
      %7830 = vmatpush1.msra.mxu0 0.0
      %7831 = vmatprep.subr.mxu0 0.0
      %7832 = vmatpush1.msra.mxu0 0.0
      %7833 = vmatprep.subr.mxu0 0.0
      %7834 = vmatpush1.msra.mxu0 0.0
      %7835 = vmatprep.subr.mxu0 0.0
      %7836 = vmatpush1.msra.mxu0 0.0
      %7837 = vmatprep.subr.mxu0 0.0
      %7838 = vmatpush1.msra.mxu0 0.0
      %7839 = vmatprep.subr.mxu0 0.0
      %7840 = vmatpush1.msra.mxu0 0.0
      %7841 = vmatprep.subr.mxu0 0.0
      %7842 = vmatpush1.msra.mxu0 0.0
      %7843 = vmatprep.subr.mxu0 0.0
      %7844 = vmatpush1.msra.mxu0 0.0
      %7845 = vmatprep.subr.mxu0 0.0
      %7846 = vmatpush1.msra.mxu0 %v7813
      %7847 = vmatprep.subr.mxu0 0.0
      %7848 = vmatpush2.msra.mxu0 0.0
      %7849 = vmatprep.subr.mxu0 0.0
      %7850 = vmatpush2.msra.mxu0 0.0
      %7851 = vmatprep.subr.mxu0 0.0
      %7852 = vmatpush2.msra.mxu0 0.0
      %7853 = vmatprep.subr.mxu0 0.0
      %7854 = vmatpush2.msra.mxu0 0.0
      %7855 = vmatprep.subr.mxu0 0.0
      %7856 = vmatpush2.msra.mxu0 0.0
      %7857 = vmatprep.subr.mxu0 0.0
      %7858 = vmatpush2.msra.mxu0 0.0
      %7859 = vmatprep.subr.mxu0 0.0
      %7860 = vmatpush2.msra.mxu0 0.0
      %7861 = vmatprep.subr.mxu0 0.0
      %7862 = vmatpush2.msra.mxu0 0.0
      %7863 = vmatprep.subr.mxu0 0.0
      %7864 = vmatpush2.msra.mxu0 0.0
      %7865 = vmatprep.subr.mxu0 0.0
      %7866 = vmatpush2.msra.mxu0 0.0
      %7867 = vmatprep.subr.mxu0 0.0
      %7868 = vmatpush2.msra.mxu0 0.0
      %7869 = vmatprep.subr.mxu0 0.0
      %7870 = vmatpush2.msra.mxu0 0.0
      %7871 = vmatprep.subr.mxu0 0.0
      %7872 = vmatpush2.msra.mxu0 0.0
      %7873 = vmatprep.subr.mxu0 0.0
      %7874 = vmatpush2.msra.mxu0 0.0
      %7875 = vmatprep.subr.mxu0 0.0
      %7876 = vmatpush2.msra.mxu0 0.0
      %7877 = vmatprep.subr.mxu0 0.0
      %7878 = vmatpush2.msra.mxu0 0.0
      %7879 = vmatprep.mubr.f32.mxu0 0.0
      %7880 = vmatmul.mubr.f32.gmra.mxu0 %v7621
      %v7881 = vpop.f32.mrf.mxu0
      %v7882 = vadd.f32 0.0, %v7881
      %v7883 = vpop.f32.mrf.mxu0
      %7884 = vmatprep.mubr.f32.mxu0 0.0
      %7885 = vmatmul.mubr.f32.gmra.mxu0 %v7624
      %v7886 = vpop.f32.mrf.mxu0
      %v7887 = vadd.f32 0.0, %v7886
      %v7888 = vpop.f32.mrf.mxu0
      %7889 = vmatprep.mubr.f32.mxu0 0.0
      %7890 = vmatmul.mubr.f32.gmra.mxu0 %v7627
      %v7891 = vpop.f32.mrf.mxu0
      %v7892 = vadd.f32 0.0, %v7891
      %v7893 = vpop.f32.mrf.mxu0
      %7894 = vmatprep.mubr.f32.mxu0 0.0
      %7895 = vmatmul.mubr.f32.gmra.mxu0 %v7630
      %v7896 = vpop.f32.mrf.mxu0
      %v7897 = vadd.f32 0.0, %v7896
      %v7898 = vpop.f32.mrf.mxu0
      %7899 = vmatprep.mubr.f32.mxu0 0.0
      %7900 = vmatmul.mubr.f32.gmra.mxu0 %v7633
      %v7901 = vpop.f32.mrf.mxu0
      %v7902 = vadd.f32 0.0, %v7901
      %v7903 = vpop.f32.mrf.mxu0
      %7904 = vmatprep.mubr.f32.mxu0 0.0
      %7905 = vmatmul.mubr.f32.gmra.mxu0 %v7636
      %v7906 = vpop.f32.mrf.mxu0
      %v7907 = vadd.f32 0.0, %v7906
      %v7908 = vpop.f32.mrf.mxu0
      %7909 = vmatprep.mubr.f32.mxu0 0.0
      %7910 = vmatmul.mubr.f32.gmra.mxu0 %v7639
      %v7911 = vpop.f32.mrf.mxu0
      %v7912 = vadd.f32 0.0, %v7911
      %v7913 = vpop.f32.mrf.mxu0
      %7914 = vmatprep.mubr.f32.mxu0 0.0
      %7915 = vmatmul.mubr.f32.gmra.mxu0 %v7642
      %v7916 = vpop.f32.mrf.mxu0
      %v7917 = vadd.f32 0.0, %v7916
      %v7918 = vpop.f32.mrf.mxu0
      %7919 = vmatprep.mubr.f32.mxu0 0.0
      %7920 = vmatmul.mubr.f32.gmra.mxu0 %v7645
      %v7921 = vpop.f32.mrf.mxu0
      %v7922 = vadd.f32 0.0, %v7921
      %v7923 = vpop.f32.mrf.mxu0
      %7924 = vmatprep.mubr.f32.mxu0 0.0
      %7925 = vmatmul.mubr.f32.gmra.mxu0 %v7648
      %v7926 = vpop.f32.mrf.mxu0
      %v7927 = vadd.f32 0.0, %v7926
      %v7928 = vpop.f32.mrf.mxu0
      %7929 = vmatprep.mubr.f32.mxu0 0.0
      %7930 = vmatmul.mubr.f32.gmra.mxu0 %v7651
      %v7931 = vpop.f32.mrf.mxu0
      %v7932 = vadd.f32 0.0, %v7931
      %v7933 = vpop.f32.mrf.mxu0
      %7934 = vmatprep.mubr.f32.mxu0 0.0
      %7935 = vmatmul.mubr.f32.gmra.mxu0 %v7654
      %v7936 = vpop.f32.mrf.mxu0
      %v7937 = vadd.f32 0.0, %v7936
      %v7938 = vpop.f32.mrf.mxu0
      %7939 = vmatprep.mubr.f32.mxu0 0.0
      %7940 = vmatmul.mubr.f32.gmra.mxu0 %v7657
      %v7941 = vpop.f32.mrf.mxu0
      %v7942 = vadd.f32 0.0, %v7941
      %v7943 = vpop.f32.mrf.mxu0
      %7944 = vmatprep.mubr.f32.mxu0 0.0
      %7945 = vmatmul.mubr.f32.gmra.mxu0 %v7660
      %v7946 = vpop.f32.mrf.mxu0
      %v7947 = vadd.f32 0.0, %v7946
      %v7948 = vpop.f32.mrf.mxu0
      %7949 = vmatprep.mubr.f32.mxu0 0.0
      %7950 = vmatmul.mubr.f32.gmra.mxu0 %v7663
      %v7951 = vpop.f32.mrf.mxu0
      %v7952 = vadd.f32 0.0, %v7951
      %v7953 = vpop.f32.mrf.mxu0
      %7954 = vmatprep.mubr.f32.mxu0 0.0
      %7955 = vmatmul.mubr.f32.gmra.mxu0 %v7666
      %v7956 = vpop.f32.mrf.mxu0
      %v7957 = vadd.f32 0.0, %v7956
      %v7958 = vpop.f32.mrf.mxu0
      %7959 = vmatprep.mubr.f32.mxu0 0.0
      %7960 = vmatmul.mubr.f32.gmra.mxu0 %v7669
      %v7961 = vpop.f32.mrf.mxu0
      %v7962 = vadd.f32 0.0, %v7961
      %v7963 = vpop.f32.mrf.mxu0
      %7964 = vmatprep.mubr.f32.mxu0 0.0
      %7965 = vmatmul.mubr.f32.gmra.mxu0 %v7672
      %v7966 = vpop.f32.mrf.mxu0
      %v7967 = vadd.f32 0.0, %v7966
      %v7968 = vpop.f32.mrf.mxu0
      %7969 = vmatprep.mubr.f32.mxu0 0.0
      %7970 = vmatmul.mubr.f32.gmra.mxu0 %v7675
      %v7971 = vpop.f32.mrf.mxu0
      %v7972 = vadd.f32 0.0, %v7971
      %v7973 = vpop.f32.mrf.mxu0
      %7974 = vmatprep.mubr.f32.mxu0 0.0
      %7975 = vmatmul.mubr.f32.gmra.mxu0 %v7678
      %v7976 = vpop.f32.mrf.mxu0
      %v7977 = vadd.f32 0.0, %v7976
      %v7978 = vpop.f32.mrf.mxu0
      %7979 = vmatprep.mubr.f32.mxu0 0.0
      %7980 = vmatmul.mubr.f32.gmra.mxu0 %v7681
      %v7981 = vpop.f32.mrf.mxu0
      %v7982 = vadd.f32 0.0, %v7981
      %v7983 = vpop.f32.mrf.mxu0
      %7984 = vmatprep.mubr.f32.mxu0 0.0
      %7985 = vmatmul.mubr.f32.gmra.mxu0 %v7684
      %v7986 = vpop.f32.mrf.mxu0
      %v7987 = vadd.f32 0.0, %v7986
      %v7988 = vpop.f32.mrf.mxu0
      %7989 = vmatprep.mubr.f32.mxu0 0.0
      %7990 = vmatmul.mubr.f32.gmra.mxu0 %v7687
      %v7991 = vpop.f32.mrf.mxu0
      %v7992 = vadd.f32 0.0, %v7991
      %v7993 = vpop.f32.mrf.mxu0
      %7994 = vmatprep.mubr.f32.mxu0 0.0
      %7995 = vmatmul.mubr.f32.gmra.mxu0 %v7690
      %v7996 = vpop.f32.mrf.mxu0
      %v7997 = vadd.f32 0.0, %v7996
      %v7998 = vpop.f32.mrf.mxu0
      %7999 = vmatprep.mubr.f32.mxu0 0.0
      %8000 = vmatmul.mubr.f32.gmra.mxu0 %v7693
      %v8001 = vpop.f32.mrf.mxu0
      %v8002 = vadd.f32 0.0, %v8001
      %v8003 = vpop.f32.mrf.mxu0
      %8004 = vmatprep.mubr.f32.mxu0 0.0
      %8005 = vmatmul.mubr.f32.gmra.mxu0 %v7696
      %v8006 = vpop.f32.mrf.mxu0
      %v8007 = vadd.f32 0.0, %v8006
      %v8008 = vpop.f32.mrf.mxu0
      %8009 = vmatprep.mubr.f32.mxu0 0.0
      %8010 = vmatmul.mubr.f32.gmra.mxu0 %v7699
      %v8011 = vpop.f32.mrf.mxu0
      %v8012 = vadd.f32 0.0, %v8011
      %v8013 = vpop.f32.mrf.mxu0
      %8014 = vmatprep.mubr.f32.mxu0 0.0
      %8015 = vmatmul.mubr.f32.gmra.mxu0 %v7702
      %v8016 = vpop.f32.mrf.mxu0
      %v8017 = vadd.f32 0.0, %v8016
      %v8018 = vpop.f32.mrf.mxu0
      %8019 = vmatprep.mubr.f32.mxu0 0.0
      %8020 = vmatmul.mubr.f32.gmra.mxu0 %v7705
      %v8021 = vpop.f32.mrf.mxu0
      %v8022 = vadd.f32 0.0, %v8021
      %v8023 = vpop.f32.mrf.mxu0
      %8024 = vmatprep.mubr.f32.mxu0 0.0
      %8025 = vmatmul.mubr.f32.gmra.mxu0 %v7708
      %v8026 = vpop.f32.mrf.mxu0
      %v8027 = vadd.f32 0.0, %v8026
      %v8028 = vpop.f32.mrf.mxu0
      %8029 = vmatprep.mubr.f32.mxu0 0.0
      %8030 = vmatmul.mubr.f32.gmra.mxu0 %v7711
      %v8031 = vpop.f32.mrf.mxu0
      %v8032 = vadd.f32 0.0, %v8031
      %v8033 = vpop.f32.mrf.mxu0
      %8034 = vmatprep.mubr.f32.mxu0 0.0
      %8035 = vmatmul.mubr.f32.gmra.mxu0 %v7714
      %v8036 = vpop.f32.mrf.mxu0
      %v8037 = vadd.f32 0.0, %v8036
      %v8038 = vpop.f32.mrf.mxu0
      %8039 = vmatprep.mubr.f32.mxu0 0.0
      %8040 = vmatmul.mubr.f32.gmra.mxu0 %v7717
      %v8041 = vpop.f32.mrf.mxu0
      %v8042 = vadd.f32 0.0, %v8041
      %v8043 = vpop.f32.mrf.mxu0
      %8044 = vmatprep.mubr.f32.mxu0 0.0
      %8045 = vmatmul.mubr.f32.gmra.mxu0 %v7720
      %v8046 = vpop.f32.mrf.mxu0
      %v8047 = vadd.f32 0.0, %v8046
      %v8048 = vpop.f32.mrf.mxu0
      %8049 = vmatprep.mubr.f32.mxu0 0.0
      %8050 = vmatmul.mubr.f32.gmra.mxu0 %v7723
      %v8051 = vpop.f32.mrf.mxu0
      %v8052 = vadd.f32 0.0, %v8051
      %v8053 = vpop.f32.mrf.mxu0
      %8054 = vmatprep.mubr.f32.mxu0 0.0
      %8055 = vmatmul.mubr.f32.gmra.mxu0 %v7726
      %v8056 = vpop.f32.mrf.mxu0
      %v8057 = vadd.f32 0.0, %v8056
      %v8058 = vpop.f32.mrf.mxu0
      %8059 = vmatprep.mubr.f32.mxu0 0.0
      %8060 = vmatmul.mubr.f32.gmra.mxu0 %v7729
      %v8061 = vpop.f32.mrf.mxu0
      %v8062 = vadd.f32 0.0, %v8061
      %v8063 = vpop.f32.mrf.mxu0
      %8064 = vmatprep.mubr.f32.mxu0 0.0
      %8065 = vmatmul.mubr.f32.gmra.mxu0 %v7732
      %v8066 = vpop.f32.mrf.mxu0
      %v8067 = vadd.f32 0.0, %v8066
      %v8068 = vpop.f32.mrf.mxu0
      %8069 = vmatprep.mubr.f32.mxu0 0.0
      %8070 = vmatmul.mubr.f32.gmra.mxu0 %v7735
      %v8071 = vpop.f32.mrf.mxu0
      %v8072 = vadd.f32 0.0, %v8071
      %v8073 = vpop.f32.mrf.mxu0
      %8074 = vmatprep.mubr.f32.mxu0 0.0
      %8075 = vmatmul.mubr.f32.gmra.mxu0 %v7738
      %v8076 = vpop.f32.mrf.mxu0
      %v8077 = vadd.f32 0.0, %v8076
      %v8078 = vpop.f32.mrf.mxu0
      %8079 = vmatprep.mubr.f32.mxu0 0.0
      %8080 = vmatmul.mubr.f32.gmra.mxu0 %v7741
      %v8081 = vpop.f32.mrf.mxu0
      %v8082 = vadd.f32 0.0, %v8081
      %v8083 = vpop.f32.mrf.mxu0
      %8084 = vmatprep.mubr.f32.mxu0 0.0
      %8085 = vmatmul.mubr.f32.gmra.mxu0 %v7744
      %v8086 = vpop.f32.mrf.mxu0
      %v8087 = vadd.f32 0.0, %v8086
      %v8088 = vpop.f32.mrf.mxu0
      %8089 = vmatprep.mubr.f32.mxu0 0.0
      %8090 = vmatmul.mubr.f32.gmra.mxu0 %v7747
      %v8091 = vpop.f32.mrf.mxu0
      %v8092 = vadd.f32 0.0, %v8091
      %v8093 = vpop.f32.mrf.mxu0
      %8094 = vmatprep.mubr.f32.mxu0 0.0
      %8095 = vmatmul.mubr.f32.gmra.mxu0 %v7750
      %v8096 = vpop.f32.mrf.mxu0
      %v8097 = vadd.f32 0.0, %v8096
      %v8098 = vpop.f32.mrf.mxu0
      %8099 = vmatprep.mubr.f32.mxu0 0.0
      %8100 = vmatmul.mubr.f32.gmra.mxu0 %v7753
      %v8101 = vpop.f32.mrf.mxu0
      %v8102 = vadd.f32 0.0, %v8101
      %v8103 = vpop.f32.mrf.mxu0
      %8104 = vmatprep.mubr.f32.mxu0 0.0
      %8105 = vmatmul.mubr.f32.gmra.mxu0 %v7756
      %v8106 = vpop.f32.mrf.mxu0
      %v8107 = vadd.f32 0.0, %v8106
      %v8108 = vpop.f32.mrf.mxu0
      %8109 = vmatprep.mubr.f32.mxu0 0.0
      %8110 = vmatmul.mubr.f32.gmra.mxu0 %v7759
      %v8111 = vpop.f32.mrf.mxu0
      %v8112 = vadd.f32 0.0, %v8111
      %v8113 = vpop.f32.mrf.mxu0
      %8114 = vmatprep.mubr.f32.mxu0 0.0
      %8115 = vmatmul.mubr.f32.gmra.mxu0 %v7762
      %v8116 = vpop.f32.mrf.mxu0
      %v8117 = vadd.f32 0.0, %v8116
      %v8118 = vpop.f32.mrf.mxu0
      %8119 = vmatprep.mubr.f32.mxu0 0.0
      %8120 = vmatmul.mubr.f32.gmra.mxu0 %v7765
      %v8121 = vpop.f32.mrf.mxu0
      %v8122 = vadd.f32 0.0, %v8121
      %v8123 = vpop.f32.mrf.mxu0
      %8124 = vmatprep.mubr.f32.mxu0 0.0
      %8125 = vmatmul.mubr.f32.gmra.mxu0 %v7768
      %v8126 = vpop.f32.mrf.mxu0
      %v8127 = vadd.f32 0.0, %v8126
      %v8128 = vpop.f32.mrf.mxu0
      %8129 = vmatprep.mubr.f32.mxu0 0.0
      %8130 = vmatmul.mubr.f32.gmra.mxu0 %v7771
      %v8131 = vpop.f32.mrf.mxu0
      %v8132 = vadd.f32 0.0, %v8131
      %v8133 = vpop.f32.mrf.mxu0
      %8134 = vmatprep.mubr.f32.mxu0 0.0
      %8135 = vmatmul.mubr.f32.gmra.mxu0 %v7774
      %v8136 = vpop.f32.mrf.mxu0
      %v8137 = vadd.f32 0.0, %v8136
      %v8138 = vpop.f32.mrf.mxu0
      %8139 = vmatprep.mubr.f32.mxu0 0.0
      %8140 = vmatmul.mubr.f32.gmra.mxu0 %v7777
      %v8141 = vpop.f32.mrf.mxu0
      %v8142 = vadd.f32 0.0, %v8141
      %v8143 = vpop.f32.mrf.mxu0
      %8144 = vmatprep.mubr.f32.mxu0 0.0
      %8145 = vmatmul.mubr.f32.gmra.mxu0 %v7780
      %v8146 = vpop.f32.mrf.mxu0
      %v8147 = vadd.f32 0.0, %v8146
      %v8148 = vpop.f32.mrf.mxu0
      %8149 = vmatprep.mubr.f32.mxu0 0.0
      %8150 = vmatmul.mubr.f32.gmra.mxu0 %v7783
      %v8151 = vpop.f32.mrf.mxu0
      %v8152 = vadd.f32 0.0, %v8151
      %v8153 = vpop.f32.mrf.mxu0
      %8154 = vmatprep.mubr.f32.mxu0 0.0
      %8155 = vmatmul.mubr.f32.gmra.mxu0 %v7786
      %v8156 = vpop.f32.mrf.mxu0
      %v8157 = vadd.f32 0.0, %v8156
      %v8158 = vpop.f32.mrf.mxu0
      %8159 = vmatprep.mubr.f32.mxu0 0.0
      %8160 = vmatmul.mubr.f32.gmra.mxu0 %v7789
      %v8161 = vpop.f32.mrf.mxu0
      %v8162 = vadd.f32 0.0, %v8161
      %v8163 = vpop.f32.mrf.mxu0
      %8164 = vmatprep.mubr.f32.mxu0 0.0
      %8165 = vmatmul.mubr.f32.gmra.mxu0 %v7792
      %v8166 = vpop.f32.mrf.mxu0
      %v8167 = vadd.f32 0.0, %v8166
      %v8168 = vpop.f32.mrf.mxu0
      %8169 = vmatprep.mubr.f32.mxu0 0.0
      %8170 = vmatmul.mubr.f32.gmra.mxu0 %v7795
      %v8171 = vpop.f32.mrf.mxu0
      %v8172 = vadd.f32 0.0, %v8171
      %v8173 = vpop.f32.mrf.mxu0
      %8174 = vmatprep.mubr.f32.mxu0 0.0
      %8175 = vmatmul.mubr.f32.gmra.mxu0 %v7798
      %v8176 = vpop.f32.mrf.mxu0
      %v8177 = vadd.f32 0.0, %v8176
      %v8178 = vpop.f32.mrf.mxu0
      %8179 = vmatprep.mubr.f32.mxu0 0.0
      %8180 = vmatmul.mubr.f32.gmra.mxu0 %v7801
      %v8181 = vpop.f32.mrf.mxu0
      %v8182 = vadd.f32 0.0, %v8181
      %v8183 = vpop.f32.mrf.mxu0
      %8184 = vmatprep.mubr.f32.mxu0 0.0
      %8185 = vmatmul.mubr.f32.gmra.mxu0 %v7804
      %v8186 = vpop.f32.mrf.mxu0
      %v8187 = vadd.f32 0.0, %v8186
      %v8188 = vpop.f32.mrf.mxu0
      %8189 = vmatprep.mubr.f32.mxu0 0.0
      %8190 = vmatmul.mubr.f32.gmra.mxu0 %v7807
      %v8191 = vpop.f32.mrf.mxu0
      %v8192 = vadd.f32 0.0, %v8191
      %v8193 = vpop.f32.mrf.mxu0
      %8194 = vmatprep.mubr.f32.mxu0 0.0
      %8195 = vmatmul.mubr.f32.gmra.mxu0 %v7810
      %v8196 = vpop.f32.mrf.mxu0
      %v8197 = vadd.f32 0.0, %v8196
      %v8198 = vpop.f32.mrf.mxu0
      %8199 = vdwg.mxu0
      %v8201 = vsel %vm1080, %v3229, 0
      %v8204 = vsel %vm1080, %v3234, 0
      %v8207 = vsel %vm1080, %v3239, 0
      %v8210 = vsel %vm1080, %v3244, 0
      %v8213 = vsel %vm1080, %v3249, 0
      %v8216 = vsel %vm1080, %v3254, 0
      %v8219 = vsel %vm1080, %v3259, 0
      %v8222 = vsel %vm1080, %v3264, 0
      %v8225 = vsel %vm1080, %v3382, 0
      %v8228 = vsel %vm1080, %v3387, 0
      %v8231 = vsel %vm1080, %v3392, 0
      %v8234 = vsel %vm1080, %v3397, 0
      %v8237 = vsel %vm1080, %v3402, 0
      %v8240 = vsel %vm1080, %v3407, 0
      %v8243 = vsel %vm1080, %v3412, 0
      %v8246 = vsel %vm1080, %v3417, 0
      %v8249 = vsel %vm1080, %v3535, 0
      %v8252 = vsel %vm1080, %v3540, 0
      %v8255 = vsel %vm1080, %v3545, 0
      %v8258 = vsel %vm1080, %v3550, 0
      %v8261 = vsel %vm1080, %v3555, 0
      %v8264 = vsel %vm1080, %v3560, 0
      %v8267 = vsel %vm1080, %v3565, 0
      %v8270 = vsel %vm1080, %v3570, 0
      %v8273 = vsel %vm1080, %v3688, 0
      %v8276 = vsel %vm1080, %v3693, 0
      %v8279 = vsel %vm1080, %v3698, 0
      %v8282 = vsel %vm1080, %v3703, 0
      %v8285 = vsel %vm1080, %v3708, 0
      %v8288 = vsel %vm1080, %v3713, 0
      %v8291 = vsel %vm1080, %v3718, 0
      %v8294 = vsel %vm1080, %v3723, 0
      %v8297 = vsel %vm1080, %v3841, 0
      %v8300 = vsel %vm1080, %v3846, 0
      %v8303 = vsel %vm1080, %v3851, 0
      %v8306 = vsel %vm1080, %v3856, 0
      %v8309 = vsel %vm1080, %v3861, 0
      %v8312 = vsel %vm1080, %v3866, 0
      %v8315 = vsel %vm1080, %v3871, 0
      %v8318 = vsel %vm1080, %v3876, 0
      %v8321 = vsel %vm1080, %v3994, 0
      %v8324 = vsel %vm1080, %v3999, 0
      %v8327 = vsel %vm1080, %v4004, 0
      %v8330 = vsel %vm1080, %v4009, 0
      %v8333 = vsel %vm1080, %v4014, 0
      %v8336 = vsel %vm1080, %v4019, 0
      %v8339 = vsel %vm1080, %v4024, 0
      %v8342 = vsel %vm1080, %v4029, 0
      %v8345 = vsel %vm1080, %v4147, 0
      %v8348 = vsel %vm1080, %v4152, 0
      %v8351 = vsel %vm1080, %v4157, 0
      %v8354 = vsel %vm1080, %v4162, 0
      %v8357 = vsel %vm1080, %v4167, 0
      %v8360 = vsel %vm1080, %v4172, 0
      %v8363 = vsel %vm1080, %v4177, 0
      %v8366 = vsel %vm1080, %v4182, 0
      %v8369 = vsel %vm1080, %v4300, 0
      %v8372 = vsel %vm1080, %v4305, 0
      %v8375 = vsel %vm1080, %v4310, 0
      %v8378 = vsel %vm1080, %v4315, 0
      %v8381 = vsel %vm1080, %v4320, 0
      %v8384 = vsel %vm1080, %v4325, 0
      %v8387 = vsel %vm1080, %v4330, 0
      %v8390 = vsel %vm1080, %v4335, 0
      %v8392 = vsel %vm7812, %v991, 0
      %8394 = vmatprep.subr.mxu0 0.0
      %8395 = vmatpush1.msra.mxu0 0.0
      %8396 = vmatprep.subr.mxu0 0.0
      %8397 = vmatpush1.msra.mxu0 0.0
      %8398 = vmatprep.subr.mxu0 0.0
      %8399 = vmatpush1.msra.mxu0 0.0
      %8400 = vmatprep.subr.mxu0 0.0
      %8401 = vmatpush1.msra.mxu0 0.0
      %8402 = vmatprep.subr.mxu0 0.0
      %8403 = vmatpush1.msra.mxu0 0.0
      %8404 = vmatprep.subr.mxu0 0.0
      %8405 = vmatpush1.msra.mxu0 0.0
      %8406 = vmatprep.subr.mxu0 0.0
      %8407 = vmatpush1.msra.mxu0 0.0
      %8408 = vmatprep.subr.mxu0 0.0
      %8409 = vmatpush1.msra.mxu0 0.0
      %8410 = vmatprep.subr.mxu0 0.0
      %8411 = vmatpush1.msra.mxu0 0.0
      %8412 = vmatprep.subr.mxu0 0.0
      %8413 = vmatpush1.msra.mxu0 0.0
      %8414 = vmatprep.subr.mxu0 0.0
      %8415 = vmatpush1.msra.mxu0 0.0
      %8416 = vmatprep.subr.mxu0 0.0
      %8417 = vmatpush1.msra.mxu0 0.0
      %8418 = vmatprep.subr.mxu0 0.0
      %8419 = vmatpush1.msra.mxu0 0.0
      %8420 = vmatprep.subr.mxu0 0.0
      %8421 = vmatpush1.msra.mxu0 0.0
      %8422 = vmatprep.subr.mxu0 0.0
      %8423 = vmatpush1.msra.mxu0 0.0
      %8424 = vmatprep.subr.mxu0 0.0
      %8425 = vmatpush1.msra.mxu0 %v8392
      %8426 = vmatprep.subr.mxu0 0.0
      %8427 = vmatpush2.msra.mxu0 0.0
      %8428 = vmatprep.subr.mxu0 0.0
      %8429 = vmatpush2.msra.mxu0 0.0
      %8430 = vmatprep.subr.mxu0 0.0
      %8431 = vmatpush2.msra.mxu0 0.0
      %8432 = vmatprep.subr.mxu0 0.0
      %8433 = vmatpush2.msra.mxu0 0.0
      %8434 = vmatprep.subr.mxu0 0.0
      %8435 = vmatpush2.msra.mxu0 0.0
      %8436 = vmatprep.subr.mxu0 0.0
      %8437 = vmatpush2.msra.mxu0 0.0
      %8438 = vmatprep.subr.mxu0 0.0
      %8439 = vmatpush2.msra.mxu0 0.0
      %8440 = vmatprep.subr.mxu0 0.0
      %8441 = vmatpush2.msra.mxu0 0.0
      %8442 = vmatprep.subr.mxu0 0.0
      %8443 = vmatpush2.msra.mxu0 0.0
      %8444 = vmatprep.subr.mxu0 0.0
      %8445 = vmatpush2.msra.mxu0 0.0
      %8446 = vmatprep.subr.mxu0 0.0
      %8447 = vmatpush2.msra.mxu0 0.0
      %8448 = vmatprep.subr.mxu0 0.0
      %8449 = vmatpush2.msra.mxu0 0.0
      %8450 = vmatprep.subr.mxu0 0.0
      %8451 = vmatpush2.msra.mxu0 0.0
      %8452 = vmatprep.subr.mxu0 0.0
      %8453 = vmatpush2.msra.mxu0 0.0
      %8454 = vmatprep.subr.mxu0 0.0
      %8455 = vmatpush2.msra.mxu0 0.0
      %8456 = vmatprep.subr.mxu0 0.0
      %8457 = vmatpush2.msra.mxu0 0.0
      %8458 = vmatprep.mubr.f32.mxu0 0.0
      %8459 = vmatmul.mubr.f32.gmra.mxu0 %v8201
      %v8460 = vpop.f32.mrf.mxu0
      %v8461 = vadd.f32 %v7882, %v8460
      %v8462 = vpop.f32.mrf.mxu0
      %8463 = vmatprep.mubr.f32.mxu0 0.0
      %8464 = vmatmul.mubr.f32.gmra.mxu0 %v8204
      %v8465 = vpop.f32.mrf.mxu0
      %v8466 = vadd.f32 %v7887, %v8465
      %v8467 = vpop.f32.mrf.mxu0
      %8468 = vmatprep.mubr.f32.mxu0 0.0
      %8469 = vmatmul.mubr.f32.gmra.mxu0 %v8207
      %v8470 = vpop.f32.mrf.mxu0
      %v8471 = vadd.f32 %v7892, %v8470
      %v8472 = vpop.f32.mrf.mxu0
      %8473 = vmatprep.mubr.f32.mxu0 0.0
      %8474 = vmatmul.mubr.f32.gmra.mxu0 %v8210
      %v8475 = vpop.f32.mrf.mxu0
      %v8476 = vadd.f32 %v7897, %v8475
      %v8477 = vpop.f32.mrf.mxu0
      %8478 = vmatprep.mubr.f32.mxu0 0.0
      %8479 = vmatmul.mubr.f32.gmra.mxu0 %v8213
      %v8480 = vpop.f32.mrf.mxu0
      %v8481 = vadd.f32 %v7902, %v8480
      %v8482 = vpop.f32.mrf.mxu0
      %8483 = vmatprep.mubr.f32.mxu0 0.0
      %8484 = vmatmul.mubr.f32.gmra.mxu0 %v8216
      %v8485 = vpop.f32.mrf.mxu0
      %v8486 = vadd.f32 %v7907, %v8485
      %v8487 = vpop.f32.mrf.mxu0
      %8488 = vmatprep.mubr.f32.mxu0 0.0
      %8489 = vmatmul.mubr.f32.gmra.mxu0 %v8219
      %v8490 = vpop.f32.mrf.mxu0
      %v8491 = vadd.f32 %v7912, %v8490
      %v8492 = vpop.f32.mrf.mxu0
      %8493 = vmatprep.mubr.f32.mxu0 0.0
      %8494 = vmatmul.mubr.f32.gmra.mxu0 %v8222
      %v8495 = vpop.f32.mrf.mxu0
      %v8496 = vadd.f32 %v7917, %v8495
      %v8497 = vpop.f32.mrf.mxu0
      %8498 = vmatprep.mubr.f32.mxu0 0.0
      %8499 = vmatmul.mubr.f32.gmra.mxu0 %v8225
      %v8500 = vpop.f32.mrf.mxu0
      %v8501 = vadd.f32 %v7922, %v8500
      %v8502 = vpop.f32.mrf.mxu0
      %8503 = vmatprep.mubr.f32.mxu0 0.0
      %8504 = vmatmul.mubr.f32.gmra.mxu0 %v8228
      %v8505 = vpop.f32.mrf.mxu0
      %v8506 = vadd.f32 %v7927, %v8505
      %v8507 = vpop.f32.mrf.mxu0
      %8508 = vmatprep.mubr.f32.mxu0 0.0
      %8509 = vmatmul.mubr.f32.gmra.mxu0 %v8231
      %v8510 = vpop.f32.mrf.mxu0
      %v8511 = vadd.f32 %v7932, %v8510
      %v8512 = vpop.f32.mrf.mxu0
      %8513 = vmatprep.mubr.f32.mxu0 0.0
      %8514 = vmatmul.mubr.f32.gmra.mxu0 %v8234
      %v8515 = vpop.f32.mrf.mxu0
      %v8516 = vadd.f32 %v7937, %v8515
      %v8517 = vpop.f32.mrf.mxu0
      %8518 = vmatprep.mubr.f32.mxu0 0.0
      %8519 = vmatmul.mubr.f32.gmra.mxu0 %v8237
      %v8520 = vpop.f32.mrf.mxu0
      %v8521 = vadd.f32 %v7942, %v8520
      %v8522 = vpop.f32.mrf.mxu0
      %8523 = vmatprep.mubr.f32.mxu0 0.0
      %8524 = vmatmul.mubr.f32.gmra.mxu0 %v8240
      %v8525 = vpop.f32.mrf.mxu0
      %v8526 = vadd.f32 %v7947, %v8525
      %v8527 = vpop.f32.mrf.mxu0
      %8528 = vmatprep.mubr.f32.mxu0 0.0
      %8529 = vmatmul.mubr.f32.gmra.mxu0 %v8243
      %v8530 = vpop.f32.mrf.mxu0
      %v8531 = vadd.f32 %v7952, %v8530
      %v8532 = vpop.f32.mrf.mxu0
      %8533 = vmatprep.mubr.f32.mxu0 0.0
      %8534 = vmatmul.mubr.f32.gmra.mxu0 %v8246
      %v8535 = vpop.f32.mrf.mxu0
      %v8536 = vadd.f32 %v7957, %v8535
      %v8537 = vpop.f32.mrf.mxu0
      %8538 = vmatprep.mubr.f32.mxu0 0.0
      %8539 = vmatmul.mubr.f32.gmra.mxu0 %v8249
      %v8540 = vpop.f32.mrf.mxu0
      %v8541 = vadd.f32 %v7962, %v8540
      %v8542 = vpop.f32.mrf.mxu0
      %8543 = vmatprep.mubr.f32.mxu0 0.0
      %8544 = vmatmul.mubr.f32.gmra.mxu0 %v8252
      %v8545 = vpop.f32.mrf.mxu0
      %v8546 = vadd.f32 %v7967, %v8545
      %v8547 = vpop.f32.mrf.mxu0
      %8548 = vmatprep.mubr.f32.mxu0 0.0
      %8549 = vmatmul.mubr.f32.gmra.mxu0 %v8255
      %v8550 = vpop.f32.mrf.mxu0
      %v8551 = vadd.f32 %v7972, %v8550
      %v8552 = vpop.f32.mrf.mxu0
      %8553 = vmatprep.mubr.f32.mxu0 0.0
      %8554 = vmatmul.mubr.f32.gmra.mxu0 %v8258
      %v8555 = vpop.f32.mrf.mxu0
      %v8556 = vadd.f32 %v7977, %v8555
      %v8557 = vpop.f32.mrf.mxu0
      %8558 = vmatprep.mubr.f32.mxu0 0.0
      %8559 = vmatmul.mubr.f32.gmra.mxu0 %v8261
      %v8560 = vpop.f32.mrf.mxu0
      %v8561 = vadd.f32 %v7982, %v8560
      %v8562 = vpop.f32.mrf.mxu0
      %8563 = vmatprep.mubr.f32.mxu0 0.0
      %8564 = vmatmul.mubr.f32.gmra.mxu0 %v8264
      %v8565 = vpop.f32.mrf.mxu0
      %v8566 = vadd.f32 %v7987, %v8565
      %v8567 = vpop.f32.mrf.mxu0
      %8568 = vmatprep.mubr.f32.mxu0 0.0
      %8569 = vmatmul.mubr.f32.gmra.mxu0 %v8267
      %v8570 = vpop.f32.mrf.mxu0
      %v8571 = vadd.f32 %v7992, %v8570
      %v8572 = vpop.f32.mrf.mxu0
      %8573 = vmatprep.mubr.f32.mxu0 0.0
      %8574 = vmatmul.mubr.f32.gmra.mxu0 %v8270
      %v8575 = vpop.f32.mrf.mxu0
      %v8576 = vadd.f32 %v7997, %v8575
      %v8577 = vpop.f32.mrf.mxu0
      %8578 = vmatprep.mubr.f32.mxu0 0.0
      %8579 = vmatmul.mubr.f32.gmra.mxu0 %v8273
      %v8580 = vpop.f32.mrf.mxu0
      %v8581 = vadd.f32 %v8002, %v8580
      %v8582 = vpop.f32.mrf.mxu0
      %8583 = vmatprep.mubr.f32.mxu0 0.0
      %8584 = vmatmul.mubr.f32.gmra.mxu0 %v8276
      %v8585 = vpop.f32.mrf.mxu0
      %v8586 = vadd.f32 %v8007, %v8585
      %v8587 = vpop.f32.mrf.mxu0
      %8588 = vmatprep.mubr.f32.mxu0 0.0
      %8589 = vmatmul.mubr.f32.gmra.mxu0 %v8279
      %v8590 = vpop.f32.mrf.mxu0
      %v8591 = vadd.f32 %v8012, %v8590
      %v8592 = vpop.f32.mrf.mxu0
      %8593 = vmatprep.mubr.f32.mxu0 0.0
      %8594 = vmatmul.mubr.f32.gmra.mxu0 %v8282
      %v8595 = vpop.f32.mrf.mxu0
      %v8596 = vadd.f32 %v8017, %v8595
      %v8597 = vpop.f32.mrf.mxu0
      %8598 = vmatprep.mubr.f32.mxu0 0.0
      %8599 = vmatmul.mubr.f32.gmra.mxu0 %v8285
      %v8600 = vpop.f32.mrf.mxu0
      %v8601 = vadd.f32 %v8022, %v8600
      %v8602 = vpop.f32.mrf.mxu0
      %8603 = vmatprep.mubr.f32.mxu0 0.0
      %8604 = vmatmul.mubr.f32.gmra.mxu0 %v8288
      %v8605 = vpop.f32.mrf.mxu0
      %v8606 = vadd.f32 %v8027, %v8605
      %v8607 = vpop.f32.mrf.mxu0
      %8608 = vmatprep.mubr.f32.mxu0 0.0
      %8609 = vmatmul.mubr.f32.gmra.mxu0 %v8291
      %v8610 = vpop.f32.mrf.mxu0
      %v8611 = vadd.f32 %v8032, %v8610
      %v8612 = vpop.f32.mrf.mxu0
      %8613 = vmatprep.mubr.f32.mxu0 0.0
      %8614 = vmatmul.mubr.f32.gmra.mxu0 %v8294
      %v8615 = vpop.f32.mrf.mxu0
      %v8616 = vadd.f32 %v8037, %v8615
      %v8617 = vpop.f32.mrf.mxu0
      %8618 = vmatprep.mubr.f32.mxu0 0.0
      %8619 = vmatmul.mubr.f32.gmra.mxu0 %v8297
      %v8620 = vpop.f32.mrf.mxu0
      %v8621 = vadd.f32 %v8042, %v8620
      %v8622 = vpop.f32.mrf.mxu0
      %8623 = vmatprep.mubr.f32.mxu0 0.0
      %8624 = vmatmul.mubr.f32.gmra.mxu0 %v8300
      %v8625 = vpop.f32.mrf.mxu0
      %v8626 = vadd.f32 %v8047, %v8625
      %v8627 = vpop.f32.mrf.mxu0
      %8628 = vmatprep.mubr.f32.mxu0 0.0
      %8629 = vmatmul.mubr.f32.gmra.mxu0 %v8303
      %v8630 = vpop.f32.mrf.mxu0
      %v8631 = vadd.f32 %v8052, %v8630
      %v8632 = vpop.f32.mrf.mxu0
      %8633 = vmatprep.mubr.f32.mxu0 0.0
      %8634 = vmatmul.mubr.f32.gmra.mxu0 %v8306
      %v8635 = vpop.f32.mrf.mxu0
      %v8636 = vadd.f32 %v8057, %v8635
      %v8637 = vpop.f32.mrf.mxu0
      %8638 = vmatprep.mubr.f32.mxu0 0.0
      %8639 = vmatmul.mubr.f32.gmra.mxu0 %v8309
      %v8640 = vpop.f32.mrf.mxu0
      %v8641 = vadd.f32 %v8062, %v8640
      %v8642 = vpop.f32.mrf.mxu0
      %8643 = vmatprep.mubr.f32.mxu0 0.0
      %8644 = vmatmul.mubr.f32.gmra.mxu0 %v8312
      %v8645 = vpop.f32.mrf.mxu0
      %v8646 = vadd.f32 %v8067, %v8645
      %v8647 = vpop.f32.mrf.mxu0
      %8648 = vmatprep.mubr.f32.mxu0 0.0
      %8649 = vmatmul.mubr.f32.gmra.mxu0 %v8315
      %v8650 = vpop.f32.mrf.mxu0
      %v8651 = vadd.f32 %v8072, %v8650
      %v8652 = vpop.f32.mrf.mxu0
      %8653 = vmatprep.mubr.f32.mxu0 0.0
      %8654 = vmatmul.mubr.f32.gmra.mxu0 %v8318
      %v8655 = vpop.f32.mrf.mxu0
      %v8656 = vadd.f32 %v8077, %v8655
      %v8657 = vpop.f32.mrf.mxu0
      %8658 = vmatprep.mubr.f32.mxu0 0.0
      %8659 = vmatmul.mubr.f32.gmra.mxu0 %v8321
      %v8660 = vpop.f32.mrf.mxu0
      %v8661 = vadd.f32 %v8082, %v8660
      %v8662 = vpop.f32.mrf.mxu0
      %8663 = vmatprep.mubr.f32.mxu0 0.0
      %8664 = vmatmul.mubr.f32.gmra.mxu0 %v8324
      %v8665 = vpop.f32.mrf.mxu0
      %v8666 = vadd.f32 %v8087, %v8665
      %v8667 = vpop.f32.mrf.mxu0
      %8668 = vmatprep.mubr.f32.mxu0 0.0
      %8669 = vmatmul.mubr.f32.gmra.mxu0 %v8327
      %v8670 = vpop.f32.mrf.mxu0
      %v8671 = vadd.f32 %v8092, %v8670
      %v8672 = vpop.f32.mrf.mxu0
      %8673 = vmatprep.mubr.f32.mxu0 0.0
      %8674 = vmatmul.mubr.f32.gmra.mxu0 %v8330
      %v8675 = vpop.f32.mrf.mxu0
      %v8676 = vadd.f32 %v8097, %v8675
      %v8677 = vpop.f32.mrf.mxu0
      %8678 = vmatprep.mubr.f32.mxu0 0.0
      %8679 = vmatmul.mubr.f32.gmra.mxu0 %v8333
      %v8680 = vpop.f32.mrf.mxu0
      %v8681 = vadd.f32 %v8102, %v8680
      %v8682 = vpop.f32.mrf.mxu0
      %8683 = vmatprep.mubr.f32.mxu0 0.0
      %8684 = vmatmul.mubr.f32.gmra.mxu0 %v8336
      %v8685 = vpop.f32.mrf.mxu0
      %v8686 = vadd.f32 %v8107, %v8685
      %v8687 = vpop.f32.mrf.mxu0
      %8688 = vmatprep.mubr.f32.mxu0 0.0
      %8689 = vmatmul.mubr.f32.gmra.mxu0 %v8339
      %v8690 = vpop.f32.mrf.mxu0
      %v8691 = vadd.f32 %v8112, %v8690
      %v8692 = vpop.f32.mrf.mxu0
      %8693 = vmatprep.mubr.f32.mxu0 0.0
      %8694 = vmatmul.mubr.f32.gmra.mxu0 %v8342
      %v8695 = vpop.f32.mrf.mxu0
      %v8696 = vadd.f32 %v8117, %v8695
      %v8697 = vpop.f32.mrf.mxu0
      %8698 = vmatprep.mubr.f32.mxu0 0.0
      %8699 = vmatmul.mubr.f32.gmra.mxu0 %v8345
      %v8700 = vpop.f32.mrf.mxu0
      %v8701 = vadd.f32 %v8122, %v8700
      %v8702 = vpop.f32.mrf.mxu0
      %8703 = vmatprep.mubr.f32.mxu0 0.0
      %8704 = vmatmul.mubr.f32.gmra.mxu0 %v8348
      %v8705 = vpop.f32.mrf.mxu0
      %v8706 = vadd.f32 %v8127, %v8705
      %v8707 = vpop.f32.mrf.mxu0
      %8708 = vmatprep.mubr.f32.mxu0 0.0
      %8709 = vmatmul.mubr.f32.gmra.mxu0 %v8351
      %v8710 = vpop.f32.mrf.mxu0
      %v8711 = vadd.f32 %v8132, %v8710
      %v8712 = vpop.f32.mrf.mxu0
      %8713 = vmatprep.mubr.f32.mxu0 0.0
      %8714 = vmatmul.mubr.f32.gmra.mxu0 %v8354
      %v8715 = vpop.f32.mrf.mxu0
      %v8716 = vadd.f32 %v8137, %v8715
      %v8717 = vpop.f32.mrf.mxu0
      %8718 = vmatprep.mubr.f32.mxu0 0.0
      %8719 = vmatmul.mubr.f32.gmra.mxu0 %v8357
      %v8720 = vpop.f32.mrf.mxu0
      %v8721 = vadd.f32 %v8142, %v8720
      %v8722 = vpop.f32.mrf.mxu0
      %8723 = vmatprep.mubr.f32.mxu0 0.0
      %8724 = vmatmul.mubr.f32.gmra.mxu0 %v8360
      %v8725 = vpop.f32.mrf.mxu0
      %v8726 = vadd.f32 %v8147, %v8725
      %v8727 = vpop.f32.mrf.mxu0
      %8728 = vmatprep.mubr.f32.mxu0 0.0
      %8729 = vmatmul.mubr.f32.gmra.mxu0 %v8363
      %v8730 = vpop.f32.mrf.mxu0
      %v8731 = vadd.f32 %v8152, %v8730
      %v8732 = vpop.f32.mrf.mxu0
      %8733 = vmatprep.mubr.f32.mxu0 0.0
      %8734 = vmatmul.mubr.f32.gmra.mxu0 %v8366
      %v8735 = vpop.f32.mrf.mxu0
      %v8736 = vadd.f32 %v8157, %v8735
      %v8737 = vpop.f32.mrf.mxu0
      %8738 = vmatprep.mubr.f32.mxu0 0.0
      %8739 = vmatmul.mubr.f32.gmra.mxu0 %v8369
      %v8740 = vpop.f32.mrf.mxu0
      %v8741 = vadd.f32 %v8162, %v8740
      %v8742 = vpop.f32.mrf.mxu0
      %8743 = vmatprep.mubr.f32.mxu0 0.0
      %8744 = vmatmul.mubr.f32.gmra.mxu0 %v8372
      %v8745 = vpop.f32.mrf.mxu0
      %v8746 = vadd.f32 %v8167, %v8745
      %v8747 = vpop.f32.mrf.mxu0
      %8748 = vmatprep.mubr.f32.mxu0 0.0
      %8749 = vmatmul.mubr.f32.gmra.mxu0 %v8375
      %v8750 = vpop.f32.mrf.mxu0
      %v8751 = vadd.f32 %v8172, %v8750
      %v8752 = vpop.f32.mrf.mxu0
      %8753 = vmatprep.mubr.f32.mxu0 0.0
      %8754 = vmatmul.mubr.f32.gmra.mxu0 %v8378
      %v8755 = vpop.f32.mrf.mxu0
      %v8756 = vadd.f32 %v8177, %v8755
      %v8757 = vpop.f32.mrf.mxu0
      %8758 = vmatprep.mubr.f32.mxu0 0.0
      %8759 = vmatmul.mubr.f32.gmra.mxu0 %v8381
      %v8760 = vpop.f32.mrf.mxu0
      %v8761 = vadd.f32 %v8182, %v8760
      %v8762 = vpop.f32.mrf.mxu0
      %8763 = vmatprep.mubr.f32.mxu0 0.0
      %8764 = vmatmul.mubr.f32.gmra.mxu0 %v8384
      %v8765 = vpop.f32.mrf.mxu0
      %v8766 = vadd.f32 %v8187, %v8765
      %v8767 = vpop.f32.mrf.mxu0
      %8768 = vmatprep.mubr.f32.mxu0 0.0
      %8769 = vmatmul.mubr.f32.gmra.mxu0 %v8387
      %v8770 = vpop.f32.mrf.mxu0
      %v8771 = vadd.f32 %v8192, %v8770
      %v8772 = vpop.f32.mrf.mxu0
      %8773 = vmatprep.mubr.f32.mxu0 0.0
      %8774 = vmatmul.mubr.f32.gmra.mxu0 %v8390
      %v8775 = vpop.f32.mrf.mxu0
      %v8776 = vadd.f32 %v8197, %v8775
      %v8777 = vpop.f32.mrf.mxu0
      %8778 = vdwg.mxu0
      %v8779 = vld [vmem:[%s4] sm:$0x1]
      %v8781 = vlaneseq
      %v8782 = vshrl.u32 %v8781, 7
      %v8783 = vsub.s32 0, %v8782
      %v8784 = vrot.slane %v8779, %v8783
      %v8786 = vadd.f32 %v8461, %v8784
      %v8787 = vadd.f32 %v8466, %v8784
      %v8788 = vadd.f32 %v8471, %v8784
      %v8789 = vadd.f32 %v8476, %v8784
      %v8790 = vadd.f32 %v8481, %v8784
      %v8791 = vadd.f32 %v8486, %v8784
      %v8792 = vadd.f32 %v8491, %v8784
      %v8793 = vadd.f32 %v8496, %v8784
      %v8794 = vadd.f32 %v8501, %v8784
      %v8795 = vadd.f32 %v8506, %v8784
      %v8796 = vadd.f32 %v8511, %v8784
      %v8797 = vadd.f32 %v8516, %v8784
      %v8798 = vadd.f32 %v8521, %v8784
      %v8799 = vadd.f32 %v8526, %v8784
      %v8800 = vadd.f32 %v8531, %v8784
      %v8801 = vadd.f32 %v8536, %v8784
      %v8802 = vadd.f32 %v8541, %v8784
      %v8803 = vadd.f32 %v8546, %v8784
      %v8804 = vadd.f32 %v8551, %v8784
      %v8805 = vadd.f32 %v8556, %v8784
      %v8806 = vadd.f32 %v8561, %v8784
      %v8807 = vadd.f32 %v8566, %v8784
      %v8808 = vadd.f32 %v8571, %v8784
      %v8809 = vadd.f32 %v8576, %v8784
      %v8810 = vadd.f32 %v8581, %v8784
      %v8811 = vadd.f32 %v8586, %v8784
      %v8812 = vadd.f32 %v8591, %v8784
      %v8813 = vadd.f32 %v8596, %v8784
      %v8814 = vadd.f32 %v8601, %v8784
      %v8815 = vadd.f32 %v8606, %v8784
      %v8816 = vadd.f32 %v8611, %v8784
      %v8817 = vadd.f32 %v8616, %v8784
      %v8818 = vadd.f32 %v8621, %v8784
      %v8819 = vadd.f32 %v8626, %v8784
      %v8820 = vadd.f32 %v8631, %v8784
      %v8821 = vadd.f32 %v8636, %v8784
      %v8822 = vadd.f32 %v8641, %v8784
      %v8823 = vadd.f32 %v8646, %v8784
      %v8824 = vadd.f32 %v8651, %v8784
      %v8825 = vadd.f32 %v8656, %v8784
      %v8826 = vadd.f32 %v8661, %v8784
      %v8827 = vadd.f32 %v8666, %v8784
      %v8828 = vadd.f32 %v8671, %v8784
      %v8829 = vadd.f32 %v8676, %v8784
      %v8830 = vadd.f32 %v8681, %v8784
      %v8831 = vadd.f32 %v8686, %v8784
      %v8832 = vadd.f32 %v8691, %v8784
      %v8833 = vadd.f32 %v8696, %v8784
      %v8834 = vadd.f32 %v8701, %v8784
      %v8835 = vadd.f32 %v8706, %v8784
      %v8836 = vadd.f32 %v8711, %v8784
      %v8837 = vadd.f32 %v8716, %v8784
      %v8838 = vadd.f32 %v8721, %v8784
      %v8839 = vadd.f32 %v8726, %v8784
      %v8840 = vadd.f32 %v8731, %v8784
      %v8841 = vadd.f32 %v8736, %v8784
      %v8842 = vadd.f32 %v8741, %v8784
      %v8843 = vadd.f32 %v8746, %v8784
      %v8844 = vadd.f32 %v8751, %v8784
      %v8845 = vadd.f32 %v8756, %v8784
      %v8846 = vadd.f32 %v8761, %v8784
      %v8847 = vadd.f32 %v8766, %v8784
      %v8848 = vadd.f32 %v8771, %v8784
      %v8849 = vadd.f32 %v8776, %v8784
      %v8850 = vadd.f32 %v8786, %v341
      %v8851 = vadd.f32 %v8787, %v342
      %v8852 = vadd.f32 %v8788, %v343
      %v8853 = vadd.f32 %v8789, %v344
      %v8854 = vadd.f32 %v8790, %v345
      %v8855 = vadd.f32 %v8791, %v346
      %v8856 = vadd.f32 %v8792, %v347
      %v8857 = vadd.f32 %v8793, %v348
      %v8858 = vadd.f32 %v8794, %v349
      %v8859 = vadd.f32 %v8795, %v350
      %v8860 = vadd.f32 %v8796, %v351
      %v8861 = vadd.f32 %v8797, %v352
      %v8862 = vadd.f32 %v8798, %v353
      %v8863 = vadd.f32 %v8799, %v354
      %v8864 = vadd.f32 %v8800, %v355
      %v8865 = vadd.f32 %v8801, %v356
      %v8866 = vadd.f32 %v8802, %v357
      %v8867 = vadd.f32 %v8803, %v358
      %v8868 = vadd.f32 %v8804, %v359
      %v8869 = vadd.f32 %v8805, %v360
      %v8870 = vadd.f32 %v8806, %v361
      %v8871 = vadd.f32 %v8807, %v362
      %v8872 = vadd.f32 %v8808, %v363
      %v8873 = vadd.f32 %v8809, %v364
      %v8874 = vadd.f32 %v8810, %v365
      %v8875 = vadd.f32 %v8811, %v366
      %v8876 = vadd.f32 %v8812, %v367
      %v8877 = vadd.f32 %v8813, %v368
      %v8878 = vadd.f32 %v8814, %v369
      %v8879 = vadd.f32 %v8815, %v370
      %v8880 = vadd.f32 %v8816, %v371
      %v8881 = vadd.f32 %v8817, %v372
      %v8882 = vadd.f32 %v8818, %v373
      %v8883 = vadd.f32 %v8819, %v374
      %v8884 = vadd.f32 %v8820, %v375
      %v8885 = vadd.f32 %v8821, %v376
      %v8886 = vadd.f32 %v8822, %v377
      %v8887 = vadd.f32 %v8823, %v378
      %v8888 = vadd.f32 %v8824, %v379
      %v8889 = vadd.f32 %v8825, %v380
      %v8890 = vadd.f32 %v8826, %v381
      %v8891 = vadd.f32 %v8827, %v382
      %v8892 = vadd.f32 %v8828, %v383
      %v8893 = vadd.f32 %v8829, %v384
      %v8894 = vadd.f32 %v8830, %v385
      %v8895 = vadd.f32 %v8831, %v386
      %v8896 = vadd.f32 %v8832, %v387
      %v8897 = vadd.f32 %v8833, %v388
      %v8898 = vadd.f32 %v8834, %v389
      %v8899 = vadd.f32 %v8835, %v390
      %v8900 = vadd.f32 %v8836, %v391
      %v8901 = vadd.f32 %v8837, %v392
      %v8902 = vadd.f32 %v8838, %v393
      %v8903 = vadd.f32 %v8839, %v394
      %v8904 = vadd.f32 %v8840, %v395
      %v8905 = vadd.f32 %v8841, %v396
      %v8906 = vadd.f32 %v8842, %v397
      %v8907 = vadd.f32 %v8843, %v398
      %v8908 = vadd.f32 %v8844, %v399
      %v8909 = vadd.f32 %v8845, %v400
      %v8910 = vadd.f32 %v8846, %v401
      %v8911 = vadd.f32 %v8847, %v402
      %v8912 = vadd.f32 %v8848, %v403
      %v8913 = vadd.f32 %v8849, %v404
      %v8914 = vsel %vm413, %v8850, 0.0
      %8915 = vadd.xlane.f32.xlu0 %v8914
      %v8916 = vpop.xlane.xlu0 %8915
      %v8917 = vsel %vm413, %v8851, 0.0
      %8918 = vadd.xlane.f32.xlu0 %v8917
      %v8919 = vpop.xlane.xlu0 %8918
      %v8920 = vsel %vm413, %v8852, 0.0
      %8921 = vadd.xlane.f32.xlu0 %v8920
      %v8922 = vpop.xlane.xlu0 %8921
      %v8923 = vsel %vm413, %v8853, 0.0
      %8924 = vadd.xlane.f32.xlu0 %v8923
      %v8925 = vpop.xlane.xlu0 %8924
      %v8926 = vsel %vm413, %v8854, 0.0
      %8927 = vadd.xlane.f32.xlu0 %v8926
      %v8928 = vpop.xlane.xlu0 %8927
      %v8929 = vsel %vm413, %v8855, 0.0
      %8930 = vadd.xlane.f32.xlu0 %v8929
      %v8931 = vpop.xlane.xlu0 %8930
      %v8932 = vsel %vm413, %v8856, 0.0
      %8933 = vadd.xlane.f32.xlu0 %v8932
      %v8934 = vpop.xlane.xlu0 %8933
      %v8935 = vsel %vm413, %v8857, 0.0
      %8936 = vadd.xlane.f32.xlu0 %v8935
      %v8937 = vpop.xlane.xlu0 %8936
      %v8938 = vsel %vm413, %v8858, 0.0
      %8939 = vadd.xlane.f32.xlu0 %v8938
      %v8940 = vpop.xlane.xlu0 %8939
      %v8941 = vsel %vm413, %v8859, 0.0
      %8942 = vadd.xlane.f32.xlu0 %v8941
      %v8943 = vpop.xlane.xlu0 %8942
      %v8944 = vsel %vm413, %v8860, 0.0
      %8945 = vadd.xlane.f32.xlu0 %v8944
      %v8946 = vpop.xlane.xlu0 %8945
      %v8947 = vsel %vm413, %v8861, 0.0
      %8948 = vadd.xlane.f32.xlu0 %v8947
      %v8949 = vpop.xlane.xlu0 %8948
      %v8950 = vsel %vm413, %v8862, 0.0
      %8951 = vadd.xlane.f32.xlu0 %v8950
      %v8952 = vpop.xlane.xlu0 %8951
      %v8953 = vsel %vm413, %v8863, 0.0
      %8954 = vadd.xlane.f32.xlu0 %v8953
      %v8955 = vpop.xlane.xlu0 %8954
      %v8956 = vsel %vm413, %v8864, 0.0
      %8957 = vadd.xlane.f32.xlu0 %v8956
      %v8958 = vpop.xlane.xlu0 %8957
      %v8959 = vsel %vm413, %v8865, 0.0
      %8960 = vadd.xlane.f32.xlu0 %v8959
      %v8961 = vpop.xlane.xlu0 %8960
      %v8962 = vsel %vm413, %v8866, 0.0
      %8963 = vadd.xlane.f32.xlu0 %v8962
      %v8964 = vpop.xlane.xlu0 %8963
      %v8965 = vsel %vm413, %v8867, 0.0
      %8966 = vadd.xlane.f32.xlu0 %v8965
      %v8967 = vpop.xlane.xlu0 %8966
      %v8968 = vsel %vm413, %v8868, 0.0
      %8969 = vadd.xlane.f32.xlu0 %v8968
      %v8970 = vpop.xlane.xlu0 %8969
      %v8971 = vsel %vm413, %v8869, 0.0
      %8972 = vadd.xlane.f32.xlu0 %v8971
      %v8973 = vpop.xlane.xlu0 %8972
      %v8974 = vsel %vm413, %v8870, 0.0
      %8975 = vadd.xlane.f32.xlu0 %v8974
      %v8976 = vpop.xlane.xlu0 %8975
      %v8977 = vsel %vm413, %v8871, 0.0
      %8978 = vadd.xlane.f32.xlu0 %v8977
      %v8979 = vpop.xlane.xlu0 %8978
      %v8980 = vsel %vm413, %v8872, 0.0
      %8981 = vadd.xlane.f32.xlu0 %v8980
      %v8982 = vpop.xlane.xlu0 %8981
      %v8983 = vsel %vm413, %v8873, 0.0
      %8984 = vadd.xlane.f32.xlu0 %v8983
      %v8985 = vpop.xlane.xlu0 %8984
      %v8986 = vsel %vm413, %v8874, 0.0
      %8987 = vadd.xlane.f32.xlu0 %v8986
      %v8988 = vpop.xlane.xlu0 %8987
      %v8989 = vsel %vm413, %v8875, 0.0
      %8990 = vadd.xlane.f32.xlu0 %v8989
      %v8991 = vpop.xlane.xlu0 %8990
      %v8992 = vsel %vm413, %v8876, 0.0
      %8993 = vadd.xlane.f32.xlu0 %v8992
      %v8994 = vpop.xlane.xlu0 %8993
      %v8995 = vsel %vm413, %v8877, 0.0
      %8996 = vadd.xlane.f32.xlu0 %v8995
      %v8997 = vpop.xlane.xlu0 %8996
      %v8998 = vsel %vm413, %v8878, 0.0
      %8999 = vadd.xlane.f32.xlu0 %v8998
      %v9000 = vpop.xlane.xlu0 %8999
      %v9001 = vsel %vm413, %v8879, 0.0
      %9002 = vadd.xlane.f32.xlu0 %v9001
      %v9003 = vpop.xlane.xlu0 %9002
      %v9004 = vsel %vm413, %v8880, 0.0
      %9005 = vadd.xlane.f32.xlu0 %v9004
      %v9006 = vpop.xlane.xlu0 %9005
      %v9007 = vsel %vm413, %v8881, 0.0
      %9008 = vadd.xlane.f32.xlu0 %v9007
      %v9009 = vpop.xlane.xlu0 %9008
      %v9010 = vsel %vm413, %v8882, 0.0
      %9011 = vadd.xlane.f32.xlu0 %v9010
      %v9012 = vpop.xlane.xlu0 %9011
      %v9013 = vsel %vm413, %v8883, 0.0
      %9014 = vadd.xlane.f32.xlu0 %v9013
      %v9015 = vpop.xlane.xlu0 %9014
      %v9016 = vsel %vm413, %v8884, 0.0
      %9017 = vadd.xlane.f32.xlu0 %v9016
      %v9018 = vpop.xlane.xlu0 %9017
      %v9019 = vsel %vm413, %v8885, 0.0
      %9020 = vadd.xlane.f32.xlu0 %v9019
      %v9021 = vpop.xlane.xlu0 %9020
      %v9022 = vsel %vm413, %v8886, 0.0
      %9023 = vadd.xlane.f32.xlu0 %v9022
      %v9024 = vpop.xlane.xlu0 %9023
      %v9025 = vsel %vm413, %v8887, 0.0
      %9026 = vadd.xlane.f32.xlu0 %v9025
      %v9027 = vpop.xlane.xlu0 %9026
      %v9028 = vsel %vm413, %v8888, 0.0
      %9029 = vadd.xlane.f32.xlu0 %v9028
      %v9030 = vpop.xlane.xlu0 %9029
      %v9031 = vsel %vm413, %v8889, 0.0
      %9032 = vadd.xlane.f32.xlu0 %v9031
      %v9033 = vpop.xlane.xlu0 %9032
      %v9034 = vsel %vm413, %v8890, 0.0
      %9035 = vadd.xlane.f32.xlu0 %v9034
      %v9036 = vpop.xlane.xlu0 %9035
      %v9037 = vsel %vm413, %v8891, 0.0
      %9038 = vadd.xlane.f32.xlu0 %v9037
      %v9039 = vpop.xlane.xlu0 %9038
      %v9040 = vsel %vm413, %v8892, 0.0
      %9041 = vadd.xlane.f32.xlu0 %v9040
      %v9042 = vpop.xlane.xlu0 %9041
      %v9043 = vsel %vm413, %v8893, 0.0
      %9044 = vadd.xlane.f32.xlu0 %v9043
      %v9045 = vpop.xlane.xlu0 %9044
      %v9046 = vsel %vm413, %v8894, 0.0
      %9047 = vadd.xlane.f32.xlu0 %v9046
      %v9048 = vpop.xlane.xlu0 %9047
      %v9049 = vsel %vm413, %v8895, 0.0
      %9050 = vadd.xlane.f32.xlu0 %v9049
      %v9051 = vpop.xlane.xlu0 %9050
      %v9052 = vsel %vm413, %v8896, 0.0
      %9053 = vadd.xlane.f32.xlu0 %v9052
      %v9054 = vpop.xlane.xlu0 %9053
      %v9055 = vsel %vm413, %v8897, 0.0
      %9056 = vadd.xlane.f32.xlu0 %v9055
      %v9057 = vpop.xlane.xlu0 %9056
      %v9058 = vsel %vm413, %v8898, 0.0
      %9059 = vadd.xlane.f32.xlu0 %v9058
      %v9060 = vpop.xlane.xlu0 %9059
      %v9061 = vsel %vm413, %v8899, 0.0
      %9062 = vadd.xlane.f32.xlu0 %v9061
      %v9063 = vpop.xlane.xlu0 %9062
      %v9064 = vsel %vm413, %v8900, 0.0
      %9065 = vadd.xlane.f32.xlu0 %v9064
      %v9066 = vpop.xlane.xlu0 %9065
      %v9067 = vsel %vm413, %v8901, 0.0
      %9068 = vadd.xlane.f32.xlu0 %v9067
      %v9069 = vpop.xlane.xlu0 %9068
      %v9070 = vsel %vm413, %v8902, 0.0
      %9071 = vadd.xlane.f32.xlu0 %v9070
      %v9072 = vpop.xlane.xlu0 %9071
      %v9073 = vsel %vm413, %v8903, 0.0
      %9074 = vadd.xlane.f32.xlu0 %v9073
      %v9075 = vpop.xlane.xlu0 %9074
      %v9076 = vsel %vm413, %v8904, 0.0
      %9077 = vadd.xlane.f32.xlu0 %v9076
      %v9078 = vpop.xlane.xlu0 %9077
      %v9079 = vsel %vm413, %v8905, 0.0
      %9080 = vadd.xlane.f32.xlu0 %v9079
      %v9081 = vpop.xlane.xlu0 %9080
      %v9082 = vsel %vm413, %v8906, 0.0
      %9083 = vadd.xlane.f32.xlu0 %v9082
      %v9084 = vpop.xlane.xlu0 %9083
      %v9085 = vsel %vm413, %v8907, 0.0
      %9086 = vadd.xlane.f32.xlu0 %v9085
      %v9087 = vpop.xlane.xlu0 %9086
      %v9088 = vsel %vm413, %v8908, 0.0
      %9089 = vadd.xlane.f32.xlu0 %v9088
      %v9090 = vpop.xlane.xlu0 %9089
      %v9091 = vsel %vm413, %v8909, 0.0
      %9092 = vadd.xlane.f32.xlu0 %v9091
      %v9093 = vpop.xlane.xlu0 %9092
      %v9094 = vsel %vm413, %v8910, 0.0
      %9095 = vadd.xlane.f32.xlu0 %v9094
      %v9096 = vpop.xlane.xlu0 %9095
      %v9097 = vsel %vm413, %v8911, 0.0
      %9098 = vadd.xlane.f32.xlu0 %v9097
      %v9099 = vpop.xlane.xlu0 %9098
      %v9100 = vsel %vm413, %v8912, 0.0
      %9101 = vadd.xlane.f32.xlu0 %v9100
      %v9102 = vpop.xlane.xlu0 %9101
      %v9103 = vsel %vm413, %v8913, 0.0
      %9104 = vadd.xlane.f32.xlu0 %v9103
      %v9105 = vpop.xlane.xlu0 %9104
      %v9106 = vrcp.pop 8.0
      %v9107 = vmul.f32 %v8916, %v9106
      %v9108 = vmul.f32 %v8919, %v9106
      %v9109 = vmul.f32 %v8922, %v9106
      %v9110 = vmul.f32 %v8925, %v9106
      %v9111 = vmul.f32 %v8928, %v9106
      %v9112 = vmul.f32 %v8931, %v9106
      %v9113 = vmul.f32 %v8934, %v9106
      %v9114 = vmul.f32 %v8937, %v9106
      %v9115 = vmul.f32 %v8940, %v9106
      %v9116 = vmul.f32 %v8943, %v9106
      %v9117 = vmul.f32 %v8946, %v9106
      %v9118 = vmul.f32 %v8949, %v9106
      %v9119 = vmul.f32 %v8952, %v9106
      %v9120 = vmul.f32 %v8955, %v9106
      %v9121 = vmul.f32 %v8958, %v9106
      %v9122 = vmul.f32 %v8961, %v9106
      %v9123 = vmul.f32 %v8964, %v9106
      %v9124 = vmul.f32 %v8967, %v9106
      %v9125 = vmul.f32 %v8970, %v9106
      %v9126 = vmul.f32 %v8973, %v9106
      %v9127 = vmul.f32 %v8976, %v9106
      %v9128 = vmul.f32 %v8979, %v9106
      %v9129 = vmul.f32 %v8982, %v9106
      %v9130 = vmul.f32 %v8985, %v9106
      %v9131 = vmul.f32 %v8988, %v9106
      %v9132 = vmul.f32 %v8991, %v9106
      %v9133 = vmul.f32 %v8994, %v9106
      %v9134 = vmul.f32 %v8997, %v9106
      %v9135 = vmul.f32 %v9000, %v9106
      %v9136 = vmul.f32 %v9003, %v9106
      %v9137 = vmul.f32 %v9006, %v9106
      %v9138 = vmul.f32 %v9009, %v9106
      %v9139 = vmul.f32 %v9012, %v9106
      %v9140 = vmul.f32 %v9015, %v9106
      %v9141 = vmul.f32 %v9018, %v9106
      %v9142 = vmul.f32 %v9021, %v9106
      %v9143 = vmul.f32 %v9024, %v9106
      %v9144 = vmul.f32 %v9027, %v9106
      %v9145 = vmul.f32 %v9030, %v9106
      %v9146 = vmul.f32 %v9033, %v9106
      %v9147 = vmul.f32 %v9036, %v9106
      %v9148 = vmul.f32 %v9039, %v9106
      %v9149 = vmul.f32 %v9042, %v9106
      %v9150 = vmul.f32 %v9045, %v9106
      %v9151 = vmul.f32 %v9048, %v9106
      %v9152 = vmul.f32 %v9051, %v9106
      %v9153 = vmul.f32 %v9054, %v9106
      %v9154 = vmul.f32 %v9057, %v9106
      %v9155 = vmul.f32 %v9060, %v9106
      %v9156 = vmul.f32 %v9063, %v9106
      %v9157 = vmul.f32 %v9066, %v9106
      %v9158 = vmul.f32 %v9069, %v9106
      %v9159 = vmul.f32 %v9072, %v9106
      %v9160 = vmul.f32 %v9075, %v9106
      %v9161 = vmul.f32 %v9078, %v9106
      %v9162 = vmul.f32 %v9081, %v9106
      %v9163 = vmul.f32 %v9084, %v9106
      %v9164 = vmul.f32 %v9087, %v9106
      %v9165 = vmul.f32 %v9090, %v9106
      %v9166 = vmul.f32 %v9093, %v9106
      %v9167 = vmul.f32 %v9096, %v9106
      %v9168 = vmul.f32 %v9099, %v9106
      %v9169 = vmul.f32 %v9102, %v9106
      %v9170 = vmul.f32 %v9105, %v9106
      %v9171 = vsub.f32 %v8850, %v9107
      %v9172 = vsub.f32 %v8851, %v9108
      %v9173 = vsub.f32 %v8852, %v9109
      %v9174 = vsub.f32 %v8853, %v9110
      %v9175 = vsub.f32 %v8854, %v9111
      %v9176 = vsub.f32 %v8855, %v9112
      %v9177 = vsub.f32 %v8856, %v9113
      %v9178 = vsub.f32 %v8857, %v9114
      %v9179 = vsub.f32 %v8858, %v9115
      %v9180 = vsub.f32 %v8859, %v9116
      %v9181 = vsub.f32 %v8860, %v9117
      %v9182 = vsub.f32 %v8861, %v9118
      %v9183 = vsub.f32 %v8862, %v9119
      %v9184 = vsub.f32 %v8863, %v9120
      %v9185 = vsub.f32 %v8864, %v9121
      %v9186 = vsub.f32 %v8865, %v9122
      %v9187 = vsub.f32 %v8866, %v9123
      %v9188 = vsub.f32 %v8867, %v9124
      %v9189 = vsub.f32 %v8868, %v9125
      %v9190 = vsub.f32 %v8869, %v9126
      %v9191 = vsub.f32 %v8870, %v9127
      %v9192 = vsub.f32 %v8871, %v9128
      %v9193 = vsub.f32 %v8872, %v9129
      %v9194 = vsub.f32 %v8873, %v9130
      %v9195 = vsub.f32 %v8874, %v9131
      %v9196 = vsub.f32 %v8875, %v9132
      %v9197 = vsub.f32 %v8876, %v9133
      %v9198 = vsub.f32 %v8877, %v9134
      %v9199 = vsub.f32 %v8878, %v9135
      %v9200 = vsub.f32 %v8879, %v9136
      %v9201 = vsub.f32 %v8880, %v9137
      %v9202 = vsub.f32 %v8881, %v9138
      %v9203 = vsub.f32 %v8882, %v9139
      %v9204 = vsub.f32 %v8883, %v9140
      %v9205 = vsub.f32 %v8884, %v9141
      %v9206 = vsub.f32 %v8885, %v9142
      %v9207 = vsub.f32 %v8886, %v9143
      %v9208 = vsub.f32 %v8887, %v9144
      %v9209 = vsub.f32 %v8888, %v9145
      %v9210 = vsub.f32 %v8889, %v9146
      %v9211 = vsub.f32 %v8890, %v9147
      %v9212 = vsub.f32 %v8891, %v9148
      %v9213 = vsub.f32 %v8892, %v9149
      %v9214 = vsub.f32 %v8893, %v9150
      %v9215 = vsub.f32 %v8894, %v9151
      %v9216 = vsub.f32 %v8895, %v9152
      %v9217 = vsub.f32 %v8896, %v9153
      %v9218 = vsub.f32 %v8897, %v9154
      %v9219 = vsub.f32 %v8898, %v9155
      %v9220 = vsub.f32 %v8899, %v9156
      %v9221 = vsub.f32 %v8900, %v9157
      %v9222 = vsub.f32 %v8901, %v9158
      %v9223 = vsub.f32 %v8902, %v9159
      %v9224 = vsub.f32 %v8903, %v9160
      %v9225 = vsub.f32 %v8904, %v9161
      %v9226 = vsub.f32 %v8905, %v9162
      %v9227 = vsub.f32 %v8906, %v9163
      %v9228 = vsub.f32 %v8907, %v9164
      %v9229 = vsub.f32 %v8908, %v9165
      %v9230 = vsub.f32 %v8909, %v9166
      %v9231 = vsub.f32 %v8910, %v9167
      %v9232 = vsub.f32 %v8911, %v9168
      %v9233 = vsub.f32 %v8912, %v9169
      %v9234 = vsub.f32 %v8913, %v9170
      %v9235 = vmul.f32 %v9171, %v9171
      %v9236 = vmul.f32 %v9172, %v9172
      %v9237 = vmul.f32 %v9173, %v9173
      %v9238 = vmul.f32 %v9174, %v9174
      %v9239 = vmul.f32 %v9175, %v9175
      %v9240 = vmul.f32 %v9176, %v9176
      %v9241 = vmul.f32 %v9177, %v9177
      %v9242 = vmul.f32 %v9178, %v9178
      %v9243 = vmul.f32 %v9179, %v9179
      %v9244 = vmul.f32 %v9180, %v9180
      %v9245 = vmul.f32 %v9181, %v9181
      %v9246 = vmul.f32 %v9182, %v9182
      %v9247 = vmul.f32 %v9183, %v9183
      %v9248 = vmul.f32 %v9184, %v9184
      %v9249 = vmul.f32 %v9185, %v9185
      %v9250 = vmul.f32 %v9186, %v9186
      %v9251 = vmul.f32 %v9187, %v9187
      %v9252 = vmul.f32 %v9188, %v9188
      %v9253 = vmul.f32 %v9189, %v9189
      %v9254 = vmul.f32 %v9190, %v9190
      %v9255 = vmul.f32 %v9191, %v9191
      %v9256 = vmul.f32 %v9192, %v9192
      %v9257 = vmul.f32 %v9193, %v9193
      %v9258 = vmul.f32 %v9194, %v9194
      %v9259 = vmul.f32 %v9195, %v9195
      %v9260 = vmul.f32 %v9196, %v9196
      %v9261 = vmul.f32 %v9197, %v9197
      %v9262 = vmul.f32 %v9198, %v9198
      %v9263 = vmul.f32 %v9199, %v9199
      %v9264 = vmul.f32 %v9200, %v9200
      %v9265 = vmul.f32 %v9201, %v9201
      %v9266 = vmul.f32 %v9202, %v9202
      %v9267 = vmul.f32 %v9203, %v9203
      %v9268 = vmul.f32 %v9204, %v9204
      %v9269 = vmul.f32 %v9205, %v9205
      %v9270 = vmul.f32 %v9206, %v9206
      %v9271 = vmul.f32 %v9207, %v9207
      %v9272 = vmul.f32 %v9208, %v9208
      %v9273 = vmul.f32 %v9209, %v9209
      %v9274 = vmul.f32 %v9210, %v9210
      %v9275 = vmul.f32 %v9211, %v9211
      %v9276 = vmul.f32 %v9212, %v9212
      %v9277 = vmul.f32 %v9213, %v9213
      %v9278 = vmul.f32 %v9214, %v9214
      %v9279 = vmul.f32 %v9215, %v9215
      %v9280 = vmul.f32 %v9216, %v9216
      %v9281 = vmul.f32 %v9217, %v9217
      %v9282 = vmul.f32 %v9218, %v9218
      %v9283 = vmul.f32 %v9219, %v9219
      %v9284 = vmul.f32 %v9220, %v9220
      %v9285 = vmul.f32 %v9221, %v9221
      %v9286 = vmul.f32 %v9222, %v9222
      %v9287 = vmul.f32 %v9223, %v9223
      %v9288 = vmul.f32 %v9224, %v9224
      %v9289 = vmul.f32 %v9225, %v9225
      %v9290 = vmul.f32 %v9226, %v9226
      %v9291 = vmul.f32 %v9227, %v9227
      %v9292 = vmul.f32 %v9228, %v9228
      %v9293 = vmul.f32 %v9229, %v9229
      %v9294 = vmul.f32 %v9230, %v9230
      %v9295 = vmul.f32 %v9231, %v9231
      %v9296 = vmul.f32 %v9232, %v9232
      %v9297 = vmul.f32 %v9233, %v9233
      %v9298 = vmul.f32 %v9234, %v9234
      %v9299 = vsel %vm413, %v9235, 0.0
      %9300 = vadd.xlane.f32.xlu0 %v9299
      %v9301 = vpop.xlane.xlu0 %9300
      %v9302 = vsel %vm413, %v9236, 0.0
      %9303 = vadd.xlane.f32.xlu0 %v9302
      %v9304 = vpop.xlane.xlu0 %9303
      %v9305 = vsel %vm413, %v9237, 0.0
      %9306 = vadd.xlane.f32.xlu0 %v9305
      %v9307 = vpop.xlane.xlu0 %9306
      %v9308 = vsel %vm413, %v9238, 0.0
      %9309 = vadd.xlane.f32.xlu0 %v9308
      %v9310 = vpop.xlane.xlu0 %9309
      %v9311 = vsel %vm413, %v9239, 0.0
      %9312 = vadd.xlane.f32.xlu0 %v9311
      %v9313 = vpop.xlane.xlu0 %9312
      %v9314 = vsel %vm413, %v9240, 0.0
      %9315 = vadd.xlane.f32.xlu0 %v9314
      %v9316 = vpop.xlane.xlu0 %9315
      %v9317 = vsel %vm413, %v9241, 0.0
      %9318 = vadd.xlane.f32.xlu0 %v9317
      %v9319 = vpop.xlane.xlu0 %9318
      %v9320 = vsel %vm413, %v9242, 0.0
      %9321 = vadd.xlane.f32.xlu0 %v9320
      %v9322 = vpop.xlane.xlu0 %9321
      %v9323 = vsel %vm413, %v9243, 0.0
      %9324 = vadd.xlane.f32.xlu0 %v9323
      %v9325 = vpop.xlane.xlu0 %9324
      %v9326 = vsel %vm413, %v9244, 0.0
      %9327 = vadd.xlane.f32.xlu0 %v9326
      %v9328 = vpop.xlane.xlu0 %9327
      %v9329 = vsel %vm413, %v9245, 0.0
      %9330 = vadd.xlane.f32.xlu0 %v9329
      %v9331 = vpop.xlane.xlu0 %9330
      %v9332 = vsel %vm413, %v9246, 0.0
      %9333 = vadd.xlane.f32.xlu0 %v9332
      %v9334 = vpop.xlane.xlu0 %9333
      %v9335 = vsel %vm413, %v9247, 0.0
      %9336 = vadd.xlane.f32.xlu0 %v9335
      %v9337 = vpop.xlane.xlu0 %9336
      %v9338 = vsel %vm413, %v9248, 0.0
      %9339 = vadd.xlane.f32.xlu0 %v9338
      %v9340 = vpop.xlane.xlu0 %9339
      %v9341 = vsel %vm413, %v9249, 0.0
      %9342 = vadd.xlane.f32.xlu0 %v9341
      %v9343 = vpop.xlane.xlu0 %9342
      %v9344 = vsel %vm413, %v9250, 0.0
      %9345 = vadd.xlane.f32.xlu0 %v9344
      %v9346 = vpop.xlane.xlu0 %9345
      %v9347 = vsel %vm413, %v9251, 0.0
      %9348 = vadd.xlane.f32.xlu0 %v9347
      %v9349 = vpop.xlane.xlu0 %9348
      %v9350 = vsel %vm413, %v9252, 0.0
      %9351 = vadd.xlane.f32.xlu0 %v9350
      %v9352 = vpop.xlane.xlu0 %9351
      %v9353 = vsel %vm413, %v9253, 0.0
      %9354 = vadd.xlane.f32.xlu0 %v9353
      %v9355 = vpop.xlane.xlu0 %9354
      %v9356 = vsel %vm413, %v9254, 0.0
      %9357 = vadd.xlane.f32.xlu0 %v9356
      %v9358 = vpop.xlane.xlu0 %9357
      %v9359 = vsel %vm413, %v9255, 0.0
      %9360 = vadd.xlane.f32.xlu0 %v9359
      %v9361 = vpop.xlane.xlu0 %9360
      %v9362 = vsel %vm413, %v9256, 0.0
      %9363 = vadd.xlane.f32.xlu0 %v9362
      %v9364 = vpop.xlane.xlu0 %9363
      %v9365 = vsel %vm413, %v9257, 0.0
      %9366 = vadd.xlane.f32.xlu0 %v9365
      %v9367 = vpop.xlane.xlu0 %9366
      %v9368 = vsel %vm413, %v9258, 0.0
      %9369 = vadd.xlane.f32.xlu0 %v9368
      %v9370 = vpop.xlane.xlu0 %9369
      %v9371 = vsel %vm413, %v9259, 0.0
      %9372 = vadd.xlane.f32.xlu0 %v9371
      %v9373 = vpop.xlane.xlu0 %9372
      %v9374 = vsel %vm413, %v9260, 0.0
      %9375 = vadd.xlane.f32.xlu0 %v9374
      %v9376 = vpop.xlane.xlu0 %9375
      %v9377 = vsel %vm413, %v9261, 0.0
      %9378 = vadd.xlane.f32.xlu0 %v9377
      %v9379 = vpop.xlane.xlu0 %9378
      %v9380 = vsel %vm413, %v9262, 0.0
      %9381 = vadd.xlane.f32.xlu0 %v9380
      %v9382 = vpop.xlane.xlu0 %9381
      %v9383 = vsel %vm413, %v9263, 0.0
      %9384 = vadd.xlane.f32.xlu0 %v9383
      %v9385 = vpop.xlane.xlu0 %9384
      %v9386 = vsel %vm413, %v9264, 0.0
      %9387 = vadd.xlane.f32.xlu0 %v9386
      %v9388 = vpop.xlane.xlu0 %9387
      %v9389 = vsel %vm413, %v9265, 0.0
      %9390 = vadd.xlane.f32.xlu0 %v9389
      %v9391 = vpop.xlane.xlu0 %9390
      %v9392 = vsel %vm413, %v9266, 0.0
      %9393 = vadd.xlane.f32.xlu0 %v9392
      %v9394 = vpop.xlane.xlu0 %9393
      %v9395 = vsel %vm413, %v9267, 0.0
      %9396 = vadd.xlane.f32.xlu0 %v9395
      %v9397 = vpop.xlane.xlu0 %9396
      %v9398 = vsel %vm413, %v9268, 0.0
      %9399 = vadd.xlane.f32.xlu0 %v9398
      %v9400 = vpop.xlane.xlu0 %9399
      %v9401 = vsel %vm413, %v9269, 0.0
      %9402 = vadd.xlane.f32.xlu0 %v9401
      %v9403 = vpop.xlane.xlu0 %9402
      %v9404 = vsel %vm413, %v9270, 0.0
      %9405 = vadd.xlane.f32.xlu0 %v9404
      %v9406 = vpop.xlane.xlu0 %9405
      %v9407 = vsel %vm413, %v9271, 0.0
      %9408 = vadd.xlane.f32.xlu0 %v9407
      %v9409 = vpop.xlane.xlu0 %9408
      %v9410 = vsel %vm413, %v9272, 0.0
      %9411 = vadd.xlane.f32.xlu0 %v9410
      %v9412 = vpop.xlane.xlu0 %9411
      %v9413 = vsel %vm413, %v9273, 0.0
      %9414 = vadd.xlane.f32.xlu0 %v9413
      %v9415 = vpop.xlane.xlu0 %9414
      %v9416 = vsel %vm413, %v9274, 0.0
      %9417 = vadd.xlane.f32.xlu0 %v9416
      %v9418 = vpop.xlane.xlu0 %9417
      %v9419 = vsel %vm413, %v9275, 0.0
      %9420 = vadd.xlane.f32.xlu0 %v9419
      %v9421 = vpop.xlane.xlu0 %9420
      %v9422 = vsel %vm413, %v9276, 0.0
      %9423 = vadd.xlane.f32.xlu0 %v9422
      %v9424 = vpop.xlane.xlu0 %9423
      %v9425 = vsel %vm413, %v9277, 0.0
      %9426 = vadd.xlane.f32.xlu0 %v9425
      %v9427 = vpop.xlane.xlu0 %9426
      %v9428 = vsel %vm413, %v9278, 0.0
      %9429 = vadd.xlane.f32.xlu0 %v9428
      %v9430 = vpop.xlane.xlu0 %9429
      %v9431 = vsel %vm413, %v9279, 0.0
      %9432 = vadd.xlane.f32.xlu0 %v9431
      %v9433 = vpop.xlane.xlu0 %9432
      %v9434 = vsel %vm413, %v9280, 0.0
      %9435 = vadd.xlane.f32.xlu0 %v9434
      %v9436 = vpop.xlane.xlu0 %9435
      %v9437 = vsel %vm413, %v9281, 0.0
      %9438 = vadd.xlane.f32.xlu0 %v9437
      %v9439 = vpop.xlane.xlu0 %9438
      %v9440 = vsel %vm413, %v9282, 0.0
      %9441 = vadd.xlane.f32.xlu0 %v9440
      %v9442 = vpop.xlane.xlu0 %9441
      %v9443 = vsel %vm413, %v9283, 0.0
      %9444 = vadd.xlane.f32.xlu0 %v9443
      %v9445 = vpop.xlane.xlu0 %9444
      %v9446 = vsel %vm413, %v9284, 0.0
      %9447 = vadd.xlane.f32.xlu0 %v9446
      %v9448 = vpop.xlane.xlu0 %9447
      %v9449 = vsel %vm413, %v9285, 0.0
      %9450 = vadd.xlane.f32.xlu0 %v9449
      %v9451 = vpop.xlane.xlu0 %9450
      %v9452 = vsel %vm413, %v9286, 0.0
      %9453 = vadd.xlane.f32.xlu0 %v9452
      %v9454 = vpop.xlane.xlu0 %9453
      %v9455 = vsel %vm413, %v9287, 0.0
      %9456 = vadd.xlane.f32.xlu0 %v9455
      %v9457 = vpop.xlane.xlu0 %9456
      %v9458 = vsel %vm413, %v9288, 0.0
      %9459 = vadd.xlane.f32.xlu0 %v9458
      %v9460 = vpop.xlane.xlu0 %9459
      %v9461 = vsel %vm413, %v9289, 0.0
      %9462 = vadd.xlane.f32.xlu0 %v9461
      %v9463 = vpop.xlane.xlu0 %9462
      %v9464 = vsel %vm413, %v9290, 0.0
      %9465 = vadd.xlane.f32.xlu0 %v9464
      %v9466 = vpop.xlane.xlu0 %9465
      %v9467 = vsel %vm413, %v9291, 0.0
      %9468 = vadd.xlane.f32.xlu0 %v9467
      %v9469 = vpop.xlane.xlu0 %9468
      %v9470 = vsel %vm413, %v9292, 0.0
      %9471 = vadd.xlane.f32.xlu0 %v9470
      %v9472 = vpop.xlane.xlu0 %9471
      %v9473 = vsel %vm413, %v9293, 0.0
      %9474 = vadd.xlane.f32.xlu0 %v9473
      %v9475 = vpop.xlane.xlu0 %9474
      %v9476 = vsel %vm413, %v9294, 0.0
      %9477 = vadd.xlane.f32.xlu0 %v9476
      %v9478 = vpop.xlane.xlu0 %9477
      %v9479 = vsel %vm413, %v9295, 0.0
      %9480 = vadd.xlane.f32.xlu0 %v9479
      %v9481 = vpop.xlane.xlu0 %9480
      %v9482 = vsel %vm413, %v9296, 0.0
      %9483 = vadd.xlane.f32.xlu0 %v9482
      %v9484 = vpop.xlane.xlu0 %9483
      %v9485 = vsel %vm413, %v9297, 0.0
      %9486 = vadd.xlane.f32.xlu0 %v9485
      %v9487 = vpop.xlane.xlu0 %9486
      %v9488 = vsel %vm413, %v9298, 0.0
      %9489 = vadd.xlane.f32.xlu0 %v9488
      %v9490 = vpop.xlane.xlu0 %9489
      %v9491 = vmul.f32 %v9301, %v9106
      %v9492 = vmul.f32 %v9304, %v9106
      %v9493 = vmul.f32 %v9307, %v9106
      %v9494 = vmul.f32 %v9310, %v9106
      %v9495 = vmul.f32 %v9313, %v9106
      %v9496 = vmul.f32 %v9316, %v9106
      %v9497 = vmul.f32 %v9319, %v9106
      %v9498 = vmul.f32 %v9322, %v9106
      %v9499 = vmul.f32 %v9325, %v9106
      %v9500 = vmul.f32 %v9328, %v9106
      %v9501 = vmul.f32 %v9331, %v9106
      %v9502 = vmul.f32 %v9334, %v9106
      %v9503 = vmul.f32 %v9337, %v9106
      %v9504 = vmul.f32 %v9340, %v9106
      %v9505 = vmul.f32 %v9343, %v9106
      %v9506 = vmul.f32 %v9346, %v9106
      %v9507 = vmul.f32 %v9349, %v9106
      %v9508 = vmul.f32 %v9352, %v9106
      %v9509 = vmul.f32 %v9355, %v9106
      %v9510 = vmul.f32 %v9358, %v9106
      %v9511 = vmul.f32 %v9361, %v9106
      %v9512 = vmul.f32 %v9364, %v9106
      %v9513 = vmul.f32 %v9367, %v9106
      %v9514 = vmul.f32 %v9370, %v9106
      %v9515 = vmul.f32 %v9373, %v9106
      %v9516 = vmul.f32 %v9376, %v9106
      %v9517 = vmul.f32 %v9379, %v9106
      %v9518 = vmul.f32 %v9382, %v9106
      %v9519 = vmul.f32 %v9385, %v9106
      %v9520 = vmul.f32 %v9388, %v9106
      %v9521 = vmul.f32 %v9391, %v9106
      %v9522 = vmul.f32 %v9394, %v9106
      %v9523 = vmul.f32 %v9397, %v9106
      %v9524 = vmul.f32 %v9400, %v9106
      %v9525 = vmul.f32 %v9403, %v9106
      %v9526 = vmul.f32 %v9406, %v9106
      %v9527 = vmul.f32 %v9409, %v9106
      %v9528 = vmul.f32 %v9412, %v9106
      %v9529 = vmul.f32 %v9415, %v9106
      %v9530 = vmul.f32 %v9418, %v9106
      %v9531 = vmul.f32 %v9421, %v9106
      %v9532 = vmul.f32 %v9424, %v9106
      %v9533 = vmul.f32 %v9427, %v9106
      %v9534 = vmul.f32 %v9430, %v9106
      %v9535 = vmul.f32 %v9433, %v9106
      %v9536 = vmul.f32 %v9436, %v9106
      %v9537 = vmul.f32 %v9439, %v9106
      %v9538 = vmul.f32 %v9442, %v9106
      %v9539 = vmul.f32 %v9445, %v9106
      %v9540 = vmul.f32 %v9448, %v9106
      %v9541 = vmul.f32 %v9451, %v9106
      %v9542 = vmul.f32 %v9454, %v9106
      %v9543 = vmul.f32 %v9457, %v9106
      %v9544 = vmul.f32 %v9460, %v9106
      %v9545 = vmul.f32 %v9463, %v9106
      %v9546 = vmul.f32 %v9466, %v9106
      %v9547 = vmul.f32 %v9469, %v9106
      %v9548 = vmul.f32 %v9472, %v9106
      %v9549 = vmul.f32 %v9475, %v9106
      %v9550 = vmul.f32 %v9478, %v9106
      %v9551 = vmul.f32 %v9481, %v9106
      %v9552 = vmul.f32 %v9484, %v9106
      %v9553 = vmul.f32 %v9487, %v9106
      %v9554 = vmul.f32 %v9490, %v9106
      %v9555 = vadd.f32 %v9491, 1e-05
      %v9556 = vadd.f32 %v9492, 1e-05
      %v9557 = vadd.f32 %v9493, 1e-05
      %v9558 = vadd.f32 %v9494, 1e-05
      %v9559 = vadd.f32 %v9495, 1e-05
      %v9560 = vadd.f32 %v9496, 1e-05
      %v9561 = vadd.f32 %v9497, 1e-05
      %v9562 = vadd.f32 %v9498, 1e-05
      %v9563 = vadd.f32 %v9499, 1e-05
      %v9564 = vadd.f32 %v9500, 1e-05
      %v9565 = vadd.f32 %v9501, 1e-05
      %v9566 = vadd.f32 %v9502, 1e-05
      %v9567 = vadd.f32 %v9503, 1e-05
      %v9568 = vadd.f32 %v9504, 1e-05
      %v9569 = vadd.f32 %v9505, 1e-05
      %v9570 = vadd.f32 %v9506, 1e-05
      %v9571 = vadd.f32 %v9507, 1e-05
      %v9572 = vadd.f32 %v9508, 1e-05
      %v9573 = vadd.f32 %v9509, 1e-05
      %v9574 = vadd.f32 %v9510, 1e-05
      %v9575 = vadd.f32 %v9511, 1e-05
      %v9576 = vadd.f32 %v9512, 1e-05
      %v9577 = vadd.f32 %v9513, 1e-05
      %v9578 = vadd.f32 %v9514, 1e-05
      %v9579 = vadd.f32 %v9515, 1e-05
      %v9580 = vadd.f32 %v9516, 1e-05
      %v9581 = vadd.f32 %v9517, 1e-05
      %v9582 = vadd.f32 %v9518, 1e-05
      %v9583 = vadd.f32 %v9519, 1e-05
      %v9584 = vadd.f32 %v9520, 1e-05
      %v9585 = vadd.f32 %v9521, 1e-05
      %v9586 = vadd.f32 %v9522, 1e-05
      %v9587 = vadd.f32 %v9523, 1e-05
      %v9588 = vadd.f32 %v9524, 1e-05
      %v9589 = vadd.f32 %v9525, 1e-05
      %v9590 = vadd.f32 %v9526, 1e-05
      %v9591 = vadd.f32 %v9527, 1e-05
      %v9592 = vadd.f32 %v9528, 1e-05
      %v9593 = vadd.f32 %v9529, 1e-05
      %v9594 = vadd.f32 %v9530, 1e-05
      %v9595 = vadd.f32 %v9531, 1e-05
      %v9596 = vadd.f32 %v9532, 1e-05
      %v9597 = vadd.f32 %v9533, 1e-05
      %v9598 = vadd.f32 %v9534, 1e-05
      %v9599 = vadd.f32 %v9535, 1e-05
      %v9600 = vadd.f32 %v9536, 1e-05
      %v9601 = vadd.f32 %v9537, 1e-05
      %v9602 = vadd.f32 %v9538, 1e-05
      %v9603 = vadd.f32 %v9539, 1e-05
      %v9604 = vadd.f32 %v9540, 1e-05
      %v9605 = vadd.f32 %v9541, 1e-05
      %v9606 = vadd.f32 %v9542, 1e-05
      %v9607 = vadd.f32 %v9543, 1e-05
      %v9608 = vadd.f32 %v9544, 1e-05
      %v9609 = vadd.f32 %v9545, 1e-05
      %v9610 = vadd.f32 %v9546, 1e-05
      %v9611 = vadd.f32 %v9547, 1e-05
      %v9612 = vadd.f32 %v9548, 1e-05
      %v9613 = vadd.f32 %v9549, 1e-05
      %v9614 = vadd.f32 %v9550, 1e-05
      %v9615 = vadd.f32 %v9551, 1e-05
      %v9616 = vadd.f32 %v9552, 1e-05
      %v9617 = vadd.f32 %v9553, 1e-05
      %v9618 = vadd.f32 %v9554, 1e-05
      %v9619 = vrsqrt.pop %v9555
      %v9620 = vrsqrt.pop %v9556
      %v9621 = vrsqrt.pop %v9557
      %v9622 = vrsqrt.pop %v9558
      %v9623 = vrsqrt.pop %v9559
      %v9624 = vrsqrt.pop %v9560
      %v9625 = vrsqrt.pop %v9561
      %v9626 = vrsqrt.pop %v9562
      %v9627 = vrsqrt.pop %v9563
      %v9628 = vrsqrt.pop %v9564
      %v9629 = vrsqrt.pop %v9565
      %v9630 = vrsqrt.pop %v9566
      %v9631 = vrsqrt.pop %v9567
      %v9632 = vrsqrt.pop %v9568
      %v9633 = vrsqrt.pop %v9569
      %v9634 = vrsqrt.pop %v9570
      %v9635 = vrsqrt.pop %v9571
      %v9636 = vrsqrt.pop %v9572
      %v9637 = vrsqrt.pop %v9573
      %v9638 = vrsqrt.pop %v9574
      %v9639 = vrsqrt.pop %v9575
      %v9640 = vrsqrt.pop %v9576
      %v9641 = vrsqrt.pop %v9577
      %v9642 = vrsqrt.pop %v9578
      %v9643 = vrsqrt.pop %v9579
      %v9644 = vrsqrt.pop %v9580
      %v9645 = vrsqrt.pop %v9581
      %v9646 = vrsqrt.pop %v9582
      %v9647 = vrsqrt.pop %v9583
      %v9648 = vrsqrt.pop %v9584
      %v9649 = vrsqrt.pop %v9585
      %v9650 = vrsqrt.pop %v9586
      %v9651 = vrsqrt.pop %v9587
      %v9652 = vrsqrt.pop %v9588
      %v9653 = vrsqrt.pop %v9589
      %v9654 = vrsqrt.pop %v9590
      %v9655 = vrsqrt.pop %v9591
      %v9656 = vrsqrt.pop %v9592
      %v9657 = vrsqrt.pop %v9593
      %v9658 = vrsqrt.pop %v9594
      %v9659 = vrsqrt.pop %v9595
      %v9660 = vrsqrt.pop %v9596
      %v9661 = vrsqrt.pop %v9597
      %v9662 = vrsqrt.pop %v9598
      %v9663 = vrsqrt.pop %v9599
      %v9664 = vrsqrt.pop %v9600
      %v9665 = vrsqrt.pop %v9601
      %v9666 = vrsqrt.pop %v9602
      %v9667 = vrsqrt.pop %v9603
      %v9668 = vrsqrt.pop %v9604
      %v9669 = vrsqrt.pop %v9605
      %v9670 = vrsqrt.pop %v9606
      %v9671 = vrsqrt.pop %v9607
      %v9672 = vrsqrt.pop %v9608
      %v9673 = vrsqrt.pop %v9609
      %v9674 = vrsqrt.pop %v9610
      %v9675 = vrsqrt.pop %v9611
      %v9676 = vrsqrt.pop %v9612
      %v9677 = vrsqrt.pop %v9613
      %v9678 = vrsqrt.pop %v9614
      %v9679 = vrsqrt.pop %v9615
      %v9680 = vrsqrt.pop %v9616
      %v9681 = vrsqrt.pop %v9617
      %v9682 = vrsqrt.pop %v9618
      %v9683 = vmul.f32 %v9171, %v9619
      %v9684 = vmul.f32 %v9172, %v9620
      %v9685 = vmul.f32 %v9173, %v9621
      %v9686 = vmul.f32 %v9174, %v9622
      %v9687 = vmul.f32 %v9175, %v9623
      %v9688 = vmul.f32 %v9176, %v9624
      %v9689 = vmul.f32 %v9177, %v9625
      %v9690 = vmul.f32 %v9178, %v9626
      %v9691 = vmul.f32 %v9179, %v9627
      %v9692 = vmul.f32 %v9180, %v9628
      %v9693 = vmul.f32 %v9181, %v9629
      %v9694 = vmul.f32 %v9182, %v9630
      %v9695 = vmul.f32 %v9183, %v9631
      %v9696 = vmul.f32 %v9184, %v9632
      %v9697 = vmul.f32 %v9185, %v9633
      %v9698 = vmul.f32 %v9186, %v9634
      %v9699 = vmul.f32 %v9187, %v9635
      %v9700 = vmul.f32 %v9188, %v9636
      %v9701 = vmul.f32 %v9189, %v9637
      %v9702 = vmul.f32 %v9190, %v9638
      %v9703 = vmul.f32 %v9191, %v9639
      %v9704 = vmul.f32 %v9192, %v9640
      %v9705 = vmul.f32 %v9193, %v9641
      %v9706 = vmul.f32 %v9194, %v9642
      %v9707 = vmul.f32 %v9195, %v9643
      %v9708 = vmul.f32 %v9196, %v9644
      %v9709 = vmul.f32 %v9197, %v9645
      %v9710 = vmul.f32 %v9198, %v9646
      %v9711 = vmul.f32 %v9199, %v9647
      %v9712 = vmul.f32 %v9200, %v9648
      %v9713 = vmul.f32 %v9201, %v9649
      %v9714 = vmul.f32 %v9202, %v9650
      %v9715 = vmul.f32 %v9203, %v9651
      %v9716 = vmul.f32 %v9204, %v9652
      %v9717 = vmul.f32 %v9205, %v9653
      %v9718 = vmul.f32 %v9206, %v9654
      %v9719 = vmul.f32 %v9207, %v9655
      %v9720 = vmul.f32 %v9208, %v9656
      %v9721 = vmul.f32 %v9209, %v9657
      %v9722 = vmul.f32 %v9210, %v9658
      %v9723 = vmul.f32 %v9211, %v9659
      %v9724 = vmul.f32 %v9212, %v9660
      %v9725 = vmul.f32 %v9213, %v9661
      %v9726 = vmul.f32 %v9214, %v9662
      %v9727 = vmul.f32 %v9215, %v9663
      %v9728 = vmul.f32 %v9216, %v9664
      %v9729 = vmul.f32 %v9217, %v9665
      %v9730 = vmul.f32 %v9218, %v9666
      %v9731 = vmul.f32 %v9219, %v9667
      %v9732 = vmul.f32 %v9220, %v9668
      %v9733 = vmul.f32 %v9221, %v9669
      %v9734 = vmul.f32 %v9222, %v9670
      %v9735 = vmul.f32 %v9223, %v9671
      %v9736 = vmul.f32 %v9224, %v9672
      %v9737 = vmul.f32 %v9225, %v9673
      %v9738 = vmul.f32 %v9226, %v9674
      %v9739 = vmul.f32 %v9227, %v9675
      %v9740 = vmul.f32 %v9228, %v9676
      %v9741 = vmul.f32 %v9229, %v9677
      %v9742 = vmul.f32 %v9230, %v9678
      %v9743 = vmul.f32 %v9231, %v9679
      %v9744 = vmul.f32 %v9232, %v9680
      %v9745 = vmul.f32 %v9233, %v9681
      %v9746 = vmul.f32 %v9234, %v9682
      %v9747 = vld [vmem:[%s5] sm:$0x1]
      %v9749 = vlaneseq
      %v9750 = vshrl.u32 %v9749, 7
      %v9751 = vsub.s32 0, %v9750
      %v9752 = vrot.slane %v9747, %v9751
      %v9754 = vmul.f32 %v9683, %v9752
      %v9755 = vmul.f32 %v9684, %v9752
      %v9756 = vmul.f32 %v9685, %v9752
      %v9757 = vmul.f32 %v9686, %v9752
      %v9758 = vmul.f32 %v9687, %v9752
      %v9759 = vmul.f32 %v9688, %v9752
      %v9760 = vmul.f32 %v9689, %v9752
      %v9761 = vmul.f32 %v9690, %v9752
      %v9762 = vmul.f32 %v9691, %v9752
      %v9763 = vmul.f32 %v9692, %v9752
      %v9764 = vmul.f32 %v9693, %v9752
      %v9765 = vmul.f32 %v9694, %v9752
      %v9766 = vmul.f32 %v9695, %v9752
      %v9767 = vmul.f32 %v9696, %v9752
      %v9768 = vmul.f32 %v9697, %v9752
      %v9769 = vmul.f32 %v9698, %v9752
      %v9770 = vmul.f32 %v9699, %v9752
      %v9771 = vmul.f32 %v9700, %v9752
      %v9772 = vmul.f32 %v9701, %v9752
      %v9773 = vmul.f32 %v9702, %v9752
      %v9774 = vmul.f32 %v9703, %v9752
      %v9775 = vmul.f32 %v9704, %v9752
      %v9776 = vmul.f32 %v9705, %v9752
      %v9777 = vmul.f32 %v9706, %v9752
      %v9778 = vmul.f32 %v9707, %v9752
      %v9779 = vmul.f32 %v9708, %v9752
      %v9780 = vmul.f32 %v9709, %v9752
      %v9781 = vmul.f32 %v9710, %v9752
      %v9782 = vmul.f32 %v9711, %v9752
      %v9783 = vmul.f32 %v9712, %v9752
      %v9784 = vmul.f32 %v9713, %v9752
      %v9785 = vmul.f32 %v9714, %v9752
      %v9786 = vmul.f32 %v9715, %v9752
      %v9787 = vmul.f32 %v9716, %v9752
      %v9788 = vmul.f32 %v9717, %v9752
      %v9789 = vmul.f32 %v9718, %v9752
      %v9790 = vmul.f32 %v9719, %v9752
      %v9791 = vmul.f32 %v9720, %v9752
      %v9792 = vmul.f32 %v9721, %v9752
      %v9793 = vmul.f32 %v9722, %v9752
      %v9794 = vmul.f32 %v9723, %v9752
      %v9795 = vmul.f32 %v9724, %v9752
      %v9796 = vmul.f32 %v9725, %v9752
      %v9797 = vmul.f32 %v9726, %v9752
      %v9798 = vmul.f32 %v9727, %v9752
      %v9799 = vmul.f32 %v9728, %v9752
      %v9800 = vmul.f32 %v9729, %v9752
      %v9801 = vmul.f32 %v9730, %v9752
      %v9802 = vmul.f32 %v9731, %v9752
      %v9803 = vmul.f32 %v9732, %v9752
      %v9804 = vmul.f32 %v9733, %v9752
      %v9805 = vmul.f32 %v9734, %v9752
      %v9806 = vmul.f32 %v9735, %v9752
      %v9807 = vmul.f32 %v9736, %v9752
      %v9808 = vmul.f32 %v9737, %v9752
      %v9809 = vmul.f32 %v9738, %v9752
      %v9810 = vmul.f32 %v9739, %v9752
      %v9811 = vmul.f32 %v9740, %v9752
      %v9812 = vmul.f32 %v9741, %v9752
      %v9813 = vmul.f32 %v9742, %v9752
      %v9814 = vmul.f32 %v9743, %v9752
      %v9815 = vmul.f32 %v9744, %v9752
      %v9816 = vmul.f32 %v9745, %v9752
      %v9817 = vmul.f32 %v9746, %v9752
      %v9818 = vld [vmem:[%s6] sm:$0x1]
      %v9820 = vlaneseq
      %v9821 = vshrl.u32 %v9820, 7
      %v9822 = vsub.s32 0, %v9821
      %v9823 = vrot.slane %v9818, %v9822
      %v9825 = vadd.f32 %v9754, %v9823
      %v9826 = vadd.f32 %v9755, %v9823
      %v9827 = vadd.f32 %v9756, %v9823
      %v9828 = vadd.f32 %v9757, %v9823
      %v9829 = vadd.f32 %v9758, %v9823
      %v9830 = vadd.f32 %v9759, %v9823
      %v9831 = vadd.f32 %v9760, %v9823
      %v9832 = vadd.f32 %v9761, %v9823
      %v9833 = vadd.f32 %v9762, %v9823
      %v9834 = vadd.f32 %v9763, %v9823
      %v9835 = vadd.f32 %v9764, %v9823
      %v9836 = vadd.f32 %v9765, %v9823
      %v9837 = vadd.f32 %v9766, %v9823
      %v9838 = vadd.f32 %v9767, %v9823
      %v9839 = vadd.f32 %v9768, %v9823
      %v9840 = vadd.f32 %v9769, %v9823
      %v9841 = vadd.f32 %v9770, %v9823
      %v9842 = vadd.f32 %v9771, %v9823
      %v9843 = vadd.f32 %v9772, %v9823
      %v9844 = vadd.f32 %v9773, %v9823
      %v9845 = vadd.f32 %v9774, %v9823
      %v9846 = vadd.f32 %v9775, %v9823
      %v9847 = vadd.f32 %v9776, %v9823
      %v9848 = vadd.f32 %v9777, %v9823
      %v9849 = vadd.f32 %v9778, %v9823
      %v9850 = vadd.f32 %v9779, %v9823
      %v9851 = vadd.f32 %v9780, %v9823
      %v9852 = vadd.f32 %v9781, %v9823
      %v9853 = vadd.f32 %v9782, %v9823
      %v9854 = vadd.f32 %v9783, %v9823
      %v9855 = vadd.f32 %v9784, %v9823
      %v9856 = vadd.f32 %v9785, %v9823
      %v9857 = vadd.f32 %v9786, %v9823
      %v9858 = vadd.f32 %v9787, %v9823
      %v9859 = vadd.f32 %v9788, %v9823
      %v9860 = vadd.f32 %v9789, %v9823
      %v9861 = vadd.f32 %v9790, %v9823
      %v9862 = vadd.f32 %v9791, %v9823
      %v9863 = vadd.f32 %v9792, %v9823
      %v9864 = vadd.f32 %v9793, %v9823
      %v9865 = vadd.f32 %v9794, %v9823
      %v9866 = vadd.f32 %v9795, %v9823
      %v9867 = vadd.f32 %v9796, %v9823
      %v9868 = vadd.f32 %v9797, %v9823
      %v9869 = vadd.f32 %v9798, %v9823
      %v9870 = vadd.f32 %v9799, %v9823
      %v9871 = vadd.f32 %v9800, %v9823
      %v9872 = vadd.f32 %v9801, %v9823
      %v9873 = vadd.f32 %v9802, %v9823
      %v9874 = vadd.f32 %v9803, %v9823
      %v9875 = vadd.f32 %v9804, %v9823
      %v9876 = vadd.f32 %v9805, %v9823
      %v9877 = vadd.f32 %v9806, %v9823
      %v9878 = vadd.f32 %v9807, %v9823
      %v9879 = vadd.f32 %v9808, %v9823
      %v9880 = vadd.f32 %v9809, %v9823
      %v9881 = vadd.f32 %v9810, %v9823
      %v9882 = vadd.f32 %v9811, %v9823
      %v9883 = vadd.f32 %v9812, %v9823
      %v9884 = vadd.f32 %v9813, %v9823
      %v9885 = vadd.f32 %v9814, %v9823
      %v9886 = vadd.f32 %v9815, %v9823
      %v9887 = vadd.f32 %v9816, %v9823
      %v9888 = vadd.f32 %v9817, %v9823
      %vm9889 = vcmp.ge.f32.partialorder %v9825, 2.0
      %vm9890 = vcmp.ge.f32.partialorder %v9826, 2.0
      %vm9891 = vcmp.ge.f32.partialorder %v9827, 2.0
      %vm9892 = vcmp.ge.f32.partialorder %v9828, 2.0
      %vm9893 = vcmp.ge.f32.partialorder %v9829, 2.0
      %vm9894 = vcmp.ge.f32.partialorder %v9830, 2.0
      %vm9895 = vcmp.ge.f32.partialorder %v9831, 2.0
      %vm9896 = vcmp.ge.f32.partialorder %v9832, 2.0
      %vm9897 = vcmp.ge.f32.partialorder %v9833, 2.0
      %vm9898 = vcmp.ge.f32.partialorder %v9834, 2.0
      %vm9899 = vcmp.ge.f32.partialorder %v9835, 2.0
      %vm9900 = vcmp.ge.f32.partialorder %v9836, 2.0
      %vm9901 = vcmp.ge.f32.partialorder %v9837, 2.0
      %vm9902 = vcmp.ge.f32.partialorder %v9838, 2.0
      %vm9903 = vcmp.ge.f32.partialorder %v9839, 2.0
      %vm9904 = vcmp.ge.f32.partialorder %v9840, 2.0
      %vm9905 = vcmp.ge.f32.partialorder %v9841, 2.0
      %vm9906 = vcmp.ge.f32.partialorder %v9842, 2.0
      %vm9907 = vcmp.ge.f32.partialorder %v9843, 2.0
      %vm9908 = vcmp.ge.f32.partialorder %v9844, 2.0
      %vm9909 = vcmp.ge.f32.partialorder %v9845, 2.0
      %vm9910 = vcmp.ge.f32.partialorder %v9846, 2.0
      %vm9911 = vcmp.ge.f32.partialorder %v9847, 2.0
      %vm9912 = vcmp.ge.f32.partialorder %v9848, 2.0
      %vm9913 = vcmp.ge.f32.partialorder %v9849, 2.0
      %vm9914 = vcmp.ge.f32.partialorder %v9850, 2.0
      %vm9915 = vcmp.ge.f32.partialorder %v9851, 2.0
      %vm9916 = vcmp.ge.f32.partialorder %v9852, 2.0
      %vm9917 = vcmp.ge.f32.partialorder %v9853, 2.0
      %vm9918 = vcmp.ge.f32.partialorder %v9854, 2.0
      %vm9919 = vcmp.ge.f32.partialorder %v9855, 2.0
      %vm9920 = vcmp.ge.f32.partialorder %v9856, 2.0
      %vm9921 = vcmp.ge.f32.partialorder %v9857, 2.0
      %vm9922 = vcmp.ge.f32.partialorder %v9858, 2.0
      %vm9923 = vcmp.ge.f32.partialorder %v9859, 2.0
      %vm9924 = vcmp.ge.f32.partialorder %v9860, 2.0
      %vm9925 = vcmp.ge.f32.partialorder %v9861, 2.0
      %vm9926 = vcmp.ge.f32.partialorder %v9862, 2.0
      %vm9927 = vcmp.ge.f32.partialorder %v9863, 2.0
      %vm9928 = vcmp.ge.f32.partialorder %v9864, 2.0
      %vm9929 = vcmp.ge.f32.partialorder %v9865, 2.0
      %vm9930 = vcmp.ge.f32.partialorder %v9866, 2.0
      %vm9931 = vcmp.ge.f32.partialorder %v9867, 2.0
      %vm9932 = vcmp.ge.f32.partialorder %v9868, 2.0
      %vm9933 = vcmp.ge.f32.partialorder %v9869, 2.0
      %vm9934 = vcmp.ge.f32.partialorder %v9870, 2.0
      %vm9935 = vcmp.ge.f32.partialorder %v9871, 2.0
      %vm9936 = vcmp.ge.f32.partialorder %v9872, 2.0
      %vm9937 = vcmp.ge.f32.partialorder %v9873, 2.0
      %vm9938 = vcmp.ge.f32.partialorder %v9874, 2.0
      %vm9939 = vcmp.ge.f32.partialorder %v9875, 2.0
      %vm9940 = vcmp.ge.f32.partialorder %v9876, 2.0
      %vm9941 = vcmp.ge.f32.partialorder %v9877, 2.0
      %vm9942 = vcmp.ge.f32.partialorder %v9878, 2.0
      %vm9943 = vcmp.ge.f32.partialorder %v9879, 2.0
      %vm9944 = vcmp.ge.f32.partialorder %v9880, 2.0
      %vm9945 = vcmp.ge.f32.partialorder %v9881, 2.0
      %vm9946 = vcmp.ge.f32.partialorder %v9882, 2.0
      %vm9947 = vcmp.ge.f32.partialorder %v9883, 2.0
      %vm9948 = vcmp.ge.f32.partialorder %v9884, 2.0
      %vm9949 = vcmp.ge.f32.partialorder %v9885, 2.0
      %vm9950 = vcmp.ge.f32.partialorder %v9886, 2.0
      %vm9951 = vcmp.ge.f32.partialorder %v9887, 2.0
      %vm9952 = vcmp.ge.f32.partialorder %v9888, 2.0
      %v9953 = vsel %vm9889, 1, 0
      %v9954 = vsel %vm9890, 1, 0
      %v9955 = vsel %vm9891, 1, 0
      %v9956 = vsel %vm9892, 1, 0
      %v9957 = vsel %vm9893, 1, 0
      %v9958 = vsel %vm9894, 1, 0
      %v9959 = vsel %vm9895, 1, 0
      %v9960 = vsel %vm9896, 1, 0
      %v9961 = vsel %vm9897, 1, 0
      %v9962 = vsel %vm9898, 1, 0
      %v9963 = vsel %vm9899, 1, 0
      %v9964 = vsel %vm9900, 1, 0
      %v9965 = vsel %vm9901, 1, 0
      %v9966 = vsel %vm9902, 1, 0
      %v9967 = vsel %vm9903, 1, 0
      %v9968 = vsel %vm9904, 1, 0
      %v9969 = vsel %vm9905, 1, 0
      %v9970 = vsel %vm9906, 1, 0
      %v9971 = vsel %vm9907, 1, 0
      %v9972 = vsel %vm9908, 1, 0
      %v9973 = vsel %vm9909, 1, 0
      %v9974 = vsel %vm9910, 1, 0
      %v9975 = vsel %vm9911, 1, 0
      %v9976 = vsel %vm9912, 1, 0
      %v9977 = vsel %vm9913, 1, 0
      %v9978 = vsel %vm9914, 1, 0
      %v9979 = vsel %vm9915, 1, 0
      %v9980 = vsel %vm9916, 1, 0
      %v9981 = vsel %vm9917, 1, 0
      %v9982 = vsel %vm9918, 1, 0
      %v9983 = vsel %vm9919, 1, 0
      %v9984 = vsel %vm9920, 1, 0
      %v9985 = vsel %vm9921, 1, 0
      %v9986 = vsel %vm9922, 1, 0
      %v9987 = vsel %vm9923, 1, 0
      %v9988 = vsel %vm9924, 1, 0
      %v9989 = vsel %vm9925, 1, 0
      %v9990 = vsel %vm9926, 1, 0
      %v9991 = vsel %vm9927, 1, 0
      %v9992 = vsel %vm9928, 1, 0
      %v9993 = vsel %vm9929, 1, 0
      %v9994 = vsel %vm9930, 1, 0
      %v9995 = vsel %vm9931, 1, 0
      %v9996 = vsel %vm9932, 1, 0
      %v9997 = vsel %vm9933, 1, 0
      %v9998 = vsel %vm9934, 1, 0
      %v9999 = vsel %vm9935, 1, 0
      %v10000 = vsel %vm9936, 1, 0
      %v10001 = vsel %vm9937, 1, 0
      %v10002 = vsel %vm9938, 1, 0
      %v10003 = vsel %vm9939, 1, 0
      %v10004 = vsel %vm9940, 1, 0
      %v10005 = vsel %vm9941, 1, 0
      %v10006 = vsel %vm9942, 1, 0
      %v10007 = vsel %vm9943, 1, 0
      %v10008 = vsel %vm9944, 1, 0
      %v10009 = vsel %vm9945, 1, 0
      %v10010 = vsel %vm9946, 1, 0
      %v10011 = vsel %vm9947, 1, 0
      %v10012 = vsel %vm9948, 1, 0
      %v10013 = vsel %vm9949, 1, 0
      %v10014 = vsel %vm9950, 1, 0
      %v10015 = vsel %vm9951, 1, 0
      %v10016 = vsel %vm9952, 1, 0
      %v10017 = vcvt.s32.f32 %v9953
      %v10018 = vcvt.s32.f32 %v9954
      %v10019 = vcvt.s32.f32 %v9955
      %v10020 = vcvt.s32.f32 %v9956
      %v10021 = vcvt.s32.f32 %v9957
      %v10022 = vcvt.s32.f32 %v9958
      %v10023 = vcvt.s32.f32 %v9959
      %v10024 = vcvt.s32.f32 %v9960
      %v10025 = vcvt.s32.f32 %v9961
      %v10026 = vcvt.s32.f32 %v9962
      %v10027 = vcvt.s32.f32 %v9963
      %v10028 = vcvt.s32.f32 %v9964
      %v10029 = vcvt.s32.f32 %v9965
      %v10030 = vcvt.s32.f32 %v9966
      %v10031 = vcvt.s32.f32 %v9967
      %v10032 = vcvt.s32.f32 %v9968
      %v10033 = vcvt.s32.f32 %v9969
      %v10034 = vcvt.s32.f32 %v9970
      %v10035 = vcvt.s32.f32 %v9971
      %v10036 = vcvt.s32.f32 %v9972
      %v10037 = vcvt.s32.f32 %v9973
      %v10038 = vcvt.s32.f32 %v9974
      %v10039 = vcvt.s32.f32 %v9975
      %v10040 = vcvt.s32.f32 %v9976
      %v10041 = vcvt.s32.f32 %v9977
      %v10042 = vcvt.s32.f32 %v9978
      %v10043 = vcvt.s32.f32 %v9979
      %v10044 = vcvt.s32.f32 %v9980
      %v10045 = vcvt.s32.f32 %v9981
      %v10046 = vcvt.s32.f32 %v9982
      %v10047 = vcvt.s32.f32 %v9983
      %v10048 = vcvt.s32.f32 %v9984
      %v10049 = vcvt.s32.f32 %v9985
      %v10050 = vcvt.s32.f32 %v9986
      %v10051 = vcvt.s32.f32 %v9987
      %v10052 = vcvt.s32.f32 %v9988
      %v10053 = vcvt.s32.f32 %v9989
      %v10054 = vcvt.s32.f32 %v9990
      %v10055 = vcvt.s32.f32 %v9991
      %v10056 = vcvt.s32.f32 %v9992
      %v10057 = vcvt.s32.f32 %v9993
      %v10058 = vcvt.s32.f32 %v9994
      %v10059 = vcvt.s32.f32 %v9995
      %v10060 = vcvt.s32.f32 %v9996
      %v10061 = vcvt.s32.f32 %v9997
      %v10062 = vcvt.s32.f32 %v9998
      %v10063 = vcvt.s32.f32 %v9999
      %v10064 = vcvt.s32.f32 %v10000
      %v10065 = vcvt.s32.f32 %v10001
      %v10066 = vcvt.s32.f32 %v10002
      %v10067 = vcvt.s32.f32 %v10003
      %v10068 = vcvt.s32.f32 %v10004
      %v10069 = vcvt.s32.f32 %v10005
      %v10070 = vcvt.s32.f32 %v10006
      %v10071 = vcvt.s32.f32 %v10007
      %v10072 = vcvt.s32.f32 %v10008
      %v10073 = vcvt.s32.f32 %v10009
      %v10074 = vcvt.s32.f32 %v10010
      %v10075 = vcvt.s32.f32 %v10011
      %v10076 = vcvt.s32.f32 %v10012
      %v10077 = vcvt.s32.f32 %v10013
      %v10078 = vcvt.s32.f32 %v10014
      %v10079 = vcvt.s32.f32 %v10015
      %v10080 = vcvt.s32.f32 %v10016
      %v10081 = vld [vmem:[%s7] sm:$0xff]
      %v10082 = vld [vmem:[%s8] sm:$0x1]
      %v10084 = vlaneseq
      %v10085 = vshrl.u32 %v10084, 7
      %v10086 = vsub.s32 0, %v10085
      %v10087 = vrot.slane %v10082, %v10086
      %v10090 = vsel %vm413, %v10017, 0
      %v10093 = vsel %vm413, %v10018, 0
      %v10096 = vsel %vm413, %v10019, 0
      %v10099 = vsel %vm413, %v10020, 0
      %v10102 = vsel %vm413, %v10021, 0
      %v10105 = vsel %vm413, %v10022, 0
      %v10108 = vsel %vm413, %v10023, 0
      %v10111 = vsel %vm413, %v10024, 0
      %v10114 = vsel %vm413, %v10025, 0
      %v10117 = vsel %vm413, %v10026, 0
      %v10120 = vsel %vm413, %v10027, 0
      %v10123 = vsel %vm413, %v10028, 0
      %v10126 = vsel %vm413, %v10029, 0
      %v10129 = vsel %vm413, %v10030, 0
      %v10132 = vsel %vm413, %v10031, 0
      %v10135 = vsel %vm413, %v10032, 0
      %v10138 = vsel %vm413, %v10033, 0
      %v10141 = vsel %vm413, %v10034, 0
      %v10144 = vsel %vm413, %v10035, 0
      %v10147 = vsel %vm413, %v10036, 0
      %v10150 = vsel %vm413, %v10037, 0
      %v10153 = vsel %vm413, %v10038, 0
      %v10156 = vsel %vm413, %v10039, 0
      %v10159 = vsel %vm413, %v10040, 0
      %v10162 = vsel %vm413, %v10041, 0
      %v10165 = vsel %vm413, %v10042, 0
      %v10168 = vsel %vm413, %v10043, 0
      %v10171 = vsel %vm413, %v10044, 0
      %v10174 = vsel %vm413, %v10045, 0
      %v10177 = vsel %vm413, %v10046, 0
      %v10180 = vsel %vm413, %v10047, 0
      %v10183 = vsel %vm413, %v10048, 0
      %v10186 = vsel %vm413, %v10049, 0
      %v10189 = vsel %vm413, %v10050, 0
      %v10192 = vsel %vm413, %v10051, 0
      %v10195 = vsel %vm413, %v10052, 0
      %v10198 = vsel %vm413, %v10053, 0
      %v10201 = vsel %vm413, %v10054, 0
      %v10204 = vsel %vm413, %v10055, 0
      %v10207 = vsel %vm413, %v10056, 0
      %v10210 = vsel %vm413, %v10057, 0
      %v10213 = vsel %vm413, %v10058, 0
      %v10216 = vsel %vm413, %v10059, 0
      %v10219 = vsel %vm413, %v10060, 0
      %v10222 = vsel %vm413, %v10061, 0
      %v10225 = vsel %vm413, %v10062, 0
      %v10228 = vsel %vm413, %v10063, 0
      %v10231 = vsel %vm413, %v10064, 0
      %v10234 = vsel %vm413, %v10065, 0
      %v10237 = vsel %vm413, %v10066, 0
      %v10240 = vsel %vm413, %v10067, 0
      %v10243 = vsel %vm413, %v10068, 0
      %v10246 = vsel %vm413, %v10069, 0
      %v10249 = vsel %vm413, %v10070, 0
      %v10252 = vsel %vm413, %v10071, 0
      %v10255 = vsel %vm413, %v10072, 0
      %v10258 = vsel %vm413, %v10073, 0
      %v10261 = vsel %vm413, %v10074, 0
      %v10264 = vsel %vm413, %v10075, 0
      %v10267 = vsel %vm413, %v10076, 0
      %v10270 = vsel %vm413, %v10077, 0
      %v10273 = vsel %vm413, %v10078, 0
      %v10276 = vsel %vm413, %v10079, 0
      %v10279 = vsel %vm413, %v10080, 0
      %10281 = vmatprep.subr.mxu0 0.0
      %10282 = vmatpush1.msra.mxu0 0.0
      %10283 = vmatprep.subr.mxu0 0.0
      %10284 = vmatpush1.msra.mxu0 0.0
      %10285 = vmatprep.subr.mxu0 0.0
      %10286 = vmatpush1.msra.mxu0 0.0
      %10287 = vmatprep.subr.mxu0 0.0
      %10288 = vmatpush1.msra.mxu0 0.0
      %10289 = vmatprep.subr.mxu0 0.0
      %10290 = vmatpush1.msra.mxu0 0.0
      %10291 = vmatprep.subr.mxu0 0.0
      %10292 = vmatpush1.msra.mxu0 0.0
      %10293 = vmatprep.subr.mxu0 0.0
      %10294 = vmatpush1.msra.mxu0 0.0
      %10295 = vmatprep.subr.mxu0 0.0
      %10296 = vmatpush1.msra.mxu0 0.0
      %10297 = vmatprep.subr.mxu0 0.0
      %10298 = vmatpush1.msra.mxu0 0.0
      %10299 = vmatprep.subr.mxu0 0.0
      %10300 = vmatpush1.msra.mxu0 0.0
      %10301 = vmatprep.subr.mxu0 0.0
      %10302 = vmatpush1.msra.mxu0 0.0
      %10303 = vmatprep.subr.mxu0 0.0
      %10304 = vmatpush1.msra.mxu0 0.0
      %10305 = vmatprep.subr.mxu0 0.0
      %10306 = vmatpush1.msra.mxu0 0.0
      %10307 = vmatprep.subr.mxu0 0.0
      %10308 = vmatpush1.msra.mxu0 0.0
      %10309 = vmatprep.subr.mxu0 0.0
      %10310 = vmatpush1.msra.mxu0 0.0
      %10311 = vmatprep.subr.mxu0 0.0
      %10312 = vmatpush1.msra.mxu0 %v10081
      %10313 = vmatprep.subr.mxu0 0.0
      %10314 = vmatpush2.msra.mxu0 0.0
      %10315 = vmatprep.subr.mxu0 0.0
      %10316 = vmatpush2.msra.mxu0 0.0
      %10317 = vmatprep.subr.mxu0 0.0
      %10318 = vmatpush2.msra.mxu0 0.0
      %10319 = vmatprep.subr.mxu0 0.0
      %10320 = vmatpush2.msra.mxu0 0.0
      %10321 = vmatprep.subr.mxu0 0.0
      %10322 = vmatpush2.msra.mxu0 0.0
      %10323 = vmatprep.subr.mxu0 0.0
      %10324 = vmatpush2.msra.mxu0 0.0
      %10325 = vmatprep.subr.mxu0 0.0
      %10326 = vmatpush2.msra.mxu0 0.0
      %10327 = vmatprep.subr.mxu0 0.0
      %10328 = vmatpush2.msra.mxu0 0.0
      %10329 = vmatprep.subr.mxu0 0.0
      %10330 = vmatpush2.msra.mxu0 0.0
      %10331 = vmatprep.subr.mxu0 0.0
      %10332 = vmatpush2.msra.mxu0 0.0
      %10333 = vmatprep.subr.mxu0 0.0
      %10334 = vmatpush2.msra.mxu0 0.0
      %10335 = vmatprep.subr.mxu0 0.0
      %10336 = vmatpush2.msra.mxu0 0.0
      %10337 = vmatprep.subr.mxu0 0.0
      %10338 = vmatpush2.msra.mxu0 0.0
      %10339 = vmatprep.subr.mxu0 0.0
      %10340 = vmatpush2.msra.mxu0 0.0
      %10341 = vmatprep.subr.mxu0 0.0
      %10342 = vmatpush2.msra.mxu0 0.0
      %10343 = vmatprep.subr.mxu0 0.0
      %10344 = vmatpush2.msra.mxu0 0.0
      %10345 = vmatprep.mubr.f32.mxu0 0.0
      %10346 = vmatmul.mubr.f32.gmra.mxu0 %v10090
      %v10347 = vpop.f32.mrf.mxu0
      %v10348 = vadd.f32 %v10087, %v10347
      %v10349 = vpop.f32.mrf.mxu0
      %10350 = vmatprep.mubr.f32.mxu0 0.0
      %10351 = vmatmul.mubr.f32.gmra.mxu0 %v10093
      %v10352 = vpop.f32.mrf.mxu0
      %v10353 = vadd.f32 %v10087, %v10352
      %v10354 = vpop.f32.mrf.mxu0
      %10355 = vmatprep.mubr.f32.mxu0 0.0
      %10356 = vmatmul.mubr.f32.gmra.mxu0 %v10096
      %v10357 = vpop.f32.mrf.mxu0
      %v10358 = vadd.f32 %v10087, %v10357
      %v10359 = vpop.f32.mrf.mxu0
      %10360 = vmatprep.mubr.f32.mxu0 0.0
      %10361 = vmatmul.mubr.f32.gmra.mxu0 %v10099
      %v10362 = vpop.f32.mrf.mxu0
      %v10363 = vadd.f32 %v10087, %v10362
      %v10364 = vpop.f32.mrf.mxu0
      %10365 = vmatprep.mubr.f32.mxu0 0.0
      %10366 = vmatmul.mubr.f32.gmra.mxu0 %v10102
      %v10367 = vpop.f32.mrf.mxu0
      %v10368 = vadd.f32 %v10087, %v10367
      %v10369 = vpop.f32.mrf.mxu0
      %10370 = vmatprep.mubr.f32.mxu0 0.0
      %10371 = vmatmul.mubr.f32.gmra.mxu0 %v10105
      %v10372 = vpop.f32.mrf.mxu0
      %v10373 = vadd.f32 %v10087, %v10372
      %v10374 = vpop.f32.mrf.mxu0
      %10375 = vmatprep.mubr.f32.mxu0 0.0
      %10376 = vmatmul.mubr.f32.gmra.mxu0 %v10108
      %v10377 = vpop.f32.mrf.mxu0
      %v10378 = vadd.f32 %v10087, %v10377
      %v10379 = vpop.f32.mrf.mxu0
      %10380 = vmatprep.mubr.f32.mxu0 0.0
      %10381 = vmatmul.mubr.f32.gmra.mxu0 %v10111
      %v10382 = vpop.f32.mrf.mxu0
      %v10383 = vadd.f32 %v10087, %v10382
      %v10384 = vpop.f32.mrf.mxu0
      %10385 = vmatprep.mubr.f32.mxu0 0.0
      %10386 = vmatmul.mubr.f32.gmra.mxu0 %v10114
      %v10387 = vpop.f32.mrf.mxu0
      %v10388 = vadd.f32 %v10087, %v10387
      %v10389 = vpop.f32.mrf.mxu0
      %10390 = vmatprep.mubr.f32.mxu0 0.0
      %10391 = vmatmul.mubr.f32.gmra.mxu0 %v10117
      %v10392 = vpop.f32.mrf.mxu0
      %v10393 = vadd.f32 %v10087, %v10392
      %v10394 = vpop.f32.mrf.mxu0
      %10395 = vmatprep.mubr.f32.mxu0 0.0
      %10396 = vmatmul.mubr.f32.gmra.mxu0 %v10120
      %v10397 = vpop.f32.mrf.mxu0
      %v10398 = vadd.f32 %v10087, %v10397
      %v10399 = vpop.f32.mrf.mxu0
      %10400 = vmatprep.mubr.f32.mxu0 0.0
      %10401 = vmatmul.mubr.f32.gmra.mxu0 %v10123
      %v10402 = vpop.f32.mrf.mxu0
      %v10403 = vadd.f32 %v10087, %v10402
      %v10404 = vpop.f32.mrf.mxu0
      %10405 = vmatprep.mubr.f32.mxu0 0.0
      %10406 = vmatmul.mubr.f32.gmra.mxu0 %v10126
      %v10407 = vpop.f32.mrf.mxu0
      %v10408 = vadd.f32 %v10087, %v10407
      %v10409 = vpop.f32.mrf.mxu0
      %10410 = vmatprep.mubr.f32.mxu0 0.0
      %10411 = vmatmul.mubr.f32.gmra.mxu0 %v10129
      %v10412 = vpop.f32.mrf.mxu0
      %v10413 = vadd.f32 %v10087, %v10412
      %v10414 = vpop.f32.mrf.mxu0
      %10415 = vmatprep.mubr.f32.mxu0 0.0
      %10416 = vmatmul.mubr.f32.gmra.mxu0 %v10132
      %v10417 = vpop.f32.mrf.mxu0
      %v10418 = vadd.f32 %v10087, %v10417
      %v10419 = vpop.f32.mrf.mxu0
      %10420 = vmatprep.mubr.f32.mxu0 0.0
      %10421 = vmatmul.mubr.f32.gmra.mxu0 %v10135
      %v10422 = vpop.f32.mrf.mxu0
      %v10423 = vadd.f32 %v10087, %v10422
      %v10424 = vpop.f32.mrf.mxu0
      %10425 = vmatprep.mubr.f32.mxu0 0.0
      %10426 = vmatmul.mubr.f32.gmra.mxu0 %v10138
      %v10427 = vpop.f32.mrf.mxu0
      %v10428 = vadd.f32 %v10087, %v10427
      %v10429 = vpop.f32.mrf.mxu0
      %10430 = vmatprep.mubr.f32.mxu0 0.0
      %10431 = vmatmul.mubr.f32.gmra.mxu0 %v10141
      %v10432 = vpop.f32.mrf.mxu0
      %v10433 = vadd.f32 %v10087, %v10432
      %v10434 = vpop.f32.mrf.mxu0
      %10435 = vmatprep.mubr.f32.mxu0 0.0
      %10436 = vmatmul.mubr.f32.gmra.mxu0 %v10144
      %v10437 = vpop.f32.mrf.mxu0
      %v10438 = vadd.f32 %v10087, %v10437
      %v10439 = vpop.f32.mrf.mxu0
      %10440 = vmatprep.mubr.f32.mxu0 0.0
      %10441 = vmatmul.mubr.f32.gmra.mxu0 %v10147
      %v10442 = vpop.f32.mrf.mxu0
      %v10443 = vadd.f32 %v10087, %v10442
      %v10444 = vpop.f32.mrf.mxu0
      %10445 = vmatprep.mubr.f32.mxu0 0.0
      %10446 = vmatmul.mubr.f32.gmra.mxu0 %v10150
      %v10447 = vpop.f32.mrf.mxu0
      %v10448 = vadd.f32 %v10087, %v10447
      %v10449 = vpop.f32.mrf.mxu0
      %10450 = vmatprep.mubr.f32.mxu0 0.0
      %10451 = vmatmul.mubr.f32.gmra.mxu0 %v10153
      %v10452 = vpop.f32.mrf.mxu0
      %v10453 = vadd.f32 %v10087, %v10452
      %v10454 = vpop.f32.mrf.mxu0
      %10455 = vmatprep.mubr.f32.mxu0 0.0
      %10456 = vmatmul.mubr.f32.gmra.mxu0 %v10156
      %v10457 = vpop.f32.mrf.mxu0
      %v10458 = vadd.f32 %v10087, %v10457
      %v10459 = vpop.f32.mrf.mxu0
      %10460 = vmatprep.mubr.f32.mxu0 0.0
      %10461 = vmatmul.mubr.f32.gmra.mxu0 %v10159
      %v10462 = vpop.f32.mrf.mxu0
      %v10463 = vadd.f32 %v10087, %v10462
      %v10464 = vpop.f32.mrf.mxu0
      %10465 = vmatprep.mubr.f32.mxu0 0.0
      %10466 = vmatmul.mubr.f32.gmra.mxu0 %v10162
      %v10467 = vpop.f32.mrf.mxu0
      %v10468 = vadd.f32 %v10087, %v10467
      %v10469 = vpop.f32.mrf.mxu0
      %10470 = vmatprep.mubr.f32.mxu0 0.0
      %10471 = vmatmul.mubr.f32.gmra.mxu0 %v10165
      %v10472 = vpop.f32.mrf.mxu0
      %v10473 = vadd.f32 %v10087, %v10472
      %v10474 = vpop.f32.mrf.mxu0
      %10475 = vmatprep.mubr.f32.mxu0 0.0
      %10476 = vmatmul.mubr.f32.gmra.mxu0 %v10168
      %v10477 = vpop.f32.mrf.mxu0
      %v10478 = vadd.f32 %v10087, %v10477
      %v10479 = vpop.f32.mrf.mxu0
      %10480 = vmatprep.mubr.f32.mxu0 0.0
      %10481 = vmatmul.mubr.f32.gmra.mxu0 %v10171
      %v10482 = vpop.f32.mrf.mxu0
      %v10483 = vadd.f32 %v10087, %v10482
      %v10484 = vpop.f32.mrf.mxu0
      %10485 = vmatprep.mubr.f32.mxu0 0.0
      %10486 = vmatmul.mubr.f32.gmra.mxu0 %v10174
      %v10487 = vpop.f32.mrf.mxu0
      %v10488 = vadd.f32 %v10087, %v10487
      %v10489 = vpop.f32.mrf.mxu0
      %10490 = vmatprep.mubr.f32.mxu0 0.0
      %10491 = vmatmul.mubr.f32.gmra.mxu0 %v10177
      %v10492 = vpop.f32.mrf.mxu0
      %v10493 = vadd.f32 %v10087, %v10492
      %v10494 = vpop.f32.mrf.mxu0
      %10495 = vmatprep.mubr.f32.mxu0 0.0
      %10496 = vmatmul.mubr.f32.gmra.mxu0 %v10180
      %v10497 = vpop.f32.mrf.mxu0
      %v10498 = vadd.f32 %v10087, %v10497
      %v10499 = vpop.f32.mrf.mxu0
      %10500 = vmatprep.mubr.f32.mxu0 0.0
      %10501 = vmatmul.mubr.f32.gmra.mxu0 %v10183
      %v10502 = vpop.f32.mrf.mxu0
      %v10503 = vadd.f32 %v10087, %v10502
      %v10504 = vpop.f32.mrf.mxu0
      %10505 = vmatprep.mubr.f32.mxu0 0.0
      %10506 = vmatmul.mubr.f32.gmra.mxu0 %v10186
      %v10507 = vpop.f32.mrf.mxu0
      %v10508 = vadd.f32 %v10087, %v10507
      %v10509 = vpop.f32.mrf.mxu0
      %10510 = vmatprep.mubr.f32.mxu0 0.0
      %10511 = vmatmul.mubr.f32.gmra.mxu0 %v10189
      %v10512 = vpop.f32.mrf.mxu0
      %v10513 = vadd.f32 %v10087, %v10512
      %v10514 = vpop.f32.mrf.mxu0
      %10515 = vmatprep.mubr.f32.mxu0 0.0
      %10516 = vmatmul.mubr.f32.gmra.mxu0 %v10192
      %v10517 = vpop.f32.mrf.mxu0
      %v10518 = vadd.f32 %v10087, %v10517
      %v10519 = vpop.f32.mrf.mxu0
      %10520 = vmatprep.mubr.f32.mxu0 0.0
      %10521 = vmatmul.mubr.f32.gmra.mxu0 %v10195
      %v10522 = vpop.f32.mrf.mxu0
      %v10523 = vadd.f32 %v10087, %v10522
      %v10524 = vpop.f32.mrf.mxu0
      %10525 = vmatprep.mubr.f32.mxu0 0.0
      %10526 = vmatmul.mubr.f32.gmra.mxu0 %v10198
      %v10527 = vpop.f32.mrf.mxu0
      %v10528 = vadd.f32 %v10087, %v10527
      %v10529 = vpop.f32.mrf.mxu0
      %10530 = vmatprep.mubr.f32.mxu0 0.0
      %10531 = vmatmul.mubr.f32.gmra.mxu0 %v10201
      %v10532 = vpop.f32.mrf.mxu0
      %v10533 = vadd.f32 %v10087, %v10532
      %v10534 = vpop.f32.mrf.mxu0
      %10535 = vmatprep.mubr.f32.mxu0 0.0
      %10536 = vmatmul.mubr.f32.gmra.mxu0 %v10204
      %v10537 = vpop.f32.mrf.mxu0
      %v10538 = vadd.f32 %v10087, %v10537
      %v10539 = vpop.f32.mrf.mxu0
      %10540 = vmatprep.mubr.f32.mxu0 0.0
      %10541 = vmatmul.mubr.f32.gmra.mxu0 %v10207
      %v10542 = vpop.f32.mrf.mxu0
      %v10543 = vadd.f32 %v10087, %v10542
      %v10544 = vpop.f32.mrf.mxu0
      %10545 = vmatprep.mubr.f32.mxu0 0.0
      %10546 = vmatmul.mubr.f32.gmra.mxu0 %v10210
      %v10547 = vpop.f32.mrf.mxu0
      %v10548 = vadd.f32 %v10087, %v10547
      %v10549 = vpop.f32.mrf.mxu0
      %10550 = vmatprep.mubr.f32.mxu0 0.0
      %10551 = vmatmul.mubr.f32.gmra.mxu0 %v10213
      %v10552 = vpop.f32.mrf.mxu0
      %v10553 = vadd.f32 %v10087, %v10552
      %v10554 = vpop.f32.mrf.mxu0
      %10555 = vmatprep.mubr.f32.mxu0 0.0
      %10556 = vmatmul.mubr.f32.gmra.mxu0 %v10216
      %v10557 = vpop.f32.mrf.mxu0
      %v10558 = vadd.f32 %v10087, %v10557
      %v10559 = vpop.f32.mrf.mxu0
      %10560 = vmatprep.mubr.f32.mxu0 0.0
      %10561 = vmatmul.mubr.f32.gmra.mxu0 %v10219
      %v10562 = vpop.f32.mrf.mxu0
      %v10563 = vadd.f32 %v10087, %v10562
      %v10564 = vpop.f32.mrf.mxu0
      %10565 = vmatprep.mubr.f32.mxu0 0.0
      %10566 = vmatmul.mubr.f32.gmra.mxu0 %v10222
      %v10567 = vpop.f32.mrf.mxu0
      %v10568 = vadd.f32 %v10087, %v10567
      %v10569 = vpop.f32.mrf.mxu0
      %10570 = vmatprep.mubr.f32.mxu0 0.0
      %10571 = vmatmul.mubr.f32.gmra.mxu0 %v10225
      %v10572 = vpop.f32.mrf.mxu0
      %v10573 = vadd.f32 %v10087, %v10572
      %v10574 = vpop.f32.mrf.mxu0
      %10575 = vmatprep.mubr.f32.mxu0 0.0
      %10576 = vmatmul.mubr.f32.gmra.mxu0 %v10228
      %v10577 = vpop.f32.mrf.mxu0
      %v10578 = vadd.f32 %v10087, %v10577
      %v10579 = vpop.f32.mrf.mxu0
      %10580 = vmatprep.mubr.f32.mxu0 0.0
      %10581 = vmatmul.mubr.f32.gmra.mxu0 %v10231
      %v10582 = vpop.f32.mrf.mxu0
      %v10583 = vadd.f32 %v10087, %v10582
      %v10584 = vpop.f32.mrf.mxu0
      %10585 = vmatprep.mubr.f32.mxu0 0.0
      %10586 = vmatmul.mubr.f32.gmra.mxu0 %v10234
      %v10587 = vpop.f32.mrf.mxu0
      %v10588 = vadd.f32 %v10087, %v10587
      %v10589 = vpop.f32.mrf.mxu0
      %10590 = vmatprep.mubr.f32.mxu0 0.0
      %10591 = vmatmul.mubr.f32.gmra.mxu0 %v10237
      %v10592 = vpop.f32.mrf.mxu0
      %v10593 = vadd.f32 %v10087, %v10592
      %v10594 = vpop.f32.mrf.mxu0
      %10595 = vmatprep.mubr.f32.mxu0 0.0
      %10596 = vmatmul.mubr.f32.gmra.mxu0 %v10240
      %v10597 = vpop.f32.mrf.mxu0
      %v10598 = vadd.f32 %v10087, %v10597
      %v10599 = vpop.f32.mrf.mxu0
      %10600 = vmatprep.mubr.f32.mxu0 0.0
      %10601 = vmatmul.mubr.f32.gmra.mxu0 %v10243
      %v10602 = vpop.f32.mrf.mxu0
      %v10603 = vadd.f32 %v10087, %v10602
      %v10604 = vpop.f32.mrf.mxu0
      %10605 = vmatprep.mubr.f32.mxu0 0.0
      %10606 = vmatmul.mubr.f32.gmra.mxu0 %v10246
      %v10607 = vpop.f32.mrf.mxu0
      %v10608 = vadd.f32 %v10087, %v10607
      %v10609 = vpop.f32.mrf.mxu0
      %10610 = vmatprep.mubr.f32.mxu0 0.0
      %10611 = vmatmul.mubr.f32.gmra.mxu0 %v10249
      %v10612 = vpop.f32.mrf.mxu0
      %v10613 = vadd.f32 %v10087, %v10612
      %v10614 = vpop.f32.mrf.mxu0
      %10615 = vmatprep.mubr.f32.mxu0 0.0
      %10616 = vmatmul.mubr.f32.gmra.mxu0 %v10252
      %v10617 = vpop.f32.mrf.mxu0
      %v10618 = vadd.f32 %v10087, %v10617
      %v10619 = vpop.f32.mrf.mxu0
      %10620 = vmatprep.mubr.f32.mxu0 0.0
      %10621 = vmatmul.mubr.f32.gmra.mxu0 %v10255
      %v10622 = vpop.f32.mrf.mxu0
      %v10623 = vadd.f32 %v10087, %v10622
      %v10624 = vpop.f32.mrf.mxu0
      %10625 = vmatprep.mubr.f32.mxu0 0.0
      %10626 = vmatmul.mubr.f32.gmra.mxu0 %v10258
      %v10627 = vpop.f32.mrf.mxu0
      %v10628 = vadd.f32 %v10087, %v10627
      %v10629 = vpop.f32.mrf.mxu0
      %10630 = vmatprep.mubr.f32.mxu0 0.0
      %10631 = vmatmul.mubr.f32.gmra.mxu0 %v10261
      %v10632 = vpop.f32.mrf.mxu0
      %v10633 = vadd.f32 %v10087, %v10632
      %v10634 = vpop.f32.mrf.mxu0
      %10635 = vmatprep.mubr.f32.mxu0 0.0
      %10636 = vmatmul.mubr.f32.gmra.mxu0 %v10264
      %v10637 = vpop.f32.mrf.mxu0
      %v10638 = vadd.f32 %v10087, %v10637
      %v10639 = vpop.f32.mrf.mxu0
      %10640 = vmatprep.mubr.f32.mxu0 0.0
      %10641 = vmatmul.mubr.f32.gmra.mxu0 %v10267
      %v10642 = vpop.f32.mrf.mxu0
      %v10643 = vadd.f32 %v10087, %v10642
      %v10644 = vpop.f32.mrf.mxu0
      %10645 = vmatprep.mubr.f32.mxu0 0.0
      %10646 = vmatmul.mubr.f32.gmra.mxu0 %v10270
      %v10647 = vpop.f32.mrf.mxu0
      %v10648 = vadd.f32 %v10087, %v10647
      %v10649 = vpop.f32.mrf.mxu0
      %10650 = vmatprep.mubr.f32.mxu0 0.0
      %10651 = vmatmul.mubr.f32.gmra.mxu0 %v10273
      %v10652 = vpop.f32.mrf.mxu0
      %v10653 = vadd.f32 %v10087, %v10652
      %v10654 = vpop.f32.mrf.mxu0
      %10655 = vmatprep.mubr.f32.mxu0 0.0
      %10656 = vmatmul.mubr.f32.gmra.mxu0 %v10276
      %v10657 = vpop.f32.mrf.mxu0
      %v10658 = vadd.f32 %v10087, %v10657
      %v10659 = vpop.f32.mrf.mxu0
      %10660 = vmatprep.mubr.f32.mxu0 0.0
      %10661 = vmatmul.mubr.f32.gmra.mxu0 %v10279
      %v10662 = vpop.f32.mrf.mxu0
      %v10663 = vadd.f32 %v10087, %v10662
      %v10664 = vpop.f32.mrf.mxu0
      %10665 = vdwg.mxu0
      %vm10666 = vcmp.ge.f32.partialorder %v10348, 2.0
      %vm10667 = vcmp.ge.f32.partialorder %v10353, 2.0
      %vm10668 = vcmp.ge.f32.partialorder %v10358, 2.0
      %vm10669 = vcmp.ge.f32.partialorder %v10363, 2.0
      %vm10670 = vcmp.ge.f32.partialorder %v10368, 2.0
      %vm10671 = vcmp.ge.f32.partialorder %v10373, 2.0
      %vm10672 = vcmp.ge.f32.partialorder %v10378, 2.0
      %vm10673 = vcmp.ge.f32.partialorder %v10383, 2.0
      %vm10674 = vcmp.ge.f32.partialorder %v10388, 2.0
      %vm10675 = vcmp.ge.f32.partialorder %v10393, 2.0
      %vm10676 = vcmp.ge.f32.partialorder %v10398, 2.0
      %vm10677 = vcmp.ge.f32.partialorder %v10403, 2.0
      %vm10678 = vcmp.ge.f32.partialorder %v10408, 2.0
      %vm10679 = vcmp.ge.f32.partialorder %v10413, 2.0
      %vm10680 = vcmp.ge.f32.partialorder %v10418, 2.0
      %vm10681 = vcmp.ge.f32.partialorder %v10423, 2.0
      %vm10682 = vcmp.ge.f32.partialorder %v10428, 2.0
      %vm10683 = vcmp.ge.f32.partialorder %v10433, 2.0
      %vm10684 = vcmp.ge.f32.partialorder %v10438, 2.0
      %vm10685 = vcmp.ge.f32.partialorder %v10443, 2.0
      %vm10686 = vcmp.ge.f32.partialorder %v10448, 2.0
      %vm10687 = vcmp.ge.f32.partialorder %v10453, 2.0
      %vm10688 = vcmp.ge.f32.partialorder %v10458, 2.0
      %vm10689 = vcmp.ge.f32.partialorder %v10463, 2.0
      %vm10690 = vcmp.ge.f32.partialorder %v10468, 2.0
      %vm10691 = vcmp.ge.f32.partialorder %v10473, 2.0
      %vm10692 = vcmp.ge.f32.partialorder %v10478, 2.0
      %vm10693 = vcmp.ge.f32.partialorder %v10483, 2.0
      %vm10694 = vcmp.ge.f32.partialorder %v10488, 2.0
      %vm10695 = vcmp.ge.f32.partialorder %v10493, 2.0
      %vm10696 = vcmp.ge.f32.partialorder %v10498, 2.0
      %vm10697 = vcmp.ge.f32.partialorder %v10503, 2.0
      %vm10698 = vcmp.ge.f32.partialorder %v10508, 2.0
      %vm10699 = vcmp.ge.f32.partialorder %v10513, 2.0
      %vm10700 = vcmp.ge.f32.partialorder %v10518, 2.0
      %vm10701 = vcmp.ge.f32.partialorder %v10523, 2.0
      %vm10702 = vcmp.ge.f32.partialorder %v10528, 2.0
      %vm10703 = vcmp.ge.f32.partialorder %v10533, 2.0
      %vm10704 = vcmp.ge.f32.partialorder %v10538, 2.0
      %vm10705 = vcmp.ge.f32.partialorder %v10543, 2.0
      %vm10706 = vcmp.ge.f32.partialorder %v10548, 2.0
      %vm10707 = vcmp.ge.f32.partialorder %v10553, 2.0
      %vm10708 = vcmp.ge.f32.partialorder %v10558, 2.0
      %vm10709 = vcmp.ge.f32.partialorder %v10563, 2.0
      %vm10710 = vcmp.ge.f32.partialorder %v10568, 2.0
      %vm10711 = vcmp.ge.f32.partialorder %v10573, 2.0
      %vm10712 = vcmp.ge.f32.partialorder %v10578, 2.0
      %vm10713 = vcmp.ge.f32.partialorder %v10583, 2.0
      %vm10714 = vcmp.ge.f32.partialorder %v10588, 2.0
      %vm10715 = vcmp.ge.f32.partialorder %v10593, 2.0
      %vm10716 = vcmp.ge.f32.partialorder %v10598, 2.0
      %vm10717 = vcmp.ge.f32.partialorder %v10603, 2.0
      %vm10718 = vcmp.ge.f32.partialorder %v10608, 2.0
      %vm10719 = vcmp.ge.f32.partialorder %v10613, 2.0
      %vm10720 = vcmp.ge.f32.partialorder %v10618, 2.0
      %vm10721 = vcmp.ge.f32.partialorder %v10623, 2.0
      %vm10722 = vcmp.ge.f32.partialorder %v10628, 2.0
      %vm10723 = vcmp.ge.f32.partialorder %v10633, 2.0
      %vm10724 = vcmp.ge.f32.partialorder %v10638, 2.0
      %vm10725 = vcmp.ge.f32.partialorder %v10643, 2.0
      %vm10726 = vcmp.ge.f32.partialorder %v10648, 2.0
      %vm10727 = vcmp.ge.f32.partialorder %v10653, 2.0
      %vm10728 = vcmp.ge.f32.partialorder %v10658, 2.0
      %vm10729 = vcmp.ge.f32.partialorder %v10663, 2.0
      %v10730 = vsel %vm10666, 1, 0
      %v10731 = vsel %vm10667, 1, 0
      %v10732 = vsel %vm10668, 1, 0
      %v10733 = vsel %vm10669, 1, 0
      %v10734 = vsel %vm10670, 1, 0
      %v10735 = vsel %vm10671, 1, 0
      %v10736 = vsel %vm10672, 1, 0
      %v10737 = vsel %vm10673, 1, 0
      %v10738 = vsel %vm10674, 1, 0
      %v10739 = vsel %vm10675, 1, 0
      %v10740 = vsel %vm10676, 1, 0
      %v10741 = vsel %vm10677, 1, 0
      %v10742 = vsel %vm10678, 1, 0
      %v10743 = vsel %vm10679, 1, 0
      %v10744 = vsel %vm10680, 1, 0
      %v10745 = vsel %vm10681, 1, 0
      %v10746 = vsel %vm10682, 1, 0
      %v10747 = vsel %vm10683, 1, 0
      %v10748 = vsel %vm10684, 1, 0
      %v10749 = vsel %vm10685, 1, 0
      %v10750 = vsel %vm10686, 1, 0
      %v10751 = vsel %vm10687, 1, 0
      %v10752 = vsel %vm10688, 1, 0
      %v10753 = vsel %vm10689, 1, 0
      %v10754 = vsel %vm10690, 1, 0
      %v10755 = vsel %vm10691, 1, 0
      %v10756 = vsel %vm10692, 1, 0
      %v10757 = vsel %vm10693, 1, 0
      %v10758 = vsel %vm10694, 1, 0
      %v10759 = vsel %vm10695, 1, 0
      %v10760 = vsel %vm10696, 1, 0
      %v10761 = vsel %vm10697, 1, 0
      %v10762 = vsel %vm10698, 1, 0
      %v10763 = vsel %vm10699, 1, 0
      %v10764 = vsel %vm10700, 1, 0
      %v10765 = vsel %vm10701, 1, 0
      %v10766 = vsel %vm10702, 1, 0
      %v10767 = vsel %vm10703, 1, 0
      %v10768 = vsel %vm10704, 1, 0
      %v10769 = vsel %vm10705, 1, 0
      %v10770 = vsel %vm10706, 1, 0
      %v10771 = vsel %vm10707, 1, 0
      %v10772 = vsel %vm10708, 1, 0
      %v10773 = vsel %vm10709, 1, 0
      %v10774 = vsel %vm10710, 1, 0
      %v10775 = vsel %vm10711, 1, 0
      %v10776 = vsel %vm10712, 1, 0
      %v10777 = vsel %vm10713, 1, 0
      %v10778 = vsel %vm10714, 1, 0
      %v10779 = vsel %vm10715, 1, 0
      %v10780 = vsel %vm10716, 1, 0
      %v10781 = vsel %vm10717, 1, 0
      %v10782 = vsel %vm10718, 1, 0
      %v10783 = vsel %vm10719, 1, 0
      %v10784 = vsel %vm10720, 1, 0
      %v10785 = vsel %vm10721, 1, 0
      %v10786 = vsel %vm10722, 1, 0
      %v10787 = vsel %vm10723, 1, 0
      %v10788 = vsel %vm10724, 1, 0
      %v10789 = vsel %vm10725, 1, 0
      %v10790 = vsel %vm10726, 1, 0
      %v10791 = vsel %vm10727, 1, 0
      %v10792 = vsel %vm10728, 1, 0
      %v10793 = vsel %vm10729, 1, 0
      %v10794 = vcvt.s32.f32 %v10730
      %v10795 = vcvt.s32.f32 %v10731
      %v10796 = vcvt.s32.f32 %v10732
      %v10797 = vcvt.s32.f32 %v10733
      %v10798 = vcvt.s32.f32 %v10734
      %v10799 = vcvt.s32.f32 %v10735
      %v10800 = vcvt.s32.f32 %v10736
      %v10801 = vcvt.s32.f32 %v10737
      %v10802 = vcvt.s32.f32 %v10738
      %v10803 = vcvt.s32.f32 %v10739
      %v10804 = vcvt.s32.f32 %v10740
      %v10805 = vcvt.s32.f32 %v10741
      %v10806 = vcvt.s32.f32 %v10742
      %v10807 = vcvt.s32.f32 %v10743
      %v10808 = vcvt.s32.f32 %v10744
      %v10809 = vcvt.s32.f32 %v10745
      %v10810 = vcvt.s32.f32 %v10746
      %v10811 = vcvt.s32.f32 %v10747
      %v10812 = vcvt.s32.f32 %v10748
      %v10813 = vcvt.s32.f32 %v10749
      %v10814 = vcvt.s32.f32 %v10750
      %v10815 = vcvt.s32.f32 %v10751
      %v10816 = vcvt.s32.f32 %v10752
      %v10817 = vcvt.s32.f32 %v10753
      %v10818 = vcvt.s32.f32 %v10754
      %v10819 = vcvt.s32.f32 %v10755
      %v10820 = vcvt.s32.f32 %v10756
      %v10821 = vcvt.s32.f32 %v10757
      %v10822 = vcvt.s32.f32 %v10758
      %v10823 = vcvt.s32.f32 %v10759
      %v10824 = vcvt.s32.f32 %v10760
      %v10825 = vcvt.s32.f32 %v10761
      %v10826 = vcvt.s32.f32 %v10762
      %v10827 = vcvt.s32.f32 %v10763
      %v10828 = vcvt.s32.f32 %v10764
      %v10829 = vcvt.s32.f32 %v10765
      %v10830 = vcvt.s32.f32 %v10766
      %v10831 = vcvt.s32.f32 %v10767
      %v10832 = vcvt.s32.f32 %v10768
      %v10833 = vcvt.s32.f32 %v10769
      %v10834 = vcvt.s32.f32 %v10770
      %v10835 = vcvt.s32.f32 %v10771
      %v10836 = vcvt.s32.f32 %v10772
      %v10837 = vcvt.s32.f32 %v10773
      %v10838 = vcvt.s32.f32 %v10774
      %v10839 = vcvt.s32.f32 %v10775
      %v10840 = vcvt.s32.f32 %v10776
      %v10841 = vcvt.s32.f32 %v10777
      %v10842 = vcvt.s32.f32 %v10778
      %v10843 = vcvt.s32.f32 %v10779
      %v10844 = vcvt.s32.f32 %v10780
      %v10845 = vcvt.s32.f32 %v10781
      %v10846 = vcvt.s32.f32 %v10782
      %v10847 = vcvt.s32.f32 %v10783
      %v10848 = vcvt.s32.f32 %v10784
      %v10849 = vcvt.s32.f32 %v10785
      %v10850 = vcvt.s32.f32 %v10786
      %v10851 = vcvt.s32.f32 %v10787
      %v10852 = vcvt.s32.f32 %v10788
      %v10853 = vcvt.s32.f32 %v10789
      %v10854 = vcvt.s32.f32 %v10790
      %v10855 = vcvt.s32.f32 %v10791
      %v10856 = vcvt.s32.f32 %v10792
      %v10857 = vcvt.s32.f32 %v10793
      %10858 = vst.msk [vmem:[%s339] sm:$0xff] %vm413, %v10794
      %10859 = vst.msk [vmem:[%s339 + $0x8] sm:$0xff] %vm413, %v10795
      %10860 = vst.msk [vmem:[%s339 + $0x10] sm:$0xff] %vm413, %v10796
      %10861 = vst.msk [vmem:[%s339 + $0x18] sm:$0xff] %vm413, %v10797
      %10862 = vst.msk [vmem:[%s339 + $0x20] sm:$0xff] %vm413, %v10798
      %10863 = vst.msk [vmem:[%s339 + $0x28] sm:$0xff] %vm413, %v10799
      %10864 = vst.msk [vmem:[%s339 + $0x30] sm:$0xff] %vm413, %v10800
      %10865 = vst.msk [vmem:[%s339 + $0x38] sm:$0xff] %vm413, %v10801
      %10866 = vst.msk [vmem:[%s339 + $0x40] sm:$0xff] %vm413, %v10802
      %10867 = vst.msk [vmem:[%s339 + $0x48] sm:$0xff] %vm413, %v10803
      %10868 = vst.msk [vmem:[%s339 + $0x50] sm:$0xff] %vm413, %v10804
      %10869 = vst.msk [vmem:[%s339 + $0x58] sm:$0xff] %vm413, %v10805
      %10870 = vst.msk [vmem:[%s339 + $0x60] sm:$0xff] %vm413, %v10806
      %10871 = vst.msk [vmem:[%s339 + $0x68] sm:$0xff] %vm413, %v10807
      %10872 = vst.msk [vmem:[%s339 + $0x70] sm:$0xff] %vm413, %v10808
      %10873 = vst.msk [vmem:[%s339 + $0x78] sm:$0xff] %vm413, %v10809
      %10874 = vst.msk [vmem:[%s339 + $0x80] sm:$0xff] %vm413, %v10810
      %10875 = vst.msk [vmem:[%s339 + $0x88] sm:$0xff] %vm413, %v10811
      %10876 = vst.msk [vmem:[%s339 + $0x90] sm:$0xff] %vm413, %v10812
      %10877 = vst.msk [vmem:[%s339 + $0x98] sm:$0xff] %vm413, %v10813
      %10878 = vst.msk [vmem:[%s339 + $0xa0] sm:$0xff] %vm413, %v10814
      %10879 = vst.msk [vmem:[%s339 + $0xa8] sm:$0xff] %vm413, %v10815
      %10880 = vst.msk [vmem:[%s339 + $0xb0] sm:$0xff] %vm413, %v10816
      %10881 = vst.msk [vmem:[%s339 + $0xb8] sm:$0xff] %vm413, %v10817
      %10882 = vst.msk [vmem:[%s339 + $0xc0] sm:$0xff] %vm413, %v10818
      %10883 = vst.msk [vmem:[%s339 + $0xc8] sm:$0xff] %vm413, %v10819
      %10884 = vst.msk [vmem:[%s339 + $0xd0] sm:$0xff] %vm413, %v10820
      %10885 = vst.msk [vmem:[%s339 + $0xd8] sm:$0xff] %vm413, %v10821
      %10886 = vst.msk [vmem:[%s339 + $0xe0] sm:$0xff] %vm413, %v10822
      %10887 = vst.msk [vmem:[%s339 + $0xe8] sm:$0xff] %vm413, %v10823
      %10888 = vst.msk [vmem:[%s339 + $0xf0] sm:$0xff] %vm413, %v10824
      %10889 = vst.msk [vmem:[%s339 + $0xf8] sm:$0xff] %vm413, %v10825
      %10890 = vst.msk [vmem:[%s339 + $0x100] sm:$0xff] %vm413, %v10826
      %10891 = vst.msk [vmem:[%s339 + $0x108] sm:$0xff] %vm413, %v10827
      %10892 = vst.msk [vmem:[%s339 + $0x110] sm:$0xff] %vm413, %v10828
      %10893 = vst.msk [vmem:[%s339 + $0x118] sm:$0xff] %vm413, %v10829
      %10894 = vst.msk [vmem:[%s339 + $0x120] sm:$0xff] %vm413, %v10830
      %10895 = vst.msk [vmem:[%s339 + $0x128] sm:$0xff] %vm413, %v10831
      %10896 = vst.msk [vmem:[%s339 + $0x130] sm:$0xff] %vm413, %v10832
      %10897 = vst.msk [vmem:[%s339 + $0x138] sm:$0xff] %vm413, %v10833
      %10898 = vst.msk [vmem:[%s339 + $0x140] sm:$0xff] %vm413, %v10834
      %10899 = vst.msk [vmem:[%s339 + $0x148] sm:$0xff] %vm413, %v10835
      %10900 = vst.msk [vmem:[%s339 + $0x150] sm:$0xff] %vm413, %v10836
      %10901 = vst.msk [vmem:[%s339 + $0x158] sm:$0xff] %vm413, %v10837
      %10902 = vst.msk [vmem:[%s339 + $0x160] sm:$0xff] %vm413, %v10838
      %10903 = vst.msk [vmem:[%s339 + $0x168] sm:$0xff] %vm413, %v10839
      %10904 = vst.msk [vmem:[%s339 + $0x170] sm:$0xff] %vm413, %v10840
      %10905 = vst.msk [vmem:[%s339 + $0x178] sm:$0xff] %vm413, %v10841
      %10906 = vst.msk [vmem:[%s339 + $0x180] sm:$0xff] %vm413, %v10842
      %10907 = vst.msk [vmem:[%s339 + $0x188] sm:$0xff] %vm413, %v10843
      %10908 = vst.msk [vmem:[%s339 + $0x190] sm:$0xff] %vm413, %v10844
      %10909 = vst.msk [vmem:[%s339 + $0x198] sm:$0xff] %vm413, %v10845
      %10910 = vst.msk [vmem:[%s339 + $0x1a0] sm:$0xff] %vm413, %v10846
      %10911 = vst.msk [vmem:[%s339 + $0x1a8] sm:$0xff] %vm413, %v10847
      %10912 = vst.msk [vmem:[%s339 + $0x1b0] sm:$0xff] %vm413, %v10848
      %10913 = vst.msk [vmem:[%s339 + $0x1b8] sm:$0xff] %vm413, %v10849
      %10914 = vst.msk [vmem:[%s339 + $0x1c0] sm:$0xff] %vm413, %v10850
      %10915 = vst.msk [vmem:[%s339 + $0x1c8] sm:$0xff] %vm413, %v10851
      %10916 = vst.msk [vmem:[%s339 + $0x1d0] sm:$0xff] %vm413, %v10852
      %10917 = vst.msk [vmem:[%s339 + $0x1d8] sm:$0xff] %vm413, %v10853
      %10918 = vst.msk [vmem:[%s339 + $0x1e0] sm:$0xff] %vm413, %v10854
      %10919 = vst.msk [vmem:[%s339 + $0x1e8] sm:$0xff] %vm413, %v10855
      %10920 = vst.msk [vmem:[%s339 + $0x1f0] sm:$0xff] %vm413, %v10856
      %10921 = vst.msk [vmem:[%s339 + $0x1f8] sm:$0xff] %vm413, %v10857
      %s10922 = smul.u32 8, %s20
      %p10923 = scmp.lt.s32.totalorder %s10922, 15
      %s10924 = scalar_select %p10923, %s10922, 15
      %s10925 = smul.addr %s10924, 8
      %s10926 = smul.addr %s10925, 8
      %s10927 = scalar_lea.vmem %s9, %s10926
      // Predicated region
      $region57: #{spiking_transformer_block_3d.1} parent=55 // pred_check
        %p10928 = pneg %p232
      $region58: #{spiking_transformer_block_3d.1} parent=55 // pred_check_branch
        %10930 = sbr.rel (%p10928) target = $region60
      $region59: #{spiking_transformer_block_3d.1} parent=55 // pred_region
        %s10931 = smul.u32 8, %s20
      $region60: #{spiking_transformer_block_3d.1} parent=55 // pred_fallthru
        _
    $region56: #{spiking_transformer_block_3d.1} parent=5 // pred_fallthru
      _
    %p10932 = scmp.le.s32.totalorder 2, %s15
    // Predicated region
    $region61: #{spiking_transformer_block_3d.1} parent=5 // pred_check
      %p10933 = pneg %p10932
    $region62: #{spiking_transformer_block_3d.1} parent=5 // pred_check_branch
      %10935 = sbr.rel (%p10933) target = $region64
    $region63: #{spiking_transformer_block_3d.1} parent=5 // pred_region
      %s10936 = ssub.s32 %s15, 2
      // Predicated region
      $region65: #{spiking_transformer_block_3d.1} parent=63 // pred_check
        %p10937 = pneg %p238
      $region66: #{spiking_transformer_block_3d.1} parent=63 // pred_check_branch
        %10939 = sbr.rel (%p10937) target = $region68
      $region67: #{spiking_transformer_block_3d.1} parent=63 // pred_region
        %s10940 = smul.u32 8, %s21
        %p10941 = scmp.lt.s32.totalorder %s10940, 15
        %s10942 = scalar_select %p10941, %s10940, 15
        %s10943 = smul.addr %s10942, 8
        %s10944 = smul.addr %s10943, 8
        %s10945 = scalar_lea.vmem %s9, %s10944
      $region68: #{spiking_transformer_block_3d.1} parent=63 // pred_fallthru
        _
    $region64: #{spiking_transformer_block_3d.1} parent=5 // pred_fallthru
      _
  $region6: #{spiking_transformer_block_3d.1} parent=0 // loop_footer
    %s19 = sadd.s32 1, %s15
  $region7: #{spiking_transformer_block_3d.1} parent=0 // loop_footer_branch
    %14 = sbr.rel target = $region3
  $region8: #{spiking_transformer_block_3d.1} parent=0 // loop_exit
    _

</llo_original>
